<compile_context>
chip_gen: v7x
topology: tpu7x:2x2x1
jax: 0.10.0
libtpu: 0.0.40
codegen_flags: <defaults>
</compile_context>

<pallas_src>
import jax
import jax.numpy as jnp
from jax.experimental import pallas as pl
from jax.experimental.pallas import tpu as pltpu


NUM_LAYERS = 3
DIM_INPUT = 40
DIM_CELL = 256
DIM_EMB = 256
BATCH_TILE = 8      # batch padded to a multiple of 8 (one f32 sublane group)
TIME_CHUNK = 32     # timesteps per projection matmul  ->  M = 32 * 8 = 256 rows


def _sigmoid(x):
    return 1.0 / (1.0 + jnp.exp(-x))


def _dvector_kernel(x_ref, w_ih0_ref, w_ih12_ref, w_hh_ref, b_lstm_ref,
                    w_emb_ref, b_emb_ref, w_att_ref, b_att_ref,
                    o_ref, xproj_ref, hseq_ref, eseq_ref):
    # x_ref     : (T, 8, DIM_INPUT) f32   time-major input tile (one batch tile)
    # w_ih0_ref : (DIM_INPUT, 4H) bf16    layer-0 input->gates weights
    # w_ih12_ref: (2, H, 4H)      bf16    layer-1/2 input->gates weights
    # w_hh_ref  : (3, H, 4H)      bf16    hidden->gates weights
    # b_lstm_ref: (3, 1, 4H)      f32     b_ih + b_hh per layer
    # w_emb_ref : (H, E) bf16, b_emb_ref: (1, E) f32     embedding Linear
    # w_att_ref : (1, E) f32, b_att_ref: (1, 1) f32      attention Linear(E, 1)
    # o_ref     : (8, E) f32              L2-normalised d-vectors
    # scratch   : xproj (T, 8, 4H) f32, hseq (T, 8, H) f32, eseq (T, 8, E) f32
    T, BT, CIN = x_ref.shape
    H4 = xproj_ref.shape[-1]
    H = H4 // 4
    E = eseq_ref.shape[-1]
    TC = min(T, TIME_CHUNK)

    def project(get_lhs_chunk, get_w, bias):
        # xproj[t0:t0+tc] = lhs_chunk @ W_ih + (b_ih + b_hh)  for all timesteps,
        # chunked over time so each MXU call has M = TC * 8 rows.
        for t0 in range(0, T, TC):
            tc = min(TC, T - t0)
            lhs = get_lhs_chunk(t0, tc)                       # (tc*BT, in) bf16
            acc = jnp.dot(lhs, get_w(),
                          preferred_element_type=jnp.float32) + bias
            xproj_ref[pl.ds(t0, tc), :, :] = acc.reshape(tc, BT, H4)

    def recurrence(layer):
        # Sequential LSTM recurrence; only the small (BT, H) @ (H, 4H) matmul
        # remains per timestep.  Gate order matches PyTorch: [i, f, g, o].
        def step(t, carry):
            h, c = carry                                      # (BT, H) f32
            gates = xproj_ref[t] + jnp.dot(
                h.astype(jnp.bfloat16), w_hh_ref[layer],
                preferred_element_type=jnp.float32)           # (BT, 4H) f32
            i_g = _sigmoid(gates[:, 0 * H:1 * H])
            f_g = _sigmoid(gates[:, 1 * H:2 * H])
            g_g = jnp.tanh(gates[:, 2 * H:3 * H])
            o_g = _sigmoid(gates[:, 3 * H:4 * H])
            c = f_g * c + i_g * g_g
            h = o_g * jnp.tanh(c)
            hseq_ref[t] = h
            return h, c
        init = (jnp.zeros((BT, H), jnp.float32),
                jnp.zeros((BT, H), jnp.float32))
        jax.lax.fori_loop(0, T, step, init)

    def x_chunk(t0, tc):
        return (x_ref[pl.ds(t0, tc), :, :]
                .reshape(tc * BT, CIN).astype(jnp.bfloat16))

    def h_chunk(t0, tc):
        return (hseq_ref[pl.ds(t0, tc), :, :]
                .reshape(tc * BT, H).astype(jnp.bfloat16))

    # ---- LSTM layer 0 --------------------------------------------------------
    project(x_chunk, lambda: w_ih0_ref[...], b_lstm_ref[0])
    recurrence(0)

    # ---- LSTM layers 1, 2 ----------------------------------------------------
    for layer in range(1, NUM_LAYERS):
        project(h_chunk, lambda l=layer: w_ih12_ref[l - 1], b_lstm_ref[layer])
        recurrence(layer)

    # ---- embedding: tanh(Linear(h_t)) for all timesteps ------------------------
    for t0 in range(0, T, TC):
        tc = min(TC, T - t0)
        e = jnp.tanh(jnp.dot(h_chunk(t0, tc), w_emb_ref[...],
                             preferred_element_type=jnp.float32)
                     + b_emb_ref[...])                        # (tc*BT, E) f32
        eseq_ref[pl.ds(t0, tc), :, :] = e.reshape(tc, BT, E)

    # ---- attentive pooling (softmax over time) + L2 normalisation -------------
    e3 = eseq_ref[...]                                        # (T, BT, E) f32
    s = jnp.sum(e3 * w_att_ref[...], axis=-1, keepdims=True) + b_att_ref[...]
    m = jnp.max(s, axis=0, keepdims=True)                     # (1, BT, 1)
    p = jnp.exp(s - m)
    attn = p / jnp.sum(p, axis=0, keepdims=True)              # softmax over time
    emb = jnp.sum(e3 * attn, axis=0)                          # (BT, E)
    norm = jnp.sqrt(jnp.sum(emb * emb, axis=-1, keepdims=True))
    o_ref[...] = (emb / norm).astype(o_ref.dtype)


def init_params(key):
    """Deterministic synthetic parameters (PyTorch-style uniform init)."""
    H, E, CIN = DIM_CELL, DIM_EMB, DIM_INPUT
    ks = jax.random.split(key, 9)
    u = lambda k, shape, b: jax.random.uniform(k, shape, jnp.float32, -b, b)
    bl = 1.0 / (H ** 0.5)

    # LSTM weights stored transposed as (in_dim, 4H) so the kernel does x @ W.
    w_ih0 = u(ks[0], (CIN, 4 * H), bl)
    w_ih12 = u(ks[1], (NUM_LAYERS - 1, H, 4 * H), bl)
    w_hh = u(ks[2], (NUM_LAYERS, H, 4 * H), bl)
    b_lstm = (u(ks[3], (NUM_LAYERS, 1, 4 * H), bl)
              + u(ks[4], (NUM_LAYERS, 1, 4 * H), bl))          # b_ih + b_hh

    w_emb = u(ks[5], (H, E), bl)
    b_emb = u(ks[6], (1, E), bl)
    w_att = u(ks[7], (1, E), 1.0 / (E ** 0.5))
    b_att = u(ks[8], (1, 1), 1.0 / (E ** 0.5))

    return {
        "w_ih0": w_ih0.astype(jnp.bfloat16),
        "w_ih12": w_ih12.astype(jnp.bfloat16),
        "w_hh": w_hh.astype(jnp.bfloat16),
        "b_lstm": b_lstm,
        "w_emb": w_emb.astype(jnp.bfloat16),
        "b_emb": b_emb,
        "w_att": w_att,
        "b_att": b_att,
    }


def attentive_pooled_lstm_dvector(params, x):
    """x: (B, T, DIM_INPUT) -> (B, 1, DIM_EMB) L2-normalised d-vectors."""
    B, T, CIN = x.shape
    assert CIN == DIM_INPUT
    H, E = DIM_CELL, DIM_EMB
    BT = BATCH_TILE
    B_pad = ((B + BT - 1) // BT) * BT
    if B_pad != B:
        x = jnp.pad(x, ((0, B_pad - B), (0, 0), (0, 0)))
    # Time-major layout: per-timestep in-kernel access is leading-dim indexing.
    x_tm = jnp.transpose(x.astype(jnp.float32), (1, 0, 2))    # (T, B_pad, CIN)

    grid = (B_pad // BT,)   # parallel over batch tiles (>=2 steps when B >= 16)

    out = pl.pallas_call(
        _dvector_kernel,
        out_shape=jax.ShapeDtypeStruct((B_pad, E), jnp.float32),
        grid=grid,
        in_specs=[
            pl.BlockSpec((T, BT, CIN), lambda bi: (0, bi, 0)),               # x
            pl.BlockSpec((CIN, 4 * H), lambda bi: (0, 0)),                   # w_ih0
            pl.BlockSpec((NUM_LAYERS - 1, H, 4 * H), lambda bi: (0, 0, 0)),  # w_ih12
            pl.BlockSpec((NUM_LAYERS, H, 4 * H), lambda bi: (0, 0, 0)),      # w_hh
            pl.BlockSpec((NUM_LAYERS, 1, 4 * H), lambda bi: (0, 0, 0)),      # b_lstm
            pl.BlockSpec((H, E), lambda bi: (0, 0)),                         # w_emb
            pl.BlockSpec((1, E), lambda bi: (0, 0)),                         # b_emb
            pl.BlockSpec((1, E), lambda bi: (0, 0)),                         # w_att
            pl.BlockSpec((1, 1), lambda bi: (0, 0)),                         # b_att
        ],
        out_specs=pl.BlockSpec((BT, E), lambda bi: (bi, 0)),
        scratch_shapes=[
            pltpu.VMEM((T, BT, 4 * H), jnp.float32),   # xproj of current layer
            pltpu.VMEM((T, BT, H), jnp.float32),       # hidden-state sequence
            pltpu.VMEM((T, BT, E), jnp.float32),       # embedding sequence
        ],
        compiler_params=pltpu.CompilerParams(
            dimension_semantics=("parallel",),
            vmem_limit_bytes=32 * 1024 * 1024,
        ),
    )(x_tm, params["w_ih0"], params["w_ih12"], params["w_hh"],
      params["b_lstm"], params["w_emb"], params["b_emb"],
      params["w_att"], params["b_att"])

    return out[:B, None, :]


if __name__ == "__main__":
    key = jax.random.PRNGKey(0)
    k_params, k_x = jax.random.split(key)
    params = init_params(k_params)

    B, T = 2, 16   # small demo shapes (the module's default seg_len=160 also works)
    x = jax.random.normal(k_x, (B, T, DIM_INPUT), jnp.float32)

    out = jax.block_until_ready(attentive_pooled_lstm_dvector(params, x))
    assert out.shape == (B, 1, DIM_EMB), out.shape
    assert bool(jnp.all(jnp.isfinite(out)))
    norms = jnp.sqrt(jnp.sum(out[:, 0, :] ** 2, axis=-1))
    assert bool(jnp.all(jnp.abs(norms - 1.0) < 1e-2)), norms   # unit-norm output
    print("KERNEL_OK")
</pallas_src>

<mosaic_0001>
module attributes {stable_mosaic.version = 11 : i64} {
  func.func @_dvector_kernel(%arg0: i32, %arg1: memref<16x8x40xf32, #tpu.memory_space<vmem>>, %arg2: memref<40x1024xbf16, #tpu.memory_space<vmem>>, %arg3: memref<2x256x1024xbf16, #tpu.memory_space<vmem>>, %arg4: memref<3x256x1024xbf16, #tpu.memory_space<vmem>>, %arg5: memref<3x1x1024xf32, #tpu.memory_space<vmem>>, %arg6: memref<256x256xbf16, #tpu.memory_space<vmem>>, %arg7: memref<1x256xf32, #tpu.memory_space<vmem>>, %arg8: memref<1x256xf32, #tpu.memory_space<vmem>>, %arg9: memref<1x1xf32, #tpu.memory_space<vmem>>, %arg10: memref<8x256xf32, #tpu.memory_space<vmem>>, %arg11: memref<16x8x1024xf32, #tpu.memory_space<vmem>>, %arg12: memref<16x8x256xf32, #tpu.memory_space<vmem>>, %arg13: memref<16x8x256xf32, #tpu.memory_space<vmem>>) attributes {dimension_semantics = [#tpu.dimension_semantics<parallel>], iteration_bounds = array<i64: 1>, scalar_prefetch = 0 : i64, scratch_operands = 3 : i64, tpu.core_type = #tpu.core_type<tc>, window_params = [{transform_indices = @transform_0, window_bounds = array<i64: 16, 8, 40>}, {pipeline_mode = #tpu.pipeline_mode<synchronous>, transform_indices = @transform_1, window_bounds = array<i64: 40, 1024>}, {pipeline_mode = #tpu.pipeline_mode<synchronous>, transform_indices = @transform_2, window_bounds = array<i64: 2, 256, 1024>}, {pipeline_mode = #tpu.pipeline_mode<synchronous>, transform_indices = @transform_3, window_bounds = array<i64: 3, 256, 1024>}, {pipeline_mode = #tpu.pipeline_mode<synchronous>, transform_indices = @transform_4, window_bounds = array<i64: 3, 1, 1024>}, {pipeline_mode = #tpu.pipeline_mode<synchronous>, transform_indices = @transform_5, window_bounds = array<i64: 256, 256>}, {pipeline_mode = #tpu.pipeline_mode<synchronous>, transform_indices = @transform_6, window_bounds = array<i64: 1, 256>}, {pipeline_mode = #tpu.pipeline_mode<synchronous>, transform_indices = @transform_7, window_bounds = array<i64: 1, 256>}, {pipeline_mode = #tpu.pipeline_mode<synchronous>, transform_indices = @transform_8, window_bounds = array<i64: 1, 1>}, {transform_indices = @transform_9, window_bounds = array<i64: 8, 256>}]} {
    %c0 = arith.constant 0 : index
    %c0_0 = arith.constant 0 : index
    %c0_1 = arith.constant 0 : index
    %0 = vector.load %arg5[%c0, %c0_0, %c0_1] : memref<3x1x1024xf32, #tpu.memory_space<vmem>>, vector<1x1x1024xf32>
    %1 = vector.shape_cast %0 : vector<1x1x1024xf32> to vector<1x1024xf32>
    %c0_2 = arith.constant 0 : index
    %c0_3 = arith.constant 0 : index
    %c0_4 = arith.constant 0 : index
    %2 = vector.load %arg1[%c0_2, %c0_3, %c0_4] : memref<16x8x40xf32, #tpu.memory_space<vmem>>, vector<16x8x40xf32>
    %3 = vector.shape_cast %2 : vector<16x8x40xf32> to vector<128x40xf32>
    %4 = arith.truncf %3 : vector<128x40xf32> to vector<128x40xbf16>
    %c0_5 = arith.constant 0 : index
    %c0_6 = arith.constant 0 : index
    %5 = vector.load %arg2[%c0_5, %c0_6] : memref<40x1024xbf16, #tpu.memory_space<vmem>>, vector<40x1024xbf16>
    %cst = arith.constant dense<0.000000e+00> : vector<128x1024xf32>
    %6 = tpu.matmul %4, %5, %cst {dimension_numbers = #tpu.dot_dimension_numbers<[1], [0], [0], [1], [0, 0, 1, 1], [], []>} : vector<128x40xbf16>, vector<40x1024xbf16>, vector<128x1024xf32> -> vector<128x1024xf32>
    %7 = vector.broadcast %1 : vector<1x1024xf32> to vector<128x1024xf32>
    %8 = arith.addf %6, %7 : vector<128x1024xf32>
    %9 = vector.shape_cast %8 : vector<128x1024xf32> to vector<16x8x1024xf32>
    %c0_7 = arith.constant 0 : index
    %c0_8 = arith.constant 0 : index
    %c0_9 = arith.constant 0 : index
    %10 = vector.load %arg11[%c0_7, %c0_8, %c0_9] : memref<16x8x1024xf32, #tpu.memory_space<vmem>>, vector<16x8x1024xf32>
    tpu.vector_store %arg11[%c0_7, %c0_8, %c0_9], %9 {strides = array<i32>} : memref<16x8x1024xf32, #tpu.memory_space<vmem>>, vector<16x8x1024xf32>,
    %cst_10 = arith.constant 0.000000e+00 : f32
    %11 = vector.broadcast %cst_10 : f32 to vector<8x256xf32>
    %cst_11 = arith.constant 0.000000e+00 : f32
    %12 = vector.broadcast %cst_11 : f32 to vector<8x256xf32>
    %c0_i32 = arith.constant 0 : i32
    %c16_i32 = arith.constant 16 : i32
    %13 = arith.addi %c0_i32, %c16_i32 : i32
    %c1_i32 = arith.constant 1 : i32
    %14:2 = scf.for %arg14 = %c0_i32 to %13 step %c1_i32 iter_args(%arg15 = %11, %arg16 = %12) -> (vector<8x256xf32>, vector<8x256xf32>)  : i32 {
      %88 = arith.index_cast %arg14 : i32 to index
      %c0_74 = arith.constant 0 : index
      %c0_75 = arith.constant 0 : index
      %89 = vector.load %arg11[%88, %c0_74, %c0_75] : memref<16x8x1024xf32, #tpu.memory_space<vmem>>, vector<1x8x1024xf32>
      %90 = vector.shape_cast %89 : vector<1x8x1024xf32> to vector<8x1024xf32>
      %91 = arith.truncf %arg15 : vector<8x256xf32> to vector<8x256xbf16>
      %c0_76 = arith.constant 0 : index
      %c0_77 = arith.constant 0 : index
      %c0_78 = arith.constant 0 : index
      %92 = vector.load %arg4[%c0_76, %c0_77, %c0_78] : memref<3x256x1024xbf16, #tpu.memory_space<vmem>>, vector<1x256x1024xbf16>
      %93 = vector.shape_cast %92 : vector<1x256x1024xbf16> to vector<256x1024xbf16>
      %cst_79 = arith.constant dense<0.000000e+00> : vector<8x1024xf32>
      %94 = tpu.matmul %91, %93, %cst_79 {dimension_numbers = #tpu.dot_dimension_numbers<[1], [0], [0], [1], [0, 0, 1, 1], [], []>} : vector<8x256xbf16>, vector<256x1024xbf16>, vector<8x1024xf32> -> vector<8x1024xf32>
      %95 = arith.addf %90, %94 : vector<8x1024xf32>
      %96 = vector.extract_strided_slice %95 {offsets = [0, 0], sizes = [8, 256], strides = [1, 1]} : vector<8x1024xf32> to vector<8x256xf32>
      %cst_80 = arith.constant 0.000000e+00 : f32
      %97 = vector.broadcast %cst_80 : f32 to vector<8x256xf32>
      %98 = arith.subf %97, %96 : vector<8x256xf32>
      %99 = math.exp %98 : vector<8x256xf32>
      %cst_81 = arith.constant 1.000000e+00 : f32
      %100 = vector.broadcast %cst_81 : f32 to vector<8x256xf32>
      %101 = arith.addf %100, %99 : vector<8x256xf32>
      %cst_82 = arith.constant 1.000000e+00 : f32
      %102 = vector.broadcast %cst_82 : f32 to vector<8x256xf32>
      %103 = arith.divf %102, %101 : vector<8x256xf32>
      %104 = vector.extract_strided_slice %95 {offsets = [0, 256], sizes = [8, 256], strides = [1, 1]} : vector<8x1024xf32> to vector<8x256xf32>
      %cst_83 = arith.constant 0.000000e+00 : f32
      %105 = vector.broadcast %cst_83 : f32 to vector<8x256xf32>
      %106 = arith.subf %105, %104 : vector<8x256xf32>
      %107 = math.exp %106 : vector<8x256xf32>
      %cst_84 = arith.constant 1.000000e+00 : f32
      %108 = vector.broadcast %cst_84 : f32 to vector<8x256xf32>
      %109 = arith.addf %108, %107 : vector<8x256xf32>
      %cst_85 = arith.constant 1.000000e+00 : f32
      %110 = vector.broadcast %cst_85 : f32 to vector<8x256xf32>
      %111 = arith.divf %110, %109 : vector<8x256xf32>
      %112 = vector.extract_strided_slice %95 {offsets = [0, 512], sizes = [8, 256], strides = [1, 1]} : vector<8x1024xf32> to vector<8x256xf32>
      %113 = math.tanh %112 : vector<8x256xf32>
      %114 = vector.extract_strided_slice %95 {offsets = [0, 768], sizes = [8, 256], strides = [1, 1]} : vector<8x1024xf32> to vector<8x256xf32>
      %cst_86 = arith.constant 0.000000e+00 : f32
      %115 = vector.broadcast %cst_86 : f32 to vector<8x256xf32>
      %116 = arith.subf %115, %114 : vector<8x256xf32>
      %117 = math.exp %116 : vector<8x256xf32>
      %cst_87 = arith.constant 1.000000e+00 : f32
      %118 = vector.broadcast %cst_87 : f32 to vector<8x256xf32>
      %119 = arith.addf %118, %117 : vector<8x256xf32>
      %cst_88 = arith.constant 1.000000e+00 : f32
      %120 = vector.broadcast %cst_88 : f32 to vector<8x256xf32>
      %121 = arith.divf %120, %119 : vector<8x256xf32>
      %122 = arith.mulf %111, %arg16 : vector<8x256xf32>
      %123 = arith.mulf %103, %113 : vector<8x256xf32>
      %124 = arith.addf %122, %123 : vector<8x256xf32>
      %125 = math.tanh %124 : vector<8x256xf32>
      %126 = arith.mulf %121, %125 : vector<8x256xf32>
      %127 = arith.index_cast %arg14 : i32 to index
      %c0_89 = arith.constant 0 : index
      %c0_90 = arith.constant 0 : index
      %128 = vector.load %arg12[%127, %c0_89, %c0_90] : memref<16x8x256xf32, #tpu.memory_space<vmem>>, vector<1x8x256xf32>
      %129 = vector.shape_cast %128 : vector<1x8x256xf32> to vector<8x256xf32>
      %130 = vector.shape_cast %126 : vector<8x256xf32> to vector<1x8x256xf32>
      tpu.vector_store %arg12[%127, %c0_89, %c0_90], %130 {strides = array<i32>} : memref<16x8x256xf32, #tpu.memory_space<vmem>>, vector<1x8x256xf32>,
      scf.yield %126, %124 : vector<8x256xf32>, vector<8x256xf32>
    }
    %c16_i32_12 = arith.constant 16 : i32
    %c1 = arith.constant 1 : index
    %c0_13 = arith.constant 0 : index
    %c0_14 = arith.constant 0 : index
    %15 = vector.load %arg5[%c1, %c0_13, %c0_14] : memref<3x1x1024xf32, #tpu.memory_space<vmem>>, vector<1x1x1024xf32>
    %16 = vector.shape_cast %15 : vector<1x1x1024xf32> to vector<1x1024xf32>
    %c0_15 = arith.constant 0 : index
    %c0_16 = arith.constant 0 : index
    %c0_17 = arith.constant 0 : index
    %17 = vector.load %arg12[%c0_15, %c0_16, %c0_17] : memref<16x8x256xf32, #tpu.memory_space<vmem>>, vector<16x8x256xf32>
    %18 = vector.shape_cast %17 : vector<16x8x256xf32> to vector<128x256xf32>
    %19 = arith.truncf %18 : vector<128x256xf32> to vector<128x256xbf16>
    %c0_18 = arith.constant 0 : index
    %c0_19 = arith.constant 0 : index
    %c0_20 = arith.constant 0 : index
    %20 = vector.load %arg3[%c0_18, %c0_19, %c0_20] : memref<2x256x1024xbf16, #tpu.memory_space<vmem>>, vector<1x256x1024xbf16>
    %21 = vector.shape_cast %20 : vector<1x256x1024xbf16> to vector<256x1024xbf16>
    %cst_21 = arith.constant dense<0.000000e+00> : vector<128x1024xf32>
    %22 = tpu.matmul %19, %21, %cst_21 {dimension_numbers = #tpu.dot_dimension_numbers<[1], [0], [0], [1], [0, 0, 1, 1], [], []>} : vector<128x256xbf16>, vector<256x1024xbf16>, vector<128x1024xf32> -> vector<128x1024xf32>
    %23 = vector.broadcast %16 : vector<1x1024xf32> to vector<128x1024xf32>
    %24 = arith.addf %22, %23 : vector<128x1024xf32>
    %25 = vector.shape_cast %24 : vector<128x1024xf32> to vector<16x8x1024xf32>
    %c0_22 = arith.constant 0 : index
    %c0_23 = arith.constant 0 : index
    %c0_24 = arith.constant 0 : index
    %26 = vector.load %arg11[%c0_22, %c0_23, %c0_24] : memref<16x8x1024xf32, #tpu.memory_space<vmem>>, vector<16x8x1024xf32>
    tpu.vector_store %arg11[%c0_22, %c0_23, %c0_24], %25 {strides = array<i32>} : memref<16x8x1024xf32, #tpu.memory_space<vmem>>, vector<16x8x1024xf32>,
    %cst_25 = arith.constant 0.000000e+00 : f32
    %27 = vector.broadcast %cst_25 : f32 to vector<8x256xf32>
    %cst_26 = arith.constant 0.000000e+00 : f32
    %28 = vector.broadcast %cst_26 : f32 to vector<8x256xf32>
    %c0_i32_27 = arith.constant 0 : i32
    %c16_i32_28 = arith.constant 16 : i32
    %29 = arith.addi %c0_i32_27, %c16_i32_28 : i32
    %c1_i32_29 = arith.constant 1 : i32
    %30:2 = scf.for %arg14 = %c0_i32_27 to %29 step %c1_i32_29 iter_args(%arg15 = %27, %arg16 = %28) -> (vector<8x256xf32>, vector<8x256xf32>)  : i32 {
      %88 = arith.index_cast %arg14 : i32 to index
      %c0_74 = arith.constant 0 : index
      %c0_75 = arith.constant 0 : index
      %89 = vector.load %arg11[%88, %c0_74, %c0_75] : memref<16x8x1024xf32, #tpu.memory_space<vmem>>, vector<1x8x1024xf32>
      %90 = vector.shape_cast %89 : vector<1x8x1024xf32> to vector<8x1024xf32>
      %91 = arith.truncf %arg15 : vector<8x256xf32> to vector<8x256xbf16>
      %c1_76 = arith.constant 1 : index
      %c0_77 = arith.constant 0 : index
      %c0_78 = arith.constant 0 : index
      %92 = vector.load %arg4[%c1_76, %c0_77, %c0_78] : memref<3x256x1024xbf16, #tpu.memory_space<vmem>>, vector<1x256x1024xbf16>
      %93 = vector.shape_cast %92 : vector<1x256x1024xbf16> to vector<256x1024xbf16>
      %cst_79 = arith.constant dense<0.000000e+00> : vector<8x1024xf32>
      %94 = tpu.matmul %91, %93, %cst_79 {dimension_numbers = #tpu.dot_dimension_numbers<[1], [0], [0], [1], [0, 0, 1, 1], [], []>} : vector<8x256xbf16>, vector<256x1024xbf16>, vector<8x1024xf32> -> vector<8x1024xf32>
      %95 = arith.addf %90, %94 : vector<8x1024xf32>
      %96 = vector.extract_strided_slice %95 {offsets = [0, 0], sizes = [8, 256], strides = [1, 1]} : vector<8x1024xf32> to vector<8x256xf32>
      %cst_80 = arith.constant 0.000000e+00 : f32
      %97 = vector.broadcast %cst_80 : f32 to vector<8x256xf32>
      %98 = arith.subf %97, %96 : vector<8x256xf32>
      %99 = math.exp %98 : vector<8x256xf32>
      %cst_81 = arith.constant 1.000000e+00 : f32
      %100 = vector.broadcast %cst_81 : f32 to vector<8x256xf32>
      %101 = arith.addf %100, %99 : vector<8x256xf32>
      %cst_82 = arith.constant 1.000000e+00 : f32
      %102 = vector.broadcast %cst_82 : f32 to vector<8x256xf32>
      %103 = arith.divf %102, %101 : vector<8x256xf32>
      %104 = vector.extract_strided_slice %95 {offsets = [0, 256], sizes = [8, 256], strides = [1, 1]} : vector<8x1024xf32> to vector<8x256xf32>
      %cst_83 = arith.constant 0.000000e+00 : f32
      %105 = vector.broadcast %cst_83 : f32 to vector<8x256xf32>
      %106 = arith.subf %105, %104 : vector<8x256xf32>
      %107 = math.exp %106 : vector<8x256xf32>
      %cst_84 = arith.constant 1.000000e+00 : f32
      %108 = vector.broadcast %cst_84 : f32 to vector<8x256xf32>
      %109 = arith.addf %108, %107 : vector<8x256xf32>
      %cst_85 = arith.constant 1.000000e+00 : f32
      %110 = vector.broadcast %cst_85 : f32 to vector<8x256xf32>
      %111 = arith.divf %110, %109 : vector<8x256xf32>
      %112 = vector.extract_strided_slice %95 {offsets = [0, 512], sizes = [8, 256], strides = [1, 1]} : vector<8x1024xf32> to vector<8x256xf32>
      %113 = math.tanh %112 : vector<8x256xf32>
      %114 = vector.extract_strided_slice %95 {offsets = [0, 768], sizes = [8, 256], strides = [1, 1]} : vector<8x1024xf32> to vector<8x256xf32>
      %cst_86 = arith.constant 0.000000e+00 : f32
      %115 = vector.broadcast %cst_86 : f32 to vector<8x256xf32>
      %116 = arith.subf %115, %114 : vector<8x256xf32>
      %117 = math.exp %116 : vector<8x256xf32>
      %cst_87 = arith.constant 1.000000e+00 : f32
      %118 = vector.broadcast %cst_87 : f32 to vector<8x256xf32>
      %119 = arith.addf %118, %117 : vector<8x256xf32>
      %cst_88 = arith.constant 1.000000e+00 : f32
      %120 = vector.broadcast %cst_88 : f32 to vector<8x256xf32>
      %121 = arith.divf %120, %119 : vector<8x256xf32>
      %122 = arith.mulf %111, %arg16 : vector<8x256xf32>
      %123 = arith.mulf %103, %113 : vector<8x256xf32>
      %124 = arith.addf %122, %123 : vector<8x256xf32>
      %125 = math.tanh %124 : vector<8x256xf32>
      %126 = arith.mulf %121, %125 : vector<8x256xf32>
      %127 = arith.index_cast %arg14 : i32 to index
      %c0_89 = arith.constant 0 : index
      %c0_90 = arith.constant 0 : index
      %128 = vector.load %arg12[%127, %c0_89, %c0_90] : memref<16x8x256xf32, #tpu.memory_space<vmem>>, vector<1x8x256xf32>
      %129 = vector.shape_cast %128 : vector<1x8x256xf32> to vector<8x256xf32>
      %130 = vector.shape_cast %126 : vector<8x256xf32> to vector<1x8x256xf32>
      tpu.vector_store %arg12[%127, %c0_89, %c0_90], %130 {strides = array<i32>} : memref<16x8x256xf32, #tpu.memory_space<vmem>>, vector<1x8x256xf32>,
      scf.yield %126, %124 : vector<8x256xf32>, vector<8x256xf32>
    }
    %c16_i32_30 = arith.constant 16 : i32
    %c2 = arith.constant 2 : index
    %c0_31 = arith.constant 0 : index
    %c0_32 = arith.constant 0 : index
    %31 = vector.load %arg5[%c2, %c0_31, %c0_32] : memref<3x1x1024xf32, #tpu.memory_space<vmem>>, vector<1x1x1024xf32>
    %32 = vector.shape_cast %31 : vector<1x1x1024xf32> to vector<1x1024xf32>
    %c0_33 = arith.constant 0 : index
    %c0_34 = arith.constant 0 : index
    %c0_35 = arith.constant 0 : index
    %33 = vector.load %arg12[%c0_33, %c0_34, %c0_35] : memref<16x8x256xf32, #tpu.memory_space<vmem>>, vector<16x8x256xf32>
    %34 = vector.shape_cast %33 : vector<16x8x256xf32> to vector<128x256xf32>
    %35 = arith.truncf %34 : vector<128x256xf32> to vector<128x256xbf16>
    %c1_36 = arith.constant 1 : index
    %c0_37 = arith.constant 0 : index
    %c0_38 = arith.constant 0 : index
    %36 = vector.load %arg3[%c1_36, %c0_37, %c0_38] : memref<2x256x1024xbf16, #tpu.memory_space<vmem>>, vector<1x256x1024xbf16>
    %37 = vector.shape_cast %36 : vector<1x256x1024xbf16> to vector<256x1024xbf16>
    %cst_39 = arith.constant dense<0.000000e+00> : vector<128x1024xf32>
    %38 = tpu.matmul %35, %37, %cst_39 {dimension_numbers = #tpu.dot_dimension_numbers<[1], [0], [0], [1], [0, 0, 1, 1], [], []>} : vector<128x256xbf16>, vector<256x1024xbf16>, vector<128x1024xf32> -> vector<128x1024xf32>
    %39 = vector.broadcast %32 : vector<1x1024xf32> to vector<128x1024xf32>
    %40 = arith.addf %38, %39 : vector<128x1024xf32>
    %41 = vector.shape_cast %40 : vector<128x1024xf32> to vector<16x8x1024xf32>
    %c0_40 = arith.constant 0 : index
    %c0_41 = arith.constant 0 : index
    %c0_42 = arith.constant 0 : index
    %42 = vector.load %arg11[%c0_40, %c0_41, %c0_42] : memref<16x8x1024xf32, #tpu.memory_space<vmem>>, vector<16x8x1024xf32>
    tpu.vector_store %arg11[%c0_40, %c0_41, %c0_42], %41 {strides = array<i32>} : memref<16x8x1024xf32, #tpu.memory_space<vmem>>, vector<16x8x1024xf32>,
    %cst_43 = arith.constant 0.000000e+00 : f32
    %43 = vector.broadcast %cst_43 : f32 to vector<8x256xf32>
    %cst_44 = arith.constant 0.000000e+00 : f32
    %44 = vector.broadcast %cst_44 : f32 to vector<8x256xf32>
    %c0_i32_45 = arith.constant 0 : i32
    %c16_i32_46 = arith.constant 16 : i32
    %45 = arith.addi %c0_i32_45, %c16_i32_46 : i32
    %c1_i32_47 = arith.constant 1 : i32
    %46:2 = scf.for %arg14 = %c0_i32_45 to %45 step %c1_i32_47 iter_args(%arg15 = %43, %arg16 = %44) -> (vector<8x256xf32>, vector<8x256xf32>)  : i32 {
      %88 = arith.index_cast %arg14 : i32 to index
      %c0_74 = arith.constant 0 : index
      %c0_75 = arith.constant 0 : index
      %89 = vector.load %arg11[%88, %c0_74, %c0_75] : memref<16x8x1024xf32, #tpu.memory_space<vmem>>, vector<1x8x1024xf32>
      %90 = vector.shape_cast %89 : vector<1x8x1024xf32> to vector<8x1024xf32>
      %91 = arith.truncf %arg15 : vector<8x256xf32> to vector<8x256xbf16>
      %c2_76 = arith.constant 2 : index
      %c0_77 = arith.constant 0 : index
      %c0_78 = arith.constant 0 : index
      %92 = vector.load %arg4[%c2_76, %c0_77, %c0_78] : memref<3x256x1024xbf16, #tpu.memory_space<vmem>>, vector<1x256x1024xbf16>
      %93 = vector.shape_cast %92 : vector<1x256x1024xbf16> to vector<256x1024xbf16>
      %cst_79 = arith.constant dense<0.000000e+00> : vector<8x1024xf32>
      %94 = tpu.matmul %91, %93, %cst_79 {dimension_numbers = #tpu.dot_dimension_numbers<[1], [0], [0], [1], [0, 0, 1, 1], [], []>} : vector<8x256xbf16>, vector<256x1024xbf16>, vector<8x1024xf32> -> vector<8x1024xf32>
      %95 = arith.addf %90, %94 : vector<8x1024xf32>
      %96 = vector.extract_strided_slice %95 {offsets = [0, 0], sizes = [8, 256], strides = [1, 1]} : vector<8x1024xf32> to vector<8x256xf32>
      %cst_80 = arith.constant 0.000000e+00 : f32
      %97 = vector.broadcast %cst_80 : f32 to vector<8x256xf32>
      %98 = arith.subf %97, %96 : vector<8x256xf32>
      %99 = math.exp %98 : vector<8x256xf32>
      %cst_81 = arith.constant 1.000000e+00 : f32
      %100 = vector.broadcast %cst_81 : f32 to vector<8x256xf32>
      %101 = arith.addf %100, %99 : vector<8x256xf32>
      %cst_82 = arith.constant 1.000000e+00 : f32
      %102 = vector.broadcast %cst_82 : f32 to vector<8x256xf32>
      %103 = arith.divf %102, %101 : vector<8x256xf32>
      %104 = vector.extract_strided_slice %95 {offsets = [0, 256], sizes = [8, 256], strides = [1, 1]} : vector<8x1024xf32> to vector<8x256xf32>
      %cst_83 = arith.constant 0.000000e+00 : f32
      %105 = vector.broadcast %cst_83 : f32 to vector<8x256xf32>
      %106 = arith.subf %105, %104 : vector<8x256xf32>
      %107 = math.exp %106 : vector<8x256xf32>
      %cst_84 = arith.constant 1.000000e+00 : f32
      %108 = vector.broadcast %cst_84 : f32 to vector<8x256xf32>
      %109 = arith.addf %108, %107 : vector<8x256xf32>
      %cst_85 = arith.constant 1.000000e+00 : f32
      %110 = vector.broadcast %cst_85 : f32 to vector<8x256xf32>
      %111 = arith.divf %110, %109 : vector<8x256xf32>
      %112 = vector.extract_strided_slice %95 {offsets = [0, 512], sizes = [8, 256], strides = [1, 1]} : vector<8x1024xf32> to vector<8x256xf32>
      %113 = math.tanh %112 : vector<8x256xf32>
      %114 = vector.extract_strided_slice %95 {offsets = [0, 768], sizes = [8, 256], strides = [1, 1]} : vector<8x1024xf32> to vector<8x256xf32>
      %cst_86 = arith.constant 0.000000e+00 : f32
      %115 = vector.broadcast %cst_86 : f32 to vector<8x256xf32>
      %116 = arith.subf %115, %114 : vector<8x256xf32>
      %117 = math.exp %116 : vector<8x256xf32>
      %cst_87 = arith.constant 1.000000e+00 : f32
      %118 = vector.broadcast %cst_87 : f32 to vector<8x256xf32>
      %119 = arith.addf %118, %117 : vector<8x256xf32>
      %cst_88 = arith.constant 1.000000e+00 : f32
      %120 = vector.broadcast %cst_88 : f32 to vector<8x256xf32>
      %121 = arith.divf %120, %119 : vector<8x256xf32>
      %122 = arith.mulf %111, %arg16 : vector<8x256xf32>
      %123 = arith.mulf %103, %113 : vector<8x256xf32>
      %124 = arith.addf %122, %123 : vector<8x256xf32>
      %125 = math.tanh %124 : vector<8x256xf32>
      %126 = arith.mulf %121, %125 : vector<8x256xf32>
      %127 = arith.index_cast %arg14 : i32 to index
      %c0_89 = arith.constant 0 : index
      %c0_90 = arith.constant 0 : index
      %128 = vector.load %arg12[%127, %c0_89, %c0_90] : memref<16x8x256xf32, #tpu.memory_space<vmem>>, vector<1x8x256xf32>
      %129 = vector.shape_cast %128 : vector<1x8x256xf32> to vector<8x256xf32>
      %130 = vector.shape_cast %126 : vector<8x256xf32> to vector<1x8x256xf32>
      tpu.vector_store %arg12[%127, %c0_89, %c0_90], %130 {strides = array<i32>} : memref<16x8x256xf32, #tpu.memory_space<vmem>>, vector<1x8x256xf32>,
      scf.yield %126, %124 : vector<8x256xf32>, vector<8x256xf32>
    }
    %c16_i32_48 = arith.constant 16 : i32
    %c0_49 = arith.constant 0 : index
    %c0_50 = arith.constant 0 : index
    %c0_51 = arith.constant 0 : index
    %47 = vector.load %arg12[%c0_49, %c0_50, %c0_51] : memref<16x8x256xf32, #tpu.memory_space<vmem>>, vector<16x8x256xf32>
    %48 = vector.shape_cast %47 : vector<16x8x256xf32> to vector<128x256xf32>
    %49 = arith.truncf %48 : vector<128x256xf32> to vector<128x256xbf16>
    %c0_52 = arith.constant 0 : index
    %c0_53 = arith.constant 0 : index
    %50 = vector.load %arg6[%c0_52, %c0_53] : memref<256x256xbf16, #tpu.memory_space<vmem>>, vector<256x256xbf16>
    %cst_54 = arith.constant dense<0.000000e+00> : vector<128x256xf32>
    %51 = tpu.matmul %49, %50, %cst_54 {dimension_numbers = #tpu.dot_dimension_numbers<[1], [0], [0], [1], [0, 0, 1, 1], [], []>} : vector<128x256xbf16>, vector<256x256xbf16>, vector<128x256xf32> -> vector<128x256xf32>
    %c0_55 = arith.constant 0 : index
    %c0_56 = arith.constant 0 : index
    %52 = vector.load %arg7[%c0_55, %c0_56] : memref<1x256xf32, #tpu.memory_space<vmem>>, vector<1x256xf32>
    %53 = vector.broadcast %52 : vector<1x256xf32> to vector<128x256xf32>
    %54 = arith.addf %51, %53 : vector<128x256xf32>
    %55 = math.tanh %54 : vector<128x256xf32>
    %56 = vector.shape_cast %55 : vector<128x256xf32> to vector<16x8x256xf32>
    %c0_57 = arith.constant 0 : index
    %c0_58 = arith.constant 0 : index
    %c0_59 = arith.constant 0 : index
    %57 = vector.load %arg13[%c0_57, %c0_58, %c0_59] : memref<16x8x256xf32, #tpu.memory_space<vmem>>, vector<16x8x256xf32>
    tpu.vector_store %arg13[%c0_57, %c0_58, %c0_59], %56 {strides = array<i32>} : memref<16x8x256xf32, #tpu.memory_space<vmem>>, vector<16x8x256xf32>,
    %c0_60 = arith.constant 0 : index
    %c0_61 = arith.constant 0 : index
    %c0_62 = arith.constant 0 : index
    %58 = vector.load %arg13[%c0_60, %c0_61, %c0_62] : memref<16x8x256xf32, #tpu.memory_space<vmem>>, vector<16x8x256xf32>
    %c0_63 = arith.constant 0 : index
    %c0_64 = arith.constant 0 : index
    %59 = vector.load %arg8[%c0_63, %c0_64] : memref<1x256xf32, #tpu.memory_space<vmem>>, vector<1x256xf32>
    %60 = vector.shape_cast %59 : vector<1x256xf32> to vector<1x1x256xf32>
    %61 = vector.broadcast %60 : vector<1x1x256xf32> to vector<16x8x256xf32>
    %62 = arith.mulf %58, %61 : vector<16x8x256xf32>
    %cst_65 = arith.constant dense<0.000000e+00> : vector<16x8xf32>
    %63 = vector.multi_reduction <add>, %62, %cst_65 [2] : vector<16x8x256xf32> to vector<16x8xf32>
    %64 = vector.shape_cast %63 : vector<16x8xf32> to vector<16x8x1xf32>
    %c0_66 = arith.constant 0 : index
    %c0_67 = arith.constant 0 : index
    %65 = vector.load %arg9[%c0_66, %c0_67] : memref<1x1xf32, #tpu.memory_space<vmem>>, vector<1x1xf32>
    %66 = vector.shape_cast %65 : vector<1x1xf32> to vector<1x1x1xf32>
    %67 = vector.broadcast %66 : vector<1x1x1xf32> to vector<16x8x1xf32>
    %68 = arith.addf %64, %67 : vector<16x8x1xf32>
    %cst_68 = arith.constant dense<0xFF800000> : vector<8x1xf32>
    %69 = vector.multi_reduction <maximumf>, %68, %cst_68 [0] : vector<16x8x1xf32> to vector<8x1xf32>
    %70 = vector.shape_cast %69 : vector<8x1xf32> to vector<1x8x1xf32>
    %71 = vector.broadcast %70 : vector<1x8x1xf32> to vector<16x8x1xf32>
    %72 = arith.subf %68, %71 : vector<16x8x1xf32>
    %73 = math.exp %72 : vector<16x8x1xf32>
    %cst_69 = arith.constant dense<0.000000e+00> : vector<8x1xf32>
    %74 = vector.multi_reduction <add>, %73, %cst_69 [0] : vector<16x8x1xf32> to vector<8x1xf32>
    %75 = vector.shape_cast %74 : vector<8x1xf32> to vector<1x8x1xf32>
    %76 = vector.broadcast %75 : vector<1x8x1xf32> to vector<16x8x1xf32>
    %77 = arith.divf %73, %76 : vector<16x8x1xf32>
    %78 = vector.broadcast %77 : vector<16x8x1xf32> to vector<16x8x256xf32>
    %79 = arith.mulf %58, %78 : vector<16x8x256xf32>
    %cst_70 = arith.constant dense<0.000000e+00> : vector<8x256xf32>
    %80 = vector.multi_reduction <add>, %79, %cst_70 [0] : vector<16x8x256xf32> to vector<8x256xf32>
    %81 = arith.mulf %80, %80 : vector<8x256xf32>
    %cst_71 = arith.constant dense<0.000000e+00> : vector<8xf32>
    %82 = vector.multi_reduction <add>, %81, %cst_71 [1] : vector<8x256xf32> to vector<8xf32>
    %83 = vector.shape_cast %82 : vector<8xf32> to vector<8x1xf32>
    %84 = math.sqrt %83 : vector<8x1xf32>
    %85 = vector.broadcast %84 : vector<8x1xf32> to vector<8x256xf32>
    %86 = arith.divf %80, %85 : vector<8x256xf32>
    %c0_72 = arith.constant 0 : index
    %c0_73 = arith.constant 0 : index
    %87 = vector.load %arg10[%c0_72, %c0_73] : memref<8x256xf32, #tpu.memory_space<vmem>>, vector<8x256xf32>
    tpu.vector_store %arg10[%c0_72, %c0_73], %86 {strides = array<i32>} : memref<8x256xf32, #tpu.memory_space<vmem>>, vector<8x256xf32>,
    return
  }
  func.func @transform_0(%arg0: i32) -> (i32, i32, i32) {
    %c0_i32 = arith.constant 0 : i32
    %c0_i32_0 = arith.constant 0 : i32
    %c0_i32_1 = arith.constant 0 : i32
    return %c0_i32, %arg0, %c0_i32_0 : i32, i32, i32
  }
  func.func @transform_1(%arg0: i32) -> (i32, i32) {
    %c0_i32 = arith.constant 0 : i32
    %c0_i32_0 = arith.constant 0 : i32
    %c0_i32_1 = arith.constant 0 : i32
    return %c0_i32, %c0_i32_0 : i32, i32
  }
  func.func @transform_2(%arg0: i32) -> (i32, i32, i32) {
    %c0_i32 = arith.constant 0 : i32
    %c0_i32_0 = arith.constant 0 : i32
    %c0_i32_1 = arith.constant 0 : i32
    %c0_i32_2 = arith.constant 0 : i32
    return %c0_i32, %c0_i32_0, %c0_i32_1 : i32, i32, i32
  }
  func.func @transform_3(%arg0: i32) -> (i32, i32, i32) {
    %c0_i32 = arith.constant 0 : i32
    %c0_i32_0 = arith.constant 0 : i32
    %c0_i32_1 = arith.constant 0 : i32
    %c0_i32_2 = arith.constant 0 : i32
    return %c0_i32, %c0_i32_0, %c0_i32_1 : i32, i32, i32
  }
  func.func @transform_4(%arg0: i32) -> (i32, i32, i32) {
    %c0_i32 = arith.constant 0 : i32
    %c0_i32_0 = arith.constant 0 : i32
    %c0_i32_1 = arith.constant 0 : i32
    %c0_i32_2 = arith.constant 0 : i32
    return %c0_i32, %c0_i32_0, %c0_i32_1 : i32, i32, i32
  }
  func.func @transform_5(%arg0: i32) -> (i32, i32) {
    %c0_i32 = arith.constant 0 : i32
    %c0_i32_0 = arith.constant 0 : i32
    %c0_i32_1 = arith.constant 0 : i32
    return %c0_i32, %c0_i32_0 : i32, i32
  }
  func.func @transform_6(%arg0: i32) -> (i32, i32) {
    %c0_i32 = arith.constant 0 : i32
    %c0_i32_0 = arith.constant 0 : i32
    %c0_i32_1 = arith.constant 0 : i32
    return %c0_i32, %c0_i32_0 : i32, i32
  }
  func.func @transform_7(%arg0: i32) -> (i32, i32) {
    %c0_i32 = arith.constant 0 : i32
    %c0_i32_0 = arith.constant 0 : i32
    %c0_i32_1 = arith.constant 0 : i32
    return %c0_i32, %c0_i32_0 : i32, i32
  }
  func.func @transform_8(%arg0: i32) -> (i32, i32) {
    %c0_i32 = arith.constant 0 : i32
    %c0_i32_0 = arith.constant 0 : i32
    %c0_i32_1 = arith.constant 0 : i32
    return %c0_i32, %c0_i32_0 : i32, i32
  }
  func.func @transform_9(%arg0: i32) -> (i32, i32) {
    %c0_i32 = arith.constant 0 : i32
    %c0_i32_0 = arith.constant 0 : i32
    return %arg0, %c0_i32 : i32, i32
  }
}

</mosaic_0001>

<llo_original>
// kernel: tpu_custom_call.1
$region0: #{tpu_custom_call.1}
  #allocation0 [shape = 'u32[]', space=smem, size = 0x4, offset = 0x4, fixed_abs, tag = 'smem constant byte address 0x4 - core index']
  #allocation1 [shape = 'u32[144,128]{1,0:T(1,128)}', space=vmem, size = 0x12000, scoped, tag = 'internal scratch']
  #allocation2 [shape = 'f32[16,8,1024]{2,1,0:T(8,128)}', space=vmem, size = 0x80000, scoped, tag = 'scratch operand']
  #allocation3 [shape = 'f32[16,8,256]{2,1,0:T(8,128)}', space=vmem, size = 0x20000, scoped, tag = 'scratch operand']
  #allocation4 [shape = 'f32[16,8,256]{2,1,0:T(8,128)}', space=vmem, size = 0x20000, scoped, tag = 'scratch operand']
  #allocation5 [shape = 'f32[1,1]{1,0:T(1,128)S(1)}', space=vmem, size = 0x200, scoped, tag = 'scoped memory for tpu_custom_call.1']
  %s0 = inlined_call_operand.hbm [shape: f32[16,8,40], index: 0, kind: input, shape index: {}]
  %s1 = inlined_call_operand.hbm [shape: bf16[40,1024], index: 1, kind: input, shape index: {}]
  %s2 = inlined_call_operand.hbm [shape: bf16[2,256,1024], index: 2, kind: input, shape index: {}]
  %s3 = inlined_call_operand.hbm [shape: bf16[3,256,1024], index: 3, kind: input, shape index: {}]
  %s4 = inlined_call_operand.hbm [shape: f32[3,1,1024], index: 4, kind: input, shape index: {}]
  %s5 = inlined_call_operand.hbm [shape: bf16[256,256], index: 5, kind: input, shape index: {}]
  %s6 = inlined_call_operand.hbm [shape: f32[1,256], index: 6, kind: input, shape index: {}]
  %s7 = inlined_call_operand.hbm [shape: f32[1,256], index: 7, kind: input, shape index: {}]
  %s8 = inlined_call_operand.<no memory space> [shape: f32[1,1], index: 8, kind: input, shape index: {}]
  %s9 = inlined_call_operand.hbm [shape: f32[8,256], index: 9, kind: output, shape index: {}]
  %s10 = sld [smem:[#allocation0]]
  $region99: #{tpu_custom_call.1} parent=0
    _
  %s12 = ssub.s32 1, %s10
  %s13 = scalar_select 0, %s12, %s10
  %v14 = vstv %s8
  %15 = vst [vmem:[#allocation5] sm:$0x1] %v14
  $region1: #{tpu_custom_call.1} parent=0
    #allocation6 [shape = 'u8[65536]{0}', space=vmem, size = 0x10000, scoped, tag = 'input window, operand 0, single buffered']
    #allocation7 [shape = 's32[1]{0}', space=sflag, size = 0x4, scoped, tag = 'scoped memory for tpu_custom_call.1']
    #allocation8 [shape = 's32[1]{0}', space=sflag, size = 0x4, scoped, tag = 'scoped memory for tpu_custom_call.1']
    #allocation9 [shape = 'u8[81920]{0}', space=vmem, size = 0x14000, scoped, tag = 'input window, operand 1, single buffered']
    #allocation10 [shape = 's32[1]{0}', space=sflag, size = 0x4, scoped, tag = 'scoped memory for tpu_custom_call.1']
    #allocation11 [shape = 'u8[1048576]{0}', space=vmem, size = 0x100000, scoped, tag = 'input window, operand 2, single buffered']
    #allocation12 [shape = 'u8[1572864]{0}', space=vmem, size = 0x180000, scoped, tag = 'input window, operand 3, single buffered']
    #allocation13 [shape = 's32[1]{0}', space=sflag, size = 0x4, scoped, tag = 'scoped memory for tpu_custom_call.1']
    #allocation14 [shape = 'u8[12288]{0}', space=vmem, size = 0x3000, scoped, tag = 'input window, operand 4, single buffered']
    #allocation15 [shape = 'u8[131072]{0}', space=vmem, size = 0x20000, scoped, tag = 'input window, operand 5, single buffered']
    #allocation16 [shape = 's32[1]{0}', space=sflag, size = 0x4, scoped, tag = 'scoped memory for tpu_custom_call.1']
    #allocation17 [shape = 'u8[1024]{0}', space=vmem, size = 0x400, scoped, tag = 'input window, operand 6, single buffered']
    #allocation18 [shape = 'u8[1024]{0}', space=vmem, size = 0x400, scoped, tag = 'input window, operand 7, single buffered']
    #allocation19 [shape = 's32[1]{0}', space=sflag, size = 0x4, scoped, tag = 'scoped memory for tpu_custom_call.1']
    #allocation20 [shape = 'u8[8192]{0}', space=vmem, size = 0x2000, scoped, tag = 'output window, operand 0, single buffered']
    %16 = vsyncpa [#allocation7], 0
    %17 = vsyncpa [#allocation10], 0
    %18 = vsyncpa [#allocation13], 0
    %19 = vsyncpa [#allocation16], 0
    %20 = vsyncpa [#allocation19], 0
    %21 = vsyncpa [#allocation8], 0
    // Predicated region
    $region2: #{tpu_custom_call.1} parent=1 // pred_check
      _
    $region3: #{tpu_custom_call.1} parent=1 // pred_check_branch
      %23 = sbr.rel (0) target = $region5
    $region4: #{tpu_custom_call.1} parent=1 // pred_region
      %s25 = ssub.s32 2048, 2048
      %26 = vsyncadd [#allocation7], %s25
      %s27 = sshll.u32 [#allocation6], 4
      %s28 = int_to_ptr.vmem [resolvable:$true] %s27
      %33 = dma.hbm_to_vmem [thread:$0]  %s0, 2048, %s28, [#allocation7], 128, 128, 8
    $region5: #{tpu_custom_call.1} parent=1 // pred_fallthru
      _
    // Predicated region
    $region6: #{tpu_custom_call.1} parent=1 // pred_check
      _
    $region7: #{tpu_custom_call.1} parent=1 // pred_check_branch
      %35 = sbr.rel (0) target = $region9
    $region8: #{tpu_custom_call.1} parent=1 // pred_region
      %s37 = ssub.s32 2560, 2560
      %38 = vsyncadd [#allocation10], %s37
      %s39 = sshll.u32 [#allocation9], 4
      %s40 = int_to_ptr.vmem [resolvable:$true] %s39
      %45 = dma.hbm_to_vmem [thread:$0]  %s1, 2560, %s40, [#allocation10], 512, 512, 32
    $region9: #{tpu_custom_call.1} parent=1 // pred_fallthru
      _
    // Predicated region
    $region10: #{tpu_custom_call.1} parent=1 // pred_check
      _
    $region11: #{tpu_custom_call.1} parent=1 // pred_check_branch
      %47 = sbr.rel (0) target = $region13
    $region12: #{tpu_custom_call.1} parent=1 // pred_region
      %s49 = ssub.s32 32768, 32768
      %50 = vsyncadd [#allocation10], %s49
      %s51 = sshll.u32 [#allocation11], 4
      %s52 = int_to_ptr.vmem [resolvable:$true] %s51
      %57 = dma.hbm_to_vmem [thread:$0]  %s2, 32768, %s52, [#allocation10], 512, 512, 32
    $region13: #{tpu_custom_call.1} parent=1 // pred_fallthru
      _
    // Predicated region
    $region14: #{tpu_custom_call.1} parent=1 // pred_check
      _
    $region15: #{tpu_custom_call.1} parent=1 // pred_check_branch
      %59 = sbr.rel (0) target = $region17
    $region16: #{tpu_custom_call.1} parent=1 // pred_region
      %s61 = ssub.s32 49152, 49152
      %62 = vsyncadd [#allocation13], %s61
      %s63 = sshll.u32 [#allocation12], 4
      %s64 = int_to_ptr.vmem [resolvable:$true] %s63
      %69 = dma.hbm_to_vmem [thread:$0]  %s3, 49152, %s64, [#allocation13], 512, 512, 32
    $region17: #{tpu_custom_call.1} parent=1 // pred_fallthru
      _
    // Predicated region
    $region18: #{tpu_custom_call.1} parent=1 // pred_check
      _
    $region19: #{tpu_custom_call.1} parent=1 // pred_check_branch
      %71 = sbr.rel (0) target = $region21
    $region20: #{tpu_custom_call.1} parent=1 // pred_region
      %s73 = ssub.s32 384, 384
      %74 = vsyncadd [#allocation13], %s73
      %s75 = sshll.u32 [#allocation14], 4
      %s76 = int_to_ptr.vmem [resolvable:$true] %s75
      %81 = dma.hbm_to_vmem [thread:$0]  %s4, 384, %s76, [#allocation13], 128, 128, 8
    $region21: #{tpu_custom_call.1} parent=1 // pred_fallthru
      _
    // Predicated region
    $region22: #{tpu_custom_call.1} parent=1 // pred_check
      _
    $region23: #{tpu_custom_call.1} parent=1 // pred_check_branch
      %83 = sbr.rel (0) target = $region25
    $region24: #{tpu_custom_call.1} parent=1 // pred_region
      %s85 = ssub.s32 4096, 4096
      %86 = vsyncadd [#allocation16], %s85
      %s87 = sshll.u32 [#allocation15], 4
      %s88 = int_to_ptr.vmem [resolvable:$true] %s87
      %93 = dma.hbm_to_vmem [thread:$0]  %s5, 4096, %s88, [#allocation16], 128, 128, 8
    $region25: #{tpu_custom_call.1} parent=1 // pred_fallthru
      _
    // Predicated region
    $region26: #{tpu_custom_call.1} parent=1 // pred_check
      _
    $region27: #{tpu_custom_call.1} parent=1 // pred_check_branch
      %95 = sbr.rel (0) target = $region29
    $region28: #{tpu_custom_call.1} parent=1 // pred_region
      %s97 = ssub.s32 32, 32
      %98 = vsyncadd [#allocation16], %s97
      %s100 = sshll.u32 [#allocation17], 4
      %s101 = int_to_ptr.vmem [resolvable:$true] %s100
      %103 = dma.hbm_to_vmem [thread:$0]  %s6, 32, %s101, [#allocation16]
    $region29: #{tpu_custom_call.1} parent=1 // pred_fallthru
      _
    // Predicated region
    $region30: #{tpu_custom_call.1} parent=1 // pred_check
      _
    $region31: #{tpu_custom_call.1} parent=1 // pred_check_branch
      %105 = sbr.rel (0) target = $region33
    $region32: #{tpu_custom_call.1} parent=1 // pred_region
      %s107 = ssub.s32 32, 32
      %108 = vsyncadd [#allocation19], %s107
      %s110 = sshll.u32 [#allocation18], 4
      %s111 = int_to_ptr.vmem [resolvable:$true] %s110
      %113 = dma.hbm_to_vmem [thread:$0]  %s7, 32, %s111, [#allocation19]
    $region33: #{tpu_custom_call.1} parent=1 // pred_fallthru
      _
    // Predicated region
    $region34: #{tpu_custom_call.1} parent=1 // pred_check
      _
    $region35: #{tpu_custom_call.1} parent=1 // pred_check_branch
      %115 = sbr.rel (0) target = $region37
    $region36: #{tpu_custom_call.1} parent=1 // pred_region
      _
    $region37: #{tpu_custom_call.1} parent=1 // pred_fallthru
      _
    // Predicated region
    $region38: #{tpu_custom_call.1} parent=1 // pred_check
      _
    $region39: #{tpu_custom_call.1} parent=1 // pred_check_branch
      %117 = sbr.rel (0) target = $region41
    $region40: #{tpu_custom_call.1} parent=1 // pred_region
      %118 = dma.done [#allocation7], 2048
    $region41: #{tpu_custom_call.1} parent=1 // pred_fallthru
      _
    // Predicated region
    $region42: #{tpu_custom_call.1} parent=1 // pred_check
      _
    $region43: #{tpu_custom_call.1} parent=1 // pred_check_branch
      %120 = sbr.rel (0) target = $region45
    $region44: #{tpu_custom_call.1} parent=1 // pred_region
      %121 = dma.done [#allocation10], 2560
    $region45: #{tpu_custom_call.1} parent=1 // pred_fallthru
      _
    // Predicated region
    $region46: #{tpu_custom_call.1} parent=1 // pred_check
      _
    $region47: #{tpu_custom_call.1} parent=1 // pred_check_branch
      %123 = sbr.rel (0) target = $region49
    $region48: #{tpu_custom_call.1} parent=1 // pred_region
      %124 = dma.done [#allocation10], 32768
    $region49: #{tpu_custom_call.1} parent=1 // pred_fallthru
      _
    // Predicated region
    $region50: #{tpu_custom_call.1} parent=1 // pred_check
      _
    $region51: #{tpu_custom_call.1} parent=1 // pred_check_branch
      %126 = sbr.rel (0) target = $region53
    $region52: #{tpu_custom_call.1} parent=1 // pred_region
      %127 = dma.done [#allocation13], 49152
    $region53: #{tpu_custom_call.1} parent=1 // pred_fallthru
      _
    // Predicated region
    $region54: #{tpu_custom_call.1} parent=1 // pred_check
      _
    $region55: #{tpu_custom_call.1} parent=1 // pred_check_branch
      %129 = sbr.rel (0) target = $region57
    $region56: #{tpu_custom_call.1} parent=1 // pred_region
      %130 = dma.done [#allocation13], 384
    $region57: #{tpu_custom_call.1} parent=1 // pred_fallthru
      _
    // Predicated region
    $region58: #{tpu_custom_call.1} parent=1 // pred_check
      _
    $region59: #{tpu_custom_call.1} parent=1 // pred_check_branch
      %132 = sbr.rel (0) target = $region61
    $region60: #{tpu_custom_call.1} parent=1 // pred_region
      %133 = dma.done [#allocation16], 4096
    $region61: #{tpu_custom_call.1} parent=1 // pred_fallthru
      _
    // Predicated region
    $region62: #{tpu_custom_call.1} parent=1 // pred_check
      _
    $region63: #{tpu_custom_call.1} parent=1 // pred_check_branch
      %135 = sbr.rel (0) target = $region65
    $region64: #{tpu_custom_call.1} parent=1 // pred_region
      %136 = dma.done [#allocation16], 32
    $region65: #{tpu_custom_call.1} parent=1 // pred_fallthru
      _
    // Predicated region
    $region66: #{tpu_custom_call.1} parent=1 // pred_check
      _
    $region67: #{tpu_custom_call.1} parent=1 // pred_check_branch
      %138 = sbr.rel (0) target = $region69
    $region68: #{tpu_custom_call.1} parent=1 // pred_region
      %139 = dma.done [#allocation19], 32
    $region69: #{tpu_custom_call.1} parent=1 // pred_fallthru
      _
    %v141 = vld [vmem:[#allocation14] sm:$0xff]
    %v142 = vld [vmem:[#allocation6] sm:$0xff]
    %v143 = vld [vmem:[#allocation6 + $0x8] sm:$0xff]
    %v144 = vld [vmem:[#allocation6 + $0x10] sm:$0xff]
    %v145 = vld [vmem:[#allocation6 + $0x18] sm:$0xff]
    %v146 = vld [vmem:[#allocation6 + $0x20] sm:$0xff]
    %v147 = vld [vmem:[#allocation6 + $0x28] sm:$0xff]
    %v148 = vld [vmem:[#allocation6 + $0x30] sm:$0xff]
    %v149 = vld [vmem:[#allocation6 + $0x38] sm:$0xff]
    %v150 = vld [vmem:[#allocation6 + $0x40] sm:$0xff]
    %v151 = vld [vmem:[#allocation6 + $0x48] sm:$0xff]
    %v152 = vld [vmem:[#allocation6 + $0x50] sm:$0xff]
    %v153 = vld [vmem:[#allocation6 + $0x58] sm:$0xff]
    %v154 = vld [vmem:[#allocation6 + $0x60] sm:$0xff]
    %v155 = vld [vmem:[#allocation6 + $0x68] sm:$0xff]
    %v156 = vld [vmem:[#allocation6 + $0x70] sm:$0xff]
    %v157 = vld [vmem:[#allocation6 + $0x78] sm:$0xff]
    %v158 = vpack.c.bf16 %v143, %v142
    %v159 = vpack.c.bf16 %v145, %v144
    %v160 = vpack.c.bf16 %v147, %v146
    %v161 = vpack.c.bf16 %v149, %v148
    %v162 = vpack.c.bf16 %v151, %v150
    %v163 = vpack.c.bf16 %v153, %v152
    %v164 = vpack.c.bf16 %v155, %v154
    %v165 = vpack.c.bf16 %v157, %v156
    %v166 = vld [vmem:[#allocation9] sm:$0xff]
    %v167 = vld [vmem:[#allocation9 + $0x8] sm:$0xff]
    %v168 = vld [vmem:[#allocation9 + $0x10] sm:$0xff]
    %v169 = vld [vmem:[#allocation9 + $0x18] sm:$0xff]
    %v170 = vld [vmem:[#allocation9 + $0x20] sm:$0xff]
    %v171 = vld [vmem:[#allocation9 + $0x28] sm:$0xff]
    %v172 = vld [vmem:[#allocation9 + $0x30] sm:$0xff]
    %v173 = vld [vmem:[#allocation9 + $0x38] sm:$0xff]
    %v174 = vld [vmem:[#allocation9 + $0x40] sm:$0xff]
    %v175 = vld [vmem:[#allocation9 + $0x48] sm:$0xff]
    %v176 = vld [vmem:[#allocation9 + $0x50] sm:$0xff]
    %v177 = vld [vmem:[#allocation9 + $0x58] sm:$0xff]
    %v178 = vld [vmem:[#allocation9 + $0x60] sm:$0xff]
    %v179 = vld [vmem:[#allocation9 + $0x68] sm:$0xff]
    %v180 = vld [vmem:[#allocation9 + $0x70] sm:$0xff]
    %v181 = vld [vmem:[#allocation9 + $0x78] sm:$0xff]
    %v182 = vld [vmem:[#allocation9 + $0x80] sm:$0xff]
    %v183 = vld [vmem:[#allocation9 + $0x88] sm:$0xff]
    %v184 = vld [vmem:[#allocation9 + $0x90] sm:$0xff]
    %v185 = vld [vmem:[#allocation9 + $0x98] sm:$0xff]
    %v187 = vlaneseq
    %v188 = vshrl.u32 %v187, 7
    %v189 = vsub.s32 0, %v188
    %v190 = vrot.slane %v141, %v189
    %v191 = vlaneseq
    %v192 = vshrl.u32 %v191, 7
    %v193 = vsub.s32 1, %v192
    %v194 = vrot.slane %v141, %v193
    %v195 = vlaneseq
    %v196 = vshrl.u32 %v195, 7
    %v197 = vsub.s32 2, %v196
    %v198 = vrot.slane %v141, %v197
    %v199 = vlaneseq
    %v200 = vshrl.u32 %v199, 7
    %v201 = vsub.s32 3, %v200
    %v202 = vrot.slane %v141, %v201
    %v203 = vlaneseq
    %v204 = vshrl.u32 %v203, 7
    %v205 = vsub.s32 4, %v204
    %v206 = vrot.slane %v141, %v205
    %v207 = vlaneseq
    %v208 = vshrl.u32 %v207, 7
    %v209 = vsub.s32 5, %v208
    %v210 = vrot.slane %v141, %v209
    %v211 = vlaneseq
    %v212 = vshrl.u32 %v211, 7
    %v213 = vsub.s32 6, %v212
    %v214 = vrot.slane %v141, %v213
    %v215 = vlaneseq
    %v216 = vshrl.u32 %v215, 7
    %v217 = vsub.s32 7, %v216
    %v218 = vrot.slane %v141, %v217
    %v247 = vunpack.c.l.b16 %v166
    %v248 = vunpack.c.h.b16 %v166
    %v249 = vunpack.c.l.b16 %v167
    %v250 = vunpack.c.h.b16 %v167
    %v251 = vunpack.c.l.b16 %v168
    %v252 = vunpack.c.h.b16 %v168
    %v253 = vunpack.c.l.b16 %v169
    %v254 = vunpack.c.h.b16 %v169
    %v255 = vunpack.c.l.b16 %v170
    %v256 = vunpack.c.h.b16 %v170
    %v257 = vunpack.c.l.b16 %v171
    %v258 = vunpack.c.h.b16 %v171
    %v259 = vunpack.c.l.b16 %v172
    %v260 = vunpack.c.h.b16 %v172
    %v261 = vunpack.c.l.b16 %v173
    %v262 = vunpack.c.h.b16 %v173
    %v263 = vunpack.c.l.b16 %v174
    %v264 = vunpack.c.h.b16 %v174
    %v265 = vunpack.c.l.b16 %v175
    %v266 = vunpack.c.h.b16 %v175
    %v267 = vunpack.c.l.b16 %v176
    %v268 = vunpack.c.h.b16 %v176
    %v269 = vunpack.c.l.b16 %v177
    %v270 = vunpack.c.h.b16 %v177
    %v271 = vunpack.c.l.b16 %v178
    %v272 = vunpack.c.h.b16 %v178
    %v273 = vunpack.c.l.b16 %v179
    %v274 = vunpack.c.h.b16 %v179
    %v275 = vunpack.c.l.b16 %v180
    %v276 = vunpack.c.h.b16 %v180
    %v277 = vunpack.c.l.b16 %v181
    %v278 = vunpack.c.h.b16 %v181
    %v279 = vunpack.c.l.b16 %v182
    %v280 = vunpack.c.h.b16 %v182
    %v281 = vunpack.c.l.b16 %v183
    %v282 = vunpack.c.h.b16 %v183
    %v283 = vunpack.c.l.b16 %v184
    %v284 = vunpack.c.h.b16 %v184
    %v285 = vunpack.c.l.b16 %v185
    %v286 = vunpack.c.h.b16 %v185
    %v287 = vpack.c.b16 %v255, %v247
    %v288 = vpack.c.b16 %v256, %v248
    %v289 = vpack.c.b16 %v257, %v249
    %v290 = vpack.c.b16 %v258, %v250
    %v291 = vpack.c.b16 %v259, %v251
    %v292 = vpack.c.b16 %v260, %v252
    %v293 = vpack.c.b16 %v261, %v253
    %v294 = vpack.c.b16 %v262, %v254
    %v295 = vpack.c.b16 %v271, %v263
    %v296 = vpack.c.b16 %v272, %v264
    %v297 = vpack.c.b16 %v273, %v265
    %v298 = vpack.c.b16 %v274, %v266
    %v299 = vpack.c.b16 %v275, %v267
    %v300 = vpack.c.b16 %v276, %v268
    %v301 = vpack.c.b16 %v277, %v269
    %v302 = vpack.c.b16 %v278, %v270
    %v303 = vpack.c.b16 %v279, %v279
    %v304 = vpack.c.b16 %v280, %v280
    %v305 = vpack.c.b16 %v281, %v281
    %v306 = vpack.c.b16 %v282, %v282
    %v307 = vpack.c.b16 %v283, %v283
    %v308 = vpack.c.b16 %v284, %v284
    %v309 = vpack.c.b16 %v285, %v285
    %v310 = vpack.c.b16 %v286, %v286
    %vm327 = vcmask 326656
    %v329 = vsel %vm327, %v158, 0
    %v332 = vsel %vm327, %v159, 0
    %v335 = vsel %vm327, %v160, 0
    %v338 = vsel %vm327, %v161, 0
    %v341 = vsel %vm327, %v162, 0
    %v344 = vsel %vm327, %v163, 0
    %v347 = vsel %vm327, %v164, 0
    %v350 = vsel %vm327, %v165, 0
    %vm352 = vcmask 1043456
    %v354 = vsel %vm352, %v303, 0
    %v357 = vsel %vm352, %v304, 0
    %v360 = vsel %vm352, %v305, 0
    %v363 = vsel %vm352, %v306, 0
    %v366 = vsel %vm352, %v307, 0
    %v369 = vsel %vm352, %v308, 0
    %v372 = vsel %vm352, %v309, 0
    %v375 = vsel %vm352, %v310, 0
    %377 = vmatprep.subr.bf16.mxu0 %v288
    %378 = vmatpush1.bf16.msra.mxu0 %v287
    %379 = vmatprep.subr.bf16.mxu0 %v296
    %380 = vmatpush1.bf16.msra.mxu0 %v295
    %381 = vmatprep.subr.bf16.mxu0 %v357
    %382 = vmatpush1.bf16.msra.mxu0 %v354
    %383 = vmatprep.subr.bf16.mxu0 0
    %384 = vmatpush1.bf16.msra.mxu0 0
    %385 = vmatprep.subr.bf16.mxu0 0
    %386 = vmatpush1.bf16.msra.mxu0 0
    %387 = vmatprep.subr.bf16.mxu0 0
    %388 = vmatpush1.bf16.msra.mxu0 0
    %389 = vmatprep.subr.bf16.mxu0 0
    %390 = vmatpush1.bf16.msra.mxu0 0
    %391 = vmatprep.subr.bf16.mxu0 0
    %392 = vmatpush1.bf16.msra.mxu0 0
    %393 = vmatprep.subr.bf16.mxu0 0
    %394 = vmatpush1.bf16.msra.mxu0 0
    %395 = vmatprep.subr.bf16.mxu0 0
    %396 = vmatpush1.bf16.msra.mxu0 0
    %397 = vmatprep.subr.bf16.mxu0 0
    %398 = vmatpush1.bf16.msra.mxu0 0
    %399 = vmatprep.subr.bf16.mxu0 0
    %400 = vmatpush1.bf16.msra.mxu0 0
    %401 = vmatprep.subr.bf16.mxu0 0
    %402 = vmatpush1.bf16.msra.mxu0 0
    %403 = vmatprep.subr.bf16.mxu0 0
    %404 = vmatpush1.bf16.msra.mxu0 0
    %405 = vmatprep.subr.bf16.mxu0 0
    %406 = vmatpush1.bf16.msra.mxu0 0
    %407 = vmatprep.subr.bf16.mxu0 0
    %408 = vmatpush1.bf16.msra.mxu0 0
    %409 = vmatprep.mubr.bf16.mxu0 0
    %410 = vmatmul.mubr.bf16.gmra.mrb[0].mxu0 %v329
    %v411 = vpop.f32.mrb[0].mxu0
    %v412 = vadd.f32 %v190, %v411
    %v413 = vpop.f32.mrb[0].mxu0
    %v414 = vadd.f32 %v194, %v413
    %v415 = vpop.f32.mrb[0].mxu0
    %v416 = vadd.f32 %v190, %v415
    %v417 = vpop.f32.mrb[0].mxu0
    %v418 = vadd.f32 %v194, %v417
    %419 = vmatprep.mubr.bf16.mxu0 0
    %420 = vmatmul.mubr.bf16.gmra.mrb[0].mxu0 %v332
    %v421 = vpop.f32.mrb[0].mxu0
    %v422 = vadd.f32 %v190, %v421
    %v423 = vpop.f32.mrb[0].mxu0
    %v424 = vadd.f32 %v194, %v423
    %v425 = vpop.f32.mrb[0].mxu0
    %v426 = vadd.f32 %v190, %v425
    %v427 = vpop.f32.mrb[0].mxu0
    %v428 = vadd.f32 %v194, %v427
    %429 = vmatprep.mubr.bf16.mxu0 0
    %430 = vmatmul.mubr.bf16.gmra.mrb[0].mxu0 %v335
    %v431 = vpop.f32.mrb[0].mxu0
    %v432 = vadd.f32 %v190, %v431
    %v433 = vpop.f32.mrb[0].mxu0
    %v434 = vadd.f32 %v194, %v433
    %v435 = vpop.f32.mrb[0].mxu0
    %v436 = vadd.f32 %v190, %v435
    %v437 = vpop.f32.mrb[0].mxu0
    %v438 = vadd.f32 %v194, %v437
    %439 = vmatprep.mubr.bf16.mxu0 0
    %440 = vmatmul.mubr.bf16.gmra.mrb[0].mxu0 %v338
    %v441 = vpop.f32.mrb[0].mxu0
    %v442 = vadd.f32 %v190, %v441
    %v443 = vpop.f32.mrb[0].mxu0
    %v444 = vadd.f32 %v194, %v443
    %v445 = vpop.f32.mrb[0].mxu0
    %v446 = vadd.f32 %v190, %v445
    %v447 = vpop.f32.mrb[0].mxu0
    %v448 = vadd.f32 %v194, %v447
    %449 = vmatprep.mubr.bf16.mxu0 0
    %450 = vmatmul.mubr.bf16.gmra.mrb[0].mxu0 %v341
    %v451 = vpop.f32.mrb[0].mxu0
    %v452 = vadd.f32 %v190, %v451
    %v453 = vpop.f32.mrb[0].mxu0
    %v454 = vadd.f32 %v194, %v453
    %v455 = vpop.f32.mrb[0].mxu0
    %v456 = vadd.f32 %v190, %v455
    %v457 = vpop.f32.mrb[0].mxu0
    %v458 = vadd.f32 %v194, %v457
    %459 = vmatprep.mubr.bf16.mxu0 0
    %460 = vmatmul.mubr.bf16.gmra.mrb[0].mxu0 %v344
    %v461 = vpop.f32.mrb[0].mxu0
    %v462 = vadd.f32 %v190, %v461
    %v463 = vpop.f32.mrb[0].mxu0
    %v464 = vadd.f32 %v194, %v463
    %v465 = vpop.f32.mrb[0].mxu0
    %v466 = vadd.f32 %v190, %v465
    %v467 = vpop.f32.mrb[0].mxu0
    %v468 = vadd.f32 %v194, %v467
    %469 = vmatprep.mubr.bf16.mxu0 0
    %470 = vmatmul.mubr.bf16.gmra.mrb[0].mxu0 %v347
    %v471 = vpop.f32.mrb[0].mxu0
    %v472 = vadd.f32 %v190, %v471
    %v473 = vpop.f32.mrb[0].mxu0
    %v474 = vadd.f32 %v194, %v473
    %v475 = vpop.f32.mrb[0].mxu0
    %v476 = vadd.f32 %v190, %v475
    %v477 = vpop.f32.mrb[0].mxu0
    %v478 = vadd.f32 %v194, %v477
    %479 = vmatprep.mubr.bf16.mxu0 0
    %480 = vmatmul.mubr.bf16.gmra.mrb[0].mxu0 %v350
    %v481 = vpop.f32.mrb[0].mxu0
    %v482 = vadd.f32 %v190, %v481
    %v483 = vpop.f32.mrb[0].mxu0
    %v484 = vadd.f32 %v194, %v483
    %v485 = vpop.f32.mrb[0].mxu0
    %v486 = vadd.f32 %v190, %v485
    %v487 = vpop.f32.mrb[0].mxu0
    %v488 = vadd.f32 %v194, %v487
    %489 = vdwg.mxu0
    %490 = vmatprep.subr.bf16.mxu0 %v290
    %491 = vmatpush1.bf16.msra.mxu0 %v289
    %492 = vmatprep.subr.bf16.mxu0 %v298
    %493 = vmatpush1.bf16.msra.mxu0 %v297
    %494 = vmatprep.subr.bf16.mxu0 %v363
    %495 = vmatpush1.bf16.msra.mxu0 %v360
    %496 = vmatprep.subr.bf16.mxu0 0
    %497 = vmatpush1.bf16.msra.mxu0 0
    %498 = vmatprep.subr.bf16.mxu0 0
    %499 = vmatpush1.bf16.msra.mxu0 0
    %500 = vmatprep.subr.bf16.mxu0 0
    %501 = vmatpush1.bf16.msra.mxu0 0
    %502 = vmatprep.subr.bf16.mxu0 0
    %503 = vmatpush1.bf16.msra.mxu0 0
    %504 = vmatprep.subr.bf16.mxu0 0
    %505 = vmatpush1.bf16.msra.mxu0 0
    %506 = vmatprep.subr.bf16.mxu0 0
    %507 = vmatpush1.bf16.msra.mxu0 0
    %508 = vmatprep.subr.bf16.mxu0 0
    %509 = vmatpush1.bf16.msra.mxu0 0
    %510 = vmatprep.subr.bf16.mxu0 0
    %511 = vmatpush1.bf16.msra.mxu0 0
    %512 = vmatprep.subr.bf16.mxu0 0
    %513 = vmatpush1.bf16.msra.mxu0 0
    %514 = vmatprep.subr.bf16.mxu0 0
    %515 = vmatpush1.bf16.msra.mxu0 0
    %516 = vmatprep.subr.bf16.mxu0 0
    %517 = vmatpush1.bf16.msra.mxu0 0
    %518 = vmatprep.subr.bf16.mxu0 0
    %519 = vmatpush1.bf16.msra.mxu0 0
    %520 = vmatprep.subr.bf16.mxu0 0
    %521 = vmatpush1.bf16.msra.mxu0 0
    %522 = vmatprep.mubr.bf16.mxu0 0
    %523 = vmatmul.mubr.bf16.gmra.mrb[0].mxu0 %v329
    %v524 = vpop.f32.mrb[0].mxu0
    %v525 = vadd.f32 %v198, %v524
    %v526 = vpop.f32.mrb[0].mxu0
    %v527 = vadd.f32 %v202, %v526
    %v528 = vpop.f32.mrb[0].mxu0
    %v529 = vadd.f32 %v198, %v528
    %v530 = vpop.f32.mrb[0].mxu0
    %v531 = vadd.f32 %v202, %v530
    %532 = vmatprep.mubr.bf16.mxu0 0
    %533 = vmatmul.mubr.bf16.gmra.mrb[0].mxu0 %v332
    %v534 = vpop.f32.mrb[0].mxu0
    %v535 = vadd.f32 %v198, %v534
    %v536 = vpop.f32.mrb[0].mxu0
    %v537 = vadd.f32 %v202, %v536
    %v538 = vpop.f32.mrb[0].mxu0
    %v539 = vadd.f32 %v198, %v538
    %v540 = vpop.f32.mrb[0].mxu0
    %v541 = vadd.f32 %v202, %v540
    %542 = vmatprep.mubr.bf16.mxu0 0
    %543 = vmatmul.mubr.bf16.gmra.mrb[0].mxu0 %v335
    %v544 = vpop.f32.mrb[0].mxu0
    %v545 = vadd.f32 %v198, %v544
    %v546 = vpop.f32.mrb[0].mxu0
    %v547 = vadd.f32 %v202, %v546
    %v548 = vpop.f32.mrb[0].mxu0
    %v549 = vadd.f32 %v198, %v548
    %v550 = vpop.f32.mrb[0].mxu0
    %v551 = vadd.f32 %v202, %v550
    %552 = vmatprep.mubr.bf16.mxu0 0
    %553 = vmatmul.mubr.bf16.gmra.mrb[0].mxu0 %v338
    %v554 = vpop.f32.mrb[0].mxu0
    %v555 = vadd.f32 %v198, %v554
    %v556 = vpop.f32.mrb[0].mxu0
    %v557 = vadd.f32 %v202, %v556
    %v558 = vpop.f32.mrb[0].mxu0
    %v559 = vadd.f32 %v198, %v558
    %v560 = vpop.f32.mrb[0].mxu0
    %v561 = vadd.f32 %v202, %v560
    %562 = vmatprep.mubr.bf16.mxu0 0
    %563 = vmatmul.mubr.bf16.gmra.mrb[0].mxu0 %v341
    %v564 = vpop.f32.mrb[0].mxu0
    %v565 = vadd.f32 %v198, %v564
    %v566 = vpop.f32.mrb[0].mxu0
    %v567 = vadd.f32 %v202, %v566
    %v568 = vpop.f32.mrb[0].mxu0
    %v569 = vadd.f32 %v198, %v568
    %v570 = vpop.f32.mrb[0].mxu0
    %v571 = vadd.f32 %v202, %v570
    %572 = vmatprep.mubr.bf16.mxu0 0
    %573 = vmatmul.mubr.bf16.gmra.mrb[0].mxu0 %v344
    %v574 = vpop.f32.mrb[0].mxu0
    %v575 = vadd.f32 %v198, %v574
    %v576 = vpop.f32.mrb[0].mxu0
    %v577 = vadd.f32 %v202, %v576
    %v578 = vpop.f32.mrb[0].mxu0
    %v579 = vadd.f32 %v198, %v578
    %v580 = vpop.f32.mrb[0].mxu0
    %v581 = vadd.f32 %v202, %v580
    %582 = vmatprep.mubr.bf16.mxu0 0
    %583 = vmatmul.mubr.bf16.gmra.mrb[0].mxu0 %v347
    %v584 = vpop.f32.mrb[0].mxu0
    %v585 = vadd.f32 %v198, %v584
    %v586 = vpop.f32.mrb[0].mxu0
    %v587 = vadd.f32 %v202, %v586
    %v588 = vpop.f32.mrb[0].mxu0
    %v589 = vadd.f32 %v198, %v588
    %v590 = vpop.f32.mrb[0].mxu0
    %v591 = vadd.f32 %v202, %v590
    %592 = vmatprep.mubr.bf16.mxu0 0
    %593 = vmatmul.mubr.bf16.gmra.mrb[0].mxu0 %v350
    %v594 = vpop.f32.mrb[0].mxu0
    %v595 = vadd.f32 %v198, %v594
    %v596 = vpop.f32.mrb[0].mxu0
    %v597 = vadd.f32 %v202, %v596
    %v598 = vpop.f32.mrb[0].mxu0
    %v599 = vadd.f32 %v198, %v598
    %v600 = vpop.f32.mrb[0].mxu0
    %v601 = vadd.f32 %v202, %v600
    %602 = vdwg.mxu0
    %603 = vmatprep.subr.bf16.mxu0 %v292
    %604 = vmatpush1.bf16.msra.mxu0 %v291
    %605 = vmatprep.subr.bf16.mxu0 %v300
    %606 = vmatpush1.bf16.msra.mxu0 %v299
    %607 = vmatprep.subr.bf16.mxu0 %v369
    %608 = vmatpush1.bf16.msra.mxu0 %v366
    %609 = vmatprep.subr.bf16.mxu0 0
    %610 = vmatpush1.bf16.msra.mxu0 0
    %611 = vmatprep.subr.bf16.mxu0 0
    %612 = vmatpush1.bf16.msra.mxu0 0
    %613 = vmatprep.subr.bf16.mxu0 0
    %614 = vmatpush1.bf16.msra.mxu0 0
    %615 = vmatprep.subr.bf16.mxu0 0
    %616 = vmatpush1.bf16.msra.mxu0 0
    %617 = vmatprep.subr.bf16.mxu0 0
    %618 = vmatpush1.bf16.msra.mxu0 0
    %619 = vmatprep.subr.bf16.mxu0 0
    %620 = vmatpush1.bf16.msra.mxu0 0
    %621 = vmatprep.subr.bf16.mxu0 0
    %622 = vmatpush1.bf16.msra.mxu0 0
    %623 = vmatprep.subr.bf16.mxu0 0
    %624 = vmatpush1.bf16.msra.mxu0 0
    %625 = vmatprep.subr.bf16.mxu0 0
    %626 = vmatpush1.bf16.msra.mxu0 0
    %627 = vmatprep.subr.bf16.mxu0 0
    %628 = vmatpush1.bf16.msra.mxu0 0
    %629 = vmatprep.subr.bf16.mxu0 0
    %630 = vmatpush1.bf16.msra.mxu0 0
    %631 = vmatprep.subr.bf16.mxu0 0
    %632 = vmatpush1.bf16.msra.mxu0 0
    %633 = vmatprep.subr.bf16.mxu0 0
    %634 = vmatpush1.bf16.msra.mxu0 0
    %635 = vmatprep.mubr.bf16.mxu0 0
    %636 = vmatmul.mubr.bf16.gmra.mrb[0].mxu0 %v329
    %v637 = vpop.f32.mrb[0].mxu0
    %v638 = vadd.f32 %v206, %v637
    %v639 = vpop.f32.mrb[0].mxu0
    %v640 = vadd.f32 %v210, %v639
    %v641 = vpop.f32.mrb[0].mxu0
    %v642 = vadd.f32 %v206, %v641
    %v643 = vpop.f32.mrb[0].mxu0
    %v644 = vadd.f32 %v210, %v643
    %645 = vmatprep.mubr.bf16.mxu0 0
    %646 = vmatmul.mubr.bf16.gmra.mrb[0].mxu0 %v332
    %v647 = vpop.f32.mrb[0].mxu0
    %v648 = vadd.f32 %v206, %v647
    %v649 = vpop.f32.mrb[0].mxu0
    %v650 = vadd.f32 %v210, %v649
    %v651 = vpop.f32.mrb[0].mxu0
    %v652 = vadd.f32 %v206, %v651
    %v653 = vpop.f32.mrb[0].mxu0
    %v654 = vadd.f32 %v210, %v653
    %655 = vmatprep.mubr.bf16.mxu0 0
    %656 = vmatmul.mubr.bf16.gmra.mrb[0].mxu0 %v335
    %v657 = vpop.f32.mrb[0].mxu0
    %v658 = vadd.f32 %v206, %v657
    %v659 = vpop.f32.mrb[0].mxu0
    %v660 = vadd.f32 %v210, %v659
    %v661 = vpop.f32.mrb[0].mxu0
    %v662 = vadd.f32 %v206, %v661
    %v663 = vpop.f32.mrb[0].mxu0
    %v664 = vadd.f32 %v210, %v663
    %665 = vmatprep.mubr.bf16.mxu0 0
    %666 = vmatmul.mubr.bf16.gmra.mrb[0].mxu0 %v338
    %v667 = vpop.f32.mrb[0].mxu0
    %v668 = vadd.f32 %v206, %v667
    %v669 = vpop.f32.mrb[0].mxu0
    %v670 = vadd.f32 %v210, %v669
    %v671 = vpop.f32.mrb[0].mxu0
    %v672 = vadd.f32 %v206, %v671
    %v673 = vpop.f32.mrb[0].mxu0
    %v674 = vadd.f32 %v210, %v673
    %675 = vmatprep.mubr.bf16.mxu0 0
    %676 = vmatmul.mubr.bf16.gmra.mrb[0].mxu0 %v341
    %v677 = vpop.f32.mrb[0].mxu0
    %v678 = vadd.f32 %v206, %v677
    %v679 = vpop.f32.mrb[0].mxu0
    %v680 = vadd.f32 %v210, %v679
    %v681 = vpop.f32.mrb[0].mxu0
    %v682 = vadd.f32 %v206, %v681
    %v683 = vpop.f32.mrb[0].mxu0
    %v684 = vadd.f32 %v210, %v683
    %685 = vmatprep.mubr.bf16.mxu0 0
    %686 = vmatmul.mubr.bf16.gmra.mrb[0].mxu0 %v344
    %v687 = vpop.f32.mrb[0].mxu0
    %v688 = vadd.f32 %v206, %v687
    %v689 = vpop.f32.mrb[0].mxu0
    %v690 = vadd.f32 %v210, %v689
    %v691 = vpop.f32.mrb[0].mxu0
    %v692 = vadd.f32 %v206, %v691
    %v693 = vpop.f32.mrb[0].mxu0
    %v694 = vadd.f32 %v210, %v693
    %695 = vmatprep.mubr.bf16.mxu0 0
    %696 = vmatmul.mubr.bf16.gmra.mrb[0].mxu0 %v347
    %v697 = vpop.f32.mrb[0].mxu0
    %v698 = vadd.f32 %v206, %v697
    %v699 = vpop.f32.mrb[0].mxu0
    %v700 = vadd.f32 %v210, %v699
    %v701 = vpop.f32.mrb[0].mxu0
    %v702 = vadd.f32 %v206, %v701
    %v703 = vpop.f32.mrb[0].mxu0
    %v704 = vadd.f32 %v210, %v703
    %705 = vmatprep.mubr.bf16.mxu0 0
    %706 = vmatmul.mubr.bf16.gmra.mrb[0].mxu0 %v350
    %v707 = vpop.f32.mrb[0].mxu0
    %v708 = vadd.f32 %v206, %v707
    %v709 = vpop.f32.mrb[0].mxu0
    %v710 = vadd.f32 %v210, %v709
    %v711 = vpop.f32.mrb[0].mxu0
    %v712 = vadd.f32 %v206, %v711
    %v713 = vpop.f32.mrb[0].mxu0
    %v714 = vadd.f32 %v210, %v713
    %715 = vdwg.mxu0
    %716 = vmatprep.subr.bf16.mxu0 %v294
    %717 = vmatpush1.bf16.msra.mxu0 %v293
    %718 = vmatprep.subr.bf16.mxu0 %v302
    %719 = vmatpush1.bf16.msra.mxu0 %v301
    %720 = vmatprep.subr.bf16.mxu0 %v375
    %721 = vmatpush1.bf16.msra.mxu0 %v372
    %722 = vmatprep.subr.bf16.mxu0 0
    %723 = vmatpush1.bf16.msra.mxu0 0
    %724 = vmatprep.subr.bf16.mxu0 0
    %725 = vmatpush1.bf16.msra.mxu0 0
    %726 = vmatprep.subr.bf16.mxu0 0
    %727 = vmatpush1.bf16.msra.mxu0 0
    %728 = vmatprep.subr.bf16.mxu0 0
    %729 = vmatpush1.bf16.msra.mxu0 0
    %730 = vmatprep.subr.bf16.mxu0 0
    %731 = vmatpush1.bf16.msra.mxu0 0
    %732 = vmatprep.subr.bf16.mxu0 0
    %733 = vmatpush1.bf16.msra.mxu0 0
    %734 = vmatprep.subr.bf16.mxu0 0
    %735 = vmatpush1.bf16.msra.mxu0 0
    %736 = vmatprep.subr.bf16.mxu0 0
    %737 = vmatpush1.bf16.msra.mxu0 0
    %738 = vmatprep.subr.bf16.mxu0 0
    %739 = vmatpush1.bf16.msra.mxu0 0
    %740 = vmatprep.subr.bf16.mxu0 0
    %741 = vmatpush1.bf16.msra.mxu0 0
    %742 = vmatprep.subr.bf16.mxu0 0
    %743 = vmatpush1.bf16.msra.mxu0 0
    %744 = vmatprep.subr.bf16.mxu0 0
    %745 = vmatpush1.bf16.msra.mxu0 0
    %746 = vmatprep.subr.bf16.mxu0 0
    %747 = vmatpush1.bf16.msra.mxu0 0
    %748 = vmatprep.mubr.bf16.mxu0 0
    %749 = vmatmul.mubr.bf16.gmra.mrb[0].mxu0 %v329
    %v750 = vpop.f32.mrb[0].mxu0
    %v751 = vadd.f32 %v214, %v750
    %v752 = vpop.f32.mrb[0].mxu0
    %v753 = vadd.f32 %v218, %v752
    %v754 = vpop.f32.mrb[0].mxu0
    %v755 = vadd.f32 %v214, %v754
    %v756 = vpop.f32.mrb[0].mxu0
    %v757 = vadd.f32 %v218, %v756
    %758 = vmatprep.mubr.bf16.mxu0 0
    %759 = vmatmul.mubr.bf16.gmra.mrb[0].mxu0 %v332
    %v760 = vpop.f32.mrb[0].mxu0
    %v761 = vadd.f32 %v214, %v760
    %v762 = vpop.f32.mrb[0].mxu0
    %v763 = vadd.f32 %v218, %v762
    %v764 = vpop.f32.mrb[0].mxu0
    %v765 = vadd.f32 %v214, %v764
    %v766 = vpop.f32.mrb[0].mxu0
    %v767 = vadd.f32 %v218, %v766
    %768 = vmatprep.mubr.bf16.mxu0 0
    %769 = vmatmul.mubr.bf16.gmra.mrb[0].mxu0 %v335
    %v770 = vpop.f32.mrb[0].mxu0
    %v771 = vadd.f32 %v214, %v770
    %v772 = vpop.f32.mrb[0].mxu0
    %v773 = vadd.f32 %v218, %v772
    %v774 = vpop.f32.mrb[0].mxu0
    %v775 = vadd.f32 %v214, %v774
    %v776 = vpop.f32.mrb[0].mxu0
    %v777 = vadd.f32 %v218, %v776
    %778 = vmatprep.mubr.bf16.mxu0 0
    %779 = vmatmul.mubr.bf16.gmra.mrb[0].mxu0 %v338
    %v780 = vpop.f32.mrb[0].mxu0
    %v781 = vadd.f32 %v214, %v780
    %v782 = vpop.f32.mrb[0].mxu0
    %v783 = vadd.f32 %v218, %v782
    %v784 = vpop.f32.mrb[0].mxu0
    %v785 = vadd.f32 %v214, %v784
    %v786 = vpop.f32.mrb[0].mxu0
    %v787 = vadd.f32 %v218, %v786
    %788 = vmatprep.mubr.bf16.mxu0 0
    %789 = vmatmul.mubr.bf16.gmra.mrb[0].mxu0 %v341
    %v790 = vpop.f32.mrb[0].mxu0
    %v791 = vadd.f32 %v214, %v790
    %v792 = vpop.f32.mrb[0].mxu0
    %v793 = vadd.f32 %v218, %v792
    %v794 = vpop.f32.mrb[0].mxu0
    %v795 = vadd.f32 %v214, %v794
    %v796 = vpop.f32.mrb[0].mxu0
    %v797 = vadd.f32 %v218, %v796
    %798 = vmatprep.mubr.bf16.mxu0 0
    %799 = vmatmul.mubr.bf16.gmra.mrb[0].mxu0 %v344
    %v800 = vpop.f32.mrb[0].mxu0
    %v801 = vadd.f32 %v214, %v800
    %v802 = vpop.f32.mrb[0].mxu0
    %v803 = vadd.f32 %v218, %v802
    %v804 = vpop.f32.mrb[0].mxu0
    %v805 = vadd.f32 %v214, %v804
    %v806 = vpop.f32.mrb[0].mxu0
    %v807 = vadd.f32 %v218, %v806
    %808 = vmatprep.mubr.bf16.mxu0 0
    %809 = vmatmul.mubr.bf16.gmra.mrb[0].mxu0 %v347
    %v810 = vpop.f32.mrb[0].mxu0
    %v811 = vadd.f32 %v214, %v810
    %v812 = vpop.f32.mrb[0].mxu0
    %v813 = vadd.f32 %v218, %v812
    %v814 = vpop.f32.mrb[0].mxu0
    %v815 = vadd.f32 %v214, %v814
    %v816 = vpop.f32.mrb[0].mxu0
    %v817 = vadd.f32 %v218, %v816
    %818 = vmatprep.mubr.bf16.mxu0 0
    %819 = vmatmul.mubr.bf16.gmra.mrb[0].mxu0 %v350
    %v820 = vpop.f32.mrb[0].mxu0
    %v821 = vadd.f32 %v214, %v820
    %v822 = vpop.f32.mrb[0].mxu0
    %v823 = vadd.f32 %v218, %v822
    %v824 = vpop.f32.mrb[0].mxu0
    %v825 = vadd.f32 %v214, %v824
    %v826 = vpop.f32.mrb[0].mxu0
    %v827 = vadd.f32 %v218, %v826
    %828 = vdwg.mxu0
    %829 = vst [vmem:[#allocation2] sm:$0xff] %v412
    %830 = vst [vmem:[#allocation2 + $0x8] sm:$0xff] %v414
    %831 = vst [vmem:[#allocation2 + $0x10] sm:$0xff] %v525
    %832 = vst [vmem:[#allocation2 + $0x18] sm:$0xff] %v527
    %833 = vst [vmem:[#allocation2 + $0x20] sm:$0xff] %v638
    %834 = vst [vmem:[#allocation2 + $0x28] sm:$0xff] %v640
    %835 = vst [vmem:[#allocation2 + $0x30] sm:$0xff] %v751
    %836 = vst [vmem:[#allocation2 + $0x38] sm:$0xff] %v753
    %837 = vst [vmem:[#allocation2 + $0x40] sm:$0xff] %v416
    %838 = vst [vmem:[#allocation2 + $0x48] sm:$0xff] %v418
    %839 = vst [vmem:[#allocation2 + $0x50] sm:$0xff] %v529
    %840 = vst [vmem:[#allocation2 + $0x58] sm:$0xff] %v531
    %841 = vst [vmem:[#allocation2 + $0x60] sm:$0xff] %v642
    %842 = vst [vmem:[#allocation2 + $0x68] sm:$0xff] %v644
    %843 = vst [vmem:[#allocation2 + $0x70] sm:$0xff] %v755
    %844 = vst [vmem:[#allocation2 + $0x78] sm:$0xff] %v757
    %845 = vst [vmem:[#allocation2 + $0x80] sm:$0xff] %v422
    %846 = vst [vmem:[#allocation2 + $0x88] sm:$0xff] %v424
    %847 = vst [vmem:[#allocation2 + $0x90] sm:$0xff] %v535
    %848 = vst [vmem:[#allocation2 + $0x98] sm:$0xff] %v537
    %849 = vst [vmem:[#allocation2 + $0xa0] sm:$0xff] %v648
    %850 = vst [vmem:[#allocation2 + $0xa8] sm:$0xff] %v650
    %851 = vst [vmem:[#allocation2 + $0xb0] sm:$0xff] %v761
    %852 = vst [vmem:[#allocation2 + $0xb8] sm:$0xff] %v763
    %853 = vst [vmem:[#allocation2 + $0xc0] sm:$0xff] %v426
    %854 = vst [vmem:[#allocation2 + $0xc8] sm:$0xff] %v428
    %855 = vst [vmem:[#allocation2 + $0xd0] sm:$0xff] %v539
    %856 = vst [vmem:[#allocation2 + $0xd8] sm:$0xff] %v541
    %857 = vst [vmem:[#allocation2 + $0xe0] sm:$0xff] %v652
    %858 = vst [vmem:[#allocation2 + $0xe8] sm:$0xff] %v654
    %859 = vst [vmem:[#allocation2 + $0xf0] sm:$0xff] %v765
    %860 = vst [vmem:[#allocation2 + $0xf8] sm:$0xff] %v767
    %861 = vst [vmem:[#allocation2 + $0x100] sm:$0xff] %v432
    %862 = vst [vmem:[#allocation2 + $0x108] sm:$0xff] %v434
    %863 = vst [vmem:[#allocation2 + $0x110] sm:$0xff] %v545
    %864 = vst [vmem:[#allocation2 + $0x118] sm:$0xff] %v547
    %865 = vst [vmem:[#allocation2 + $0x120] sm:$0xff] %v658
    %866 = vst [vmem:[#allocation2 + $0x128] sm:$0xff] %v660
    %867 = vst [vmem:[#allocation2 + $0x130] sm:$0xff] %v771
    %868 = vst [vmem:[#allocation2 + $0x138] sm:$0xff] %v773
    %869 = vst [vmem:[#allocation2 + $0x140] sm:$0xff] %v436
    %870 = vst [vmem:[#allocation2 + $0x148] sm:$0xff] %v438
    %871 = vst [vmem:[#allocation2 + $0x150] sm:$0xff] %v549
    %872 = vst [vmem:[#allocation2 + $0x158] sm:$0xff] %v551
    %873 = vst [vmem:[#allocation2 + $0x160] sm:$0xff] %v662
    %874 = vst [vmem:[#allocation2 + $0x168] sm:$0xff] %v664
    %875 = vst [vmem:[#allocation2 + $0x170] sm:$0xff] %v775
    %876 = vst [vmem:[#allocation2 + $0x178] sm:$0xff] %v777
    %877 = vst [vmem:[#allocation2 + $0x180] sm:$0xff] %v442
    %878 = vst [vmem:[#allocation2 + $0x188] sm:$0xff] %v444
    %879 = vst [vmem:[#allocation2 + $0x190] sm:$0xff] %v555
    %880 = vst [vmem:[#allocation2 + $0x198] sm:$0xff] %v557
    %881 = vst [vmem:[#allocation2 + $0x1a0] sm:$0xff] %v668
    %882 = vst [vmem:[#allocation2 + $0x1a8] sm:$0xff] %v670
    %883 = vst [vmem:[#allocation2 + $0x1b0] sm:$0xff] %v781
    %884 = vst [vmem:[#allocation2 + $0x1b8] sm:$0xff] %v783
    %885 = vst [vmem:[#allocation2 + $0x1c0] sm:$0xff] %v446
    %886 = vst [vmem:[#allocation2 + $0x1c8] sm:$0xff] %v448
    %887 = vst [vmem:[#allocation2 + $0x1d0] sm:$0xff] %v559
    %888 = vst [vmem:[#allocation2 + $0x1d8] sm:$0xff] %v561
    %889 = vst [vmem:[#allocation2 + $0x1e0] sm:$0xff] %v672
    %890 = vst [vmem:[#allocation2 + $0x1e8] sm:$0xff] %v674
    %891 = vst [vmem:[#allocation2 + $0x1f0] sm:$0xff] %v785
    %892 = vst [vmem:[#allocation2 + $0x1f8] sm:$0xff] %v787
    %893 = vst [vmem:[#allocation2 + $0x200] sm:$0xff] %v452
    %894 = vst [vmem:[#allocation2 + $0x208] sm:$0xff] %v454
    %895 = vst [vmem:[#allocation2 + $0x210] sm:$0xff] %v565
    %896 = vst [vmem:[#allocation2 + $0x218] sm:$0xff] %v567
    %897 = vst [vmem:[#allocation2 + $0x220] sm:$0xff] %v678
    %898 = vst [vmem:[#allocation2 + $0x228] sm:$0xff] %v680
    %899 = vst [vmem:[#allocation2 + $0x230] sm:$0xff] %v791
    %900 = vst [vmem:[#allocation2 + $0x238] sm:$0xff] %v793
    %901 = vst [vmem:[#allocation2 + $0x240] sm:$0xff] %v456
    %902 = vst [vmem:[#allocation2 + $0x248] sm:$0xff] %v458
    %903 = vst [vmem:[#allocation2 + $0x250] sm:$0xff] %v569
    %904 = vst [vmem:[#allocation2 + $0x258] sm:$0xff] %v571
    %905 = vst [vmem:[#allocation2 + $0x260] sm:$0xff] %v682
    %906 = vst [vmem:[#allocation2 + $0x268] sm:$0xff] %v684
    %907 = vst [vmem:[#allocation2 + $0x270] sm:$0xff] %v795
    %908 = vst [vmem:[#allocation2 + $0x278] sm:$0xff] %v797
    %909 = vst [vmem:[#allocation2 + $0x280] sm:$0xff] %v462
    %910 = vst [vmem:[#allocation2 + $0x288] sm:$0xff] %v464
    %911 = vst [vmem:[#allocation2 + $0x290] sm:$0xff] %v575
    %912 = vst [vmem:[#allocation2 + $0x298] sm:$0xff] %v577
    %913 = vst [vmem:[#allocation2 + $0x2a0] sm:$0xff] %v688
    %914 = vst [vmem:[#allocation2 + $0x2a8] sm:$0xff] %v690
    %915 = vst [vmem:[#allocation2 + $0x2b0] sm:$0xff] %v801
    %916 = vst [vmem:[#allocation2 + $0x2b8] sm:$0xff] %v803
    %917 = vst [vmem:[#allocation2 + $0x2c0] sm:$0xff] %v466
    %918 = vst [vmem:[#allocation2 + $0x2c8] sm:$0xff] %v468
    %919 = vst [vmem:[#allocation2 + $0x2d0] sm:$0xff] %v579
    %920 = vst [vmem:[#allocation2 + $0x2d8] sm:$0xff] %v581
    %921 = vst [vmem:[#allocation2 + $0x2e0] sm:$0xff] %v692
    %922 = vst [vmem:[#allocation2 + $0x2e8] sm:$0xff] %v694
    %923 = vst [vmem:[#allocation2 + $0x2f0] sm:$0xff] %v805
    %924 = vst [vmem:[#allocation2 + $0x2f8] sm:$0xff] %v807
    %925 = vst [vmem:[#allocation2 + $0x300] sm:$0xff] %v472
    %926 = vst [vmem:[#allocation2 + $0x308] sm:$0xff] %v474
    %927 = vst [vmem:[#allocation2 + $0x310] sm:$0xff] %v585
    %928 = vst [vmem:[#allocation2 + $0x318] sm:$0xff] %v587
    %929 = vst [vmem:[#allocation2 + $0x320] sm:$0xff] %v698
    %930 = vst [vmem:[#allocation2 + $0x328] sm:$0xff] %v700
    %931 = vst [vmem:[#allocation2 + $0x330] sm:$0xff] %v811
    %932 = vst [vmem:[#allocation2 + $0x338] sm:$0xff] %v813
    %933 = vst [vmem:[#allocation2 + $0x340] sm:$0xff] %v476
    %934 = vst [vmem:[#allocation2 + $0x348] sm:$0xff] %v478
    %935 = vst [vmem:[#allocation2 + $0x350] sm:$0xff] %v589
    %936 = vst [vmem:[#allocation2 + $0x358] sm:$0xff] %v591
    %937 = vst [vmem:[#allocation2 + $0x360] sm:$0xff] %v702
    %938 = vst [vmem:[#allocation2 + $0x368] sm:$0xff] %v704
    %939 = vst [vmem:[#allocation2 + $0x370] sm:$0xff] %v815
    %940 = vst [vmem:[#allocation2 + $0x378] sm:$0xff] %v817
    %941 = vst [vmem:[#allocation2 + $0x380] sm:$0xff] %v482
    %942 = vst [vmem:[#allocation2 + $0x388] sm:$0xff] %v484
    %943 = vst [vmem:[#allocation2 + $0x390] sm:$0xff] %v595
    %944 = vst [vmem:[#allocation2 + $0x398] sm:$0xff] %v597
    %945 = vst [vmem:[#allocation2 + $0x3a0] sm:$0xff] %v708
    %946 = vst [vmem:[#allocation2 + $0x3a8] sm:$0xff] %v710
    %947 = vst [vmem:[#allocation2 + $0x3b0] sm:$0xff] %v821
    %948 = vst [vmem:[#allocation2 + $0x3b8] sm:$0xff] %v823
    %949 = vst [vmem:[#allocation2 + $0x3c0] sm:$0xff] %v486
    %950 = vst [vmem:[#allocation2 + $0x3c8] sm:$0xff] %v488
    %951 = vst [vmem:[#allocation2 + $0x3d0] sm:$0xff] %v599
    %952 = vst [vmem:[#allocation2 + $0x3d8] sm:$0xff] %v601
    %953 = vst [vmem:[#allocation2 + $0x3e0] sm:$0xff] %v712
    %954 = vst [vmem:[#allocation2 + $0x3e8] sm:$0xff] %v714
    %955 = vst [vmem:[#allocation2 + $0x3f0] sm:$0xff] %v825
    %956 = vst [vmem:[#allocation2 + $0x3f8] sm:$0xff] %v827
    loop: start=0, step=1, limit=16
    $region70: #{tpu_custom_call.1} parent=1 // loop_pre_header
      _
    $region71: #{tpu_custom_call.1} parent=1 // loop_header
      %s958 = sphi 0, %s962
      %p959 = scmp.ge.s32.totalorder %s958, 16
      %v963 = vphi 0.0, %v1966
      %v964 = vphi 0.0, %v1967
      %v965 = vphi 0.0, %v1962
      %v966 = vphi 0.0, %v1963
    $region72: #{tpu_custom_call.1} parent=1 // loop_header_branch
      %961 = sbr.rel (%p959) target = $region76
    $region73: #{tpu_custom_call.1} parent=1 // loop_body
      %s967 = smul.u32 %s958, 8
      %s968 = smul.addr %s967, 8
      %s969 = scalar_lea.vmem [#allocation2], %s968
      %v970 = vld [vmem:[%s969] sm:$0xff]
      %v971 = vld [vmem:[%s969 + $0x8] sm:$0xff]
      %v972 = vld [vmem:[%s969 + $0x10] sm:$0xff]
      %v973 = vld [vmem:[%s969 + $0x18] sm:$0xff]
      %v974 = vld [vmem:[%s969 + $0x20] sm:$0xff]
      %v975 = vld [vmem:[%s969 + $0x28] sm:$0xff]
      %v976 = vld [vmem:[%s969 + $0x30] sm:$0xff]
      %v977 = vld [vmem:[%s969 + $0x38] sm:$0xff]
      %v978 = vpack.c.bf16 %v963, %v963
      %v979 = vpack.c.bf16 %v964, %v964
      %v980 = vld [vmem:[#allocation12] sm:$0xff]
      %v981 = vld [vmem:[#allocation12 + $0x8] sm:$0xff]
      %v982 = vld [vmem:[#allocation12 + $0x10] sm:$0xff]
      %v983 = vld [vmem:[#allocation12 + $0x18] sm:$0xff]
      %v984 = vld [vmem:[#allocation12 + $0x20] sm:$0xff]
      %v985 = vld [vmem:[#allocation12 + $0x28] sm:$0xff]
      %v986 = vld [vmem:[#allocation12 + $0x30] sm:$0xff]
      %v987 = vld [vmem:[#allocation12 + $0x38] sm:$0xff]
      %v988 = vld [vmem:[#allocation12 + $0x40] sm:$0xff]
      %v989 = vld [vmem:[#allocation12 + $0x48] sm:$0xff]
      %v990 = vld [vmem:[#allocation12 + $0x50] sm:$0xff]
      %v991 = vld [vmem:[#allocation12 + $0x58] sm:$0xff]
      %v992 = vld [vmem:[#allocation12 + $0x60] sm:$0xff]
      %v993 = vld [vmem:[#allocation12 + $0x68] sm:$0xff]
      %v994 = vld [vmem:[#allocation12 + $0x70] sm:$0xff]
      %v995 = vld [vmem:[#allocation12 + $0x78] sm:$0xff]
      %v996 = vld [vmem:[#allocation12 + $0x80] sm:$0xff]
      %v997 = vld [vmem:[#allocation12 + $0x88] sm:$0xff]
      %v998 = vld [vmem:[#allocation12 + $0x90] sm:$0xff]
      %v999 = vld [vmem:[#allocation12 + $0x98] sm:$0xff]
      %v1000 = vld [vmem:[#allocation12 + $0xa0] sm:$0xff]
      %v1001 = vld [vmem:[#allocation12 + $0xa8] sm:$0xff]
      %v1002 = vld [vmem:[#allocation12 + $0xb0] sm:$0xff]
      %v1003 = vld [vmem:[#allocation12 + $0xb8] sm:$0xff]
      %v1004 = vld [vmem:[#allocation12 + $0xc0] sm:$0xff]
      %v1005 = vld [vmem:[#allocation12 + $0xc8] sm:$0xff]
      %v1006 = vld [vmem:[#allocation12 + $0xd0] sm:$0xff]
      %v1007 = vld [vmem:[#allocation12 + $0xd8] sm:$0xff]
      %v1008 = vld [vmem:[#allocation12 + $0xe0] sm:$0xff]
      %v1009 = vld [vmem:[#allocation12 + $0xe8] sm:$0xff]
      %v1010 = vld [vmem:[#allocation12 + $0xf0] sm:$0xff]
      %v1011 = vld [vmem:[#allocation12 + $0xf8] sm:$0xff]
      %v1012 = vld [vmem:[#allocation12 + $0x100] sm:$0xff]
      %v1013 = vld [vmem:[#allocation12 + $0x108] sm:$0xff]
      %v1014 = vld [vmem:[#allocation12 + $0x110] sm:$0xff]
      %v1015 = vld [vmem:[#allocation12 + $0x118] sm:$0xff]
      %v1016 = vld [vmem:[#allocation12 + $0x120] sm:$0xff]
      %v1017 = vld [vmem:[#allocation12 + $0x128] sm:$0xff]
      %v1018 = vld [vmem:[#allocation12 + $0x130] sm:$0xff]
      %v1019 = vld [vmem:[#allocation12 + $0x138] sm:$0xff]
      %v1020 = vld [vmem:[#allocation12 + $0x140] sm:$0xff]
      %v1021 = vld [vmem:[#allocation12 + $0x148] sm:$0xff]
      %v1022 = vld [vmem:[#allocation12 + $0x150] sm:$0xff]
      %v1023 = vld [vmem:[#allocation12 + $0x158] sm:$0xff]
      %v1024 = vld [vmem:[#allocation12 + $0x160] sm:$0xff]
      %v1025 = vld [vmem:[#allocation12 + $0x168] sm:$0xff]
      %v1026 = vld [vmem:[#allocation12 + $0x170] sm:$0xff]
      %v1027 = vld [vmem:[#allocation12 + $0x178] sm:$0xff]
      %v1028 = vld [vmem:[#allocation12 + $0x180] sm:$0xff]
      %v1029 = vld [vmem:[#allocation12 + $0x188] sm:$0xff]
      %v1030 = vld [vmem:[#allocation12 + $0x190] sm:$0xff]
      %v1031 = vld [vmem:[#allocation12 + $0x198] sm:$0xff]
      %v1032 = vld [vmem:[#allocation12 + $0x1a0] sm:$0xff]
      %v1033 = vld [vmem:[#allocation12 + $0x1a8] sm:$0xff]
      %v1034 = vld [vmem:[#allocation12 + $0x1b0] sm:$0xff]
      %v1035 = vld [vmem:[#allocation12 + $0x1b8] sm:$0xff]
      %v1036 = vld [vmem:[#allocation12 + $0x1c0] sm:$0xff]
      %v1037 = vld [vmem:[#allocation12 + $0x1c8] sm:$0xff]
      %v1038 = vld [vmem:[#allocation12 + $0x1d0] sm:$0xff]
      %v1039 = vld [vmem:[#allocation12 + $0x1d8] sm:$0xff]
      %v1040 = vld [vmem:[#allocation12 + $0x1e0] sm:$0xff]
      %v1041 = vld [vmem:[#allocation12 + $0x1e8] sm:$0xff]
      %v1042 = vld [vmem:[#allocation12 + $0x1f0] sm:$0xff]
      %v1043 = vld [vmem:[#allocation12 + $0x1f8] sm:$0xff]
      %v1044 = vld [vmem:[#allocation12 + $0x200] sm:$0xff]
      %v1045 = vld [vmem:[#allocation12 + $0x208] sm:$0xff]
      %v1046 = vld [vmem:[#allocation12 + $0x210] sm:$0xff]
      %v1047 = vld [vmem:[#allocation12 + $0x218] sm:$0xff]
      %v1048 = vld [vmem:[#allocation12 + $0x220] sm:$0xff]
      %v1049 = vld [vmem:[#allocation12 + $0x228] sm:$0xff]
      %v1050 = vld [vmem:[#allocation12 + $0x230] sm:$0xff]
      %v1051 = vld [vmem:[#allocation12 + $0x238] sm:$0xff]
      %v1052 = vld [vmem:[#allocation12 + $0x240] sm:$0xff]
      %v1053 = vld [vmem:[#allocation12 + $0x248] sm:$0xff]
      %v1054 = vld [vmem:[#allocation12 + $0x250] sm:$0xff]
      %v1055 = vld [vmem:[#allocation12 + $0x258] sm:$0xff]
      %v1056 = vld [vmem:[#allocation12 + $0x260] sm:$0xff]
      %v1057 = vld [vmem:[#allocation12 + $0x268] sm:$0xff]
      %v1058 = vld [vmem:[#allocation12 + $0x270] sm:$0xff]
      %v1059 = vld [vmem:[#allocation12 + $0x278] sm:$0xff]
      %v1060 = vld [vmem:[#allocation12 + $0x280] sm:$0xff]
      %v1061 = vld [vmem:[#allocation12 + $0x288] sm:$0xff]
      %v1062 = vld [vmem:[#allocation12 + $0x290] sm:$0xff]
      %v1063 = vld [vmem:[#allocation12 + $0x298] sm:$0xff]
      %v1064 = vld [vmem:[#allocation12 + $0x2a0] sm:$0xff]
      %v1065 = vld [vmem:[#allocation12 + $0x2a8] sm:$0xff]
      %v1066 = vld [vmem:[#allocation12 + $0x2b0] sm:$0xff]
      %v1067 = vld [vmem:[#allocation12 + $0x2b8] sm:$0xff]
      %v1068 = vld [vmem:[#allocation12 + $0x2c0] sm:$0xff]
      %v1069 = vld [vmem:[#allocation12 + $0x2c8] sm:$0xff]
      %v1070 = vld [vmem:[#allocation12 + $0x2d0] sm:$0xff]
      %v1071 = vld [vmem:[#allocation12 + $0x2d8] sm:$0xff]
      %v1072 = vld [vmem:[#allocation12 + $0x2e0] sm:$0xff]
      %v1073 = vld [vmem:[#allocation12 + $0x2e8] sm:$0xff]
      %v1074 = vld [vmem:[#allocation12 + $0x2f0] sm:$0xff]
      %v1075 = vld [vmem:[#allocation12 + $0x2f8] sm:$0xff]
      %v1076 = vld [vmem:[#allocation12 + $0x300] sm:$0xff]
      %v1077 = vld [vmem:[#allocation12 + $0x308] sm:$0xff]
      %v1078 = vld [vmem:[#allocation12 + $0x310] sm:$0xff]
      %v1079 = vld [vmem:[#allocation12 + $0x318] sm:$0xff]
      %v1080 = vld [vmem:[#allocation12 + $0x320] sm:$0xff]
      %v1081 = vld [vmem:[#allocation12 + $0x328] sm:$0xff]
      %v1082 = vld [vmem:[#allocation12 + $0x330] sm:$0xff]
      %v1083 = vld [vmem:[#allocation12 + $0x338] sm:$0xff]
      %v1084 = vld [vmem:[#allocation12 + $0x340] sm:$0xff]
      %v1085 = vld [vmem:[#allocation12 + $0x348] sm:$0xff]
      %v1086 = vld [vmem:[#allocation12 + $0x350] sm:$0xff]
      %v1087 = vld [vmem:[#allocation12 + $0x358] sm:$0xff]
      %v1088 = vld [vmem:[#allocation12 + $0x360] sm:$0xff]
      %v1089 = vld [vmem:[#allocation12 + $0x368] sm:$0xff]
      %v1090 = vld [vmem:[#allocation12 + $0x370] sm:$0xff]
      %v1091 = vld [vmem:[#allocation12 + $0x378] sm:$0xff]
      %v1092 = vld [vmem:[#allocation12 + $0x380] sm:$0xff]
      %v1093 = vld [vmem:[#allocation12 + $0x388] sm:$0xff]
      %v1094 = vld [vmem:[#allocation12 + $0x390] sm:$0xff]
      %v1095 = vld [vmem:[#allocation12 + $0x398] sm:$0xff]
      %v1096 = vld [vmem:[#allocation12 + $0x3a0] sm:$0xff]
      %v1097 = vld [vmem:[#allocation12 + $0x3a8] sm:$0xff]
      %v1098 = vld [vmem:[#allocation12 + $0x3b0] sm:$0xff]
      %v1099 = vld [vmem:[#allocation12 + $0x3b8] sm:$0xff]
      %v1100 = vld [vmem:[#allocation12 + $0x3c0] sm:$0xff]
      %v1101 = vld [vmem:[#allocation12 + $0x3c8] sm:$0xff]
      %v1102 = vld [vmem:[#allocation12 + $0x3d0] sm:$0xff]
      %v1103 = vld [vmem:[#allocation12 + $0x3d8] sm:$0xff]
      %v1104 = vld [vmem:[#allocation12 + $0x3e0] sm:$0xff]
      %v1105 = vld [vmem:[#allocation12 + $0x3e8] sm:$0xff]
      %v1106 = vld [vmem:[#allocation12 + $0x3f0] sm:$0xff]
      %v1107 = vld [vmem:[#allocation12 + $0x3f8] sm:$0xff]
      %v1236 = vunpack.c.l.b16 %v980
      %v1237 = vunpack.c.h.b16 %v980
      %v1238 = vunpack.c.l.b16 %v981
      %v1239 = vunpack.c.h.b16 %v981
      %v1240 = vunpack.c.l.b16 %v982
      %v1241 = vunpack.c.h.b16 %v982
      %v1242 = vunpack.c.l.b16 %v983
      %v1243 = vunpack.c.h.b16 %v983
      %v1244 = vunpack.c.l.b16 %v984
      %v1245 = vunpack.c.h.b16 %v984
      %v1246 = vunpack.c.l.b16 %v985
      %v1247 = vunpack.c.h.b16 %v985
      %v1248 = vunpack.c.l.b16 %v986
      %v1249 = vunpack.c.h.b16 %v986
      %v1250 = vunpack.c.l.b16 %v987
      %v1251 = vunpack.c.h.b16 %v987
      %v1252 = vunpack.c.l.b16 %v988
      %v1253 = vunpack.c.h.b16 %v988
      %v1254 = vunpack.c.l.b16 %v989
      %v1255 = vunpack.c.h.b16 %v989
      %v1256 = vunpack.c.l.b16 %v990
      %v1257 = vunpack.c.h.b16 %v990
      %v1258 = vunpack.c.l.b16 %v991
      %v1259 = vunpack.c.h.b16 %v991
      %v1260 = vunpack.c.l.b16 %v992
      %v1261 = vunpack.c.h.b16 %v992
      %v1262 = vunpack.c.l.b16 %v993
      %v1263 = vunpack.c.h.b16 %v993
      %v1264 = vunpack.c.l.b16 %v994
      %v1265 = vunpack.c.h.b16 %v994
      %v1266 = vunpack.c.l.b16 %v995
      %v1267 = vunpack.c.h.b16 %v995
      %v1268 = vunpack.c.l.b16 %v996
      %v1269 = vunpack.c.h.b16 %v996
      %v1270 = vunpack.c.l.b16 %v997
      %v1271 = vunpack.c.h.b16 %v997
      %v1272 = vunpack.c.l.b16 %v998
      %v1273 = vunpack.c.h.b16 %v998
      %v1274 = vunpack.c.l.b16 %v999
      %v1275 = vunpack.c.h.b16 %v999
      %v1276 = vunpack.c.l.b16 %v1000
      %v1277 = vunpack.c.h.b16 %v1000
      %v1278 = vunpack.c.l.b16 %v1001
      %v1279 = vunpack.c.h.b16 %v1001
      %v1280 = vunpack.c.l.b16 %v1002
      %v1281 = vunpack.c.h.b16 %v1002
      %v1282 = vunpack.c.l.b16 %v1003
      %v1283 = vunpack.c.h.b16 %v1003
      %v1284 = vunpack.c.l.b16 %v1004
      %v1285 = vunpack.c.h.b16 %v1004
      %v1286 = vunpack.c.l.b16 %v1005
      %v1287 = vunpack.c.h.b16 %v1005
      %v1288 = vunpack.c.l.b16 %v1006
      %v1289 = vunpack.c.h.b16 %v1006
      %v1290 = vunpack.c.l.b16 %v1007
      %v1291 = vunpack.c.h.b16 %v1007
      %v1292 = vunpack.c.l.b16 %v1008
      %v1293 = vunpack.c.h.b16 %v1008
      %v1294 = vunpack.c.l.b16 %v1009
      %v1295 = vunpack.c.h.b16 %v1009
      %v1296 = vunpack.c.l.b16 %v1010
      %v1297 = vunpack.c.h.b16 %v1010
      %v1298 = vunpack.c.l.b16 %v1011
      %v1299 = vunpack.c.h.b16 %v1011
      %v1300 = vunpack.c.l.b16 %v1012
      %v1301 = vunpack.c.h.b16 %v1012
      %v1302 = vunpack.c.l.b16 %v1013
      %v1303 = vunpack.c.h.b16 %v1013
      %v1304 = vunpack.c.l.b16 %v1014
      %v1305 = vunpack.c.h.b16 %v1014
      %v1306 = vunpack.c.l.b16 %v1015
      %v1307 = vunpack.c.h.b16 %v1015
      %v1308 = vunpack.c.l.b16 %v1016
      %v1309 = vunpack.c.h.b16 %v1016
      %v1310 = vunpack.c.l.b16 %v1017
      %v1311 = vunpack.c.h.b16 %v1017
      %v1312 = vunpack.c.l.b16 %v1018
      %v1313 = vunpack.c.h.b16 %v1018
      %v1314 = vunpack.c.l.b16 %v1019
      %v1315 = vunpack.c.h.b16 %v1019
      %v1316 = vunpack.c.l.b16 %v1020
      %v1317 = vunpack.c.h.b16 %v1020
      %v1318 = vunpack.c.l.b16 %v1021
      %v1319 = vunpack.c.h.b16 %v1021
      %v1320 = vunpack.c.l.b16 %v1022
      %v1321 = vunpack.c.h.b16 %v1022
      %v1322 = vunpack.c.l.b16 %v1023
      %v1323 = vunpack.c.h.b16 %v1023
      %v1324 = vunpack.c.l.b16 %v1024
      %v1325 = vunpack.c.h.b16 %v1024
      %v1326 = vunpack.c.l.b16 %v1025
      %v1327 = vunpack.c.h.b16 %v1025
      %v1328 = vunpack.c.l.b16 %v1026
      %v1329 = vunpack.c.h.b16 %v1026
      %v1330 = vunpack.c.l.b16 %v1027
      %v1331 = vunpack.c.h.b16 %v1027
      %v1332 = vunpack.c.l.b16 %v1028
      %v1333 = vunpack.c.h.b16 %v1028
      %v1334 = vunpack.c.l.b16 %v1029
      %v1335 = vunpack.c.h.b16 %v1029
      %v1336 = vunpack.c.l.b16 %v1030
      %v1337 = vunpack.c.h.b16 %v1030
      %v1338 = vunpack.c.l.b16 %v1031
      %v1339 = vunpack.c.h.b16 %v1031
      %v1340 = vunpack.c.l.b16 %v1032
      %v1341 = vunpack.c.h.b16 %v1032
      %v1342 = vunpack.c.l.b16 %v1033
      %v1343 = vunpack.c.h.b16 %v1033
      %v1344 = vunpack.c.l.b16 %v1034
      %v1345 = vunpack.c.h.b16 %v1034
      %v1346 = vunpack.c.l.b16 %v1035
      %v1347 = vunpack.c.h.b16 %v1035
      %v1348 = vunpack.c.l.b16 %v1036
      %v1349 = vunpack.c.h.b16 %v1036
      %v1350 = vunpack.c.l.b16 %v1037
      %v1351 = vunpack.c.h.b16 %v1037
      %v1352 = vunpack.c.l.b16 %v1038
      %v1353 = vunpack.c.h.b16 %v1038
      %v1354 = vunpack.c.l.b16 %v1039
      %v1355 = vunpack.c.h.b16 %v1039
      %v1356 = vunpack.c.l.b16 %v1040
      %v1357 = vunpack.c.h.b16 %v1040
      %v1358 = vunpack.c.l.b16 %v1041
      %v1359 = vunpack.c.h.b16 %v1041
      %v1360 = vunpack.c.l.b16 %v1042
      %v1361 = vunpack.c.h.b16 %v1042
      %v1362 = vunpack.c.l.b16 %v1043
      %v1363 = vunpack.c.h.b16 %v1043
      %v1364 = vunpack.c.l.b16 %v1044
      %v1365 = vunpack.c.h.b16 %v1044
      %v1366 = vunpack.c.l.b16 %v1045
      %v1367 = vunpack.c.h.b16 %v1045
      %v1368 = vunpack.c.l.b16 %v1046
      %v1369 = vunpack.c.h.b16 %v1046
      %v1370 = vunpack.c.l.b16 %v1047
      %v1371 = vunpack.c.h.b16 %v1047
      %v1372 = vunpack.c.l.b16 %v1048
      %v1373 = vunpack.c.h.b16 %v1048
      %v1374 = vunpack.c.l.b16 %v1049
      %v1375 = vunpack.c.h.b16 %v1049
      %v1376 = vunpack.c.l.b16 %v1050
      %v1377 = vunpack.c.h.b16 %v1050
      %v1378 = vunpack.c.l.b16 %v1051
      %v1379 = vunpack.c.h.b16 %v1051
      %v1380 = vunpack.c.l.b16 %v1052
      %v1381 = vunpack.c.h.b16 %v1052
      %v1382 = vunpack.c.l.b16 %v1053
      %v1383 = vunpack.c.h.b16 %v1053
      %v1384 = vunpack.c.l.b16 %v1054
      %v1385 = vunpack.c.h.b16 %v1054
      %v1386 = vunpack.c.l.b16 %v1055
      %v1387 = vunpack.c.h.b16 %v1055
      %v1388 = vunpack.c.l.b16 %v1056
      %v1389 = vunpack.c.h.b16 %v1056
      %v1390 = vunpack.c.l.b16 %v1057
      %v1391 = vunpack.c.h.b16 %v1057
      %v1392 = vunpack.c.l.b16 %v1058
      %v1393 = vunpack.c.h.b16 %v1058
      %v1394 = vunpack.c.l.b16 %v1059
      %v1395 = vunpack.c.h.b16 %v1059
      %v1396 = vunpack.c.l.b16 %v1060
      %v1397 = vunpack.c.h.b16 %v1060
      %v1398 = vunpack.c.l.b16 %v1061
      %v1399 = vunpack.c.h.b16 %v1061
      %v1400 = vunpack.c.l.b16 %v1062
      %v1401 = vunpack.c.h.b16 %v1062
      %v1402 = vunpack.c.l.b16 %v1063
      %v1403 = vunpack.c.h.b16 %v1063
      %v1404 = vunpack.c.l.b16 %v1064
      %v1405 = vunpack.c.h.b16 %v1064
      %v1406 = vunpack.c.l.b16 %v1065
      %v1407 = vunpack.c.h.b16 %v1065
      %v1408 = vunpack.c.l.b16 %v1066
      %v1409 = vunpack.c.h.b16 %v1066
      %v1410 = vunpack.c.l.b16 %v1067
      %v1411 = vunpack.c.h.b16 %v1067
      %v1412 = vunpack.c.l.b16 %v1068
      %v1413 = vunpack.c.h.b16 %v1068
      %v1414 = vunpack.c.l.b16 %v1069
      %v1415 = vunpack.c.h.b16 %v1069
      %v1416 = vunpack.c.l.b16 %v1070
      %v1417 = vunpack.c.h.b16 %v1070
      %v1418 = vunpack.c.l.b16 %v1071
      %v1419 = vunpack.c.h.b16 %v1071
      %v1420 = vunpack.c.l.b16 %v1072
      %v1421 = vunpack.c.h.b16 %v1072
      %v1422 = vunpack.c.l.b16 %v1073
      %v1423 = vunpack.c.h.b16 %v1073
      %v1424 = vunpack.c.l.b16 %v1074
      %v1425 = vunpack.c.h.b16 %v1074
      %v1426 = vunpack.c.l.b16 %v1075
      %v1427 = vunpack.c.h.b16 %v1075
      %v1428 = vunpack.c.l.b16 %v1076
      %v1429 = vunpack.c.h.b16 %v1076
      %v1430 = vunpack.c.l.b16 %v1077
      %v1431 = vunpack.c.h.b16 %v1077
      %v1432 = vunpack.c.l.b16 %v1078
      %v1433 = vunpack.c.h.b16 %v1078
      %v1434 = vunpack.c.l.b16 %v1079
      %v1435 = vunpack.c.h.b16 %v1079
      %v1436 = vunpack.c.l.b16 %v1080
      %v1437 = vunpack.c.h.b16 %v1080
      %v1438 = vunpack.c.l.b16 %v1081
      %v1439 = vunpack.c.h.b16 %v1081
      %v1440 = vunpack.c.l.b16 %v1082
      %v1441 = vunpack.c.h.b16 %v1082
      %v1442 = vunpack.c.l.b16 %v1083
      %v1443 = vunpack.c.h.b16 %v1083
      %v1444 = vunpack.c.l.b16 %v1084
      %v1445 = vunpack.c.h.b16 %v1084
      %v1446 = vunpack.c.l.b16 %v1085
      %v1447 = vunpack.c.h.b16 %v1085
      %v1448 = vunpack.c.l.b16 %v1086
      %v1449 = vunpack.c.h.b16 %v1086
      %v1450 = vunpack.c.l.b16 %v1087
      %v1451 = vunpack.c.h.b16 %v1087
      %v1452 = vunpack.c.l.b16 %v1088
      %v1453 = vunpack.c.h.b16 %v1088
      %v1454 = vunpack.c.l.b16 %v1089
      %v1455 = vunpack.c.h.b16 %v1089
      %v1456 = vunpack.c.l.b16 %v1090
      %v1457 = vunpack.c.h.b16 %v1090
      %v1458 = vunpack.c.l.b16 %v1091
      %v1459 = vunpack.c.h.b16 %v1091
      %v1460 = vunpack.c.l.b16 %v1092
      %v1461 = vunpack.c.h.b16 %v1092
      %v1462 = vunpack.c.l.b16 %v1093
      %v1463 = vunpack.c.h.b16 %v1093
      %v1464 = vunpack.c.l.b16 %v1094
      %v1465 = vunpack.c.h.b16 %v1094
      %v1466 = vunpack.c.l.b16 %v1095
      %v1467 = vunpack.c.h.b16 %v1095
      %v1468 = vunpack.c.l.b16 %v1096
      %v1469 = vunpack.c.h.b16 %v1096
      %v1470 = vunpack.c.l.b16 %v1097
      %v1471 = vunpack.c.h.b16 %v1097
      %v1472 = vunpack.c.l.b16 %v1098
      %v1473 = vunpack.c.h.b16 %v1098
      %v1474 = vunpack.c.l.b16 %v1099
      %v1475 = vunpack.c.h.b16 %v1099
      %v1476 = vunpack.c.l.b16 %v1100
      %v1477 = vunpack.c.h.b16 %v1100
      %v1478 = vunpack.c.l.b16 %v1101
      %v1479 = vunpack.c.h.b16 %v1101
      %v1480 = vunpack.c.l.b16 %v1102
      %v1481 = vunpack.c.h.b16 %v1102
      %v1482 = vunpack.c.l.b16 %v1103
      %v1483 = vunpack.c.h.b16 %v1103
      %v1484 = vunpack.c.l.b16 %v1104
      %v1485 = vunpack.c.h.b16 %v1104
      %v1486 = vunpack.c.l.b16 %v1105
      %v1487 = vunpack.c.h.b16 %v1105
      %v1488 = vunpack.c.l.b16 %v1106
      %v1489 = vunpack.c.h.b16 %v1106
      %v1490 = vunpack.c.l.b16 %v1107
      %v1491 = vunpack.c.h.b16 %v1107
      %v1492 = vpack.c.b16 %v1244, %v1236
      %v1493 = vpack.c.b16 %v1245, %v1237
      %v1494 = vpack.c.b16 %v1246, %v1238
      %v1495 = vpack.c.b16 %v1247, %v1239
      %v1496 = vpack.c.b16 %v1248, %v1240
      %v1497 = vpack.c.b16 %v1249, %v1241
      %v1498 = vpack.c.b16 %v1250, %v1242
      %v1499 = vpack.c.b16 %v1251, %v1243
      %v1500 = vpack.c.b16 %v1260, %v1252
      %v1501 = vpack.c.b16 %v1261, %v1253
      %v1502 = vpack.c.b16 %v1262, %v1254
      %v1503 = vpack.c.b16 %v1263, %v1255
      %v1504 = vpack.c.b16 %v1264, %v1256
      %v1505 = vpack.c.b16 %v1265, %v1257
      %v1506 = vpack.c.b16 %v1266, %v1258
      %v1507 = vpack.c.b16 %v1267, %v1259
      %v1508 = vpack.c.b16 %v1276, %v1268
      %v1509 = vpack.c.b16 %v1277, %v1269
      %v1510 = vpack.c.b16 %v1278, %v1270
      %v1511 = vpack.c.b16 %v1279, %v1271
      %v1512 = vpack.c.b16 %v1280, %v1272
      %v1513 = vpack.c.b16 %v1281, %v1273
      %v1514 = vpack.c.b16 %v1282, %v1274
      %v1515 = vpack.c.b16 %v1283, %v1275
      %v1516 = vpack.c.b16 %v1292, %v1284
      %v1517 = vpack.c.b16 %v1293, %v1285
      %v1518 = vpack.c.b16 %v1294, %v1286
      %v1519 = vpack.c.b16 %v1295, %v1287
      %v1520 = vpack.c.b16 %v1296, %v1288
      %v1521 = vpack.c.b16 %v1297, %v1289
      %v1522 = vpack.c.b16 %v1298, %v1290
      %v1523 = vpack.c.b16 %v1299, %v1291
      %v1524 = vpack.c.b16 %v1308, %v1300
      %v1525 = vpack.c.b16 %v1309, %v1301
      %v1526 = vpack.c.b16 %v1310, %v1302
      %v1527 = vpack.c.b16 %v1311, %v1303
      %v1528 = vpack.c.b16 %v1312, %v1304
      %v1529 = vpack.c.b16 %v1313, %v1305
      %v1530 = vpack.c.b16 %v1314, %v1306
      %v1531 = vpack.c.b16 %v1315, %v1307
      %v1532 = vpack.c.b16 %v1324, %v1316
      %v1533 = vpack.c.b16 %v1325, %v1317
      %v1534 = vpack.c.b16 %v1326, %v1318
      %v1535 = vpack.c.b16 %v1327, %v1319
      %v1536 = vpack.c.b16 %v1328, %v1320
      %v1537 = vpack.c.b16 %v1329, %v1321
      %v1538 = vpack.c.b16 %v1330, %v1322
      %v1539 = vpack.c.b16 %v1331, %v1323
      %v1540 = vpack.c.b16 %v1340, %v1332
      %v1541 = vpack.c.b16 %v1341, %v1333
      %v1542 = vpack.c.b16 %v1342, %v1334
      %v1543 = vpack.c.b16 %v1343, %v1335
      %v1544 = vpack.c.b16 %v1344, %v1336
      %v1545 = vpack.c.b16 %v1345, %v1337
      %v1546 = vpack.c.b16 %v1346, %v1338
      %v1547 = vpack.c.b16 %v1347, %v1339
      %v1548 = vpack.c.b16 %v1356, %v1348
      %v1549 = vpack.c.b16 %v1357, %v1349
      %v1550 = vpack.c.b16 %v1358, %v1350
      %v1551 = vpack.c.b16 %v1359, %v1351
      %v1552 = vpack.c.b16 %v1360, %v1352
      %v1553 = vpack.c.b16 %v1361, %v1353
      %v1554 = vpack.c.b16 %v1362, %v1354
      %v1555 = vpack.c.b16 %v1363, %v1355
      %v1556 = vpack.c.b16 %v1372, %v1364
      %v1557 = vpack.c.b16 %v1373, %v1365
      %v1558 = vpack.c.b16 %v1374, %v1366
      %v1559 = vpack.c.b16 %v1375, %v1367
      %v1560 = vpack.c.b16 %v1376, %v1368
      %v1561 = vpack.c.b16 %v1377, %v1369
      %v1562 = vpack.c.b16 %v1378, %v1370
      %v1563 = vpack.c.b16 %v1379, %v1371
      %v1564 = vpack.c.b16 %v1388, %v1380
      %v1565 = vpack.c.b16 %v1389, %v1381
      %v1566 = vpack.c.b16 %v1390, %v1382
      %v1567 = vpack.c.b16 %v1391, %v1383
      %v1568 = vpack.c.b16 %v1392, %v1384
      %v1569 = vpack.c.b16 %v1393, %v1385
      %v1570 = vpack.c.b16 %v1394, %v1386
      %v1571 = vpack.c.b16 %v1395, %v1387
      %v1572 = vpack.c.b16 %v1404, %v1396
      %v1573 = vpack.c.b16 %v1405, %v1397
      %v1574 = vpack.c.b16 %v1406, %v1398
      %v1575 = vpack.c.b16 %v1407, %v1399
      %v1576 = vpack.c.b16 %v1408, %v1400
      %v1577 = vpack.c.b16 %v1409, %v1401
      %v1578 = vpack.c.b16 %v1410, %v1402
      %v1579 = vpack.c.b16 %v1411, %v1403
      %v1580 = vpack.c.b16 %v1420, %v1412
      %v1581 = vpack.c.b16 %v1421, %v1413
      %v1582 = vpack.c.b16 %v1422, %v1414
      %v1583 = vpack.c.b16 %v1423, %v1415
      %v1584 = vpack.c.b16 %v1424, %v1416
      %v1585 = vpack.c.b16 %v1425, %v1417
      %v1586 = vpack.c.b16 %v1426, %v1418
      %v1587 = vpack.c.b16 %v1427, %v1419
      %v1588 = vpack.c.b16 %v1436, %v1428
      %v1589 = vpack.c.b16 %v1437, %v1429
      %v1590 = vpack.c.b16 %v1438, %v1430
      %v1591 = vpack.c.b16 %v1439, %v1431
      %v1592 = vpack.c.b16 %v1440, %v1432
      %v1593 = vpack.c.b16 %v1441, %v1433
      %v1594 = vpack.c.b16 %v1442, %v1434
      %v1595 = vpack.c.b16 %v1443, %v1435
      %v1596 = vpack.c.b16 %v1452, %v1444
      %v1597 = vpack.c.b16 %v1453, %v1445
      %v1598 = vpack.c.b16 %v1454, %v1446
      %v1599 = vpack.c.b16 %v1455, %v1447
      %v1600 = vpack.c.b16 %v1456, %v1448
      %v1601 = vpack.c.b16 %v1457, %v1449
      %v1602 = vpack.c.b16 %v1458, %v1450
      %v1603 = vpack.c.b16 %v1459, %v1451
      %v1604 = vpack.c.b16 %v1468, %v1460
      %v1605 = vpack.c.b16 %v1469, %v1461
      %v1606 = vpack.c.b16 %v1470, %v1462
      %v1607 = vpack.c.b16 %v1471, %v1463
      %v1608 = vpack.c.b16 %v1472, %v1464
      %v1609 = vpack.c.b16 %v1473, %v1465
      %v1610 = vpack.c.b16 %v1474, %v1466
      %v1611 = vpack.c.b16 %v1475, %v1467
      %v1612 = vpack.c.b16 %v1484, %v1476
      %v1613 = vpack.c.b16 %v1485, %v1477
      %v1614 = vpack.c.b16 %v1486, %v1478
      %v1615 = vpack.c.b16 %v1487, %v1479
      %v1616 = vpack.c.b16 %v1488, %v1480
      %v1617 = vpack.c.b16 %v1489, %v1481
      %v1618 = vpack.c.b16 %v1490, %v1482
      %v1619 = vpack.c.b16 %v1491, %v1483
      %1748 = vmatprep.subr.bf16.mxu0 %v1493
      %1749 = vmatpush1.bf16.msra.mxu0 %v1492
      %1750 = vmatprep.subr.bf16.mxu0 %v1501
      %1751 = vmatpush1.bf16.msra.mxu0 %v1500
      %1752 = vmatprep.subr.bf16.mxu0 %v1509
      %1753 = vmatpush1.bf16.msra.mxu0 %v1508
      %1754 = vmatprep.subr.bf16.mxu0 %v1517
      %1755 = vmatpush1.bf16.msra.mxu0 %v1516
      %1756 = vmatprep.subr.bf16.mxu0 %v1525
      %1757 = vmatpush1.bf16.msra.mxu0 %v1524
      %1758 = vmatprep.subr.bf16.mxu0 %v1533
      %1759 = vmatpush1.bf16.msra.mxu0 %v1532
      %1760 = vmatprep.subr.bf16.mxu0 %v1541
      %1761 = vmatpush1.bf16.msra.mxu0 %v1540
      %1762 = vmatprep.subr.bf16.mxu0 %v1549
      %1763 = vmatpush1.bf16.msra.mxu0 %v1548
      %1764 = vmatprep.subr.bf16.mxu0 %v1557
      %1765 = vmatpush1.bf16.msra.mxu0 %v1556
      %1766 = vmatprep.subr.bf16.mxu0 %v1565
      %1767 = vmatpush1.bf16.msra.mxu0 %v1564
      %1768 = vmatprep.subr.bf16.mxu0 %v1573
      %1769 = vmatpush1.bf16.msra.mxu0 %v1572
      %1770 = vmatprep.subr.bf16.mxu0 %v1581
      %1771 = vmatpush1.bf16.msra.mxu0 %v1580
      %1772 = vmatprep.subr.bf16.mxu0 %v1589
      %1773 = vmatpush1.bf16.msra.mxu0 %v1588
      %1774 = vmatprep.subr.bf16.mxu0 %v1597
      %1775 = vmatpush1.bf16.msra.mxu0 %v1596
      %1776 = vmatprep.subr.bf16.mxu0 %v1605
      %1777 = vmatpush1.bf16.msra.mxu0 %v1604
      %1778 = vmatprep.subr.bf16.mxu0 %v1613
      %1779 = vmatpush1.bf16.msra.mxu0 %v1612
      %1780 = vmatprep.mubr.bf16.mxu0 %v979
      %1781 = vmatmul.mubr.bf16.gmra.mrb[0].mxu0 %v978
      %v1782 = vpop.f32.mrb[0].mxu0
      %v1783 = vadd.f32 0.0, %v1782
      %v1784 = vpop.f32.mrb[0].mxu0
      %v1785 = vadd.f32 0.0, %v1784
      %v1786 = vpop.f32.mrb[0].mxu0
      %v1787 = vpop.f32.mrb[0].mxu0
      %1788 = vdwg.mxu0
      %1789 = vmatprep.subr.bf16.mxu0 %v1495
      %1790 = vmatpush1.bf16.msra.mxu0 %v1494
      %1791 = vmatprep.subr.bf16.mxu0 %v1503
      %1792 = vmatpush1.bf16.msra.mxu0 %v1502
      %1793 = vmatprep.subr.bf16.mxu0 %v1511
      %1794 = vmatpush1.bf16.msra.mxu0 %v1510
      %1795 = vmatprep.subr.bf16.mxu0 %v1519
      %1796 = vmatpush1.bf16.msra.mxu0 %v1518
      %1797 = vmatprep.subr.bf16.mxu0 %v1527
      %1798 = vmatpush1.bf16.msra.mxu0 %v1526
      %1799 = vmatprep.subr.bf16.mxu0 %v1535
      %1800 = vmatpush1.bf16.msra.mxu0 %v1534
      %1801 = vmatprep.subr.bf16.mxu0 %v1543
      %1802 = vmatpush1.bf16.msra.mxu0 %v1542
      %1803 = vmatprep.subr.bf16.mxu0 %v1551
      %1804 = vmatpush1.bf16.msra.mxu0 %v1550
      %1805 = vmatprep.subr.bf16.mxu0 %v1559
      %1806 = vmatpush1.bf16.msra.mxu0 %v1558
      %1807 = vmatprep.subr.bf16.mxu0 %v1567
      %1808 = vmatpush1.bf16.msra.mxu0 %v1566
      %1809 = vmatprep.subr.bf16.mxu0 %v1575
      %1810 = vmatpush1.bf16.msra.mxu0 %v1574
      %1811 = vmatprep.subr.bf16.mxu0 %v1583
      %1812 = vmatpush1.bf16.msra.mxu0 %v1582
      %1813 = vmatprep.subr.bf16.mxu0 %v1591
      %1814 = vmatpush1.bf16.msra.mxu0 %v1590
      %1815 = vmatprep.subr.bf16.mxu0 %v1599
      %1816 = vmatpush1.bf16.msra.mxu0 %v1598
      %1817 = vmatprep.subr.bf16.mxu0 %v1607
      %1818 = vmatpush1.bf16.msra.mxu0 %v1606
      %1819 = vmatprep.subr.bf16.mxu0 %v1615
      %1820 = vmatpush1.bf16.msra.mxu0 %v1614
      %1821 = vmatprep.mubr.bf16.mxu0 %v979
      %1822 = vmatmul.mubr.bf16.gmra.mrb[0].mxu0 %v978
      %v1823 = vpop.f32.mrb[0].mxu0
      %v1824 = vadd.f32 0.0, %v1823
      %v1825 = vpop.f32.mrb[0].mxu0
      %v1826 = vadd.f32 0.0, %v1825
      %v1827 = vpop.f32.mrb[0].mxu0
      %v1828 = vpop.f32.mrb[0].mxu0
      %1829 = vdwg.mxu0
      %1830 = vmatprep.subr.bf16.mxu0 %v1497
      %1831 = vmatpush1.bf16.msra.mxu0 %v1496
      %1832 = vmatprep.subr.bf16.mxu0 %v1505
      %1833 = vmatpush1.bf16.msra.mxu0 %v1504
      %1834 = vmatprep.subr.bf16.mxu0 %v1513
      %1835 = vmatpush1.bf16.msra.mxu0 %v1512
      %1836 = vmatprep.subr.bf16.mxu0 %v1521
      %1837 = vmatpush1.bf16.msra.mxu0 %v1520
      %1838 = vmatprep.subr.bf16.mxu0 %v1529
      %1839 = vmatpush1.bf16.msra.mxu0 %v1528
      %1840 = vmatprep.subr.bf16.mxu0 %v1537
      %1841 = vmatpush1.bf16.msra.mxu0 %v1536
      %1842 = vmatprep.subr.bf16.mxu0 %v1545
      %1843 = vmatpush1.bf16.msra.mxu0 %v1544
      %1844 = vmatprep.subr.bf16.mxu0 %v1553
      %1845 = vmatpush1.bf16.msra.mxu0 %v1552
      %1846 = vmatprep.subr.bf16.mxu0 %v1561
      %1847 = vmatpush1.bf16.msra.mxu0 %v1560
      %1848 = vmatprep.subr.bf16.mxu0 %v1569
      %1849 = vmatpush1.bf16.msra.mxu0 %v1568
      %1850 = vmatprep.subr.bf16.mxu0 %v1577
      %1851 = vmatpush1.bf16.msra.mxu0 %v1576
      %1852 = vmatprep.subr.bf16.mxu0 %v1585
      %1853 = vmatpush1.bf16.msra.mxu0 %v1584
      %1854 = vmatprep.subr.bf16.mxu0 %v1593
      %1855 = vmatpush1.bf16.msra.mxu0 %v1592
      %1856 = vmatprep.subr.bf16.mxu0 %v1601
      %1857 = vmatpush1.bf16.msra.mxu0 %v1600
      %1858 = vmatprep.subr.bf16.mxu0 %v1609
      %1859 = vmatpush1.bf16.msra.mxu0 %v1608
      %1860 = vmatprep.subr.bf16.mxu0 %v1617
      %1861 = vmatpush1.bf16.msra.mxu0 %v1616
      %1862 = vmatprep.mubr.bf16.mxu0 %v979
      %1863 = vmatmul.mubr.bf16.gmra.mrb[0].mxu0 %v978
      %v1864 = vpop.f32.mrb[0].mxu0
      %v1865 = vadd.f32 0.0, %v1864
      %v1866 = vpop.f32.mrb[0].mxu0
      %v1867 = vadd.f32 0.0, %v1866
      %v1868 = vpop.f32.mrb[0].mxu0
      %v1869 = vpop.f32.mrb[0].mxu0
      %1870 = vdwg.mxu0
      %1871 = vmatprep.subr.bf16.mxu0 %v1499
      %1872 = vmatpush1.bf16.msra.mxu0 %v1498
      %1873 = vmatprep.subr.bf16.mxu0 %v1507
      %1874 = vmatpush1.bf16.msra.mxu0 %v1506
      %1875 = vmatprep.subr.bf16.mxu0 %v1515
      %1876 = vmatpush1.bf16.msra.mxu0 %v1514
      %1877 = vmatprep.subr.bf16.mxu0 %v1523
      %1878 = vmatpush1.bf16.msra.mxu0 %v1522
      %1879 = vmatprep.subr.bf16.mxu0 %v1531
      %1880 = vmatpush1.bf16.msra.mxu0 %v1530
      %1881 = vmatprep.subr.bf16.mxu0 %v1539
      %1882 = vmatpush1.bf16.msra.mxu0 %v1538
      %1883 = vmatprep.subr.bf16.mxu0 %v1547
      %1884 = vmatpush1.bf16.msra.mxu0 %v1546
      %1885 = vmatprep.subr.bf16.mxu0 %v1555
      %1886 = vmatpush1.bf16.msra.mxu0 %v1554
      %1887 = vmatprep.subr.bf16.mxu0 %v1563
      %1888 = vmatpush1.bf16.msra.mxu0 %v1562
      %1889 = vmatprep.subr.bf16.mxu0 %v1571
      %1890 = vmatpush1.bf16.msra.mxu0 %v1570
      %1891 = vmatprep.subr.bf16.mxu0 %v1579
      %1892 = vmatpush1.bf16.msra.mxu0 %v1578
      %1893 = vmatprep.subr.bf16.mxu0 %v1587
      %1894 = vmatpush1.bf16.msra.mxu0 %v1586
      %1895 = vmatprep.subr.bf16.mxu0 %v1595
      %1896 = vmatpush1.bf16.msra.mxu0 %v1594
      %1897 = vmatprep.subr.bf16.mxu0 %v1603
      %1898 = vmatpush1.bf16.msra.mxu0 %v1602
      %1899 = vmatprep.subr.bf16.mxu0 %v1611
      %1900 = vmatpush1.bf16.msra.mxu0 %v1610
      %1901 = vmatprep.subr.bf16.mxu0 %v1619
      %1902 = vmatpush1.bf16.msra.mxu0 %v1618
      %1903 = vmatprep.mubr.bf16.mxu0 %v979
      %1904 = vmatmul.mubr.bf16.gmra.mrb[0].mxu0 %v978
      %v1905 = vpop.f32.mrb[0].mxu0
      %v1906 = vadd.f32 0.0, %v1905
      %v1907 = vpop.f32.mrb[0].mxu0
      %v1908 = vadd.f32 0.0, %v1907
      %v1909 = vpop.f32.mrb[0].mxu0
      %v1910 = vpop.f32.mrb[0].mxu0
      %1911 = vdwg.mxu0
      %v1912 = vadd.f32 %v970, %v1783
      %v1913 = vadd.f32 %v971, %v1785
      %v1914 = vadd.f32 %v972, %v1824
      %v1915 = vadd.f32 %v973, %v1826
      %v1916 = vadd.f32 %v974, %v1865
      %v1917 = vadd.f32 %v975, %v1867
      %v1918 = vadd.f32 %v976, %v1906
      %v1919 = vadd.f32 %v977, %v1908
      %v1920 = vsub.f32 0.0, %v1912
      %v1921 = vsub.f32 0.0, %v1913
      %v1922 = vmul.f32 %v1920, 1.442695
      %v1923 = vpow.pop %v1922
      %v1924 = vmul.f32 %v1921, 1.442695
      %v1925 = vpow.pop %v1924
      %v1926 = vadd.f32 %v1923, 1.0
      %v1927 = vadd.f32 %v1925, 1.0
      %v1928 = vrcp.pop %v1926
      %v1929 = vmul.f32 1.0, %v1928
      %v1930 = vrcp.pop %v1927
      %v1931 = vmul.f32 1.0, %v1930
      %v1932 = vsub.f32 0.0, %v1914
      %v1933 = vsub.f32 0.0, %v1915
      %v1934 = vmul.f32 %v1932, 1.442695
      %v1935 = vpow.pop %v1934
      %v1936 = vmul.f32 %v1933, 1.442695
      %v1937 = vpow.pop %v1936
      %v1938 = vadd.f32 %v1935, 1.0
      %v1939 = vadd.f32 %v1937, 1.0
      %v1940 = vrcp.pop %v1938
      %v1941 = vmul.f32 1.0, %v1940
      %v1942 = vrcp.pop %v1939
      %v1943 = vmul.f32 1.0, %v1942
      %v1944 = vtanh.pop %v1916
      %v1945 = vtanh.pop %v1917
      %v1946 = vsub.f32 0.0, %v1918
      %v1947 = vsub.f32 0.0, %v1919
      %v1948 = vmul.f32 %v1946, 1.442695
      %v1949 = vpow.pop %v1948
      %v1950 = vmul.f32 %v1947, 1.442695
      %v1951 = vpow.pop %v1950
      %v1952 = vadd.f32 %v1949, 1.0
      %v1953 = vadd.f32 %v1951, 1.0
      %v1954 = vrcp.pop %v1952
      %v1955 = vmul.f32 1.0, %v1954
      %v1956 = vrcp.pop %v1953
      %v1957 = vmul.f32 1.0, %v1956
      %v1958 = vmul.f32 %v1941, %v965
      %v1959 = vmul.f32 %v1943, %v966
      %v1960 = vmul.f32 %v1929, %v1944
      %v1961 = vmul.f32 %v1931, %v1945
      %v1962 = vadd.f32 %v1958, %v1960
      %v1963 = vadd.f32 %v1959, %v1961
      %v1964 = vtanh.pop %v1962
      %v1965 = vtanh.pop %v1963
      %v1966 = vmul.f32 %v1955, %v1964
      %v1967 = vmul.f32 %v1957, %v1965
      %s1968 = smul.u32 %s958, 2
      %s1969 = smul.addr %s1968, 8
      %s1970 = scalar_lea.vmem [#allocation3], %s1969
      %1971 = vst [vmem:[%s1970] sm:$0xff] %v1966
      %1972 = vst [vmem:[%s1970 + $0x8] sm:$0xff] %v1967
    $region74: #{tpu_custom_call.1} parent=1 // loop_footer
      %s962 = sadd.s32 1, %s958
    $region75: #{tpu_custom_call.1} parent=1 // loop_footer_branch
      %957 = sbr.rel target = $region71
    $region76: #{tpu_custom_call.1} parent=1 // loop_exit
      _
    %s1973 = scalar_lea.vmem [#allocation14], 8
    %v1974 = vld [vmem:[%s1973] sm:$0xff]
    %v1975 = vld [vmem:[#allocation3] sm:$0xff]
    %v1976 = vld [vmem:[#allocation3 + $0x8] sm:$0xff]
    %v1977 = vld [vmem:[#allocation3 + $0x10] sm:$0xff]
    %v1978 = vld [vmem:[#allocation3 + $0x18] sm:$0xff]
    %v1979 = vld [vmem:[#allocation3 + $0x20] sm:$0xff]
    %v1980 = vld [vmem:[#allocation3 + $0x28] sm:$0xff]
    %v1981 = vld [vmem:[#allocation3 + $0x30] sm:$0xff]
    %v1982 = vld [vmem:[#allocation3 + $0x38] sm:$0xff]
    %v1983 = vld [vmem:[#allocation3 + $0x40] sm:$0xff]
    %v1984 = vld [vmem:[#allocation3 + $0x48] sm:$0xff]
    %v1985 = vld [vmem:[#allocation3 + $0x50] sm:$0xff]
    %v1986 = vld [vmem:[#allocation3 + $0x58] sm:$0xff]
    %v1987 = vld [vmem:[#allocation3 + $0x60] sm:$0xff]
    %v1988 = vld [vmem:[#allocation3 + $0x68] sm:$0xff]
    %v1989 = vld [vmem:[#allocation3 + $0x70] sm:$0xff]
    %v1990 = vld [vmem:[#allocation3 + $0x78] sm:$0xff]
    %v1991 = vld [vmem:[#allocation3 + $0x80] sm:$0xff]
    %v1992 = vld [vmem:[#allocation3 + $0x88] sm:$0xff]
    %v1993 = vld [vmem:[#allocation3 + $0x90] sm:$0xff]
    %v1994 = vld [vmem:[#allocation3 + $0x98] sm:$0xff]
    %v1995 = vld [vmem:[#allocation3 + $0xa0] sm:$0xff]
    %v1996 = vld [vmem:[#allocation3 + $0xa8] sm:$0xff]
    %v1997 = vld [vmem:[#allocation3 + $0xb0] sm:$0xff]
    %v1998 = vld [vmem:[#allocation3 + $0xb8] sm:$0xff]
    %v1999 = vld [vmem:[#allocation3 + $0xc0] sm:$0xff]
    %v2000 = vld [vmem:[#allocation3 + $0xc8] sm:$0xff]
    %v2001 = vld [vmem:[#allocation3 + $0xd0] sm:$0xff]
    %v2002 = vld [vmem:[#allocation3 + $0xd8] sm:$0xff]
    %v2003 = vld [vmem:[#allocation3 + $0xe0] sm:$0xff]
    %v2004 = vld [vmem:[#allocation3 + $0xe8] sm:$0xff]
    %v2005 = vld [vmem:[#allocation3 + $0xf0] sm:$0xff]
    %v2006 = vld [vmem:[#allocation3 + $0xf8] sm:$0xff]
    %v2007 = vpack.c.bf16 %v1977, %v1975
    %v2008 = vpack.c.bf16 %v1978, %v1976
    %v2009 = vpack.c.bf16 %v1981, %v1979
    %v2010 = vpack.c.bf16 %v1982, %v1980
    %v2011 = vpack.c.bf16 %v1985, %v1983
    %v2012 = vpack.c.bf16 %v1986, %v1984
    %v2013 = vpack.c.bf16 %v1989, %v1987
    %v2014 = vpack.c.bf16 %v1990, %v1988
    %v2015 = vpack.c.bf16 %v1993, %v1991
    %v2016 = vpack.c.bf16 %v1994, %v1992
    %v2017 = vpack.c.bf16 %v1997, %v1995
    %v2018 = vpack.c.bf16 %v1998, %v1996
    %v2019 = vpack.c.bf16 %v2001, %v1999
    %v2020 = vpack.c.bf16 %v2002, %v2000
    %v2021 = vpack.c.bf16 %v2005, %v2003
    %v2022 = vpack.c.bf16 %v2006, %v2004
    %v2023 = vld [vmem:[#allocation11] sm:$0xff]
    %v2024 = vld [vmem:[#allocation11 + $0x8] sm:$0xff]
    %v2025 = vld [vmem:[#allocation11 + $0x10] sm:$0xff]
    %v2026 = vld [vmem:[#allocation11 + $0x18] sm:$0xff]
    %v2027 = vld [vmem:[#allocation11 + $0x20] sm:$0xff]
    %v2028 = vld [vmem:[#allocation11 + $0x28] sm:$0xff]
    %v2029 = vld [vmem:[#allocation11 + $0x30] sm:$0xff]
    %v2030 = vld [vmem:[#allocation11 + $0x38] sm:$0xff]
    %v2031 = vld [vmem:[#allocation11 + $0x40] sm:$0xff]
    %v2032 = vld [vmem:[#allocation11 + $0x48] sm:$0xff]
    %v2033 = vld [vmem:[#allocation11 + $0x50] sm:$0xff]
    %v2034 = vld [vmem:[#allocation11 + $0x58] sm:$0xff]
    %v2035 = vld [vmem:[#allocation11 + $0x60] sm:$0xff]
    %v2036 = vld [vmem:[#allocation11 + $0x68] sm:$0xff]
    %v2037 = vld [vmem:[#allocation11 + $0x70] sm:$0xff]
    %v2038 = vld [vmem:[#allocation11 + $0x78] sm:$0xff]
    %v2039 = vld [vmem:[#allocation11 + $0x80] sm:$0xff]
    %v2040 = vld [vmem:[#allocation11 + $0x88] sm:$0xff]
    %v2041 = vld [vmem:[#allocation11 + $0x90] sm:$0xff]
    %v2042 = vld [vmem:[#allocation11 + $0x98] sm:$0xff]
    %v2043 = vld [vmem:[#allocation11 + $0xa0] sm:$0xff]
    %v2044 = vld [vmem:[#allocation11 + $0xa8] sm:$0xff]
    %v2045 = vld [vmem:[#allocation11 + $0xb0] sm:$0xff]
    %v2046 = vld [vmem:[#allocation11 + $0xb8] sm:$0xff]
    %v2047 = vld [vmem:[#allocation11 + $0xc0] sm:$0xff]
    %v2048 = vld [vmem:[#allocation11 + $0xc8] sm:$0xff]
    %v2049 = vld [vmem:[#allocation11 + $0xd0] sm:$0xff]
    %v2050 = vld [vmem:[#allocation11 + $0xd8] sm:$0xff]
    %v2051 = vld [vmem:[#allocation11 + $0xe0] sm:$0xff]
    %v2052 = vld [vmem:[#allocation11 + $0xe8] sm:$0xff]
    %v2053 = vld [vmem:[#allocation11 + $0xf0] sm:$0xff]
    %v2054 = vld [vmem:[#allocation11 + $0xf8] sm:$0xff]
    %v2055 = vld [vmem:[#allocation11 + $0x100] sm:$0xff]
    %v2056 = vld [vmem:[#allocation11 + $0x108] sm:$0xff]
    %v2057 = vld [vmem:[#allocation11 + $0x110] sm:$0xff]
    %v2058 = vld [vmem:[#allocation11 + $0x118] sm:$0xff]
    %v2059 = vld [vmem:[#allocation11 + $0x120] sm:$0xff]
    %v2060 = vld [vmem:[#allocation11 + $0x128] sm:$0xff]
    %v2061 = vld [vmem:[#allocation11 + $0x130] sm:$0xff]
    %v2062 = vld [vmem:[#allocation11 + $0x138] sm:$0xff]
    %v2063 = vld [vmem:[#allocation11 + $0x140] sm:$0xff]
    %v2064 = vld [vmem:[#allocation11 + $0x148] sm:$0xff]
    %v2065 = vld [vmem:[#allocation11 + $0x150] sm:$0xff]
    %v2066 = vld [vmem:[#allocation11 + $0x158] sm:$0xff]
    %v2067 = vld [vmem:[#allocation11 + $0x160] sm:$0xff]
    %v2068 = vld [vmem:[#allocation11 + $0x168] sm:$0xff]
    %v2069 = vld [vmem:[#allocation11 + $0x170] sm:$0xff]
    %v2070 = vld [vmem:[#allocation11 + $0x178] sm:$0xff]
    %v2071 = vld [vmem:[#allocation11 + $0x180] sm:$0xff]
    %v2072 = vld [vmem:[#allocation11 + $0x188] sm:$0xff]
    %v2073 = vld [vmem:[#allocation11 + $0x190] sm:$0xff]
    %v2074 = vld [vmem:[#allocation11 + $0x198] sm:$0xff]
    %v2075 = vld [vmem:[#allocation11 + $0x1a0] sm:$0xff]
    %v2076 = vld [vmem:[#allocation11 + $0x1a8] sm:$0xff]
    %v2077 = vld [vmem:[#allocation11 + $0x1b0] sm:$0xff]
    %v2078 = vld [vmem:[#allocation11 + $0x1b8] sm:$0xff]
    %v2079 = vld [vmem:[#allocation11 + $0x1c0] sm:$0xff]
    %v2080 = vld [vmem:[#allocation11 + $0x1c8] sm:$0xff]
    %v2081 = vld [vmem:[#allocation11 + $0x1d0] sm:$0xff]
    %v2082 = vld [vmem:[#allocation11 + $0x1d8] sm:$0xff]
    %v2083 = vld [vmem:[#allocation11 + $0x1e0] sm:$0xff]
    %v2084 = vld [vmem:[#allocation11 + $0x1e8] sm:$0xff]
    %v2085 = vld [vmem:[#allocation11 + $0x1f0] sm:$0xff]
    %v2086 = vld [vmem:[#allocation11 + $0x1f8] sm:$0xff]
    %v2087 = vld [vmem:[#allocation11 + $0x200] sm:$0xff]
    %v2088 = vld [vmem:[#allocation11 + $0x208] sm:$0xff]
    %v2089 = vld [vmem:[#allocation11 + $0x210] sm:$0xff]
    %v2090 = vld [vmem:[#allocation11 + $0x218] sm:$0xff]
    %v2091 = vld [vmem:[#allocation11 + $0x220] sm:$0xff]
    %v2092 = vld [vmem:[#allocation11 + $0x228] sm:$0xff]
    %v2093 = vld [vmem:[#allocation11 + $0x230] sm:$0xff]
    %v2094 = vld [vmem:[#allocation11 + $0x238] sm:$0xff]
    %v2095 = vld [vmem:[#allocation11 + $0x240] sm:$0xff]
    %v2096 = vld [vmem:[#allocation11 + $0x248] sm:$0xff]
    %v2097 = vld [vmem:[#allocation11 + $0x250] sm:$0xff]
    %v2098 = vld [vmem:[#allocation11 + $0x258] sm:$0xff]
    %v2099 = vld [vmem:[#allocation11 + $0x260] sm:$0xff]
    %v2100 = vld [vmem:[#allocation11 + $0x268] sm:$0xff]
    %v2101 = vld [vmem:[#allocation11 + $0x270] sm:$0xff]
    %v2102 = vld [vmem:[#allocation11 + $0x278] sm:$0xff]
    %v2103 = vld [vmem:[#allocation11 + $0x280] sm:$0xff]
    %v2104 = vld [vmem:[#allocation11 + $0x288] sm:$0xff]
    %v2105 = vld [vmem:[#allocation11 + $0x290] sm:$0xff]
    %v2106 = vld [vmem:[#allocation11 + $0x298] sm:$0xff]
    %v2107 = vld [vmem:[#allocation11 + $0x2a0] sm:$0xff]
    %v2108 = vld [vmem:[#allocation11 + $0x2a8] sm:$0xff]
    %v2109 = vld [vmem:[#allocation11 + $0x2b0] sm:$0xff]
    %v2110 = vld [vmem:[#allocation11 + $0x2b8] sm:$0xff]
    %v2111 = vld [vmem:[#allocation11 + $0x2c0] sm:$0xff]
    %v2112 = vld [vmem:[#allocation11 + $0x2c8] sm:$0xff]
    %v2113 = vld [vmem:[#allocation11 + $0x2d0] sm:$0xff]
    %v2114 = vld [vmem:[#allocation11 + $0x2d8] sm:$0xff]
    %v2115 = vld [vmem:[#allocation11 + $0x2e0] sm:$0xff]
    %v2116 = vld [vmem:[#allocation11 + $0x2e8] sm:$0xff]
    %v2117 = vld [vmem:[#allocation11 + $0x2f0] sm:$0xff]
    %v2118 = vld [vmem:[#allocation11 + $0x2f8] sm:$0xff]
    %v2119 = vld [vmem:[#allocation11 + $0x300] sm:$0xff]
    %v2120 = vld [vmem:[#allocation11 + $0x308] sm:$0xff]
    %v2121 = vld [vmem:[#allocation11 + $0x310] sm:$0xff]
    %v2122 = vld [vmem:[#allocation11 + $0x318] sm:$0xff]
    %v2123 = vld [vmem:[#allocation11 + $0x320] sm:$0xff]
    %v2124 = vld [vmem:[#allocation11 + $0x328] sm:$0xff]
    %v2125 = vld [vmem:[#allocation11 + $0x330] sm:$0xff]
    %v2126 = vld [vmem:[#allocation11 + $0x338] sm:$0xff]
    %v2127 = vld [vmem:[#allocation11 + $0x340] sm:$0xff]
    %v2128 = vld [vmem:[#allocation11 + $0x348] sm:$0xff]
    %v2129 = vld [vmem:[#allocation11 + $0x350] sm:$0xff]
    %v2130 = vld [vmem:[#allocation11 + $0x358] sm:$0xff]
    %v2131 = vld [vmem:[#allocation11 + $0x360] sm:$0xff]
    %v2132 = vld [vmem:[#allocation11 + $0x368] sm:$0xff]
    %v2133 = vld [vmem:[#allocation11 + $0x370] sm:$0xff]
    %v2134 = vld [vmem:[#allocation11 + $0x378] sm:$0xff]
    %v2135 = vld [vmem:[#allocation11 + $0x380] sm:$0xff]
    %v2136 = vld [vmem:[#allocation11 + $0x388] sm:$0xff]
    %v2137 = vld [vmem:[#allocation11 + $0x390] sm:$0xff]
    %v2138 = vld [vmem:[#allocation11 + $0x398] sm:$0xff]
    %v2139 = vld [vmem:[#allocation11 + $0x3a0] sm:$0xff]
    %v2140 = vld [vmem:[#allocation11 + $0x3a8] sm:$0xff]
    %v2141 = vld [vmem:[#allocation11 + $0x3b0] sm:$0xff]
    %v2142 = vld [vmem:[#allocation11 + $0x3b8] sm:$0xff]
    %v2143 = vld [vmem:[#allocation11 + $0x3c0] sm:$0xff]
    %v2144 = vld [vmem:[#allocation11 + $0x3c8] sm:$0xff]
    %v2145 = vld [vmem:[#allocation11 + $0x3d0] sm:$0xff]
    %v2146 = vld [vmem:[#allocation11 + $0x3d8] sm:$0xff]
    %v2147 = vld [vmem:[#allocation11 + $0x3e0] sm:$0xff]
    %v2148 = vld [vmem:[#allocation11 + $0x3e8] sm:$0xff]
    %v2149 = vld [vmem:[#allocation11 + $0x3f0] sm:$0xff]
    %v2150 = vld [vmem:[#allocation11 + $0x3f8] sm:$0xff]
    %v2152 = vlaneseq
    %v2153 = vshrl.u32 %v2152, 7
    %v2154 = vsub.s32 0, %v2153
    %v2155 = vrot.slane %v1974, %v2154
    %v2156 = vlaneseq
    %v2157 = vshrl.u32 %v2156, 7
    %v2158 = vsub.s32 1, %v2157
    %v2159 = vrot.slane %v1974, %v2158
    %v2160 = vlaneseq
    %v2161 = vshrl.u32 %v2160, 7
    %v2162 = vsub.s32 2, %v2161
    %v2163 = vrot.slane %v1974, %v2162
    %v2164 = vlaneseq
    %v2165 = vshrl.u32 %v2164, 7
    %v2166 = vsub.s32 3, %v2165
    %v2167 = vrot.slane %v1974, %v2166
    %v2168 = vlaneseq
    %v2169 = vshrl.u32 %v2168, 7
    %v2170 = vsub.s32 4, %v2169
    %v2171 = vrot.slane %v1974, %v2170
    %v2172 = vlaneseq
    %v2173 = vshrl.u32 %v2172, 7
    %v2174 = vsub.s32 5, %v2173
    %v2175 = vrot.slane %v1974, %v2174
    %v2176 = vlaneseq
    %v2177 = vshrl.u32 %v2176, 7
    %v2178 = vsub.s32 6, %v2177
    %v2179 = vrot.slane %v1974, %v2178
    %v2180 = vlaneseq
    %v2181 = vshrl.u32 %v2180, 7
    %v2182 = vsub.s32 7, %v2181
    %v2183 = vrot.slane %v1974, %v2182
    %v2320 = vunpack.c.l.b16 %v2023
    %v2321 = vunpack.c.h.b16 %v2023
    %v2322 = vunpack.c.l.b16 %v2024
    %v2323 = vunpack.c.h.b16 %v2024
    %v2324 = vunpack.c.l.b16 %v2025
    %v2325 = vunpack.c.h.b16 %v2025
    %v2326 = vunpack.c.l.b16 %v2026
    %v2327 = vunpack.c.h.b16 %v2026
    %v2328 = vunpack.c.l.b16 %v2027
    %v2329 = vunpack.c.h.b16 %v2027
    %v2330 = vunpack.c.l.b16 %v2028
    %v2331 = vunpack.c.h.b16 %v2028
    %v2332 = vunpack.c.l.b16 %v2029
    %v2333 = vunpack.c.h.b16 %v2029
    %v2334 = vunpack.c.l.b16 %v2030
    %v2335 = vunpack.c.h.b16 %v2030
    %v2336 = vunpack.c.l.b16 %v2031
    %v2337 = vunpack.c.h.b16 %v2031
    %v2338 = vunpack.c.l.b16 %v2032
    %v2339 = vunpack.c.h.b16 %v2032
    %v2340 = vunpack.c.l.b16 %v2033
    %v2341 = vunpack.c.h.b16 %v2033
    %v2342 = vunpack.c.l.b16 %v2034
    %v2343 = vunpack.c.h.b16 %v2034
    %v2344 = vunpack.c.l.b16 %v2035
    %v2345 = vunpack.c.h.b16 %v2035
    %v2346 = vunpack.c.l.b16 %v2036
    %v2347 = vunpack.c.h.b16 %v2036
    %v2348 = vunpack.c.l.b16 %v2037
    %v2349 = vunpack.c.h.b16 %v2037
    %v2350 = vunpack.c.l.b16 %v2038
    %v2351 = vunpack.c.h.b16 %v2038
    %v2352 = vunpack.c.l.b16 %v2039
    %v2353 = vunpack.c.h.b16 %v2039
    %v2354 = vunpack.c.l.b16 %v2040
    %v2355 = vunpack.c.h.b16 %v2040
    %v2356 = vunpack.c.l.b16 %v2041
    %v2357 = vunpack.c.h.b16 %v2041
    %v2358 = vunpack.c.l.b16 %v2042
    %v2359 = vunpack.c.h.b16 %v2042
    %v2360 = vunpack.c.l.b16 %v2043
    %v2361 = vunpack.c.h.b16 %v2043
    %v2362 = vunpack.c.l.b16 %v2044
    %v2363 = vunpack.c.h.b16 %v2044
    %v2364 = vunpack.c.l.b16 %v2045
    %v2365 = vunpack.c.h.b16 %v2045
    %v2366 = vunpack.c.l.b16 %v2046
    %v2367 = vunpack.c.h.b16 %v2046
    %v2368 = vunpack.c.l.b16 %v2047
    %v2369 = vunpack.c.h.b16 %v2047
    %v2370 = vunpack.c.l.b16 %v2048
    %v2371 = vunpack.c.h.b16 %v2048
    %v2372 = vunpack.c.l.b16 %v2049
    %v2373 = vunpack.c.h.b16 %v2049
    %v2374 = vunpack.c.l.b16 %v2050
    %v2375 = vunpack.c.h.b16 %v2050
    %v2376 = vunpack.c.l.b16 %v2051
    %v2377 = vunpack.c.h.b16 %v2051
    %v2378 = vunpack.c.l.b16 %v2052
    %v2379 = vunpack.c.h.b16 %v2052
    %v2380 = vunpack.c.l.b16 %v2053
    %v2381 = vunpack.c.h.b16 %v2053
    %v2382 = vunpack.c.l.b16 %v2054
    %v2383 = vunpack.c.h.b16 %v2054
    %v2384 = vunpack.c.l.b16 %v2055
    %v2385 = vunpack.c.h.b16 %v2055
    %v2386 = vunpack.c.l.b16 %v2056
    %v2387 = vunpack.c.h.b16 %v2056
    %v2388 = vunpack.c.l.b16 %v2057
    %v2389 = vunpack.c.h.b16 %v2057
    %v2390 = vunpack.c.l.b16 %v2058
    %v2391 = vunpack.c.h.b16 %v2058
    %v2392 = vunpack.c.l.b16 %v2059
    %v2393 = vunpack.c.h.b16 %v2059
    %v2394 = vunpack.c.l.b16 %v2060
    %v2395 = vunpack.c.h.b16 %v2060
    %v2396 = vunpack.c.l.b16 %v2061
    %v2397 = vunpack.c.h.b16 %v2061
    %v2398 = vunpack.c.l.b16 %v2062
    %v2399 = vunpack.c.h.b16 %v2062
    %v2400 = vunpack.c.l.b16 %v2063
    %v2401 = vunpack.c.h.b16 %v2063
    %v2402 = vunpack.c.l.b16 %v2064
    %v2403 = vunpack.c.h.b16 %v2064
    %v2404 = vunpack.c.l.b16 %v2065
    %v2405 = vunpack.c.h.b16 %v2065
    %v2406 = vunpack.c.l.b16 %v2066
    %v2407 = vunpack.c.h.b16 %v2066
    %v2408 = vunpack.c.l.b16 %v2067
    %v2409 = vunpack.c.h.b16 %v2067
    %v2410 = vunpack.c.l.b16 %v2068
    %v2411 = vunpack.c.h.b16 %v2068
    %v2412 = vunpack.c.l.b16 %v2069
    %v2413 = vunpack.c.h.b16 %v2069
    %v2414 = vunpack.c.l.b16 %v2070
    %v2415 = vunpack.c.h.b16 %v2070
    %v2416 = vunpack.c.l.b16 %v2071
    %v2417 = vunpack.c.h.b16 %v2071
    %v2418 = vunpack.c.l.b16 %v2072
    %v2419 = vunpack.c.h.b16 %v2072
    %v2420 = vunpack.c.l.b16 %v2073
    %v2421 = vunpack.c.h.b16 %v2073
    %v2422 = vunpack.c.l.b16 %v2074
    %v2423 = vunpack.c.h.b16 %v2074
    %v2424 = vunpack.c.l.b16 %v2075
    %v2425 = vunpack.c.h.b16 %v2075
    %v2426 = vunpack.c.l.b16 %v2076
    %v2427 = vunpack.c.h.b16 %v2076
    %v2428 = vunpack.c.l.b16 %v2077
    %v2429 = vunpack.c.h.b16 %v2077
    %v2430 = vunpack.c.l.b16 %v2078
    %v2431 = vunpack.c.h.b16 %v2078
    %v2432 = vunpack.c.l.b16 %v2079
    %v2433 = vunpack.c.h.b16 %v2079
    %v2434 = vunpack.c.l.b16 %v2080
    %v2435 = vunpack.c.h.b16 %v2080
    %v2436 = vunpack.c.l.b16 %v2081
    %v2437 = vunpack.c.h.b16 %v2081
    %v2438 = vunpack.c.l.b16 %v2082
    %v2439 = vunpack.c.h.b16 %v2082
    %v2440 = vunpack.c.l.b16 %v2083
    %v2441 = vunpack.c.h.b16 %v2083
    %v2442 = vunpack.c.l.b16 %v2084
    %v2443 = vunpack.c.h.b16 %v2084
    %v2444 = vunpack.c.l.b16 %v2085
    %v2445 = vunpack.c.h.b16 %v2085
    %v2446 = vunpack.c.l.b16 %v2086
    %v2447 = vunpack.c.h.b16 %v2086
    %v2448 = vunpack.c.l.b16 %v2087
    %v2449 = vunpack.c.h.b16 %v2087
    %v2450 = vunpack.c.l.b16 %v2088
    %v2451 = vunpack.c.h.b16 %v2088
    %v2452 = vunpack.c.l.b16 %v2089
    %v2453 = vunpack.c.h.b16 %v2089
    %v2454 = vunpack.c.l.b16 %v2090
    %v2455 = vunpack.c.h.b16 %v2090
    %v2456 = vunpack.c.l.b16 %v2091
    %v2457 = vunpack.c.h.b16 %v2091
    %v2458 = vunpack.c.l.b16 %v2092
    %v2459 = vunpack.c.h.b16 %v2092
    %v2460 = vunpack.c.l.b16 %v2093
    %v2461 = vunpack.c.h.b16 %v2093
    %v2462 = vunpack.c.l.b16 %v2094
    %v2463 = vunpack.c.h.b16 %v2094
    %v2464 = vunpack.c.l.b16 %v2095
    %v2465 = vunpack.c.h.b16 %v2095
    %v2466 = vunpack.c.l.b16 %v2096
    %v2467 = vunpack.c.h.b16 %v2096
    %v2468 = vunpack.c.l.b16 %v2097
    %v2469 = vunpack.c.h.b16 %v2097
    %v2470 = vunpack.c.l.b16 %v2098
    %v2471 = vunpack.c.h.b16 %v2098
    %v2472 = vunpack.c.l.b16 %v2099
    %v2473 = vunpack.c.h.b16 %v2099
    %v2474 = vunpack.c.l.b16 %v2100
    %v2475 = vunpack.c.h.b16 %v2100
    %v2476 = vunpack.c.l.b16 %v2101
    %v2477 = vunpack.c.h.b16 %v2101
    %v2478 = vunpack.c.l.b16 %v2102
    %v2479 = vunpack.c.h.b16 %v2102
    %v2480 = vunpack.c.l.b16 %v2103
    %v2481 = vunpack.c.h.b16 %v2103
    %v2482 = vunpack.c.l.b16 %v2104
    %v2483 = vunpack.c.h.b16 %v2104
    %v2484 = vunpack.c.l.b16 %v2105
    %v2485 = vunpack.c.h.b16 %v2105
    %v2486 = vunpack.c.l.b16 %v2106
    %v2487 = vunpack.c.h.b16 %v2106
    %v2488 = vunpack.c.l.b16 %v2107
    %v2489 = vunpack.c.h.b16 %v2107
    %v2490 = vunpack.c.l.b16 %v2108
    %v2491 = vunpack.c.h.b16 %v2108
    %v2492 = vunpack.c.l.b16 %v2109
    %v2493 = vunpack.c.h.b16 %v2109
    %v2494 = vunpack.c.l.b16 %v2110
    %v2495 = vunpack.c.h.b16 %v2110
    %v2496 = vunpack.c.l.b16 %v2111
    %v2497 = vunpack.c.h.b16 %v2111
    %v2498 = vunpack.c.l.b16 %v2112
    %v2499 = vunpack.c.h.b16 %v2112
    %v2500 = vunpack.c.l.b16 %v2113
    %v2501 = vunpack.c.h.b16 %v2113
    %v2502 = vunpack.c.l.b16 %v2114
    %v2503 = vunpack.c.h.b16 %v2114
    %v2504 = vunpack.c.l.b16 %v2115
    %v2505 = vunpack.c.h.b16 %v2115
    %v2506 = vunpack.c.l.b16 %v2116
    %v2507 = vunpack.c.h.b16 %v2116
    %v2508 = vunpack.c.l.b16 %v2117
    %v2509 = vunpack.c.h.b16 %v2117
    %v2510 = vunpack.c.l.b16 %v2118
    %v2511 = vunpack.c.h.b16 %v2118
    %v2512 = vunpack.c.l.b16 %v2119
    %v2513 = vunpack.c.h.b16 %v2119
    %v2514 = vunpack.c.l.b16 %v2120
    %v2515 = vunpack.c.h.b16 %v2120
    %v2516 = vunpack.c.l.b16 %v2121
    %v2517 = vunpack.c.h.b16 %v2121
    %v2518 = vunpack.c.l.b16 %v2122
    %v2519 = vunpack.c.h.b16 %v2122
    %v2520 = vunpack.c.l.b16 %v2123
    %v2521 = vunpack.c.h.b16 %v2123
    %v2522 = vunpack.c.l.b16 %v2124
    %v2523 = vunpack.c.h.b16 %v2124
    %v2524 = vunpack.c.l.b16 %v2125
    %v2525 = vunpack.c.h.b16 %v2125
    %v2526 = vunpack.c.l.b16 %v2126
    %v2527 = vunpack.c.h.b16 %v2126
    %v2528 = vunpack.c.l.b16 %v2127
    %v2529 = vunpack.c.h.b16 %v2127
    %v2530 = vunpack.c.l.b16 %v2128
    %v2531 = vunpack.c.h.b16 %v2128
    %v2532 = vunpack.c.l.b16 %v2129
    %v2533 = vunpack.c.h.b16 %v2129
    %v2534 = vunpack.c.l.b16 %v2130
    %v2535 = vunpack.c.h.b16 %v2130
    %v2536 = vunpack.c.l.b16 %v2131
    %v2537 = vunpack.c.h.b16 %v2131
    %v2538 = vunpack.c.l.b16 %v2132
    %v2539 = vunpack.c.h.b16 %v2132
    %v2540 = vunpack.c.l.b16 %v2133
    %v2541 = vunpack.c.h.b16 %v2133
    %v2542 = vunpack.c.l.b16 %v2134
    %v2543 = vunpack.c.h.b16 %v2134
    %v2544 = vunpack.c.l.b16 %v2135
    %v2545 = vunpack.c.h.b16 %v2135
    %v2546 = vunpack.c.l.b16 %v2136
    %v2547 = vunpack.c.h.b16 %v2136
    %v2548 = vunpack.c.l.b16 %v2137
    %v2549 = vunpack.c.h.b16 %v2137
    %v2550 = vunpack.c.l.b16 %v2138
    %v2551 = vunpack.c.h.b16 %v2138
    %v2552 = vunpack.c.l.b16 %v2139
    %v2553 = vunpack.c.h.b16 %v2139
    %v2554 = vunpack.c.l.b16 %v2140
    %v2555 = vunpack.c.h.b16 %v2140
    %v2556 = vunpack.c.l.b16 %v2141
    %v2557 = vunpack.c.h.b16 %v2141
    %v2558 = vunpack.c.l.b16 %v2142
    %v2559 = vunpack.c.h.b16 %v2142
    %v2560 = vunpack.c.l.b16 %v2143
    %v2561 = vunpack.c.h.b16 %v2143
    %v2562 = vunpack.c.l.b16 %v2144
    %v2563 = vunpack.c.h.b16 %v2144
    %v2564 = vunpack.c.l.b16 %v2145
    %v2565 = vunpack.c.h.b16 %v2145
    %v2566 = vunpack.c.l.b16 %v2146
    %v2567 = vunpack.c.h.b16 %v2146
    %v2568 = vunpack.c.l.b16 %v2147
    %v2569 = vunpack.c.h.b16 %v2147
    %v2570 = vunpack.c.l.b16 %v2148
    %v2571 = vunpack.c.h.b16 %v2148
    %v2572 = vunpack.c.l.b16 %v2149
    %v2573 = vunpack.c.h.b16 %v2149
    %v2574 = vunpack.c.l.b16 %v2150
    %v2575 = vunpack.c.h.b16 %v2150
    %v2576 = vpack.c.b16 %v2328, %v2320
    %v2577 = vpack.c.b16 %v2329, %v2321
    %v2578 = vpack.c.b16 %v2330, %v2322
    %v2579 = vpack.c.b16 %v2331, %v2323
    %v2580 = vpack.c.b16 %v2332, %v2324
    %v2581 = vpack.c.b16 %v2333, %v2325
    %v2582 = vpack.c.b16 %v2334, %v2326
    %v2583 = vpack.c.b16 %v2335, %v2327
    %v2584 = vpack.c.b16 %v2344, %v2336
    %v2585 = vpack.c.b16 %v2345, %v2337
    %v2586 = vpack.c.b16 %v2346, %v2338
    %v2587 = vpack.c.b16 %v2347, %v2339
    %v2588 = vpack.c.b16 %v2348, %v2340
    %v2589 = vpack.c.b16 %v2349, %v2341
    %v2590 = vpack.c.b16 %v2350, %v2342
    %v2591 = vpack.c.b16 %v2351, %v2343
    %v2592 = vpack.c.b16 %v2360, %v2352
    %v2593 = vpack.c.b16 %v2361, %v2353
    %v2594 = vpack.c.b16 %v2362, %v2354
    %v2595 = vpack.c.b16 %v2363, %v2355
    %v2596 = vpack.c.b16 %v2364, %v2356
    %v2597 = vpack.c.b16 %v2365, %v2357
    %v2598 = vpack.c.b16 %v2366, %v2358
    %v2599 = vpack.c.b16 %v2367, %v2359
    %v2600 = vpack.c.b16 %v2376, %v2368
    %v2601 = vpack.c.b16 %v2377, %v2369
    %v2602 = vpack.c.b16 %v2378, %v2370
    %v2603 = vpack.c.b16 %v2379, %v2371
    %v2604 = vpack.c.b16 %v2380, %v2372
    %v2605 = vpack.c.b16 %v2381, %v2373
    %v2606 = vpack.c.b16 %v2382, %v2374
    %v2607 = vpack.c.b16 %v2383, %v2375
    %v2608 = vpack.c.b16 %v2392, %v2384
    %v2609 = vpack.c.b16 %v2393, %v2385
    %v2610 = vpack.c.b16 %v2394, %v2386
    %v2611 = vpack.c.b16 %v2395, %v2387
    %v2612 = vpack.c.b16 %v2396, %v2388
    %v2613 = vpack.c.b16 %v2397, %v2389
    %v2614 = vpack.c.b16 %v2398, %v2390
    %v2615 = vpack.c.b16 %v2399, %v2391
    %v2616 = vpack.c.b16 %v2408, %v2400
    %v2617 = vpack.c.b16 %v2409, %v2401
    %v2618 = vpack.c.b16 %v2410, %v2402
    %v2619 = vpack.c.b16 %v2411, %v2403
    %v2620 = vpack.c.b16 %v2412, %v2404
    %v2621 = vpack.c.b16 %v2413, %v2405
    %v2622 = vpack.c.b16 %v2414, %v2406
    %v2623 = vpack.c.b16 %v2415, %v2407
    %v2624 = vpack.c.b16 %v2424, %v2416
    %v2625 = vpack.c.b16 %v2425, %v2417
    %v2626 = vpack.c.b16 %v2426, %v2418
    %v2627 = vpack.c.b16 %v2427, %v2419
    %v2628 = vpack.c.b16 %v2428, %v2420
    %v2629 = vpack.c.b16 %v2429, %v2421
    %v2630 = vpack.c.b16 %v2430, %v2422
    %v2631 = vpack.c.b16 %v2431, %v2423
    %v2632 = vpack.c.b16 %v2440, %v2432
    %v2633 = vpack.c.b16 %v2441, %v2433
    %v2634 = vpack.c.b16 %v2442, %v2434
    %v2635 = vpack.c.b16 %v2443, %v2435
    %v2636 = vpack.c.b16 %v2444, %v2436
    %v2637 = vpack.c.b16 %v2445, %v2437
    %v2638 = vpack.c.b16 %v2446, %v2438
    %v2639 = vpack.c.b16 %v2447, %v2439
    %v2640 = vpack.c.b16 %v2456, %v2448
    %v2641 = vpack.c.b16 %v2457, %v2449
    %v2642 = vpack.c.b16 %v2458, %v2450
    %v2643 = vpack.c.b16 %v2459, %v2451
    %v2644 = vpack.c.b16 %v2460, %v2452
    %v2645 = vpack.c.b16 %v2461, %v2453
    %v2646 = vpack.c.b16 %v2462, %v2454
    %v2647 = vpack.c.b16 %v2463, %v2455
    %v2648 = vpack.c.b16 %v2472, %v2464
    %v2649 = vpack.c.b16 %v2473, %v2465
    %v2650 = vpack.c.b16 %v2474, %v2466
    %v2651 = vpack.c.b16 %v2475, %v2467
    %v2652 = vpack.c.b16 %v2476, %v2468
    %v2653 = vpack.c.b16 %v2477, %v2469
    %v2654 = vpack.c.b16 %v2478, %v2470
    %v2655 = vpack.c.b16 %v2479, %v2471
    %v2656 = vpack.c.b16 %v2488, %v2480
    %v2657 = vpack.c.b16 %v2489, %v2481
    %v2658 = vpack.c.b16 %v2490, %v2482
    %v2659 = vpack.c.b16 %v2491, %v2483
    %v2660 = vpack.c.b16 %v2492, %v2484
    %v2661 = vpack.c.b16 %v2493, %v2485
    %v2662 = vpack.c.b16 %v2494, %v2486
    %v2663 = vpack.c.b16 %v2495, %v2487
    %v2664 = vpack.c.b16 %v2504, %v2496
    %v2665 = vpack.c.b16 %v2505, %v2497
    %v2666 = vpack.c.b16 %v2506, %v2498
    %v2667 = vpack.c.b16 %v2507, %v2499
    %v2668 = vpack.c.b16 %v2508, %v2500
    %v2669 = vpack.c.b16 %v2509, %v2501
    %v2670 = vpack.c.b16 %v2510, %v2502
    %v2671 = vpack.c.b16 %v2511, %v2503
    %v2672 = vpack.c.b16 %v2520, %v2512
    %v2673 = vpack.c.b16 %v2521, %v2513
    %v2674 = vpack.c.b16 %v2522, %v2514
    %v2675 = vpack.c.b16 %v2523, %v2515
    %v2676 = vpack.c.b16 %v2524, %v2516
    %v2677 = vpack.c.b16 %v2525, %v2517
    %v2678 = vpack.c.b16 %v2526, %v2518
    %v2679 = vpack.c.b16 %v2527, %v2519
    %v2680 = vpack.c.b16 %v2536, %v2528
    %v2681 = vpack.c.b16 %v2537, %v2529
    %v2682 = vpack.c.b16 %v2538, %v2530
    %v2683 = vpack.c.b16 %v2539, %v2531
    %v2684 = vpack.c.b16 %v2540, %v2532
    %v2685 = vpack.c.b16 %v2541, %v2533
    %v2686 = vpack.c.b16 %v2542, %v2534
    %v2687 = vpack.c.b16 %v2543, %v2535
    %v2688 = vpack.c.b16 %v2552, %v2544
    %v2689 = vpack.c.b16 %v2553, %v2545
    %v2690 = vpack.c.b16 %v2554, %v2546
    %v2691 = vpack.c.b16 %v2555, %v2547
    %v2692 = vpack.c.b16 %v2556, %v2548
    %v2693 = vpack.c.b16 %v2557, %v2549
    %v2694 = vpack.c.b16 %v2558, %v2550
    %v2695 = vpack.c.b16 %v2559, %v2551
    %v2696 = vpack.c.b16 %v2568, %v2560
    %v2697 = vpack.c.b16 %v2569, %v2561
    %v2698 = vpack.c.b16 %v2570, %v2562
    %v2699 = vpack.c.b16 %v2571, %v2563
    %v2700 = vpack.c.b16 %v2572, %v2564
    %v2701 = vpack.c.b16 %v2573, %v2565
    %v2702 = vpack.c.b16 %v2574, %v2566
    %v2703 = vpack.c.b16 %v2575, %v2567
    %2832 = vmatprep.subr.bf16.mxu0 %v2577
    %2833 = vmatpush1.bf16.msra.mxu0 %v2576
    %2834 = vmatprep.subr.bf16.mxu0 %v2585
    %2835 = vmatpush1.bf16.msra.mxu0 %v2584
    %2836 = vmatprep.subr.bf16.mxu0 %v2593
    %2837 = vmatpush1.bf16.msra.mxu0 %v2592
    %2838 = vmatprep.subr.bf16.mxu0 %v2601
    %2839 = vmatpush1.bf16.msra.mxu0 %v2600
    %2840 = vmatprep.subr.bf16.mxu0 %v2609
    %2841 = vmatpush1.bf16.msra.mxu0 %v2608
    %2842 = vmatprep.subr.bf16.mxu0 %v2617
    %2843 = vmatpush1.bf16.msra.mxu0 %v2616
    %2844 = vmatprep.subr.bf16.mxu0 %v2625
    %2845 = vmatpush1.bf16.msra.mxu0 %v2624
    %2846 = vmatprep.subr.bf16.mxu0 %v2633
    %2847 = vmatpush1.bf16.msra.mxu0 %v2632
    %2848 = vmatprep.subr.bf16.mxu0 %v2641
    %2849 = vmatpush1.bf16.msra.mxu0 %v2640
    %2850 = vmatprep.subr.bf16.mxu0 %v2649
    %2851 = vmatpush1.bf16.msra.mxu0 %v2648
    %2852 = vmatprep.subr.bf16.mxu0 %v2657
    %2853 = vmatpush1.bf16.msra.mxu0 %v2656
    %2854 = vmatprep.subr.bf16.mxu0 %v2665
    %2855 = vmatpush1.bf16.msra.mxu0 %v2664
    %2856 = vmatprep.subr.bf16.mxu0 %v2673
    %2857 = vmatpush1.bf16.msra.mxu0 %v2672
    %2858 = vmatprep.subr.bf16.mxu0 %v2681
    %2859 = vmatpush1.bf16.msra.mxu0 %v2680
    %2860 = vmatprep.subr.bf16.mxu0 %v2689
    %2861 = vmatpush1.bf16.msra.mxu0 %v2688
    %2862 = vmatprep.subr.bf16.mxu0 %v2697
    %2863 = vmatpush1.bf16.msra.mxu0 %v2696
    %2864 = vmatprep.mubr.bf16.mxu0 %v2008
    %2865 = vmatmul.mubr.bf16.gmra.mrb[0].mxu0 %v2007
    %v2866 = vpop.f32.mrb[0].mxu0
    %v2867 = vadd.f32 %v2155, %v2866
    %v2868 = vpop.f32.mrb[0].mxu0
    %v2869 = vadd.f32 %v2159, %v2868
    %v2870 = vpop.f32.mrb[0].mxu0
    %v2871 = vadd.f32 %v2155, %v2870
    %v2872 = vpop.f32.mrb[0].mxu0
    %v2873 = vadd.f32 %v2159, %v2872
    %2874 = vmatprep.mubr.bf16.mxu0 %v2010
    %2875 = vmatmul.mubr.bf16.gmra.mrb[0].mxu0 %v2009
    %v2876 = vpop.f32.mrb[0].mxu0
    %v2877 = vadd.f32 %v2155, %v2876
    %v2878 = vpop.f32.mrb[0].mxu0
    %v2879 = vadd.f32 %v2159, %v2878
    %v2880 = vpop.f32.mrb[0].mxu0
    %v2881 = vadd.f32 %v2155, %v2880
    %v2882 = vpop.f32.mrb[0].mxu0
    %v2883 = vadd.f32 %v2159, %v2882
    %2884 = vmatprep.mubr.bf16.mxu0 %v2012
    %2885 = vmatmul.mubr.bf16.gmra.mrb[0].mxu0 %v2011
    %v2886 = vpop.f32.mrb[0].mxu0
    %v2887 = vadd.f32 %v2155, %v2886
    %v2888 = vpop.f32.mrb[0].mxu0
    %v2889 = vadd.f32 %v2159, %v2888
    %v2890 = vpop.f32.mrb[0].mxu0
    %v2891 = vadd.f32 %v2155, %v2890
    %v2892 = vpop.f32.mrb[0].mxu0
    %v2893 = vadd.f32 %v2159, %v2892
    %2894 = vmatprep.mubr.bf16.mxu0 %v2014
    %2895 = vmatmul.mubr.bf16.gmra.mrb[0].mxu0 %v2013
    %v2896 = vpop.f32.mrb[0].mxu0
    %v2897 = vadd.f32 %v2155, %v2896
    %v2898 = vpop.f32.mrb[0].mxu0
    %v2899 = vadd.f32 %v2159, %v2898
    %v2900 = vpop.f32.mrb[0].mxu0
    %v2901 = vadd.f32 %v2155, %v2900
    %v2902 = vpop.f32.mrb[0].mxu0
    %v2903 = vadd.f32 %v2159, %v2902
    %2904 = vmatprep.mubr.bf16.mxu0 %v2016
    %2905 = vmatmul.mubr.bf16.gmra.mrb[0].mxu0 %v2015
    %v2906 = vpop.f32.mrb[0].mxu0
    %v2907 = vadd.f32 %v2155, %v2906
    %v2908 = vpop.f32.mrb[0].mxu0
    %v2909 = vadd.f32 %v2159, %v2908
    %v2910 = vpop.f32.mrb[0].mxu0
    %v2911 = vadd.f32 %v2155, %v2910
    %v2912 = vpop.f32.mrb[0].mxu0
    %v2913 = vadd.f32 %v2159, %v2912
    %2914 = vmatprep.mubr.bf16.mxu0 %v2018
    %2915 = vmatmul.mubr.bf16.gmra.mrb[0].mxu0 %v2017
    %v2916 = vpop.f32.mrb[0].mxu0
    %v2917 = vadd.f32 %v2155, %v2916
    %v2918 = vpop.f32.mrb[0].mxu0
    %v2919 = vadd.f32 %v2159, %v2918
    %v2920 = vpop.f32.mrb[0].mxu0
    %v2921 = vadd.f32 %v2155, %v2920
    %v2922 = vpop.f32.mrb[0].mxu0
    %v2923 = vadd.f32 %v2159, %v2922
    %2924 = vmatprep.mubr.bf16.mxu0 %v2020
    %2925 = vmatmul.mubr.bf16.gmra.mrb[0].mxu0 %v2019
    %v2926 = vpop.f32.mrb[0].mxu0
    %v2927 = vadd.f32 %v2155, %v2926
    %v2928 = vpop.f32.mrb[0].mxu0
    %v2929 = vadd.f32 %v2159, %v2928
    %v2930 = vpop.f32.mrb[0].mxu0
    %v2931 = vadd.f32 %v2155, %v2930
    %v2932 = vpop.f32.mrb[0].mxu0
    %v2933 = vadd.f32 %v2159, %v2932
    %2934 = vmatprep.mubr.bf16.mxu0 %v2022
    %2935 = vmatmul.mubr.bf16.gmra.mrb[0].mxu0 %v2021
    %v2936 = vpop.f32.mrb[0].mxu0
    %v2937 = vadd.f32 %v2155, %v2936
    %v2938 = vpop.f32.mrb[0].mxu0
    %v2939 = vadd.f32 %v2159, %v2938
    %v2940 = vpop.f32.mrb[0].mxu0
    %v2941 = vadd.f32 %v2155, %v2940
    %v2942 = vpop.f32.mrb[0].mxu0
    %v2943 = vadd.f32 %v2159, %v2942
    %2944 = vdwg.mxu0
    %2945 = vmatprep.subr.bf16.mxu0 %v2579
    %2946 = vmatpush1.bf16.msra.mxu0 %v2578
    %2947 = vmatprep.subr.bf16.mxu0 %v2587
    %2948 = vmatpush1.bf16.msra.mxu0 %v2586
    %2949 = vmatprep.subr.bf16.mxu0 %v2595
    %2950 = vmatpush1.bf16.msra.mxu0 %v2594
    %2951 = vmatprep.subr.bf16.mxu0 %v2603
    %2952 = vmatpush1.bf16.msra.mxu0 %v2602
    %2953 = vmatprep.subr.bf16.mxu0 %v2611
    %2954 = vmatpush1.bf16.msra.mxu0 %v2610
    %2955 = vmatprep.subr.bf16.mxu0 %v2619
    %2956 = vmatpush1.bf16.msra.mxu0 %v2618
    %2957 = vmatprep.subr.bf16.mxu0 %v2627
    %2958 = vmatpush1.bf16.msra.mxu0 %v2626
    %2959 = vmatprep.subr.bf16.mxu0 %v2635
    %2960 = vmatpush1.bf16.msra.mxu0 %v2634
    %2961 = vmatprep.subr.bf16.mxu0 %v2643
    %2962 = vmatpush1.bf16.msra.mxu0 %v2642
    %2963 = vmatprep.subr.bf16.mxu0 %v2651
    %2964 = vmatpush1.bf16.msra.mxu0 %v2650
    %2965 = vmatprep.subr.bf16.mxu0 %v2659
    %2966 = vmatpush1.bf16.msra.mxu0 %v2658
    %2967 = vmatprep.subr.bf16.mxu0 %v2667
    %2968 = vmatpush1.bf16.msra.mxu0 %v2666
    %2969 = vmatprep.subr.bf16.mxu0 %v2675
    %2970 = vmatpush1.bf16.msra.mxu0 %v2674
    %2971 = vmatprep.subr.bf16.mxu0 %v2683
    %2972 = vmatpush1.bf16.msra.mxu0 %v2682
    %2973 = vmatprep.subr.bf16.mxu0 %v2691
    %2974 = vmatpush1.bf16.msra.mxu0 %v2690
    %2975 = vmatprep.subr.bf16.mxu0 %v2699
    %2976 = vmatpush1.bf16.msra.mxu0 %v2698
    %2977 = vmatprep.mubr.bf16.mxu0 %v2008
    %2978 = vmatmul.mubr.bf16.gmra.mrb[0].mxu0 %v2007
    %v2979 = vpop.f32.mrb[0].mxu0
    %v2980 = vadd.f32 %v2163, %v2979
    %v2981 = vpop.f32.mrb[0].mxu0
    %v2982 = vadd.f32 %v2167, %v2981
    %v2983 = vpop.f32.mrb[0].mxu0
    %v2984 = vadd.f32 %v2163, %v2983
    %v2985 = vpop.f32.mrb[0].mxu0
    %v2986 = vadd.f32 %v2167, %v2985
    %2987 = vmatprep.mubr.bf16.mxu0 %v2010
    %2988 = vmatmul.mubr.bf16.gmra.mrb[0].mxu0 %v2009
    %v2989 = vpop.f32.mrb[0].mxu0
    %v2990 = vadd.f32 %v2163, %v2989
    %v2991 = vpop.f32.mrb[0].mxu0
    %v2992 = vadd.f32 %v2167, %v2991
    %v2993 = vpop.f32.mrb[0].mxu0
    %v2994 = vadd.f32 %v2163, %v2993
    %v2995 = vpop.f32.mrb[0].mxu0
    %v2996 = vadd.f32 %v2167, %v2995
    %2997 = vmatprep.mubr.bf16.mxu0 %v2012
    %2998 = vmatmul.mubr.bf16.gmra.mrb[0].mxu0 %v2011
    %v2999 = vpop.f32.mrb[0].mxu0
    %v3000 = vadd.f32 %v2163, %v2999
    %v3001 = vpop.f32.mrb[0].mxu0
    %v3002 = vadd.f32 %v2167, %v3001
    %v3003 = vpop.f32.mrb[0].mxu0
    %v3004 = vadd.f32 %v2163, %v3003
    %v3005 = vpop.f32.mrb[0].mxu0
    %v3006 = vadd.f32 %v2167, %v3005
    %3007 = vmatprep.mubr.bf16.mxu0 %v2014
    %3008 = vmatmul.mubr.bf16.gmra.mrb[0].mxu0 %v2013
    %v3009 = vpop.f32.mrb[0].mxu0
    %v3010 = vadd.f32 %v2163, %v3009
    %v3011 = vpop.f32.mrb[0].mxu0
    %v3012 = vadd.f32 %v2167, %v3011
    %v3013 = vpop.f32.mrb[0].mxu0
    %v3014 = vadd.f32 %v2163, %v3013
    %v3015 = vpop.f32.mrb[0].mxu0
    %v3016 = vadd.f32 %v2167, %v3015
    %3017 = vmatprep.mubr.bf16.mxu0 %v2016
    %3018 = vmatmul.mubr.bf16.gmra.mrb[0].mxu0 %v2015
    %v3019 = vpop.f32.mrb[0].mxu0
    %v3020 = vadd.f32 %v2163, %v3019
    %v3021 = vpop.f32.mrb[0].mxu0
    %v3022 = vadd.f32 %v2167, %v3021
    %v3023 = vpop.f32.mrb[0].mxu0
    %v3024 = vadd.f32 %v2163, %v3023
    %v3025 = vpop.f32.mrb[0].mxu0
    %v3026 = vadd.f32 %v2167, %v3025
    %3027 = vmatprep.mubr.bf16.mxu0 %v2018
    %3028 = vmatmul.mubr.bf16.gmra.mrb[0].mxu0 %v2017
    %v3029 = vpop.f32.mrb[0].mxu0
    %v3030 = vadd.f32 %v2163, %v3029
    %v3031 = vpop.f32.mrb[0].mxu0
    %v3032 = vadd.f32 %v2167, %v3031
    %v3033 = vpop.f32.mrb[0].mxu0
    %v3034 = vadd.f32 %v2163, %v3033
    %v3035 = vpop.f32.mrb[0].mxu0
    %v3036 = vadd.f32 %v2167, %v3035
    %3037 = vmatprep.mubr.bf16.mxu0 %v2020
    %3038 = vmatmul.mubr.bf16.gmra.mrb[0].mxu0 %v2019
    %v3039 = vpop.f32.mrb[0].mxu0
    %v3040 = vadd.f32 %v2163, %v3039
    %v3041 = vpop.f32.mrb[0].mxu0
    %v3042 = vadd.f32 %v2167, %v3041
    %v3043 = vpop.f32.mrb[0].mxu0
    %v3044 = vadd.f32 %v2163, %v3043
    %v3045 = vpop.f32.mrb[0].mxu0
    %v3046 = vadd.f32 %v2167, %v3045
    %3047 = vmatprep.mubr.bf16.mxu0 %v2022
    %3048 = vmatmul.mubr.bf16.gmra.mrb[0].mxu0 %v2021
    %v3049 = vpop.f32.mrb[0].mxu0
    %v3050 = vadd.f32 %v2163, %v3049
    %v3051 = vpop.f32.mrb[0].mxu0
    %v3052 = vadd.f32 %v2167, %v3051
    %v3053 = vpop.f32.mrb[0].mxu0
    %v3054 = vadd.f32 %v2163, %v3053
    %v3055 = vpop.f32.mrb[0].mxu0
    %v3056 = vadd.f32 %v2167, %v3055
    %3057 = vdwg.mxu0
    %3058 = vmatprep.subr.bf16.mxu0 %v2581
    %3059 = vmatpush1.bf16.msra.mxu0 %v2580
    %3060 = vmatprep.subr.bf16.mxu0 %v2589
    %3061 = vmatpush1.bf16.msra.mxu0 %v2588
    %3062 = vmatprep.subr.bf16.mxu0 %v2597
    %3063 = vmatpush1.bf16.msra.mxu0 %v2596
    %3064 = vmatprep.subr.bf16.mxu0 %v2605
    %3065 = vmatpush1.bf16.msra.mxu0 %v2604
    %3066 = vmatprep.subr.bf16.mxu0 %v2613
    %3067 = vmatpush1.bf16.msra.mxu0 %v2612
    %3068 = vmatprep.subr.bf16.mxu0 %v2621
    %3069 = vmatpush1.bf16.msra.mxu0 %v2620
    %3070 = vmatprep.subr.bf16.mxu0 %v2629
    %3071 = vmatpush1.bf16.msra.mxu0 %v2628
    %3072 = vmatprep.subr.bf16.mxu0 %v2637
    %3073 = vmatpush1.bf16.msra.mxu0 %v2636
    %3074 = vmatprep.subr.bf16.mxu0 %v2645
    %3075 = vmatpush1.bf16.msra.mxu0 %v2644
    %3076 = vmatprep.subr.bf16.mxu0 %v2653
    %3077 = vmatpush1.bf16.msra.mxu0 %v2652
    %3078 = vmatprep.subr.bf16.mxu0 %v2661
    %3079 = vmatpush1.bf16.msra.mxu0 %v2660
    %3080 = vmatprep.subr.bf16.mxu0 %v2669
    %3081 = vmatpush1.bf16.msra.mxu0 %v2668
    %3082 = vmatprep.subr.bf16.mxu0 %v2677
    %3083 = vmatpush1.bf16.msra.mxu0 %v2676
    %3084 = vmatprep.subr.bf16.mxu0 %v2685
    %3085 = vmatpush1.bf16.msra.mxu0 %v2684
    %3086 = vmatprep.subr.bf16.mxu0 %v2693
    %3087 = vmatpush1.bf16.msra.mxu0 %v2692
    %3088 = vmatprep.subr.bf16.mxu0 %v2701
    %3089 = vmatpush1.bf16.msra.mxu0 %v2700
    %3090 = vmatprep.mubr.bf16.mxu0 %v2008
    %3091 = vmatmul.mubr.bf16.gmra.mrb[0].mxu0 %v2007
    %v3092 = vpop.f32.mrb[0].mxu0
    %v3093 = vadd.f32 %v2171, %v3092
    %v3094 = vpop.f32.mrb[0].mxu0
    %v3095 = vadd.f32 %v2175, %v3094
    %v3096 = vpop.f32.mrb[0].mxu0
    %v3097 = vadd.f32 %v2171, %v3096
    %v3098 = vpop.f32.mrb[0].mxu0
    %v3099 = vadd.f32 %v2175, %v3098
    %3100 = vmatprep.mubr.bf16.mxu0 %v2010
    %3101 = vmatmul.mubr.bf16.gmra.mrb[0].mxu0 %v2009
    %v3102 = vpop.f32.mrb[0].mxu0
    %v3103 = vadd.f32 %v2171, %v3102
    %v3104 = vpop.f32.mrb[0].mxu0
    %v3105 = vadd.f32 %v2175, %v3104
    %v3106 = vpop.f32.mrb[0].mxu0
    %v3107 = vadd.f32 %v2171, %v3106
    %v3108 = vpop.f32.mrb[0].mxu0
    %v3109 = vadd.f32 %v2175, %v3108
    %3110 = vmatprep.mubr.bf16.mxu0 %v2012
    %3111 = vmatmul.mubr.bf16.gmra.mrb[0].mxu0 %v2011
    %v3112 = vpop.f32.mrb[0].mxu0
    %v3113 = vadd.f32 %v2171, %v3112
    %v3114 = vpop.f32.mrb[0].mxu0
    %v3115 = vadd.f32 %v2175, %v3114
    %v3116 = vpop.f32.mrb[0].mxu0
    %v3117 = vadd.f32 %v2171, %v3116
    %v3118 = vpop.f32.mrb[0].mxu0
    %v3119 = vadd.f32 %v2175, %v3118
    %3120 = vmatprep.mubr.bf16.mxu0 %v2014
    %3121 = vmatmul.mubr.bf16.gmra.mrb[0].mxu0 %v2013
    %v3122 = vpop.f32.mrb[0].mxu0
    %v3123 = vadd.f32 %v2171, %v3122
    %v3124 = vpop.f32.mrb[0].mxu0
    %v3125 = vadd.f32 %v2175, %v3124
    %v3126 = vpop.f32.mrb[0].mxu0
    %v3127 = vadd.f32 %v2171, %v3126
    %v3128 = vpop.f32.mrb[0].mxu0
    %v3129 = vadd.f32 %v2175, %v3128
    %3130 = vmatprep.mubr.bf16.mxu0 %v2016
    %3131 = vmatmul.mubr.bf16.gmra.mrb[0].mxu0 %v2015
    %v3132 = vpop.f32.mrb[0].mxu0
    %v3133 = vadd.f32 %v2171, %v3132
    %v3134 = vpop.f32.mrb[0].mxu0
    %v3135 = vadd.f32 %v2175, %v3134
    %v3136 = vpop.f32.mrb[0].mxu0
    %v3137 = vadd.f32 %v2171, %v3136
    %v3138 = vpop.f32.mrb[0].mxu0
    %v3139 = vadd.f32 %v2175, %v3138
    %3140 = vmatprep.mubr.bf16.mxu0 %v2018
    %3141 = vmatmul.mubr.bf16.gmra.mrb[0].mxu0 %v2017
    %v3142 = vpop.f32.mrb[0].mxu0
    %v3143 = vadd.f32 %v2171, %v3142
    %v3144 = vpop.f32.mrb[0].mxu0
    %v3145 = vadd.f32 %v2175, %v3144
    %v3146 = vpop.f32.mrb[0].mxu0
    %v3147 = vadd.f32 %v2171, %v3146
    %v3148 = vpop.f32.mrb[0].mxu0
    %v3149 = vadd.f32 %v2175, %v3148
    %3150 = vmatprep.mubr.bf16.mxu0 %v2020
    %3151 = vmatmul.mubr.bf16.gmra.mrb[0].mxu0 %v2019
    %v3152 = vpop.f32.mrb[0].mxu0
    %v3153 = vadd.f32 %v2171, %v3152
    %v3154 = vpop.f32.mrb[0].mxu0
    %v3155 = vadd.f32 %v2175, %v3154
    %v3156 = vpop.f32.mrb[0].mxu0
    %v3157 = vadd.f32 %v2171, %v3156
    %v3158 = vpop.f32.mrb[0].mxu0
    %v3159 = vadd.f32 %v2175, %v3158
    %3160 = vmatprep.mubr.bf16.mxu0 %v2022
    %3161 = vmatmul.mubr.bf16.gmra.mrb[0].mxu0 %v2021
    %v3162 = vpop.f32.mrb[0].mxu0
    %v3163 = vadd.f32 %v2171, %v3162
    %v3164 = vpop.f32.mrb[0].mxu0
    %v3165 = vadd.f32 %v2175, %v3164
    %v3166 = vpop.f32.mrb[0].mxu0
    %v3167 = vadd.f32 %v2171, %v3166
    %v3168 = vpop.f32.mrb[0].mxu0
    %v3169 = vadd.f32 %v2175, %v3168
    %3170 = vdwg.mxu0
    %3171 = vmatprep.subr.bf16.mxu0 %v2583
    %3172 = vmatpush1.bf16.msra.mxu0 %v2582
    %3173 = vmatprep.subr.bf16.mxu0 %v2591
    %3174 = vmatpush1.bf16.msra.mxu0 %v2590
    %3175 = vmatprep.subr.bf16.mxu0 %v2599
    %3176 = vmatpush1.bf16.msra.mxu0 %v2598
    %3177 = vmatprep.subr.bf16.mxu0 %v2607
    %3178 = vmatpush1.bf16.msra.mxu0 %v2606
    %3179 = vmatprep.subr.bf16.mxu0 %v2615
    %3180 = vmatpush1.bf16.msra.mxu0 %v2614
    %3181 = vmatprep.subr.bf16.mxu0 %v2623
    %3182 = vmatpush1.bf16.msra.mxu0 %v2622
    %3183 = vmatprep.subr.bf16.mxu0 %v2631
    %3184 = vmatpush1.bf16.msra.mxu0 %v2630
    %3185 = vmatprep.subr.bf16.mxu0 %v2639
    %3186 = vmatpush1.bf16.msra.mxu0 %v2638
    %3187 = vmatprep.subr.bf16.mxu0 %v2647
    %3188 = vmatpush1.bf16.msra.mxu0 %v2646
    %3189 = vmatprep.subr.bf16.mxu0 %v2655
    %3190 = vmatpush1.bf16.msra.mxu0 %v2654
    %3191 = vmatprep.subr.bf16.mxu0 %v2663
    %3192 = vmatpush1.bf16.msra.mxu0 %v2662
    %3193 = vmatprep.subr.bf16.mxu0 %v2671
    %3194 = vmatpush1.bf16.msra.mxu0 %v2670
    %3195 = vmatprep.subr.bf16.mxu0 %v2679
    %3196 = vmatpush1.bf16.msra.mxu0 %v2678
    %3197 = vmatprep.subr.bf16.mxu0 %v2687
    %3198 = vmatpush1.bf16.msra.mxu0 %v2686
    %3199 = vmatprep.subr.bf16.mxu0 %v2695
    %3200 = vmatpush1.bf16.msra.mxu0 %v2694
    %3201 = vmatprep.subr.bf16.mxu0 %v2703
    %3202 = vmatpush1.bf16.msra.mxu0 %v2702
    %3203 = vmatprep.mubr.bf16.mxu0 %v2008
    %3204 = vmatmul.mubr.bf16.gmra.mrb[0].mxu0 %v2007
    %v3205 = vpop.f32.mrb[0].mxu0
    %v3206 = vadd.f32 %v2179, %v3205
    %v3207 = vpop.f32.mrb[0].mxu0
    %v3208 = vadd.f32 %v2183, %v3207
    %v3209 = vpop.f32.mrb[0].mxu0
    %v3210 = vadd.f32 %v2179, %v3209
    %v3211 = vpop.f32.mrb[0].mxu0
    %v3212 = vadd.f32 %v2183, %v3211
    %3213 = vmatprep.mubr.bf16.mxu0 %v2010
    %3214 = vmatmul.mubr.bf16.gmra.mrb[0].mxu0 %v2009
    %v3215 = vpop.f32.mrb[0].mxu0
    %v3216 = vadd.f32 %v2179, %v3215
    %v3217 = vpop.f32.mrb[0].mxu0
    %v3218 = vadd.f32 %v2183, %v3217
    %v3219 = vpop.f32.mrb[0].mxu0
    %v3220 = vadd.f32 %v2179, %v3219
    %v3221 = vpop.f32.mrb[0].mxu0
    %v3222 = vadd.f32 %v2183, %v3221
    %3223 = vmatprep.mubr.bf16.mxu0 %v2012
    %3224 = vmatmul.mubr.bf16.gmra.mrb[0].mxu0 %v2011
    %v3225 = vpop.f32.mrb[0].mxu0
    %v3226 = vadd.f32 %v2179, %v3225
    %v3227 = vpop.f32.mrb[0].mxu0
    %v3228 = vadd.f32 %v2183, %v3227
    %v3229 = vpop.f32.mrb[0].mxu0
    %v3230 = vadd.f32 %v2179, %v3229
    %v3231 = vpop.f32.mrb[0].mxu0
    %v3232 = vadd.f32 %v2183, %v3231
    %3233 = vmatprep.mubr.bf16.mxu0 %v2014
    %3234 = vmatmul.mubr.bf16.gmra.mrb[0].mxu0 %v2013
    %v3235 = vpop.f32.mrb[0].mxu0
    %v3236 = vadd.f32 %v2179, %v3235
    %v3237 = vpop.f32.mrb[0].mxu0
    %v3238 = vadd.f32 %v2183, %v3237
    %v3239 = vpop.f32.mrb[0].mxu0
    %v3240 = vadd.f32 %v2179, %v3239
    %v3241 = vpop.f32.mrb[0].mxu0
    %v3242 = vadd.f32 %v2183, %v3241
    %3243 = vmatprep.mubr.bf16.mxu0 %v2016
    %3244 = vmatmul.mubr.bf16.gmra.mrb[0].mxu0 %v2015
    %v3245 = vpop.f32.mrb[0].mxu0
    %v3246 = vadd.f32 %v2179, %v3245
    %v3247 = vpop.f32.mrb[0].mxu0
    %v3248 = vadd.f32 %v2183, %v3247
    %v3249 = vpop.f32.mrb[0].mxu0
    %v3250 = vadd.f32 %v2179, %v3249
    %v3251 = vpop.f32.mrb[0].mxu0
    %v3252 = vadd.f32 %v2183, %v3251
    %3253 = vmatprep.mubr.bf16.mxu0 %v2018
    %3254 = vmatmul.mubr.bf16.gmra.mrb[0].mxu0 %v2017
    %v3255 = vpop.f32.mrb[0].mxu0
    %v3256 = vadd.f32 %v2179, %v3255
    %v3257 = vpop.f32.mrb[0].mxu0
    %v3258 = vadd.f32 %v2183, %v3257
    %v3259 = vpop.f32.mrb[0].mxu0
    %v3260 = vadd.f32 %v2179, %v3259
    %v3261 = vpop.f32.mrb[0].mxu0
    %v3262 = vadd.f32 %v2183, %v3261
    %3263 = vmatprep.mubr.bf16.mxu0 %v2020
    %3264 = vmatmul.mubr.bf16.gmra.mrb[0].mxu0 %v2019
    %v3265 = vpop.f32.mrb[0].mxu0
    %v3266 = vadd.f32 %v2179, %v3265
    %v3267 = vpop.f32.mrb[0].mxu0
    %v3268 = vadd.f32 %v2183, %v3267
    %v3269 = vpop.f32.mrb[0].mxu0
    %v3270 = vadd.f32 %v2179, %v3269
    %v3271 = vpop.f32.mrb[0].mxu0
    %v3272 = vadd.f32 %v2183, %v3271
    %3273 = vmatprep.mubr.bf16.mxu0 %v2022
    %3274 = vmatmul.mubr.bf16.gmra.mrb[0].mxu0 %v2021
    %v3275 = vpop.f32.mrb[0].mxu0
    %v3276 = vadd.f32 %v2179, %v3275
    %v3277 = vpop.f32.mrb[0].mxu0
    %v3278 = vadd.f32 %v2183, %v3277
    %v3279 = vpop.f32.mrb[0].mxu0
    %v3280 = vadd.f32 %v2179, %v3279
    %v3281 = vpop.f32.mrb[0].mxu0
    %v3282 = vadd.f32 %v2183, %v3281
    %3283 = vdwg.mxu0
    %3284 = vst [vmem:[#allocation2] sm:$0xff] %v2867
    %3285 = vst [vmem:[#allocation2 + $0x8] sm:$0xff] %v2869
    %3286 = vst [vmem:[#allocation2 + $0x10] sm:$0xff] %v2980
    %3287 = vst [vmem:[#allocation2 + $0x18] sm:$0xff] %v2982
    %3288 = vst [vmem:[#allocation2 + $0x20] sm:$0xff] %v3093
    %3289 = vst [vmem:[#allocation2 + $0x28] sm:$0xff] %v3095
    %3290 = vst [vmem:[#allocation2 + $0x30] sm:$0xff] %v3206
    %3291 = vst [vmem:[#allocation2 + $0x38] sm:$0xff] %v3208
    %3292 = vst [vmem:[#allocation2 + $0x40] sm:$0xff] %v2871
    %3293 = vst [vmem:[#allocation2 + $0x48] sm:$0xff] %v2873
    %3294 = vst [vmem:[#allocation2 + $0x50] sm:$0xff] %v2984
    %3295 = vst [vmem:[#allocation2 + $0x58] sm:$0xff] %v2986
    %3296 = vst [vmem:[#allocation2 + $0x60] sm:$0xff] %v3097
    %3297 = vst [vmem:[#allocation2 + $0x68] sm:$0xff] %v3099
    %3298 = vst [vmem:[#allocation2 + $0x70] sm:$0xff] %v3210
    %3299 = vst [vmem:[#allocation2 + $0x78] sm:$0xff] %v3212
    %3300 = vst [vmem:[#allocation2 + $0x80] sm:$0xff] %v2877
    %3301 = vst [vmem:[#allocation2 + $0x88] sm:$0xff] %v2879
    %3302 = vst [vmem:[#allocation2 + $0x90] sm:$0xff] %v2990
    %3303 = vst [vmem:[#allocation2 + $0x98] sm:$0xff] %v2992
    %3304 = vst [vmem:[#allocation2 + $0xa0] sm:$0xff] %v3103
    %3305 = vst [vmem:[#allocation2 + $0xa8] sm:$0xff] %v3105
    %3306 = vst [vmem:[#allocation2 + $0xb0] sm:$0xff] %v3216
    %3307 = vst [vmem:[#allocation2 + $0xb8] sm:$0xff] %v3218
    %3308 = vst [vmem:[#allocation2 + $0xc0] sm:$0xff] %v2881
    %3309 = vst [vmem:[#allocation2 + $0xc8] sm:$0xff] %v2883
    %3310 = vst [vmem:[#allocation2 + $0xd0] sm:$0xff] %v2994
    %3311 = vst [vmem:[#allocation2 + $0xd8] sm:$0xff] %v2996
    %3312 = vst [vmem:[#allocation2 + $0xe0] sm:$0xff] %v3107
    %3313 = vst [vmem:[#allocation2 + $0xe8] sm:$0xff] %v3109
    %3314 = vst [vmem:[#allocation2 + $0xf0] sm:$0xff] %v3220
    %3315 = vst [vmem:[#allocation2 + $0xf8] sm:$0xff] %v3222
    %3316 = vst [vmem:[#allocation2 + $0x100] sm:$0xff] %v2887
    %3317 = vst [vmem:[#allocation2 + $0x108] sm:$0xff] %v2889
    %3318 = vst [vmem:[#allocation2 + $0x110] sm:$0xff] %v3000
    %3319 = vst [vmem:[#allocation2 + $0x118] sm:$0xff] %v3002
    %3320 = vst [vmem:[#allocation2 + $0x120] sm:$0xff] %v3113
    %3321 = vst [vmem:[#allocation2 + $0x128] sm:$0xff] %v3115
    %3322 = vst [vmem:[#allocation2 + $0x130] sm:$0xff] %v3226
    %3323 = vst [vmem:[#allocation2 + $0x138] sm:$0xff] %v3228
    %3324 = vst [vmem:[#allocation2 + $0x140] sm:$0xff] %v2891
    %3325 = vst [vmem:[#allocation2 + $0x148] sm:$0xff] %v2893
    %3326 = vst [vmem:[#allocation2 + $0x150] sm:$0xff] %v3004
    %3327 = vst [vmem:[#allocation2 + $0x158] sm:$0xff] %v3006
    %3328 = vst [vmem:[#allocation2 + $0x160] sm:$0xff] %v3117
    %3329 = vst [vmem:[#allocation2 + $0x168] sm:$0xff] %v3119
    %3330 = vst [vmem:[#allocation2 + $0x170] sm:$0xff] %v3230
    %3331 = vst [vmem:[#allocation2 + $0x178] sm:$0xff] %v3232
    %3332 = vst [vmem:[#allocation2 + $0x180] sm:$0xff] %v2897
    %3333 = vst [vmem:[#allocation2 + $0x188] sm:$0xff] %v2899
    %3334 = vst [vmem:[#allocation2 + $0x190] sm:$0xff] %v3010
    %3335 = vst [vmem:[#allocation2 + $0x198] sm:$0xff] %v3012
    %3336 = vst [vmem:[#allocation2 + $0x1a0] sm:$0xff] %v3123
    %3337 = vst [vmem:[#allocation2 + $0x1a8] sm:$0xff] %v3125
    %3338 = vst [vmem:[#allocation2 + $0x1b0] sm:$0xff] %v3236
    %3339 = vst [vmem:[#allocation2 + $0x1b8] sm:$0xff] %v3238
    %3340 = vst [vmem:[#allocation2 + $0x1c0] sm:$0xff] %v2901
    %3341 = vst [vmem:[#allocation2 + $0x1c8] sm:$0xff] %v2903
    %3342 = vst [vmem:[#allocation2 + $0x1d0] sm:$0xff] %v3014
    %3343 = vst [vmem:[#allocation2 + $0x1d8] sm:$0xff] %v3016
    %3344 = vst [vmem:[#allocation2 + $0x1e0] sm:$0xff] %v3127
    %3345 = vst [vmem:[#allocation2 + $0x1e8] sm:$0xff] %v3129
    %3346 = vst [vmem:[#allocation2 + $0x1f0] sm:$0xff] %v3240
    %3347 = vst [vmem:[#allocation2 + $0x1f8] sm:$0xff] %v3242
    %3348 = vst [vmem:[#allocation2 + $0x200] sm:$0xff] %v2907
    %3349 = vst [vmem:[#allocation2 + $0x208] sm:$0xff] %v2909
    %3350 = vst [vmem:[#allocation2 + $0x210] sm:$0xff] %v3020
    %3351 = vst [vmem:[#allocation2 + $0x218] sm:$0xff] %v3022
    %3352 = vst [vmem:[#allocation2 + $0x220] sm:$0xff] %v3133
    %3353 = vst [vmem:[#allocation2 + $0x228] sm:$0xff] %v3135
    %3354 = vst [vmem:[#allocation2 + $0x230] sm:$0xff] %v3246
    %3355 = vst [vmem:[#allocation2 + $0x238] sm:$0xff] %v3248
    %3356 = vst [vmem:[#allocation2 + $0x240] sm:$0xff] %v2911
    %3357 = vst [vmem:[#allocation2 + $0x248] sm:$0xff] %v2913
    %3358 = vst [vmem:[#allocation2 + $0x250] sm:$0xff] %v3024
    %3359 = vst [vmem:[#allocation2 + $0x258] sm:$0xff] %v3026
    %3360 = vst [vmem:[#allocation2 + $0x260] sm:$0xff] %v3137
    %3361 = vst [vmem:[#allocation2 + $0x268] sm:$0xff] %v3139
    %3362 = vst [vmem:[#allocation2 + $0x270] sm:$0xff] %v3250
    %3363 = vst [vmem:[#allocation2 + $0x278] sm:$0xff] %v3252
    %3364 = vst [vmem:[#allocation2 + $0x280] sm:$0xff] %v2917
    %3365 = vst [vmem:[#allocation2 + $0x288] sm:$0xff] %v2919
    %3366 = vst [vmem:[#allocation2 + $0x290] sm:$0xff] %v3030
    %3367 = vst [vmem:[#allocation2 + $0x298] sm:$0xff] %v3032
    %3368 = vst [vmem:[#allocation2 + $0x2a0] sm:$0xff] %v3143
    %3369 = vst [vmem:[#allocation2 + $0x2a8] sm:$0xff] %v3145
    %3370 = vst [vmem:[#allocation2 + $0x2b0] sm:$0xff] %v3256
    %3371 = vst [vmem:[#allocation2 + $0x2b8] sm:$0xff] %v3258
    %3372 = vst [vmem:[#allocation2 + $0x2c0] sm:$0xff] %v2921
    %3373 = vst [vmem:[#allocation2 + $0x2c8] sm:$0xff] %v2923
    %3374 = vst [vmem:[#allocation2 + $0x2d0] sm:$0xff] %v3034
    %3375 = vst [vmem:[#allocation2 + $0x2d8] sm:$0xff] %v3036
    %3376 = vst [vmem:[#allocation2 + $0x2e0] sm:$0xff] %v3147
    %3377 = vst [vmem:[#allocation2 + $0x2e8] sm:$0xff] %v3149
    %3378 = vst [vmem:[#allocation2 + $0x2f0] sm:$0xff] %v3260
    %3379 = vst [vmem:[#allocation2 + $0x2f8] sm:$0xff] %v3262
    %3380 = vst [vmem:[#allocation2 + $0x300] sm:$0xff] %v2927
    %3381 = vst [vmem:[#allocation2 + $0x308] sm:$0xff] %v2929
    %3382 = vst [vmem:[#allocation2 + $0x310] sm:$0xff] %v3040
    %3383 = vst [vmem:[#allocation2 + $0x318] sm:$0xff] %v3042
    %3384 = vst [vmem:[#allocation2 + $0x320] sm:$0xff] %v3153
    %3385 = vst [vmem:[#allocation2 + $0x328] sm:$0xff] %v3155
    %3386 = vst [vmem:[#allocation2 + $0x330] sm:$0xff] %v3266
    %3387 = vst [vmem:[#allocation2 + $0x338] sm:$0xff] %v3268
    %3388 = vst [vmem:[#allocation2 + $0x340] sm:$0xff] %v2931
    %3389 = vst [vmem:[#allocation2 + $0x348] sm:$0xff] %v2933
    %3390 = vst [vmem:[#allocation2 + $0x350] sm:$0xff] %v3044
    %3391 = vst [vmem:[#allocation2 + $0x358] sm:$0xff] %v3046
    %3392 = vst [vmem:[#allocation2 + $0x360] sm:$0xff] %v3157
    %3393 = vst [vmem:[#allocation2 + $0x368] sm:$0xff] %v3159
    %3394 = vst [vmem:[#allocation2 + $0x370] sm:$0xff] %v3270
    %3395 = vst [vmem:[#allocation2 + $0x378] sm:$0xff] %v3272
    %3396 = vst [vmem:[#allocation2 + $0x380] sm:$0xff] %v2937
    %3397 = vst [vmem:[#allocation2 + $0x388] sm:$0xff] %v2939
    %3398 = vst [vmem:[#allocation2 + $0x390] sm:$0xff] %v3050
    %3399 = vst [vmem:[#allocation2 + $0x398] sm:$0xff] %v3052
    %3400 = vst [vmem:[#allocation2 + $0x3a0] sm:$0xff] %v3163
    %3401 = vst [vmem:[#allocation2 + $0x3a8] sm:$0xff] %v3165
    %3402 = vst [vmem:[#allocation2 + $0x3b0] sm:$0xff] %v3276
    %3403 = vst [vmem:[#allocation2 + $0x3b8] sm:$0xff] %v3278
    %3404 = vst [vmem:[#allocation2 + $0x3c0] sm:$0xff] %v2941
    %3405 = vst [vmem:[#allocation2 + $0x3c8] sm:$0xff] %v2943
    %3406 = vst [vmem:[#allocation2 + $0x3d0] sm:$0xff] %v3054
    %3407 = vst [vmem:[#allocation2 + $0x3d8] sm:$0xff] %v3056
    %3408 = vst [vmem:[#allocation2 + $0x3e0] sm:$0xff] %v3167
    %3409 = vst [vmem:[#allocation2 + $0x3e8] sm:$0xff] %v3169
    %3410 = vst [vmem:[#allocation2 + $0x3f0] sm:$0xff] %v3280
    %3411 = vst [vmem:[#allocation2 + $0x3f8] sm:$0xff] %v3282
    loop: start=0, step=1, limit=16
    $region77: #{tpu_custom_call.1} parent=1 // loop_pre_header
      _
    $region78: #{tpu_custom_call.1} parent=1 // loop_header
      %s3413 = sphi 0, %s3417
      %p3414 = scmp.ge.s32.totalorder %s3413, 16
      %v3418 = vphi 0.0, %v4422
      %v3419 = vphi 0.0, %v4423
      %v3420 = vphi 0.0, %v4418
      %v3421 = vphi 0.0, %v4419
    $region79: #{tpu_custom_call.1} parent=1 // loop_header_branch
      %3416 = sbr.rel (%p3414) target = $region83
    $region80: #{tpu_custom_call.1} parent=1 // loop_body
      %s3422 = smul.u32 %s3413, 8
      %s3423 = smul.addr %s3422, 8
      %s3424 = scalar_lea.vmem [#allocation2], %s3423
      %v3425 = vld [vmem:[%s3424] sm:$0xff]
      %v3426 = vld [vmem:[%s3424 + $0x8] sm:$0xff]
      %v3427 = vld [vmem:[%s3424 + $0x10] sm:$0xff]
      %v3428 = vld [vmem:[%s3424 + $0x18] sm:$0xff]
      %v3429 = vld [vmem:[%s3424 + $0x20] sm:$0xff]
      %v3430 = vld [vmem:[%s3424 + $0x28] sm:$0xff]
      %v3431 = vld [vmem:[%s3424 + $0x30] sm:$0xff]
      %v3432 = vld [vmem:[%s3424 + $0x38] sm:$0xff]
      %v3433 = vpack.c.bf16 %v3418, %v3418
      %v3434 = vpack.c.bf16 %v3419, %v3419
      %s3435 = scalar_lea.vmem [#allocation12], 1024
      %v3436 = vld [vmem:[%s3435] sm:$0xff]
      %v3437 = vld [vmem:[%s3435 + $0x8] sm:$0xff]
      %v3438 = vld [vmem:[%s3435 + $0x10] sm:$0xff]
      %v3439 = vld [vmem:[%s3435 + $0x18] sm:$0xff]
      %v3440 = vld [vmem:[%s3435 + $0x20] sm:$0xff]
      %v3441 = vld [vmem:[%s3435 + $0x28] sm:$0xff]
      %v3442 = vld [vmem:[%s3435 + $0x30] sm:$0xff]
      %v3443 = vld [vmem:[%s3435 + $0x38] sm:$0xff]
      %v3444 = vld [vmem:[%s3435 + $0x40] sm:$0xff]
      %v3445 = vld [vmem:[%s3435 + $0x48] sm:$0xff]
      %v3446 = vld [vmem:[%s3435 + $0x50] sm:$0xff]
      %v3447 = vld [vmem:[%s3435 + $0x58] sm:$0xff]
      %v3448 = vld [vmem:[%s3435 + $0x60] sm:$0xff]
      %v3449 = vld [vmem:[%s3435 + $0x68] sm:$0xff]
      %v3450 = vld [vmem:[%s3435 + $0x70] sm:$0xff]
      %v3451 = vld [vmem:[%s3435 + $0x78] sm:$0xff]
      %v3452 = vld [vmem:[%s3435 + $0x80] sm:$0xff]
      %v3453 = vld [vmem:[%s3435 + $0x88] sm:$0xff]
      %v3454 = vld [vmem:[%s3435 + $0x90] sm:$0xff]
      %v3455 = vld [vmem:[%s3435 + $0x98] sm:$0xff]
      %v3456 = vld [vmem:[%s3435 + $0xa0] sm:$0xff]
      %v3457 = vld [vmem:[%s3435 + $0xa8] sm:$0xff]
      %v3458 = vld [vmem:[%s3435 + $0xb0] sm:$0xff]
      %v3459 = vld [vmem:[%s3435 + $0xb8] sm:$0xff]
      %v3460 = vld [vmem:[%s3435 + $0xc0] sm:$0xff]
      %v3461 = vld [vmem:[%s3435 + $0xc8] sm:$0xff]
      %v3462 = vld [vmem:[%s3435 + $0xd0] sm:$0xff]
      %v3463 = vld [vmem:[%s3435 + $0xd8] sm:$0xff]
      %v3464 = vld [vmem:[%s3435 + $0xe0] sm:$0xff]
      %v3465 = vld [vmem:[%s3435 + $0xe8] sm:$0xff]
      %v3466 = vld [vmem:[%s3435 + $0xf0] sm:$0xff]
      %v3467 = vld [vmem:[%s3435 + $0xf8] sm:$0xff]
      %v3468 = vld [vmem:[%s3435 + $0x100] sm:$0xff]
      %v3469 = vld [vmem:[%s3435 + $0x108] sm:$0xff]
      %v3470 = vld [vmem:[%s3435 + $0x110] sm:$0xff]
      %v3471 = vld [vmem:[%s3435 + $0x118] sm:$0xff]
      %v3472 = vld [vmem:[%s3435 + $0x120] sm:$0xff]
      %v3473 = vld [vmem:[%s3435 + $0x128] sm:$0xff]
      %v3474 = vld [vmem:[%s3435 + $0x130] sm:$0xff]
      %v3475 = vld [vmem:[%s3435 + $0x138] sm:$0xff]
      %v3476 = vld [vmem:[%s3435 + $0x140] sm:$0xff]
      %v3477 = vld [vmem:[%s3435 + $0x148] sm:$0xff]
      %v3478 = vld [vmem:[%s3435 + $0x150] sm:$0xff]
      %v3479 = vld [vmem:[%s3435 + $0x158] sm:$0xff]
      %v3480 = vld [vmem:[%s3435 + $0x160] sm:$0xff]
      %v3481 = vld [vmem:[%s3435 + $0x168] sm:$0xff]
      %v3482 = vld [vmem:[%s3435 + $0x170] sm:$0xff]
      %v3483 = vld [vmem:[%s3435 + $0x178] sm:$0xff]
      %v3484 = vld [vmem:[%s3435 + $0x180] sm:$0xff]
      %v3485 = vld [vmem:[%s3435 + $0x188] sm:$0xff]
      %v3486 = vld [vmem:[%s3435 + $0x190] sm:$0xff]
      %v3487 = vld [vmem:[%s3435 + $0x198] sm:$0xff]
      %v3488 = vld [vmem:[%s3435 + $0x1a0] sm:$0xff]
      %v3489 = vld [vmem:[%s3435 + $0x1a8] sm:$0xff]
      %v3490 = vld [vmem:[%s3435 + $0x1b0] sm:$0xff]
      %v3491 = vld [vmem:[%s3435 + $0x1b8] sm:$0xff]
      %v3492 = vld [vmem:[%s3435 + $0x1c0] sm:$0xff]
      %v3493 = vld [vmem:[%s3435 + $0x1c8] sm:$0xff]
      %v3494 = vld [vmem:[%s3435 + $0x1d0] sm:$0xff]
      %v3495 = vld [vmem:[%s3435 + $0x1d8] sm:$0xff]
      %v3496 = vld [vmem:[%s3435 + $0x1e0] sm:$0xff]
      %v3497 = vld [vmem:[%s3435 + $0x1e8] sm:$0xff]
      %v3498 = vld [vmem:[%s3435 + $0x1f0] sm:$0xff]
      %v3499 = vld [vmem:[%s3435 + $0x1f8] sm:$0xff]
      %v3500 = vld [vmem:[%s3435 + $0x200] sm:$0xff]
      %v3501 = vld [vmem:[%s3435 + $0x208] sm:$0xff]
      %v3502 = vld [vmem:[%s3435 + $0x210] sm:$0xff]
      %v3503 = vld [vmem:[%s3435 + $0x218] sm:$0xff]
      %v3504 = vld [vmem:[%s3435 + $0x220] sm:$0xff]
      %v3505 = vld [vmem:[%s3435 + $0x228] sm:$0xff]
      %v3506 = vld [vmem:[%s3435 + $0x230] sm:$0xff]
      %v3507 = vld [vmem:[%s3435 + $0x238] sm:$0xff]
      %v3508 = vld [vmem:[%s3435 + $0x240] sm:$0xff]
      %v3509 = vld [vmem:[%s3435 + $0x248] sm:$0xff]
      %v3510 = vld [vmem:[%s3435 + $0x250] sm:$0xff]
      %v3511 = vld [vmem:[%s3435 + $0x258] sm:$0xff]
      %v3512 = vld [vmem:[%s3435 + $0x260] sm:$0xff]
      %v3513 = vld [vmem:[%s3435 + $0x268] sm:$0xff]
      %v3514 = vld [vmem:[%s3435 + $0x270] sm:$0xff]
      %v3515 = vld [vmem:[%s3435 + $0x278] sm:$0xff]
      %v3516 = vld [vmem:[%s3435 + $0x280] sm:$0xff]
      %v3517 = vld [vmem:[%s3435 + $0x288] sm:$0xff]
      %v3518 = vld [vmem:[%s3435 + $0x290] sm:$0xff]
      %v3519 = vld [vmem:[%s3435 + $0x298] sm:$0xff]
      %v3520 = vld [vmem:[%s3435 + $0x2a0] sm:$0xff]
      %v3521 = vld [vmem:[%s3435 + $0x2a8] sm:$0xff]
      %v3522 = vld [vmem:[%s3435 + $0x2b0] sm:$0xff]
      %v3523 = vld [vmem:[%s3435 + $0x2b8] sm:$0xff]
      %v3524 = vld [vmem:[%s3435 + $0x2c0] sm:$0xff]
      %v3525 = vld [vmem:[%s3435 + $0x2c8] sm:$0xff]
      %v3526 = vld [vmem:[%s3435 + $0x2d0] sm:$0xff]
      %v3527 = vld [vmem:[%s3435 + $0x2d8] sm:$0xff]
      %v3528 = vld [vmem:[%s3435 + $0x2e0] sm:$0xff]
      %v3529 = vld [vmem:[%s3435 + $0x2e8] sm:$0xff]
      %v3530 = vld [vmem:[%s3435 + $0x2f0] sm:$0xff]
      %v3531 = vld [vmem:[%s3435 + $0x2f8] sm:$0xff]
      %v3532 = vld [vmem:[%s3435 + $0x300] sm:$0xff]
      %v3533 = vld [vmem:[%s3435 + $0x308] sm:$0xff]
      %v3534 = vld [vmem:[%s3435 + $0x310] sm:$0xff]
      %v3535 = vld [vmem:[%s3435 + $0x318] sm:$0xff]
      %v3536 = vld [vmem:[%s3435 + $0x320] sm:$0xff]
      %v3537 = vld [vmem:[%s3435 + $0x328] sm:$0xff]
      %v3538 = vld [vmem:[%s3435 + $0x330] sm:$0xff]
      %v3539 = vld [vmem:[%s3435 + $0x338] sm:$0xff]
      %v3540 = vld [vmem:[%s3435 + $0x340] sm:$0xff]
      %v3541 = vld [vmem:[%s3435 + $0x348] sm:$0xff]
      %v3542 = vld [vmem:[%s3435 + $0x350] sm:$0xff]
      %v3543 = vld [vmem:[%s3435 + $0x358] sm:$0xff]
      %v3544 = vld [vmem:[%s3435 + $0x360] sm:$0xff]
      %v3545 = vld [vmem:[%s3435 + $0x368] sm:$0xff]
      %v3546 = vld [vmem:[%s3435 + $0x370] sm:$0xff]
      %v3547 = vld [vmem:[%s3435 + $0x378] sm:$0xff]
      %v3548 = vld [vmem:[%s3435 + $0x380] sm:$0xff]
      %v3549 = vld [vmem:[%s3435 + $0x388] sm:$0xff]
      %v3550 = vld [vmem:[%s3435 + $0x390] sm:$0xff]
      %v3551 = vld [vmem:[%s3435 + $0x398] sm:$0xff]
      %v3552 = vld [vmem:[%s3435 + $0x3a0] sm:$0xff]
      %v3553 = vld [vmem:[%s3435 + $0x3a8] sm:$0xff]
      %v3554 = vld [vmem:[%s3435 + $0x3b0] sm:$0xff]
      %v3555 = vld [vmem:[%s3435 + $0x3b8] sm:$0xff]
      %v3556 = vld [vmem:[%s3435 + $0x3c0] sm:$0xff]
      %v3557 = vld [vmem:[%s3435 + $0x3c8] sm:$0xff]
      %v3558 = vld [vmem:[%s3435 + $0x3d0] sm:$0xff]
      %v3559 = vld [vmem:[%s3435 + $0x3d8] sm:$0xff]
      %v3560 = vld [vmem:[%s3435 + $0x3e0] sm:$0xff]
      %v3561 = vld [vmem:[%s3435 + $0x3e8] sm:$0xff]
      %v3562 = vld [vmem:[%s3435 + $0x3f0] sm:$0xff]
      %v3563 = vld [vmem:[%s3435 + $0x3f8] sm:$0xff]
      %v3692 = vunpack.c.l.b16 %v3436
      %v3693 = vunpack.c.h.b16 %v3436
      %v3694 = vunpack.c.l.b16 %v3437
      %v3695 = vunpack.c.h.b16 %v3437
      %v3696 = vunpack.c.l.b16 %v3438
      %v3697 = vunpack.c.h.b16 %v3438
      %v3698 = vunpack.c.l.b16 %v3439
      %v3699 = vunpack.c.h.b16 %v3439
      %v3700 = vunpack.c.l.b16 %v3440
      %v3701 = vunpack.c.h.b16 %v3440
      %v3702 = vunpack.c.l.b16 %v3441
      %v3703 = vunpack.c.h.b16 %v3441
      %v3704 = vunpack.c.l.b16 %v3442
      %v3705 = vunpack.c.h.b16 %v3442
      %v3706 = vunpack.c.l.b16 %v3443
      %v3707 = vunpack.c.h.b16 %v3443
      %v3708 = vunpack.c.l.b16 %v3444
      %v3709 = vunpack.c.h.b16 %v3444
      %v3710 = vunpack.c.l.b16 %v3445
      %v3711 = vunpack.c.h.b16 %v3445
      %v3712 = vunpack.c.l.b16 %v3446
      %v3713 = vunpack.c.h.b16 %v3446
      %v3714 = vunpack.c.l.b16 %v3447
      %v3715 = vunpack.c.h.b16 %v3447
      %v3716 = vunpack.c.l.b16 %v3448
      %v3717 = vunpack.c.h.b16 %v3448
      %v3718 = vunpack.c.l.b16 %v3449
      %v3719 = vunpack.c.h.b16 %v3449
      %v3720 = vunpack.c.l.b16 %v3450
      %v3721 = vunpack.c.h.b16 %v3450
      %v3722 = vunpack.c.l.b16 %v3451
      %v3723 = vunpack.c.h.b16 %v3451
      %v3724 = vunpack.c.l.b16 %v3452
      %v3725 = vunpack.c.h.b16 %v3452
      %v3726 = vunpack.c.l.b16 %v3453
      %v3727 = vunpack.c.h.b16 %v3453
      %v3728 = vunpack.c.l.b16 %v3454
      %v3729 = vunpack.c.h.b16 %v3454
      %v3730 = vunpack.c.l.b16 %v3455
      %v3731 = vunpack.c.h.b16 %v3455
      %v3732 = vunpack.c.l.b16 %v3456
      %v3733 = vunpack.c.h.b16 %v3456
      %v3734 = vunpack.c.l.b16 %v3457
      %v3735 = vunpack.c.h.b16 %v3457
      %v3736 = vunpack.c.l.b16 %v3458
      %v3737 = vunpack.c.h.b16 %v3458
      %v3738 = vunpack.c.l.b16 %v3459
      %v3739 = vunpack.c.h.b16 %v3459
      %v3740 = vunpack.c.l.b16 %v3460
      %v3741 = vunpack.c.h.b16 %v3460
      %v3742 = vunpack.c.l.b16 %v3461
      %v3743 = vunpack.c.h.b16 %v3461
      %v3744 = vunpack.c.l.b16 %v3462
      %v3745 = vunpack.c.h.b16 %v3462
      %v3746 = vunpack.c.l.b16 %v3463
      %v3747 = vunpack.c.h.b16 %v3463
      %v3748 = vunpack.c.l.b16 %v3464
      %v3749 = vunpack.c.h.b16 %v3464
      %v3750 = vunpack.c.l.b16 %v3465
      %v3751 = vunpack.c.h.b16 %v3465
      %v3752 = vunpack.c.l.b16 %v3466
      %v3753 = vunpack.c.h.b16 %v3466
      %v3754 = vunpack.c.l.b16 %v3467
      %v3755 = vunpack.c.h.b16 %v3467
      %v3756 = vunpack.c.l.b16 %v3468
      %v3757 = vunpack.c.h.b16 %v3468
      %v3758 = vunpack.c.l.b16 %v3469
      %v3759 = vunpack.c.h.b16 %v3469
      %v3760 = vunpack.c.l.b16 %v3470
      %v3761 = vunpack.c.h.b16 %v3470
      %v3762 = vunpack.c.l.b16 %v3471
      %v3763 = vunpack.c.h.b16 %v3471
      %v3764 = vunpack.c.l.b16 %v3472
      %v3765 = vunpack.c.h.b16 %v3472
      %v3766 = vunpack.c.l.b16 %v3473
      %v3767 = vunpack.c.h.b16 %v3473
      %v3768 = vunpack.c.l.b16 %v3474
      %v3769 = vunpack.c.h.b16 %v3474
      %v3770 = vunpack.c.l.b16 %v3475
      %v3771 = vunpack.c.h.b16 %v3475
      %v3772 = vunpack.c.l.b16 %v3476
      %v3773 = vunpack.c.h.b16 %v3476
      %v3774 = vunpack.c.l.b16 %v3477
      %v3775 = vunpack.c.h.b16 %v3477
      %v3776 = vunpack.c.l.b16 %v3478
      %v3777 = vunpack.c.h.b16 %v3478
      %v3778 = vunpack.c.l.b16 %v3479
      %v3779 = vunpack.c.h.b16 %v3479
      %v3780 = vunpack.c.l.b16 %v3480
      %v3781 = vunpack.c.h.b16 %v3480
      %v3782 = vunpack.c.l.b16 %v3481
      %v3783 = vunpack.c.h.b16 %v3481
      %v3784 = vunpack.c.l.b16 %v3482
      %v3785 = vunpack.c.h.b16 %v3482
      %v3786 = vunpack.c.l.b16 %v3483
      %v3787 = vunpack.c.h.b16 %v3483
      %v3788 = vunpack.c.l.b16 %v3484
      %v3789 = vunpack.c.h.b16 %v3484
      %v3790 = vunpack.c.l.b16 %v3485
      %v3791 = vunpack.c.h.b16 %v3485
      %v3792 = vunpack.c.l.b16 %v3486
      %v3793 = vunpack.c.h.b16 %v3486
      %v3794 = vunpack.c.l.b16 %v3487
      %v3795 = vunpack.c.h.b16 %v3487
      %v3796 = vunpack.c.l.b16 %v3488
      %v3797 = vunpack.c.h.b16 %v3488
      %v3798 = vunpack.c.l.b16 %v3489
      %v3799 = vunpack.c.h.b16 %v3489
      %v3800 = vunpack.c.l.b16 %v3490
      %v3801 = vunpack.c.h.b16 %v3490
      %v3802 = vunpack.c.l.b16 %v3491
      %v3803 = vunpack.c.h.b16 %v3491
      %v3804 = vunpack.c.l.b16 %v3492
      %v3805 = vunpack.c.h.b16 %v3492
      %v3806 = vunpack.c.l.b16 %v3493
      %v3807 = vunpack.c.h.b16 %v3493
      %v3808 = vunpack.c.l.b16 %v3494
      %v3809 = vunpack.c.h.b16 %v3494
      %v3810 = vunpack.c.l.b16 %v3495
      %v3811 = vunpack.c.h.b16 %v3495
      %v3812 = vunpack.c.l.b16 %v3496
      %v3813 = vunpack.c.h.b16 %v3496
      %v3814 = vunpack.c.l.b16 %v3497
      %v3815 = vunpack.c.h.b16 %v3497
      %v3816 = vunpack.c.l.b16 %v3498
      %v3817 = vunpack.c.h.b16 %v3498
      %v3818 = vunpack.c.l.b16 %v3499
      %v3819 = vunpack.c.h.b16 %v3499
      %v3820 = vunpack.c.l.b16 %v3500
      %v3821 = vunpack.c.h.b16 %v3500
      %v3822 = vunpack.c.l.b16 %v3501
      %v3823 = vunpack.c.h.b16 %v3501
      %v3824 = vunpack.c.l.b16 %v3502
      %v3825 = vunpack.c.h.b16 %v3502
      %v3826 = vunpack.c.l.b16 %v3503
      %v3827 = vunpack.c.h.b16 %v3503
      %v3828 = vunpack.c.l.b16 %v3504
      %v3829 = vunpack.c.h.b16 %v3504
      %v3830 = vunpack.c.l.b16 %v3505
      %v3831 = vunpack.c.h.b16 %v3505
      %v3832 = vunpack.c.l.b16 %v3506
      %v3833 = vunpack.c.h.b16 %v3506
      %v3834 = vunpack.c.l.b16 %v3507
      %v3835 = vunpack.c.h.b16 %v3507
      %v3836 = vunpack.c.l.b16 %v3508
      %v3837 = vunpack.c.h.b16 %v3508
      %v3838 = vunpack.c.l.b16 %v3509
      %v3839 = vunpack.c.h.b16 %v3509
      %v3840 = vunpack.c.l.b16 %v3510
      %v3841 = vunpack.c.h.b16 %v3510
      %v3842 = vunpack.c.l.b16 %v3511
      %v3843 = vunpack.c.h.b16 %v3511
      %v3844 = vunpack.c.l.b16 %v3512
      %v3845 = vunpack.c.h.b16 %v3512
      %v3846 = vunpack.c.l.b16 %v3513
      %v3847 = vunpack.c.h.b16 %v3513
      %v3848 = vunpack.c.l.b16 %v3514
      %v3849 = vunpack.c.h.b16 %v3514
      %v3850 = vunpack.c.l.b16 %v3515
      %v3851 = vunpack.c.h.b16 %v3515
      %v3852 = vunpack.c.l.b16 %v3516
      %v3853 = vunpack.c.h.b16 %v3516
      %v3854 = vunpack.c.l.b16 %v3517
      %v3855 = vunpack.c.h.b16 %v3517
      %v3856 = vunpack.c.l.b16 %v3518
      %v3857 = vunpack.c.h.b16 %v3518
      %v3858 = vunpack.c.l.b16 %v3519
      %v3859 = vunpack.c.h.b16 %v3519
      %v3860 = vunpack.c.l.b16 %v3520
      %v3861 = vunpack.c.h.b16 %v3520
      %v3862 = vunpack.c.l.b16 %v3521
      %v3863 = vunpack.c.h.b16 %v3521
      %v3864 = vunpack.c.l.b16 %v3522
      %v3865 = vunpack.c.h.b16 %v3522
      %v3866 = vunpack.c.l.b16 %v3523
      %v3867 = vunpack.c.h.b16 %v3523
      %v3868 = vunpack.c.l.b16 %v3524
      %v3869 = vunpack.c.h.b16 %v3524
      %v3870 = vunpack.c.l.b16 %v3525
      %v3871 = vunpack.c.h.b16 %v3525
      %v3872 = vunpack.c.l.b16 %v3526
      %v3873 = vunpack.c.h.b16 %v3526
      %v3874 = vunpack.c.l.b16 %v3527
      %v3875 = vunpack.c.h.b16 %v3527
      %v3876 = vunpack.c.l.b16 %v3528
      %v3877 = vunpack.c.h.b16 %v3528
      %v3878 = vunpack.c.l.b16 %v3529
      %v3879 = vunpack.c.h.b16 %v3529
      %v3880 = vunpack.c.l.b16 %v3530
      %v3881 = vunpack.c.h.b16 %v3530
      %v3882 = vunpack.c.l.b16 %v3531
      %v3883 = vunpack.c.h.b16 %v3531
      %v3884 = vunpack.c.l.b16 %v3532
      %v3885 = vunpack.c.h.b16 %v3532
      %v3886 = vunpack.c.l.b16 %v3533
      %v3887 = vunpack.c.h.b16 %v3533
      %v3888 = vunpack.c.l.b16 %v3534
      %v3889 = vunpack.c.h.b16 %v3534
      %v3890 = vunpack.c.l.b16 %v3535
      %v3891 = vunpack.c.h.b16 %v3535
      %v3892 = vunpack.c.l.b16 %v3536
      %v3893 = vunpack.c.h.b16 %v3536
      %v3894 = vunpack.c.l.b16 %v3537
      %v3895 = vunpack.c.h.b16 %v3537
      %v3896 = vunpack.c.l.b16 %v3538
      %v3897 = vunpack.c.h.b16 %v3538
      %v3898 = vunpack.c.l.b16 %v3539
      %v3899 = vunpack.c.h.b16 %v3539
      %v3900 = vunpack.c.l.b16 %v3540
      %v3901 = vunpack.c.h.b16 %v3540
      %v3902 = vunpack.c.l.b16 %v3541
      %v3903 = vunpack.c.h.b16 %v3541
      %v3904 = vunpack.c.l.b16 %v3542
      %v3905 = vunpack.c.h.b16 %v3542
      %v3906 = vunpack.c.l.b16 %v3543
      %v3907 = vunpack.c.h.b16 %v3543
      %v3908 = vunpack.c.l.b16 %v3544
      %v3909 = vunpack.c.h.b16 %v3544
      %v3910 = vunpack.c.l.b16 %v3545
      %v3911 = vunpack.c.h.b16 %v3545
      %v3912 = vunpack.c.l.b16 %v3546
      %v3913 = vunpack.c.h.b16 %v3546
      %v3914 = vunpack.c.l.b16 %v3547
      %v3915 = vunpack.c.h.b16 %v3547
      %v3916 = vunpack.c.l.b16 %v3548
      %v3917 = vunpack.c.h.b16 %v3548
      %v3918 = vunpack.c.l.b16 %v3549
      %v3919 = vunpack.c.h.b16 %v3549
      %v3920 = vunpack.c.l.b16 %v3550
      %v3921 = vunpack.c.h.b16 %v3550
      %v3922 = vunpack.c.l.b16 %v3551
      %v3923 = vunpack.c.h.b16 %v3551
      %v3924 = vunpack.c.l.b16 %v3552
      %v3925 = vunpack.c.h.b16 %v3552
      %v3926 = vunpack.c.l.b16 %v3553
      %v3927 = vunpack.c.h.b16 %v3553
      %v3928 = vunpack.c.l.b16 %v3554
      %v3929 = vunpack.c.h.b16 %v3554
      %v3930 = vunpack.c.l.b16 %v3555
      %v3931 = vunpack.c.h.b16 %v3555
      %v3932 = vunpack.c.l.b16 %v3556
      %v3933 = vunpack.c.h.b16 %v3556
      %v3934 = vunpack.c.l.b16 %v3557
      %v3935 = vunpack.c.h.b16 %v3557
      %v3936 = vunpack.c.l.b16 %v3558
      %v3937 = vunpack.c.h.b16 %v3558
      %v3938 = vunpack.c.l.b16 %v3559
      %v3939 = vunpack.c.h.b16 %v3559
      %v3940 = vunpack.c.l.b16 %v3560
      %v3941 = vunpack.c.h.b16 %v3560
      %v3942 = vunpack.c.l.b16 %v3561
      %v3943 = vunpack.c.h.b16 %v3561
      %v3944 = vunpack.c.l.b16 %v3562
      %v3945 = vunpack.c.h.b16 %v3562
      %v3946 = vunpack.c.l.b16 %v3563
      %v3947 = vunpack.c.h.b16 %v3563
      %v3948 = vpack.c.b16 %v3700, %v3692
      %v3949 = vpack.c.b16 %v3701, %v3693
      %v3950 = vpack.c.b16 %v3702, %v3694
      %v3951 = vpack.c.b16 %v3703, %v3695
      %v3952 = vpack.c.b16 %v3704, %v3696
      %v3953 = vpack.c.b16 %v3705, %v3697
      %v3954 = vpack.c.b16 %v3706, %v3698
      %v3955 = vpack.c.b16 %v3707, %v3699
      %v3956 = vpack.c.b16 %v3716, %v3708
      %v3957 = vpack.c.b16 %v3717, %v3709
      %v3958 = vpack.c.b16 %v3718, %v3710
      %v3959 = vpack.c.b16 %v3719, %v3711
      %v3960 = vpack.c.b16 %v3720, %v3712
      %v3961 = vpack.c.b16 %v3721, %v3713
      %v3962 = vpack.c.b16 %v3722, %v3714
      %v3963 = vpack.c.b16 %v3723, %v3715
      %v3964 = vpack.c.b16 %v3732, %v3724
      %v3965 = vpack.c.b16 %v3733, %v3725
      %v3966 = vpack.c.b16 %v3734, %v3726
      %v3967 = vpack.c.b16 %v3735, %v3727
      %v3968 = vpack.c.b16 %v3736, %v3728
      %v3969 = vpack.c.b16 %v3737, %v3729
      %v3970 = vpack.c.b16 %v3738, %v3730
      %v3971 = vpack.c.b16 %v3739, %v3731
      %v3972 = vpack.c.b16 %v3748, %v3740
      %v3973 = vpack.c.b16 %v3749, %v3741
      %v3974 = vpack.c.b16 %v3750, %v3742
      %v3975 = vpack.c.b16 %v3751, %v3743
      %v3976 = vpack.c.b16 %v3752, %v3744
      %v3977 = vpack.c.b16 %v3753, %v3745
      %v3978 = vpack.c.b16 %v3754, %v3746
      %v3979 = vpack.c.b16 %v3755, %v3747
      %v3980 = vpack.c.b16 %v3764, %v3756
      %v3981 = vpack.c.b16 %v3765, %v3757
      %v3982 = vpack.c.b16 %v3766, %v3758
      %v3983 = vpack.c.b16 %v3767, %v3759
      %v3984 = vpack.c.b16 %v3768, %v3760
      %v3985 = vpack.c.b16 %v3769, %v3761
      %v3986 = vpack.c.b16 %v3770, %v3762
      %v3987 = vpack.c.b16 %v3771, %v3763
      %v3988 = vpack.c.b16 %v3780, %v3772
      %v3989 = vpack.c.b16 %v3781, %v3773
      %v3990 = vpack.c.b16 %v3782, %v3774
      %v3991 = vpack.c.b16 %v3783, %v3775
      %v3992 = vpack.c.b16 %v3784, %v3776
      %v3993 = vpack.c.b16 %v3785, %v3777
      %v3994 = vpack.c.b16 %v3786, %v3778
      %v3995 = vpack.c.b16 %v3787, %v3779
      %v3996 = vpack.c.b16 %v3796, %v3788
      %v3997 = vpack.c.b16 %v3797, %v3789
      %v3998 = vpack.c.b16 %v3798, %v3790
      %v3999 = vpack.c.b16 %v3799, %v3791
      %v4000 = vpack.c.b16 %v3800, %v3792
      %v4001 = vpack.c.b16 %v3801, %v3793
      %v4002 = vpack.c.b16 %v3802, %v3794
      %v4003 = vpack.c.b16 %v3803, %v3795
      %v4004 = vpack.c.b16 %v3812, %v3804
      %v4005 = vpack.c.b16 %v3813, %v3805
      %v4006 = vpack.c.b16 %v3814, %v3806
      %v4007 = vpack.c.b16 %v3815, %v3807
      %v4008 = vpack.c.b16 %v3816, %v3808
      %v4009 = vpack.c.b16 %v3817, %v3809
      %v4010 = vpack.c.b16 %v3818, %v3810
      %v4011 = vpack.c.b16 %v3819, %v3811
      %v4012 = vpack.c.b16 %v3828, %v3820
      %v4013 = vpack.c.b16 %v3829, %v3821
      %v4014 = vpack.c.b16 %v3830, %v3822
      %v4015 = vpack.c.b16 %v3831, %v3823
      %v4016 = vpack.c.b16 %v3832, %v3824
      %v4017 = vpack.c.b16 %v3833, %v3825
      %v4018 = vpack.c.b16 %v3834, %v3826
      %v4019 = vpack.c.b16 %v3835, %v3827
      %v4020 = vpack.c.b16 %v3844, %v3836
      %v4021 = vpack.c.b16 %v3845, %v3837
      %v4022 = vpack.c.b16 %v3846, %v3838
      %v4023 = vpack.c.b16 %v3847, %v3839
      %v4024 = vpack.c.b16 %v3848, %v3840
      %v4025 = vpack.c.b16 %v3849, %v3841
      %v4026 = vpack.c.b16 %v3850, %v3842
      %v4027 = vpack.c.b16 %v3851, %v3843
      %v4028 = vpack.c.b16 %v3860, %v3852
      %v4029 = vpack.c.b16 %v3861, %v3853
      %v4030 = vpack.c.b16 %v3862, %v3854
      %v4031 = vpack.c.b16 %v3863, %v3855
      %v4032 = vpack.c.b16 %v3864, %v3856
      %v4033 = vpack.c.b16 %v3865, %v3857
      %v4034 = vpack.c.b16 %v3866, %v3858
      %v4035 = vpack.c.b16 %v3867, %v3859
      %v4036 = vpack.c.b16 %v3876, %v3868
      %v4037 = vpack.c.b16 %v3877, %v3869
      %v4038 = vpack.c.b16 %v3878, %v3870
      %v4039 = vpack.c.b16 %v3879, %v3871
      %v4040 = vpack.c.b16 %v3880, %v3872
      %v4041 = vpack.c.b16 %v3881, %v3873
      %v4042 = vpack.c.b16 %v3882, %v3874
      %v4043 = vpack.c.b16 %v3883, %v3875
      %v4044 = vpack.c.b16 %v3892, %v3884
      %v4045 = vpack.c.b16 %v3893, %v3885
      %v4046 = vpack.c.b16 %v3894, %v3886
      %v4047 = vpack.c.b16 %v3895, %v3887
      %v4048 = vpack.c.b16 %v3896, %v3888
      %v4049 = vpack.c.b16 %v3897, %v3889
      %v4050 = vpack.c.b16 %v3898, %v3890
      %v4051 = vpack.c.b16 %v3899, %v3891
      %v4052 = vpack.c.b16 %v3908, %v3900
      %v4053 = vpack.c.b16 %v3909, %v3901
      %v4054 = vpack.c.b16 %v3910, %v3902
      %v4055 = vpack.c.b16 %v3911, %v3903
      %v4056 = vpack.c.b16 %v3912, %v3904
      %v4057 = vpack.c.b16 %v3913, %v3905
      %v4058 = vpack.c.b16 %v3914, %v3906
      %v4059 = vpack.c.b16 %v3915, %v3907
      %v4060 = vpack.c.b16 %v3924, %v3916
      %v4061 = vpack.c.b16 %v3925, %v3917
      %v4062 = vpack.c.b16 %v3926, %v3918
      %v4063 = vpack.c.b16 %v3927, %v3919
      %v4064 = vpack.c.b16 %v3928, %v3920
      %v4065 = vpack.c.b16 %v3929, %v3921
      %v4066 = vpack.c.b16 %v3930, %v3922
      %v4067 = vpack.c.b16 %v3931, %v3923
      %v4068 = vpack.c.b16 %v3940, %v3932
      %v4069 = vpack.c.b16 %v3941, %v3933
      %v4070 = vpack.c.b16 %v3942, %v3934
      %v4071 = vpack.c.b16 %v3943, %v3935
      %v4072 = vpack.c.b16 %v3944, %v3936
      %v4073 = vpack.c.b16 %v3945, %v3937
      %v4074 = vpack.c.b16 %v3946, %v3938
      %v4075 = vpack.c.b16 %v3947, %v3939
      %4204 = vmatprep.subr.bf16.mxu0 %v3949
      %4205 = vmatpush1.bf16.msra.mxu0 %v3948
      %4206 = vmatprep.subr.bf16.mxu0 %v3957
      %4207 = vmatpush1.bf16.msra.mxu0 %v3956
      %4208 = vmatprep.subr.bf16.mxu0 %v3965
      %4209 = vmatpush1.bf16.msra.mxu0 %v3964
      %4210 = vmatprep.subr.bf16.mxu0 %v3973
      %4211 = vmatpush1.bf16.msra.mxu0 %v3972
      %4212 = vmatprep.subr.bf16.mxu0 %v3981
      %4213 = vmatpush1.bf16.msra.mxu0 %v3980
      %4214 = vmatprep.subr.bf16.mxu0 %v3989
      %4215 = vmatpush1.bf16.msra.mxu0 %v3988
      %4216 = vmatprep.subr.bf16.mxu0 %v3997
      %4217 = vmatpush1.bf16.msra.mxu0 %v3996
      %4218 = vmatprep.subr.bf16.mxu0 %v4005
      %4219 = vmatpush1.bf16.msra.mxu0 %v4004
      %4220 = vmatprep.subr.bf16.mxu0 %v4013
      %4221 = vmatpush1.bf16.msra.mxu0 %v4012
      %4222 = vmatprep.subr.bf16.mxu0 %v4021
      %4223 = vmatpush1.bf16.msra.mxu0 %v4020
      %4224 = vmatprep.subr.bf16.mxu0 %v4029
      %4225 = vmatpush1.bf16.msra.mxu0 %v4028
      %4226 = vmatprep.subr.bf16.mxu0 %v4037
      %4227 = vmatpush1.bf16.msra.mxu0 %v4036
      %4228 = vmatprep.subr.bf16.mxu0 %v4045
      %4229 = vmatpush1.bf16.msra.mxu0 %v4044
      %4230 = vmatprep.subr.bf16.mxu0 %v4053
      %4231 = vmatpush1.bf16.msra.mxu0 %v4052
      %4232 = vmatprep.subr.bf16.mxu0 %v4061
      %4233 = vmatpush1.bf16.msra.mxu0 %v4060
      %4234 = vmatprep.subr.bf16.mxu0 %v4069
      %4235 = vmatpush1.bf16.msra.mxu0 %v4068
      %4236 = vmatprep.mubr.bf16.mxu0 %v3434
      %4237 = vmatmul.mubr.bf16.gmra.mrb[0].mxu0 %v3433
      %v4238 = vpop.f32.mrb[0].mxu0
      %v4239 = vadd.f32 0.0, %v4238
      %v4240 = vpop.f32.mrb[0].mxu0
      %v4241 = vadd.f32 0.0, %v4240
      %v4242 = vpop.f32.mrb[0].mxu0
      %v4243 = vpop.f32.mrb[0].mxu0
      %4244 = vdwg.mxu0
      %4245 = vmatprep.subr.bf16.mxu0 %v3951
      %4246 = vmatpush1.bf16.msra.mxu0 %v3950
      %4247 = vmatprep.subr.bf16.mxu0 %v3959
      %4248 = vmatpush1.bf16.msra.mxu0 %v3958
      %4249 = vmatprep.subr.bf16.mxu0 %v3967
      %4250 = vmatpush1.bf16.msra.mxu0 %v3966
      %4251 = vmatprep.subr.bf16.mxu0 %v3975
      %4252 = vmatpush1.bf16.msra.mxu0 %v3974
      %4253 = vmatprep.subr.bf16.mxu0 %v3983
      %4254 = vmatpush1.bf16.msra.mxu0 %v3982
      %4255 = vmatprep.subr.bf16.mxu0 %v3991
      %4256 = vmatpush1.bf16.msra.mxu0 %v3990
      %4257 = vmatprep.subr.bf16.mxu0 %v3999
      %4258 = vmatpush1.bf16.msra.mxu0 %v3998
      %4259 = vmatprep.subr.bf16.mxu0 %v4007
      %4260 = vmatpush1.bf16.msra.mxu0 %v4006
      %4261 = vmatprep.subr.bf16.mxu0 %v4015
      %4262 = vmatpush1.bf16.msra.mxu0 %v4014
      %4263 = vmatprep.subr.bf16.mxu0 %v4023
      %4264 = vmatpush1.bf16.msra.mxu0 %v4022
      %4265 = vmatprep.subr.bf16.mxu0 %v4031
      %4266 = vmatpush1.bf16.msra.mxu0 %v4030
      %4267 = vmatprep.subr.bf16.mxu0 %v4039
      %4268 = vmatpush1.bf16.msra.mxu0 %v4038
      %4269 = vmatprep.subr.bf16.mxu0 %v4047
      %4270 = vmatpush1.bf16.msra.mxu0 %v4046
      %4271 = vmatprep.subr.bf16.mxu0 %v4055
      %4272 = vmatpush1.bf16.msra.mxu0 %v4054
      %4273 = vmatprep.subr.bf16.mxu0 %v4063
      %4274 = vmatpush1.bf16.msra.mxu0 %v4062
      %4275 = vmatprep.subr.bf16.mxu0 %v4071
      %4276 = vmatpush1.bf16.msra.mxu0 %v4070
      %4277 = vmatprep.mubr.bf16.mxu0 %v3434
      %4278 = vmatmul.mubr.bf16.gmra.mrb[0].mxu0 %v3433
      %v4279 = vpop.f32.mrb[0].mxu0
      %v4280 = vadd.f32 0.0, %v4279
      %v4281 = vpop.f32.mrb[0].mxu0
      %v4282 = vadd.f32 0.0, %v4281
      %v4283 = vpop.f32.mrb[0].mxu0
      %v4284 = vpop.f32.mrb[0].mxu0
      %4285 = vdwg.mxu0
      %4286 = vmatprep.subr.bf16.mxu0 %v3953
      %4287 = vmatpush1.bf16.msra.mxu0 %v3952
      %4288 = vmatprep.subr.bf16.mxu0 %v3961
      %4289 = vmatpush1.bf16.msra.mxu0 %v3960
      %4290 = vmatprep.subr.bf16.mxu0 %v3969
      %4291 = vmatpush1.bf16.msra.mxu0 %v3968
      %4292 = vmatprep.subr.bf16.mxu0 %v3977
      %4293 = vmatpush1.bf16.msra.mxu0 %v3976
      %4294 = vmatprep.subr.bf16.mxu0 %v3985
      %4295 = vmatpush1.bf16.msra.mxu0 %v3984
      %4296 = vmatprep.subr.bf16.mxu0 %v3993
      %4297 = vmatpush1.bf16.msra.mxu0 %v3992
      %4298 = vmatprep.subr.bf16.mxu0 %v4001
      %4299 = vmatpush1.bf16.msra.mxu0 %v4000
      %4300 = vmatprep.subr.bf16.mxu0 %v4009
      %4301 = vmatpush1.bf16.msra.mxu0 %v4008
      %4302 = vmatprep.subr.bf16.mxu0 %v4017
      %4303 = vmatpush1.bf16.msra.mxu0 %v4016
      %4304 = vmatprep.subr.bf16.mxu0 %v4025
      %4305 = vmatpush1.bf16.msra.mxu0 %v4024
      %4306 = vmatprep.subr.bf16.mxu0 %v4033
      %4307 = vmatpush1.bf16.msra.mxu0 %v4032
      %4308 = vmatprep.subr.bf16.mxu0 %v4041
      %4309 = vmatpush1.bf16.msra.mxu0 %v4040
      %4310 = vmatprep.subr.bf16.mxu0 %v4049
      %4311 = vmatpush1.bf16.msra.mxu0 %v4048
      %4312 = vmatprep.subr.bf16.mxu0 %v4057
      %4313 = vmatpush1.bf16.msra.mxu0 %v4056
      %4314 = vmatprep.subr.bf16.mxu0 %v4065
      %4315 = vmatpush1.bf16.msra.mxu0 %v4064
      %4316 = vmatprep.subr.bf16.mxu0 %v4073
      %4317 = vmatpush1.bf16.msra.mxu0 %v4072
      %4318 = vmatprep.mubr.bf16.mxu0 %v3434
      %4319 = vmatmul.mubr.bf16.gmra.mrb[0].mxu0 %v3433
      %v4320 = vpop.f32.mrb[0].mxu0
      %v4321 = vadd.f32 0.0, %v4320
      %v4322 = vpop.f32.mrb[0].mxu0
      %v4323 = vadd.f32 0.0, %v4322
      %v4324 = vpop.f32.mrb[0].mxu0
      %v4325 = vpop.f32.mrb[0].mxu0
      %4326 = vdwg.mxu0
      %4327 = vmatprep.subr.bf16.mxu0 %v3955
      %4328 = vmatpush1.bf16.msra.mxu0 %v3954
      %4329 = vmatprep.subr.bf16.mxu0 %v3963
      %4330 = vmatpush1.bf16.msra.mxu0 %v3962
      %4331 = vmatprep.subr.bf16.mxu0 %v3971
      %4332 = vmatpush1.bf16.msra.mxu0 %v3970
      %4333 = vmatprep.subr.bf16.mxu0 %v3979
      %4334 = vmatpush1.bf16.msra.mxu0 %v3978
      %4335 = vmatprep.subr.bf16.mxu0 %v3987
      %4336 = vmatpush1.bf16.msra.mxu0 %v3986
      %4337 = vmatprep.subr.bf16.mxu0 %v3995
      %4338 = vmatpush1.bf16.msra.mxu0 %v3994
      %4339 = vmatprep.subr.bf16.mxu0 %v4003
      %4340 = vmatpush1.bf16.msra.mxu0 %v4002
      %4341 = vmatprep.subr.bf16.mxu0 %v4011
      %4342 = vmatpush1.bf16.msra.mxu0 %v4010
      %4343 = vmatprep.subr.bf16.mxu0 %v4019
      %4344 = vmatpush1.bf16.msra.mxu0 %v4018
      %4345 = vmatprep.subr.bf16.mxu0 %v4027
      %4346 = vmatpush1.bf16.msra.mxu0 %v4026
      %4347 = vmatprep.subr.bf16.mxu0 %v4035
      %4348 = vmatpush1.bf16.msra.mxu0 %v4034
      %4349 = vmatprep.subr.bf16.mxu0 %v4043
      %4350 = vmatpush1.bf16.msra.mxu0 %v4042
      %4351 = vmatprep.subr.bf16.mxu0 %v4051
      %4352 = vmatpush1.bf16.msra.mxu0 %v4050
      %4353 = vmatprep.subr.bf16.mxu0 %v4059
      %4354 = vmatpush1.bf16.msra.mxu0 %v4058
      %4355 = vmatprep.subr.bf16.mxu0 %v4067
      %4356 = vmatpush1.bf16.msra.mxu0 %v4066
      %4357 = vmatprep.subr.bf16.mxu0 %v4075
      %4358 = vmatpush1.bf16.msra.mxu0 %v4074
      %4359 = vmatprep.mubr.bf16.mxu0 %v3434
      %4360 = vmatmul.mubr.bf16.gmra.mrb[0].mxu0 %v3433
      %v4361 = vpop.f32.mrb[0].mxu0
      %v4362 = vadd.f32 0.0, %v4361
      %v4363 = vpop.f32.mrb[0].mxu0
      %v4364 = vadd.f32 0.0, %v4363
      %v4365 = vpop.f32.mrb[0].mxu0
      %v4366 = vpop.f32.mrb[0].mxu0
      %4367 = vdwg.mxu0
      %v4368 = vadd.f32 %v3425, %v4239
      %v4369 = vadd.f32 %v3426, %v4241
      %v4370 = vadd.f32 %v3427, %v4280
      %v4371 = vadd.f32 %v3428, %v4282
      %v4372 = vadd.f32 %v3429, %v4321
      %v4373 = vadd.f32 %v3430, %v4323
      %v4374 = vadd.f32 %v3431, %v4362
      %v4375 = vadd.f32 %v3432, %v4364
      %v4376 = vsub.f32 0.0, %v4368
      %v4377 = vsub.f32 0.0, %v4369
      %v4378 = vmul.f32 %v4376, 1.442695
      %v4379 = vpow.pop %v4378
      %v4380 = vmul.f32 %v4377, 1.442695
      %v4381 = vpow.pop %v4380
      %v4382 = vadd.f32 %v4379, 1.0
      %v4383 = vadd.f32 %v4381, 1.0
      %v4384 = vrcp.pop %v4382
      %v4385 = vmul.f32 1.0, %v4384
      %v4386 = vrcp.pop %v4383
      %v4387 = vmul.f32 1.0, %v4386
      %v4388 = vsub.f32 0.0, %v4370
      %v4389 = vsub.f32 0.0, %v4371
      %v4390 = vmul.f32 %v4388, 1.442695
      %v4391 = vpow.pop %v4390
      %v4392 = vmul.f32 %v4389, 1.442695
      %v4393 = vpow.pop %v4392
      %v4394 = vadd.f32 %v4391, 1.0
      %v4395 = vadd.f32 %v4393, 1.0
      %v4396 = vrcp.pop %v4394
      %v4397 = vmul.f32 1.0, %v4396
      %v4398 = vrcp.pop %v4395
      %v4399 = vmul.f32 1.0, %v4398
      %v4400 = vtanh.pop %v4372
      %v4401 = vtanh.pop %v4373
      %v4402 = vsub.f32 0.0, %v4374
      %v4403 = vsub.f32 0.0, %v4375
      %v4404 = vmul.f32 %v4402, 1.442695
      %v4405 = vpow.pop %v4404
      %v4406 = vmul.f32 %v4403, 1.442695
      %v4407 = vpow.pop %v4406
      %v4408 = vadd.f32 %v4405, 1.0
      %v4409 = vadd.f32 %v4407, 1.0
      %v4410 = vrcp.pop %v4408
      %v4411 = vmul.f32 1.0, %v4410
      %v4412 = vrcp.pop %v4409
      %v4413 = vmul.f32 1.0, %v4412
      %v4414 = vmul.f32 %v4397, %v3420
      %v4415 = vmul.f32 %v4399, %v3421
      %v4416 = vmul.f32 %v4385, %v4400
      %v4417 = vmul.f32 %v4387, %v4401
      %v4418 = vadd.f32 %v4414, %v4416
      %v4419 = vadd.f32 %v4415, %v4417
      %v4420 = vtanh.pop %v4418
      %v4421 = vtanh.pop %v4419
      %v4422 = vmul.f32 %v4411, %v4420
      %v4423 = vmul.f32 %v4413, %v4421
      %s4424 = smul.u32 %s3413, 2
      %s4425 = smul.addr %s4424, 8
      %s4426 = scalar_lea.vmem [#allocation3], %s4425
      %4427 = vst [vmem:[%s4426] sm:$0xff] %v4422
      %4428 = vst [vmem:[%s4426 + $0x8] sm:$0xff] %v4423
    $region81: #{tpu_custom_call.1} parent=1 // loop_footer
      %s3417 = sadd.s32 1, %s3413
    $region82: #{tpu_custom_call.1} parent=1 // loop_footer_branch
      %3412 = sbr.rel target = $region78
    $region83: #{tpu_custom_call.1} parent=1 // loop_exit
      _
    %s4429 = scalar_lea.vmem [#allocation14], 16
    %v4430 = vld [vmem:[%s4429] sm:$0xff]
    %v4431 = vld [vmem:[#allocation3] sm:$0xff]
    %v4432 = vld [vmem:[#allocation3 + $0x8] sm:$0xff]
    %v4433 = vld [vmem:[#allocation3 + $0x10] sm:$0xff]
    %v4434 = vld [vmem:[#allocation3 + $0x18] sm:$0xff]
    %v4435 = vld [vmem:[#allocation3 + $0x20] sm:$0xff]
    %v4436 = vld [vmem:[#allocation3 + $0x28] sm:$0xff]
    %v4437 = vld [vmem:[#allocation3 + $0x30] sm:$0xff]
    %v4438 = vld [vmem:[#allocation3 + $0x38] sm:$0xff]
    %v4439 = vld [vmem:[#allocation3 + $0x40] sm:$0xff]
    %v4440 = vld [vmem:[#allocation3 + $0x48] sm:$0xff]
    %v4441 = vld [vmem:[#allocation3 + $0x50] sm:$0xff]
    %v4442 = vld [vmem:[#allocation3 + $0x58] sm:$0xff]
    %v4443 = vld [vmem:[#allocation3 + $0x60] sm:$0xff]
    %v4444 = vld [vmem:[#allocation3 + $0x68] sm:$0xff]
    %v4445 = vld [vmem:[#allocation3 + $0x70] sm:$0xff]
    %v4446 = vld [vmem:[#allocation3 + $0x78] sm:$0xff]
    %v4447 = vld [vmem:[#allocation3 + $0x80] sm:$0xff]
    %v4448 = vld [vmem:[#allocation3 + $0x88] sm:$0xff]
    %v4449 = vld [vmem:[#allocation3 + $0x90] sm:$0xff]
    %v4450 = vld [vmem:[#allocation3 + $0x98] sm:$0xff]
    %v4451 = vld [vmem:[#allocation3 + $0xa0] sm:$0xff]
    %v4452 = vld [vmem:[#allocation3 + $0xa8] sm:$0xff]
    %v4453 = vld [vmem:[#allocation3 + $0xb0] sm:$0xff]
    %v4454 = vld [vmem:[#allocation3 + $0xb8] sm:$0xff]
    %v4455 = vld [vmem:[#allocation3 + $0xc0] sm:$0xff]
    %v4456 = vld [vmem:[#allocation3 + $0xc8] sm:$0xff]
    %v4457 = vld [vmem:[#allocation3 + $0xd0] sm:$0xff]
    %v4458 = vld [vmem:[#allocation3 + $0xd8] sm:$0xff]
    %v4459 = vld [vmem:[#allocation3 + $0xe0] sm:$0xff]
    %v4460 = vld [vmem:[#allocation3 + $0xe8] sm:$0xff]
    %v4461 = vld [vmem:[#allocation3 + $0xf0] sm:$0xff]
    %v4462 = vld [vmem:[#allocation3 + $0xf8] sm:$0xff]
    %v4463 = vpack.c.bf16 %v4433, %v4431
    %v4464 = vpack.c.bf16 %v4434, %v4432
    %v4465 = vpack.c.bf16 %v4437, %v4435
    %v4466 = vpack.c.bf16 %v4438, %v4436
    %v4467 = vpack.c.bf16 %v4441, %v4439
    %v4468 = vpack.c.bf16 %v4442, %v4440
    %v4469 = vpack.c.bf16 %v4445, %v4443
    %v4470 = vpack.c.bf16 %v4446, %v4444
    %v4471 = vpack.c.bf16 %v4449, %v4447
    %v4472 = vpack.c.bf16 %v4450, %v4448
    %v4473 = vpack.c.bf16 %v4453, %v4451
    %v4474 = vpack.c.bf16 %v4454, %v4452
    %v4475 = vpack.c.bf16 %v4457, %v4455
    %v4476 = vpack.c.bf16 %v4458, %v4456
    %v4477 = vpack.c.bf16 %v4461, %v4459
    %v4478 = vpack.c.bf16 %v4462, %v4460
    %s4479 = scalar_lea.vmem [#allocation11], 1024
    %v4480 = vld [vmem:[%s4479] sm:$0xff]
    %v4481 = vld [vmem:[%s4479 + $0x8] sm:$0xff]
    %v4482 = vld [vmem:[%s4479 + $0x10] sm:$0xff]
    %v4483 = vld [vmem:[%s4479 + $0x18] sm:$0xff]
    %v4484 = vld [vmem:[%s4479 + $0x20] sm:$0xff]
    %v4485 = vld [vmem:[%s4479 + $0x28] sm:$0xff]
    %v4486 = vld [vmem:[%s4479 + $0x30] sm:$0xff]
    %v4487 = vld [vmem:[%s4479 + $0x38] sm:$0xff]
    %v4488 = vld [vmem:[%s4479 + $0x40] sm:$0xff]
    %v4489 = vld [vmem:[%s4479 + $0x48] sm:$0xff]
    %v4490 = vld [vmem:[%s4479 + $0x50] sm:$0xff]
    %v4491 = vld [vmem:[%s4479 + $0x58] sm:$0xff]
    %v4492 = vld [vmem:[%s4479 + $0x60] sm:$0xff]
    %v4493 = vld [vmem:[%s4479 + $0x68] sm:$0xff]
    %v4494 = vld [vmem:[%s4479 + $0x70] sm:$0xff]
    %v4495 = vld [vmem:[%s4479 + $0x78] sm:$0xff]
    %v4496 = vld [vmem:[%s4479 + $0x80] sm:$0xff]
    %v4497 = vld [vmem:[%s4479 + $0x88] sm:$0xff]
    %v4498 = vld [vmem:[%s4479 + $0x90] sm:$0xff]
    %v4499 = vld [vmem:[%s4479 + $0x98] sm:$0xff]
    %v4500 = vld [vmem:[%s4479 + $0xa0] sm:$0xff]
    %v4501 = vld [vmem:[%s4479 + $0xa8] sm:$0xff]
    %v4502 = vld [vmem:[%s4479 + $0xb0] sm:$0xff]
    %v4503 = vld [vmem:[%s4479 + $0xb8] sm:$0xff]
    %v4504 = vld [vmem:[%s4479 + $0xc0] sm:$0xff]
    %v4505 = vld [vmem:[%s4479 + $0xc8] sm:$0xff]
    %v4506 = vld [vmem:[%s4479 + $0xd0] sm:$0xff]
    %v4507 = vld [vmem:[%s4479 + $0xd8] sm:$0xff]
    %v4508 = vld [vmem:[%s4479 + $0xe0] sm:$0xff]
    %v4509 = vld [vmem:[%s4479 + $0xe8] sm:$0xff]
    %v4510 = vld [vmem:[%s4479 + $0xf0] sm:$0xff]
    %v4511 = vld [vmem:[%s4479 + $0xf8] sm:$0xff]
    %v4512 = vld [vmem:[%s4479 + $0x100] sm:$0xff]
    %v4513 = vld [vmem:[%s4479 + $0x108] sm:$0xff]
    %v4514 = vld [vmem:[%s4479 + $0x110] sm:$0xff]
    %v4515 = vld [vmem:[%s4479 + $0x118] sm:$0xff]
    %v4516 = vld [vmem:[%s4479 + $0x120] sm:$0xff]
    %v4517 = vld [vmem:[%s4479 + $0x128] sm:$0xff]
    %v4518 = vld [vmem:[%s4479 + $0x130] sm:$0xff]
    %v4519 = vld [vmem:[%s4479 + $0x138] sm:$0xff]
    %v4520 = vld [vmem:[%s4479 + $0x140] sm:$0xff]
    %v4521 = vld [vmem:[%s4479 + $0x148] sm:$0xff]
    %v4522 = vld [vmem:[%s4479 + $0x150] sm:$0xff]
    %v4523 = vld [vmem:[%s4479 + $0x158] sm:$0xff]
    %v4524 = vld [vmem:[%s4479 + $0x160] sm:$0xff]
    %v4525 = vld [vmem:[%s4479 + $0x168] sm:$0xff]
    %v4526 = vld [vmem:[%s4479 + $0x170] sm:$0xff]
    %v4527 = vld [vmem:[%s4479 + $0x178] sm:$0xff]
    %v4528 = vld [vmem:[%s4479 + $0x180] sm:$0xff]
    %v4529 = vld [vmem:[%s4479 + $0x188] sm:$0xff]
    %v4530 = vld [vmem:[%s4479 + $0x190] sm:$0xff]
    %v4531 = vld [vmem:[%s4479 + $0x198] sm:$0xff]
    %v4532 = vld [vmem:[%s4479 + $0x1a0] sm:$0xff]
    %v4533 = vld [vmem:[%s4479 + $0x1a8] sm:$0xff]
    %v4534 = vld [vmem:[%s4479 + $0x1b0] sm:$0xff]
    %v4535 = vld [vmem:[%s4479 + $0x1b8] sm:$0xff]
    %v4536 = vld [vmem:[%s4479 + $0x1c0] sm:$0xff]
    %v4537 = vld [vmem:[%s4479 + $0x1c8] sm:$0xff]
    %v4538 = vld [vmem:[%s4479 + $0x1d0] sm:$0xff]
    %v4539 = vld [vmem:[%s4479 + $0x1d8] sm:$0xff]
    %v4540 = vld [vmem:[%s4479 + $0x1e0] sm:$0xff]
    %v4541 = vld [vmem:[%s4479 + $0x1e8] sm:$0xff]
    %v4542 = vld [vmem:[%s4479 + $0x1f0] sm:$0xff]
    %v4543 = vld [vmem:[%s4479 + $0x1f8] sm:$0xff]
    %v4544 = vld [vmem:[%s4479 + $0x200] sm:$0xff]
    %v4545 = vld [vmem:[%s4479 + $0x208] sm:$0xff]
    %v4546 = vld [vmem:[%s4479 + $0x210] sm:$0xff]
    %v4547 = vld [vmem:[%s4479 + $0x218] sm:$0xff]
    %v4548 = vld [vmem:[%s4479 + $0x220] sm:$0xff]
    %v4549 = vld [vmem:[%s4479 + $0x228] sm:$0xff]
    %v4550 = vld [vmem:[%s4479 + $0x230] sm:$0xff]
    %v4551 = vld [vmem:[%s4479 + $0x238] sm:$0xff]
    %v4552 = vld [vmem:[%s4479 + $0x240] sm:$0xff]
    %v4553 = vld [vmem:[%s4479 + $0x248] sm:$0xff]
    %v4554 = vld [vmem:[%s4479 + $0x250] sm:$0xff]
    %v4555 = vld [vmem:[%s4479 + $0x258] sm:$0xff]
    %v4556 = vld [vmem:[%s4479 + $0x260] sm:$0xff]
    %v4557 = vld [vmem:[%s4479 + $0x268] sm:$0xff]
    %v4558 = vld [vmem:[%s4479 + $0x270] sm:$0xff]
    %v4559 = vld [vmem:[%s4479 + $0x278] sm:$0xff]
    %v4560 = vld [vmem:[%s4479 + $0x280] sm:$0xff]
    %v4561 = vld [vmem:[%s4479 + $0x288] sm:$0xff]
    %v4562 = vld [vmem:[%s4479 + $0x290] sm:$0xff]
    %v4563 = vld [vmem:[%s4479 + $0x298] sm:$0xff]
    %v4564 = vld [vmem:[%s4479 + $0x2a0] sm:$0xff]
    %v4565 = vld [vmem:[%s4479 + $0x2a8] sm:$0xff]
    %v4566 = vld [vmem:[%s4479 + $0x2b0] sm:$0xff]
    %v4567 = vld [vmem:[%s4479 + $0x2b8] sm:$0xff]
    %v4568 = vld [vmem:[%s4479 + $0x2c0] sm:$0xff]
    %v4569 = vld [vmem:[%s4479 + $0x2c8] sm:$0xff]
    %v4570 = vld [vmem:[%s4479 + $0x2d0] sm:$0xff]
    %v4571 = vld [vmem:[%s4479 + $0x2d8] sm:$0xff]
    %v4572 = vld [vmem:[%s4479 + $0x2e0] sm:$0xff]
    %v4573 = vld [vmem:[%s4479 + $0x2e8] sm:$0xff]
    %v4574 = vld [vmem:[%s4479 + $0x2f0] sm:$0xff]
    %v4575 = vld [vmem:[%s4479 + $0x2f8] sm:$0xff]
    %v4576 = vld [vmem:[%s4479 + $0x300] sm:$0xff]
    %v4577 = vld [vmem:[%s4479 + $0x308] sm:$0xff]
    %v4578 = vld [vmem:[%s4479 + $0x310] sm:$0xff]
    %v4579 = vld [vmem:[%s4479 + $0x318] sm:$0xff]
    %v4580 = vld [vmem:[%s4479 + $0x320] sm:$0xff]
    %v4581 = vld [vmem:[%s4479 + $0x328] sm:$0xff]
    %v4582 = vld [vmem:[%s4479 + $0x330] sm:$0xff]
    %v4583 = vld [vmem:[%s4479 + $0x338] sm:$0xff]
    %v4584 = vld [vmem:[%s4479 + $0x340] sm:$0xff]
    %v4585 = vld [vmem:[%s4479 + $0x348] sm:$0xff]
    %v4586 = vld [vmem:[%s4479 + $0x350] sm:$0xff]
    %v4587 = vld [vmem:[%s4479 + $0x358] sm:$0xff]
    %v4588 = vld [vmem:[%s4479 + $0x360] sm:$0xff]
    %v4589 = vld [vmem:[%s4479 + $0x368] sm:$0xff]
    %v4590 = vld [vmem:[%s4479 + $0x370] sm:$0xff]
    %v4591 = vld [vmem:[%s4479 + $0x378] sm:$0xff]
    %v4592 = vld [vmem:[%s4479 + $0x380] sm:$0xff]
    %v4593 = vld [vmem:[%s4479 + $0x388] sm:$0xff]
    %v4594 = vld [vmem:[%s4479 + $0x390] sm:$0xff]
    %v4595 = vld [vmem:[%s4479 + $0x398] sm:$0xff]
    %v4596 = vld [vmem:[%s4479 + $0x3a0] sm:$0xff]
    %v4597 = vld [vmem:[%s4479 + $0x3a8] sm:$0xff]
    %v4598 = vld [vmem:[%s4479 + $0x3b0] sm:$0xff]
    %v4599 = vld [vmem:[%s4479 + $0x3b8] sm:$0xff]
    %v4600 = vld [vmem:[%s4479 + $0x3c0] sm:$0xff]
    %v4601 = vld [vmem:[%s4479 + $0x3c8] sm:$0xff]
    %v4602 = vld [vmem:[%s4479 + $0x3d0] sm:$0xff]
    %v4603 = vld [vmem:[%s4479 + $0x3d8] sm:$0xff]
    %v4604 = vld [vmem:[%s4479 + $0x3e0] sm:$0xff]
    %v4605 = vld [vmem:[%s4479 + $0x3e8] sm:$0xff]
    %v4606 = vld [vmem:[%s4479 + $0x3f0] sm:$0xff]
    %v4607 = vld [vmem:[%s4479 + $0x3f8] sm:$0xff]
    %v4609 = vlaneseq
    %v4610 = vshrl.u32 %v4609, 7
    %v4611 = vsub.s32 0, %v4610
    %v4612 = vrot.slane %v4430, %v4611
    %v4613 = vlaneseq
    %v4614 = vshrl.u32 %v4613, 7
    %v4615 = vsub.s32 1, %v4614
    %v4616 = vrot.slane %v4430, %v4615
    %v4617 = vlaneseq
    %v4618 = vshrl.u32 %v4617, 7
    %v4619 = vsub.s32 2, %v4618
    %v4620 = vrot.slane %v4430, %v4619
    %v4621 = vlaneseq
    %v4622 = vshrl.u32 %v4621, 7
    %v4623 = vsub.s32 3, %v4622
    %v4624 = vrot.slane %v4430, %v4623
    %v4625 = vlaneseq
    %v4626 = vshrl.u32 %v4625, 7
    %v4627 = vsub.s32 4, %v4626
    %v4628 = vrot.slane %v4430, %v4627
    %v4629 = vlaneseq
    %v4630 = vshrl.u32 %v4629, 7
    %v4631 = vsub.s32 5, %v4630
    %v4632 = vrot.slane %v4430, %v4631
    %v4633 = vlaneseq
    %v4634 = vshrl.u32 %v4633, 7
    %v4635 = vsub.s32 6, %v4634
    %v4636 = vrot.slane %v4430, %v4635
    %v4637 = vlaneseq
    %v4638 = vshrl.u32 %v4637, 7
    %v4639 = vsub.s32 7, %v4638
    %v4640 = vrot.slane %v4430, %v4639
    %v4777 = vunpack.c.l.b16 %v4480
    %v4778 = vunpack.c.h.b16 %v4480
    %v4779 = vunpack.c.l.b16 %v4481
    %v4780 = vunpack.c.h.b16 %v4481
    %v4781 = vunpack.c.l.b16 %v4482
    %v4782 = vunpack.c.h.b16 %v4482
    %v4783 = vunpack.c.l.b16 %v4483
    %v4784 = vunpack.c.h.b16 %v4483
    %v4785 = vunpack.c.l.b16 %v4484
    %v4786 = vunpack.c.h.b16 %v4484
    %v4787 = vunpack.c.l.b16 %v4485
    %v4788 = vunpack.c.h.b16 %v4485
    %v4789 = vunpack.c.l.b16 %v4486
    %v4790 = vunpack.c.h.b16 %v4486
    %v4791 = vunpack.c.l.b16 %v4487
    %v4792 = vunpack.c.h.b16 %v4487
    %v4793 = vunpack.c.l.b16 %v4488
    %v4794 = vunpack.c.h.b16 %v4488
    %v4795 = vunpack.c.l.b16 %v4489
    %v4796 = vunpack.c.h.b16 %v4489
    %v4797 = vunpack.c.l.b16 %v4490
    %v4798 = vunpack.c.h.b16 %v4490
    %v4799 = vunpack.c.l.b16 %v4491
    %v4800 = vunpack.c.h.b16 %v4491
    %v4801 = vunpack.c.l.b16 %v4492
    %v4802 = vunpack.c.h.b16 %v4492
    %v4803 = vunpack.c.l.b16 %v4493
    %v4804 = vunpack.c.h.b16 %v4493
    %v4805 = vunpack.c.l.b16 %v4494
    %v4806 = vunpack.c.h.b16 %v4494
    %v4807 = vunpack.c.l.b16 %v4495
    %v4808 = vunpack.c.h.b16 %v4495
    %v4809 = vunpack.c.l.b16 %v4496
    %v4810 = vunpack.c.h.b16 %v4496
    %v4811 = vunpack.c.l.b16 %v4497
    %v4812 = vunpack.c.h.b16 %v4497
    %v4813 = vunpack.c.l.b16 %v4498
    %v4814 = vunpack.c.h.b16 %v4498
    %v4815 = vunpack.c.l.b16 %v4499
    %v4816 = vunpack.c.h.b16 %v4499
    %v4817 = vunpack.c.l.b16 %v4500
    %v4818 = vunpack.c.h.b16 %v4500
    %v4819 = vunpack.c.l.b16 %v4501
    %v4820 = vunpack.c.h.b16 %v4501
    %v4821 = vunpack.c.l.b16 %v4502
    %v4822 = vunpack.c.h.b16 %v4502
    %v4823 = vunpack.c.l.b16 %v4503
    %v4824 = vunpack.c.h.b16 %v4503
    %v4825 = vunpack.c.l.b16 %v4504
    %v4826 = vunpack.c.h.b16 %v4504
    %v4827 = vunpack.c.l.b16 %v4505
    %v4828 = vunpack.c.h.b16 %v4505
    %v4829 = vunpack.c.l.b16 %v4506
    %v4830 = vunpack.c.h.b16 %v4506
    %v4831 = vunpack.c.l.b16 %v4507
    %v4832 = vunpack.c.h.b16 %v4507
    %v4833 = vunpack.c.l.b16 %v4508
    %v4834 = vunpack.c.h.b16 %v4508
    %v4835 = vunpack.c.l.b16 %v4509
    %v4836 = vunpack.c.h.b16 %v4509
    %v4837 = vunpack.c.l.b16 %v4510
    %v4838 = vunpack.c.h.b16 %v4510
    %v4839 = vunpack.c.l.b16 %v4511
    %v4840 = vunpack.c.h.b16 %v4511
    %v4841 = vunpack.c.l.b16 %v4512
    %v4842 = vunpack.c.h.b16 %v4512
    %v4843 = vunpack.c.l.b16 %v4513
    %v4844 = vunpack.c.h.b16 %v4513
    %v4845 = vunpack.c.l.b16 %v4514
    %v4846 = vunpack.c.h.b16 %v4514
    %v4847 = vunpack.c.l.b16 %v4515
    %v4848 = vunpack.c.h.b16 %v4515
    %v4849 = vunpack.c.l.b16 %v4516
    %v4850 = vunpack.c.h.b16 %v4516
    %v4851 = vunpack.c.l.b16 %v4517
    %v4852 = vunpack.c.h.b16 %v4517
    %v4853 = vunpack.c.l.b16 %v4518
    %v4854 = vunpack.c.h.b16 %v4518
    %v4855 = vunpack.c.l.b16 %v4519
    %v4856 = vunpack.c.h.b16 %v4519
    %v4857 = vunpack.c.l.b16 %v4520
    %v4858 = vunpack.c.h.b16 %v4520
    %v4859 = vunpack.c.l.b16 %v4521
    %v4860 = vunpack.c.h.b16 %v4521
    %v4861 = vunpack.c.l.b16 %v4522
    %v4862 = vunpack.c.h.b16 %v4522
    %v4863 = vunpack.c.l.b16 %v4523
    %v4864 = vunpack.c.h.b16 %v4523
    %v4865 = vunpack.c.l.b16 %v4524
    %v4866 = vunpack.c.h.b16 %v4524
    %v4867 = vunpack.c.l.b16 %v4525
    %v4868 = vunpack.c.h.b16 %v4525
    %v4869 = vunpack.c.l.b16 %v4526
    %v4870 = vunpack.c.h.b16 %v4526
    %v4871 = vunpack.c.l.b16 %v4527
    %v4872 = vunpack.c.h.b16 %v4527
    %v4873 = vunpack.c.l.b16 %v4528
    %v4874 = vunpack.c.h.b16 %v4528
    %v4875 = vunpack.c.l.b16 %v4529
    %v4876 = vunpack.c.h.b16 %v4529
    %v4877 = vunpack.c.l.b16 %v4530
    %v4878 = vunpack.c.h.b16 %v4530
    %v4879 = vunpack.c.l.b16 %v4531
    %v4880 = vunpack.c.h.b16 %v4531
    %v4881 = vunpack.c.l.b16 %v4532
    %v4882 = vunpack.c.h.b16 %v4532
    %v4883 = vunpack.c.l.b16 %v4533
    %v4884 = vunpack.c.h.b16 %v4533
    %v4885 = vunpack.c.l.b16 %v4534
    %v4886 = vunpack.c.h.b16 %v4534
    %v4887 = vunpack.c.l.b16 %v4535
    %v4888 = vunpack.c.h.b16 %v4535
    %v4889 = vunpack.c.l.b16 %v4536
    %v4890 = vunpack.c.h.b16 %v4536
    %v4891 = vunpack.c.l.b16 %v4537
    %v4892 = vunpack.c.h.b16 %v4537
    %v4893 = vunpack.c.l.b16 %v4538
    %v4894 = vunpack.c.h.b16 %v4538
    %v4895 = vunpack.c.l.b16 %v4539
    %v4896 = vunpack.c.h.b16 %v4539
    %v4897 = vunpack.c.l.b16 %v4540
    %v4898 = vunpack.c.h.b16 %v4540
    %v4899 = vunpack.c.l.b16 %v4541
    %v4900 = vunpack.c.h.b16 %v4541
    %v4901 = vunpack.c.l.b16 %v4542
    %v4902 = vunpack.c.h.b16 %v4542
    %v4903 = vunpack.c.l.b16 %v4543
    %v4904 = vunpack.c.h.b16 %v4543
    %v4905 = vunpack.c.l.b16 %v4544
    %v4906 = vunpack.c.h.b16 %v4544
    %v4907 = vunpack.c.l.b16 %v4545
    %v4908 = vunpack.c.h.b16 %v4545
    %v4909 = vunpack.c.l.b16 %v4546
    %v4910 = vunpack.c.h.b16 %v4546
    %v4911 = vunpack.c.l.b16 %v4547
    %v4912 = vunpack.c.h.b16 %v4547
    %v4913 = vunpack.c.l.b16 %v4548
    %v4914 = vunpack.c.h.b16 %v4548
    %v4915 = vunpack.c.l.b16 %v4549
    %v4916 = vunpack.c.h.b16 %v4549
    %v4917 = vunpack.c.l.b16 %v4550
    %v4918 = vunpack.c.h.b16 %v4550
    %v4919 = vunpack.c.l.b16 %v4551
    %v4920 = vunpack.c.h.b16 %v4551
    %v4921 = vunpack.c.l.b16 %v4552
    %v4922 = vunpack.c.h.b16 %v4552
    %v4923 = vunpack.c.l.b16 %v4553
    %v4924 = vunpack.c.h.b16 %v4553
    %v4925 = vunpack.c.l.b16 %v4554
    %v4926 = vunpack.c.h.b16 %v4554
    %v4927 = vunpack.c.l.b16 %v4555
    %v4928 = vunpack.c.h.b16 %v4555
    %v4929 = vunpack.c.l.b16 %v4556
    %v4930 = vunpack.c.h.b16 %v4556
    %v4931 = vunpack.c.l.b16 %v4557
    %v4932 = vunpack.c.h.b16 %v4557
    %v4933 = vunpack.c.l.b16 %v4558
    %v4934 = vunpack.c.h.b16 %v4558
    %v4935 = vunpack.c.l.b16 %v4559
    %v4936 = vunpack.c.h.b16 %v4559
    %v4937 = vunpack.c.l.b16 %v4560
    %v4938 = vunpack.c.h.b16 %v4560
    %v4939 = vunpack.c.l.b16 %v4561
    %v4940 = vunpack.c.h.b16 %v4561
    %v4941 = vunpack.c.l.b16 %v4562
    %v4942 = vunpack.c.h.b16 %v4562
    %v4943 = vunpack.c.l.b16 %v4563
    %v4944 = vunpack.c.h.b16 %v4563
    %v4945 = vunpack.c.l.b16 %v4564
    %v4946 = vunpack.c.h.b16 %v4564
    %v4947 = vunpack.c.l.b16 %v4565
    %v4948 = vunpack.c.h.b16 %v4565
    %v4949 = vunpack.c.l.b16 %v4566
    %v4950 = vunpack.c.h.b16 %v4566
    %v4951 = vunpack.c.l.b16 %v4567
    %v4952 = vunpack.c.h.b16 %v4567
    %v4953 = vunpack.c.l.b16 %v4568
    %v4954 = vunpack.c.h.b16 %v4568
    %v4955 = vunpack.c.l.b16 %v4569
    %v4956 = vunpack.c.h.b16 %v4569
    %v4957 = vunpack.c.l.b16 %v4570
    %v4958 = vunpack.c.h.b16 %v4570
    %v4959 = vunpack.c.l.b16 %v4571
    %v4960 = vunpack.c.h.b16 %v4571
    %v4961 = vunpack.c.l.b16 %v4572
    %v4962 = vunpack.c.h.b16 %v4572
    %v4963 = vunpack.c.l.b16 %v4573
    %v4964 = vunpack.c.h.b16 %v4573
    %v4965 = vunpack.c.l.b16 %v4574
    %v4966 = vunpack.c.h.b16 %v4574
    %v4967 = vunpack.c.l.b16 %v4575
    %v4968 = vunpack.c.h.b16 %v4575
    %v4969 = vunpack.c.l.b16 %v4576
    %v4970 = vunpack.c.h.b16 %v4576
    %v4971 = vunpack.c.l.b16 %v4577
    %v4972 = vunpack.c.h.b16 %v4577
    %v4973 = vunpack.c.l.b16 %v4578
    %v4974 = vunpack.c.h.b16 %v4578
    %v4975 = vunpack.c.l.b16 %v4579
    %v4976 = vunpack.c.h.b16 %v4579
    %v4977 = vunpack.c.l.b16 %v4580
    %v4978 = vunpack.c.h.b16 %v4580
    %v4979 = vunpack.c.l.b16 %v4581
    %v4980 = vunpack.c.h.b16 %v4581
    %v4981 = vunpack.c.l.b16 %v4582
    %v4982 = vunpack.c.h.b16 %v4582
    %v4983 = vunpack.c.l.b16 %v4583
    %v4984 = vunpack.c.h.b16 %v4583
    %v4985 = vunpack.c.l.b16 %v4584
    %v4986 = vunpack.c.h.b16 %v4584
    %v4987 = vunpack.c.l.b16 %v4585
    %v4988 = vunpack.c.h.b16 %v4585
    %v4989 = vunpack.c.l.b16 %v4586
    %v4990 = vunpack.c.h.b16 %v4586
    %v4991 = vunpack.c.l.b16 %v4587
    %v4992 = vunpack.c.h.b16 %v4587
    %v4993 = vunpack.c.l.b16 %v4588
    %v4994 = vunpack.c.h.b16 %v4588
    %v4995 = vunpack.c.l.b16 %v4589
    %v4996 = vunpack.c.h.b16 %v4589
    %v4997 = vunpack.c.l.b16 %v4590
    %v4998 = vunpack.c.h.b16 %v4590
    %v4999 = vunpack.c.l.b16 %v4591
    %v5000 = vunpack.c.h.b16 %v4591
    %v5001 = vunpack.c.l.b16 %v4592
    %v5002 = vunpack.c.h.b16 %v4592
    %v5003 = vunpack.c.l.b16 %v4593
    %v5004 = vunpack.c.h.b16 %v4593
    %v5005 = vunpack.c.l.b16 %v4594
    %v5006 = vunpack.c.h.b16 %v4594
    %v5007 = vunpack.c.l.b16 %v4595
    %v5008 = vunpack.c.h.b16 %v4595
    %v5009 = vunpack.c.l.b16 %v4596
    %v5010 = vunpack.c.h.b16 %v4596
    %v5011 = vunpack.c.l.b16 %v4597
    %v5012 = vunpack.c.h.b16 %v4597
    %v5013 = vunpack.c.l.b16 %v4598
    %v5014 = vunpack.c.h.b16 %v4598
    %v5015 = vunpack.c.l.b16 %v4599
    %v5016 = vunpack.c.h.b16 %v4599
    %v5017 = vunpack.c.l.b16 %v4600
    %v5018 = vunpack.c.h.b16 %v4600
    %v5019 = vunpack.c.l.b16 %v4601
    %v5020 = vunpack.c.h.b16 %v4601
    %v5021 = vunpack.c.l.b16 %v4602
    %v5022 = vunpack.c.h.b16 %v4602
    %v5023 = vunpack.c.l.b16 %v4603
    %v5024 = vunpack.c.h.b16 %v4603
    %v5025 = vunpack.c.l.b16 %v4604
    %v5026 = vunpack.c.h.b16 %v4604
    %v5027 = vunpack.c.l.b16 %v4605
    %v5028 = vunpack.c.h.b16 %v4605
    %v5029 = vunpack.c.l.b16 %v4606
    %v5030 = vunpack.c.h.b16 %v4606
    %v5031 = vunpack.c.l.b16 %v4607
    %v5032 = vunpack.c.h.b16 %v4607
    %v5033 = vpack.c.b16 %v4785, %v4777
    %v5034 = vpack.c.b16 %v4786, %v4778
    %v5035 = vpack.c.b16 %v4787, %v4779
    %v5036 = vpack.c.b16 %v4788, %v4780
    %v5037 = vpack.c.b16 %v4789, %v4781
    %v5038 = vpack.c.b16 %v4790, %v4782
    %v5039 = vpack.c.b16 %v4791, %v4783
    %v5040 = vpack.c.b16 %v4792, %v4784
    %v5041 = vpack.c.b16 %v4801, %v4793
    %v5042 = vpack.c.b16 %v4802, %v4794
    %v5043 = vpack.c.b16 %v4803, %v4795
    %v5044 = vpack.c.b16 %v4804, %v4796
    %v5045 = vpack.c.b16 %v4805, %v4797
    %v5046 = vpack.c.b16 %v4806, %v4798
    %v5047 = vpack.c.b16 %v4807, %v4799
    %v5048 = vpack.c.b16 %v4808, %v4800
    %v5049 = vpack.c.b16 %v4817, %v4809
    %v5050 = vpack.c.b16 %v4818, %v4810
    %v5051 = vpack.c.b16 %v4819, %v4811
    %v5052 = vpack.c.b16 %v4820, %v4812
    %v5053 = vpack.c.b16 %v4821, %v4813
    %v5054 = vpack.c.b16 %v4822, %v4814
    %v5055 = vpack.c.b16 %v4823, %v4815
    %v5056 = vpack.c.b16 %v4824, %v4816
    %v5057 = vpack.c.b16 %v4833, %v4825
    %v5058 = vpack.c.b16 %v4834, %v4826
    %v5059 = vpack.c.b16 %v4835, %v4827
    %v5060 = vpack.c.b16 %v4836, %v4828
    %v5061 = vpack.c.b16 %v4837, %v4829
    %v5062 = vpack.c.b16 %v4838, %v4830
    %v5063 = vpack.c.b16 %v4839, %v4831
    %v5064 = vpack.c.b16 %v4840, %v4832
    %v5065 = vpack.c.b16 %v4849, %v4841
    %v5066 = vpack.c.b16 %v4850, %v4842
    %v5067 = vpack.c.b16 %v4851, %v4843
    %v5068 = vpack.c.b16 %v4852, %v4844
    %v5069 = vpack.c.b16 %v4853, %v4845
    %v5070 = vpack.c.b16 %v4854, %v4846
    %v5071 = vpack.c.b16 %v4855, %v4847
    %v5072 = vpack.c.b16 %v4856, %v4848
    %v5073 = vpack.c.b16 %v4865, %v4857
    %v5074 = vpack.c.b16 %v4866, %v4858
    %v5075 = vpack.c.b16 %v4867, %v4859
    %v5076 = vpack.c.b16 %v4868, %v4860
    %v5077 = vpack.c.b16 %v4869, %v4861
    %v5078 = vpack.c.b16 %v4870, %v4862
    %v5079 = vpack.c.b16 %v4871, %v4863
    %v5080 = vpack.c.b16 %v4872, %v4864
    %v5081 = vpack.c.b16 %v4881, %v4873
    %v5082 = vpack.c.b16 %v4882, %v4874
    %v5083 = vpack.c.b16 %v4883, %v4875
    %v5084 = vpack.c.b16 %v4884, %v4876
    %v5085 = vpack.c.b16 %v4885, %v4877
    %v5086 = vpack.c.b16 %v4886, %v4878
    %v5087 = vpack.c.b16 %v4887, %v4879
    %v5088 = vpack.c.b16 %v4888, %v4880
    %v5089 = vpack.c.b16 %v4897, %v4889
    %v5090 = vpack.c.b16 %v4898, %v4890
    %v5091 = vpack.c.b16 %v4899, %v4891
    %v5092 = vpack.c.b16 %v4900, %v4892
    %v5093 = vpack.c.b16 %v4901, %v4893
    %v5094 = vpack.c.b16 %v4902, %v4894
    %v5095 = vpack.c.b16 %v4903, %v4895
    %v5096 = vpack.c.b16 %v4904, %v4896
    %v5097 = vpack.c.b16 %v4913, %v4905
    %v5098 = vpack.c.b16 %v4914, %v4906
    %v5099 = vpack.c.b16 %v4915, %v4907
    %v5100 = vpack.c.b16 %v4916, %v4908
    %v5101 = vpack.c.b16 %v4917, %v4909
    %v5102 = vpack.c.b16 %v4918, %v4910
    %v5103 = vpack.c.b16 %v4919, %v4911
    %v5104 = vpack.c.b16 %v4920, %v4912
    %v5105 = vpack.c.b16 %v4929, %v4921
    %v5106 = vpack.c.b16 %v4930, %v4922
    %v5107 = vpack.c.b16 %v4931, %v4923
    %v5108 = vpack.c.b16 %v4932, %v4924
    %v5109 = vpack.c.b16 %v4933, %v4925
    %v5110 = vpack.c.b16 %v4934, %v4926
    %v5111 = vpack.c.b16 %v4935, %v4927
    %v5112 = vpack.c.b16 %v4936, %v4928
    %v5113 = vpack.c.b16 %v4945, %v4937
    %v5114 = vpack.c.b16 %v4946, %v4938
    %v5115 = vpack.c.b16 %v4947, %v4939
    %v5116 = vpack.c.b16 %v4948, %v4940
    %v5117 = vpack.c.b16 %v4949, %v4941
    %v5118 = vpack.c.b16 %v4950, %v4942
    %v5119 = vpack.c.b16 %v4951, %v4943
    %v5120 = vpack.c.b16 %v4952, %v4944
    %v5121 = vpack.c.b16 %v4961, %v4953
    %v5122 = vpack.c.b16 %v4962, %v4954
    %v5123 = vpack.c.b16 %v4963, %v4955
    %v5124 = vpack.c.b16 %v4964, %v4956
    %v5125 = vpack.c.b16 %v4965, %v4957
    %v5126 = vpack.c.b16 %v4966, %v4958
    %v5127 = vpack.c.b16 %v4967, %v4959
    %v5128 = vpack.c.b16 %v4968, %v4960
    %v5129 = vpack.c.b16 %v4977, %v4969
    %v5130 = vpack.c.b16 %v4978, %v4970
    %v5131 = vpack.c.b16 %v4979, %v4971
    %v5132 = vpack.c.b16 %v4980, %v4972
    %v5133 = vpack.c.b16 %v4981, %v4973
    %v5134 = vpack.c.b16 %v4982, %v4974
    %v5135 = vpack.c.b16 %v4983, %v4975
    %v5136 = vpack.c.b16 %v4984, %v4976
    %v5137 = vpack.c.b16 %v4993, %v4985
    %v5138 = vpack.c.b16 %v4994, %v4986
    %v5139 = vpack.c.b16 %v4995, %v4987
    %v5140 = vpack.c.b16 %v4996, %v4988
    %v5141 = vpack.c.b16 %v4997, %v4989
    %v5142 = vpack.c.b16 %v4998, %v4990
    %v5143 = vpack.c.b16 %v4999, %v4991
    %v5144 = vpack.c.b16 %v5000, %v4992
    %v5145 = vpack.c.b16 %v5009, %v5001
    %v5146 = vpack.c.b16 %v5010, %v5002
    %v5147 = vpack.c.b16 %v5011, %v5003
    %v5148 = vpack.c.b16 %v5012, %v5004
    %v5149 = vpack.c.b16 %v5013, %v5005
    %v5150 = vpack.c.b16 %v5014, %v5006
    %v5151 = vpack.c.b16 %v5015, %v5007
    %v5152 = vpack.c.b16 %v5016, %v5008
    %v5153 = vpack.c.b16 %v5025, %v5017
    %v5154 = vpack.c.b16 %v5026, %v5018
    %v5155 = vpack.c.b16 %v5027, %v5019
    %v5156 = vpack.c.b16 %v5028, %v5020
    %v5157 = vpack.c.b16 %v5029, %v5021
    %v5158 = vpack.c.b16 %v5030, %v5022
    %v5159 = vpack.c.b16 %v5031, %v5023
    %v5160 = vpack.c.b16 %v5032, %v5024
    %5289 = vmatprep.subr.bf16.mxu0 %v5034
    %5290 = vmatpush1.bf16.msra.mxu0 %v5033
    %5291 = vmatprep.subr.bf16.mxu0 %v5042
    %5292 = vmatpush1.bf16.msra.mxu0 %v5041
    %5293 = vmatprep.subr.bf16.mxu0 %v5050
    %5294 = vmatpush1.bf16.msra.mxu0 %v5049
    %5295 = vmatprep.subr.bf16.mxu0 %v5058
    %5296 = vmatpush1.bf16.msra.mxu0 %v5057
    %5297 = vmatprep.subr.bf16.mxu0 %v5066
    %5298 = vmatpush1.bf16.msra.mxu0 %v5065
    %5299 = vmatprep.subr.bf16.mxu0 %v5074
    %5300 = vmatpush1.bf16.msra.mxu0 %v5073
    %5301 = vmatprep.subr.bf16.mxu0 %v5082
    %5302 = vmatpush1.bf16.msra.mxu0 %v5081
    %5303 = vmatprep.subr.bf16.mxu0 %v5090
    %5304 = vmatpush1.bf16.msra.mxu0 %v5089
    %5305 = vmatprep.subr.bf16.mxu0 %v5098
    %5306 = vmatpush1.bf16.msra.mxu0 %v5097
    %5307 = vmatprep.subr.bf16.mxu0 %v5106
    %5308 = vmatpush1.bf16.msra.mxu0 %v5105
    %5309 = vmatprep.subr.bf16.mxu0 %v5114
    %5310 = vmatpush1.bf16.msra.mxu0 %v5113
    %5311 = vmatprep.subr.bf16.mxu0 %v5122
    %5312 = vmatpush1.bf16.msra.mxu0 %v5121
    %5313 = vmatprep.subr.bf16.mxu0 %v5130
    %5314 = vmatpush1.bf16.msra.mxu0 %v5129
    %5315 = vmatprep.subr.bf16.mxu0 %v5138
    %5316 = vmatpush1.bf16.msra.mxu0 %v5137
    %5317 = vmatprep.subr.bf16.mxu0 %v5146
    %5318 = vmatpush1.bf16.msra.mxu0 %v5145
    %5319 = vmatprep.subr.bf16.mxu0 %v5154
    %5320 = vmatpush1.bf16.msra.mxu0 %v5153
    %5321 = vmatprep.mubr.bf16.mxu0 %v4464
    %5322 = vmatmul.mubr.bf16.gmra.mrb[0].mxu0 %v4463
    %v5323 = vpop.f32.mrb[0].mxu0
    %v5324 = vadd.f32 %v4612, %v5323
    %v5325 = vpop.f32.mrb[0].mxu0
    %v5326 = vadd.f32 %v4616, %v5325
    %v5327 = vpop.f32.mrb[0].mxu0
    %v5328 = vadd.f32 %v4612, %v5327
    %v5329 = vpop.f32.mrb[0].mxu0
    %v5330 = vadd.f32 %v4616, %v5329
    %5331 = vmatprep.mubr.bf16.mxu0 %v4466
    %5332 = vmatmul.mubr.bf16.gmra.mrb[0].mxu0 %v4465
    %v5333 = vpop.f32.mrb[0].mxu0
    %v5334 = vadd.f32 %v4612, %v5333
    %v5335 = vpop.f32.mrb[0].mxu0
    %v5336 = vadd.f32 %v4616, %v5335
    %v5337 = vpop.f32.mrb[0].mxu0
    %v5338 = vadd.f32 %v4612, %v5337
    %v5339 = vpop.f32.mrb[0].mxu0
    %v5340 = vadd.f32 %v4616, %v5339
    %5341 = vmatprep.mubr.bf16.mxu0 %v4468
    %5342 = vmatmul.mubr.bf16.gmra.mrb[0].mxu0 %v4467
    %v5343 = vpop.f32.mrb[0].mxu0
    %v5344 = vadd.f32 %v4612, %v5343
    %v5345 = vpop.f32.mrb[0].mxu0
    %v5346 = vadd.f32 %v4616, %v5345
    %v5347 = vpop.f32.mrb[0].mxu0
    %v5348 = vadd.f32 %v4612, %v5347
    %v5349 = vpop.f32.mrb[0].mxu0
    %v5350 = vadd.f32 %v4616, %v5349
    %5351 = vmatprep.mubr.bf16.mxu0 %v4470
    %5352 = vmatmul.mubr.bf16.gmra.mrb[0].mxu0 %v4469
    %v5353 = vpop.f32.mrb[0].mxu0
    %v5354 = vadd.f32 %v4612, %v5353
    %v5355 = vpop.f32.mrb[0].mxu0
    %v5356 = vadd.f32 %v4616, %v5355
    %v5357 = vpop.f32.mrb[0].mxu0
    %v5358 = vadd.f32 %v4612, %v5357
    %v5359 = vpop.f32.mrb[0].mxu0
    %v5360 = vadd.f32 %v4616, %v5359
    %5361 = vmatprep.mubr.bf16.mxu0 %v4472
    %5362 = vmatmul.mubr.bf16.gmra.mrb[0].mxu0 %v4471
    %v5363 = vpop.f32.mrb[0].mxu0
    %v5364 = vadd.f32 %v4612, %v5363
    %v5365 = vpop.f32.mrb[0].mxu0
    %v5366 = vadd.f32 %v4616, %v5365
    %v5367 = vpop.f32.mrb[0].mxu0
    %v5368 = vadd.f32 %v4612, %v5367
    %v5369 = vpop.f32.mrb[0].mxu0
    %v5370 = vadd.f32 %v4616, %v5369
    %5371 = vmatprep.mubr.bf16.mxu0 %v4474
    %5372 = vmatmul.mubr.bf16.gmra.mrb[0].mxu0 %v4473
    %v5373 = vpop.f32.mrb[0].mxu0
    %v5374 = vadd.f32 %v4612, %v5373
    %v5375 = vpop.f32.mrb[0].mxu0
    %v5376 = vadd.f32 %v4616, %v5375
    %v5377 = vpop.f32.mrb[0].mxu0
    %v5378 = vadd.f32 %v4612, %v5377
    %v5379 = vpop.f32.mrb[0].mxu0
    %v5380 = vadd.f32 %v4616, %v5379
    %5381 = vmatprep.mubr.bf16.mxu0 %v4476
    %5382 = vmatmul.mubr.bf16.gmra.mrb[0].mxu0 %v4475
    %v5383 = vpop.f32.mrb[0].mxu0
    %v5384 = vadd.f32 %v4612, %v5383
    %v5385 = vpop.f32.mrb[0].mxu0
    %v5386 = vadd.f32 %v4616, %v5385
    %v5387 = vpop.f32.mrb[0].mxu0
    %v5388 = vadd.f32 %v4612, %v5387
    %v5389 = vpop.f32.mrb[0].mxu0
    %v5390 = vadd.f32 %v4616, %v5389
    %5391 = vmatprep.mubr.bf16.mxu0 %v4478
    %5392 = vmatmul.mubr.bf16.gmra.mrb[0].mxu0 %v4477
    %v5393 = vpop.f32.mrb[0].mxu0
    %v5394 = vadd.f32 %v4612, %v5393
    %v5395 = vpop.f32.mrb[0].mxu0
    %v5396 = vadd.f32 %v4616, %v5395
    %v5397 = vpop.f32.mrb[0].mxu0
    %v5398 = vadd.f32 %v4612, %v5397
    %v5399 = vpop.f32.mrb[0].mxu0
    %v5400 = vadd.f32 %v4616, %v5399
    %5401 = vdwg.mxu0
    %5402 = vmatprep.subr.bf16.mxu0 %v5036
    %5403 = vmatpush1.bf16.msra.mxu0 %v5035
    %5404 = vmatprep.subr.bf16.mxu0 %v5044
    %5405 = vmatpush1.bf16.msra.mxu0 %v5043
    %5406 = vmatprep.subr.bf16.mxu0 %v5052
    %5407 = vmatpush1.bf16.msra.mxu0 %v5051
    %5408 = vmatprep.subr.bf16.mxu0 %v5060
    %5409 = vmatpush1.bf16.msra.mxu0 %v5059
    %5410 = vmatprep.subr.bf16.mxu0 %v5068
    %5411 = vmatpush1.bf16.msra.mxu0 %v5067
    %5412 = vmatprep.subr.bf16.mxu0 %v5076
    %5413 = vmatpush1.bf16.msra.mxu0 %v5075
    %5414 = vmatprep.subr.bf16.mxu0 %v5084
    %5415 = vmatpush1.bf16.msra.mxu0 %v5083
    %5416 = vmatprep.subr.bf16.mxu0 %v5092
    %5417 = vmatpush1.bf16.msra.mxu0 %v5091
    %5418 = vmatprep.subr.bf16.mxu0 %v5100
    %5419 = vmatpush1.bf16.msra.mxu0 %v5099
    %5420 = vmatprep.subr.bf16.mxu0 %v5108
    %5421 = vmatpush1.bf16.msra.mxu0 %v5107
    %5422 = vmatprep.subr.bf16.mxu0 %v5116
    %5423 = vmatpush1.bf16.msra.mxu0 %v5115
    %5424 = vmatprep.subr.bf16.mxu0 %v5124
    %5425 = vmatpush1.bf16.msra.mxu0 %v5123
    %5426 = vmatprep.subr.bf16.mxu0 %v5132
    %5427 = vmatpush1.bf16.msra.mxu0 %v5131
    %5428 = vmatprep.subr.bf16.mxu0 %v5140
    %5429 = vmatpush1.bf16.msra.mxu0 %v5139
    %5430 = vmatprep.subr.bf16.mxu0 %v5148
    %5431 = vmatpush1.bf16.msra.mxu0 %v5147
    %5432 = vmatprep.subr.bf16.mxu0 %v5156
    %5433 = vmatpush1.bf16.msra.mxu0 %v5155
    %5434 = vmatprep.mubr.bf16.mxu0 %v4464
    %5435 = vmatmul.mubr.bf16.gmra.mrb[0].mxu0 %v4463
    %v5436 = vpop.f32.mrb[0].mxu0
    %v5437 = vadd.f32 %v4620, %v5436
    %v5438 = vpop.f32.mrb[0].mxu0
    %v5439 = vadd.f32 %v4624, %v5438
    %v5440 = vpop.f32.mrb[0].mxu0
    %v5441 = vadd.f32 %v4620, %v5440
    %v5442 = vpop.f32.mrb[0].mxu0
    %v5443 = vadd.f32 %v4624, %v5442
    %5444 = vmatprep.mubr.bf16.mxu0 %v4466
    %5445 = vmatmul.mubr.bf16.gmra.mrb[0].mxu0 %v4465
    %v5446 = vpop.f32.mrb[0].mxu0
    %v5447 = vadd.f32 %v4620, %v5446
    %v5448 = vpop.f32.mrb[0].mxu0
    %v5449 = vadd.f32 %v4624, %v5448
    %v5450 = vpop.f32.mrb[0].mxu0
    %v5451 = vadd.f32 %v4620, %v5450
    %v5452 = vpop.f32.mrb[0].mxu0
    %v5453 = vadd.f32 %v4624, %v5452
    %5454 = vmatprep.mubr.bf16.mxu0 %v4468
    %5455 = vmatmul.mubr.bf16.gmra.mrb[0].mxu0 %v4467
    %v5456 = vpop.f32.mrb[0].mxu0
    %v5457 = vadd.f32 %v4620, %v5456
    %v5458 = vpop.f32.mrb[0].mxu0
    %v5459 = vadd.f32 %v4624, %v5458
    %v5460 = vpop.f32.mrb[0].mxu0
    %v5461 = vadd.f32 %v4620, %v5460
    %v5462 = vpop.f32.mrb[0].mxu0
    %v5463 = vadd.f32 %v4624, %v5462
    %5464 = vmatprep.mubr.bf16.mxu0 %v4470
    %5465 = vmatmul.mubr.bf16.gmra.mrb[0].mxu0 %v4469
    %v5466 = vpop.f32.mrb[0].mxu0
    %v5467 = vadd.f32 %v4620, %v5466
    %v5468 = vpop.f32.mrb[0].mxu0
    %v5469 = vadd.f32 %v4624, %v5468
    %v5470 = vpop.f32.mrb[0].mxu0
    %v5471 = vadd.f32 %v4620, %v5470
    %v5472 = vpop.f32.mrb[0].mxu0
    %v5473 = vadd.f32 %v4624, %v5472
    %5474 = vmatprep.mubr.bf16.mxu0 %v4472
    %5475 = vmatmul.mubr.bf16.gmra.mrb[0].mxu0 %v4471
    %v5476 = vpop.f32.mrb[0].mxu0
    %v5477 = vadd.f32 %v4620, %v5476
    %v5478 = vpop.f32.mrb[0].mxu0
    %v5479 = vadd.f32 %v4624, %v5478
    %v5480 = vpop.f32.mrb[0].mxu0
    %v5481 = vadd.f32 %v4620, %v5480
    %v5482 = vpop.f32.mrb[0].mxu0
    %v5483 = vadd.f32 %v4624, %v5482
    %5484 = vmatprep.mubr.bf16.mxu0 %v4474
    %5485 = vmatmul.mubr.bf16.gmra.mrb[0].mxu0 %v4473
    %v5486 = vpop.f32.mrb[0].mxu0
    %v5487 = vadd.f32 %v4620, %v5486
    %v5488 = vpop.f32.mrb[0].mxu0
    %v5489 = vadd.f32 %v4624, %v5488
    %v5490 = vpop.f32.mrb[0].mxu0
    %v5491 = vadd.f32 %v4620, %v5490
    %v5492 = vpop.f32.mrb[0].mxu0
    %v5493 = vadd.f32 %v4624, %v5492
    %5494 = vmatprep.mubr.bf16.mxu0 %v4476
    %5495 = vmatmul.mubr.bf16.gmra.mrb[0].mxu0 %v4475
    %v5496 = vpop.f32.mrb[0].mxu0
    %v5497 = vadd.f32 %v4620, %v5496
    %v5498 = vpop.f32.mrb[0].mxu0
    %v5499 = vadd.f32 %v4624, %v5498
    %v5500 = vpop.f32.mrb[0].mxu0
    %v5501 = vadd.f32 %v4620, %v5500
    %v5502 = vpop.f32.mrb[0].mxu0
    %v5503 = vadd.f32 %v4624, %v5502
    %5504 = vmatprep.mubr.bf16.mxu0 %v4478
    %5505 = vmatmul.mubr.bf16.gmra.mrb[0].mxu0 %v4477
    %v5506 = vpop.f32.mrb[0].mxu0
    %v5507 = vadd.f32 %v4620, %v5506
    %v5508 = vpop.f32.mrb[0].mxu0
    %v5509 = vadd.f32 %v4624, %v5508
    %v5510 = vpop.f32.mrb[0].mxu0
    %v5511 = vadd.f32 %v4620, %v5510
    %v5512 = vpop.f32.mrb[0].mxu0
    %v5513 = vadd.f32 %v4624, %v5512
    %5514 = vdwg.mxu0
    %5515 = vmatprep.subr.bf16.mxu0 %v5038
    %5516 = vmatpush1.bf16.msra.mxu0 %v5037
    %5517 = vmatprep.subr.bf16.mxu0 %v5046
    %5518 = vmatpush1.bf16.msra.mxu0 %v5045
    %5519 = vmatprep.subr.bf16.mxu0 %v5054
    %5520 = vmatpush1.bf16.msra.mxu0 %v5053
    %5521 = vmatprep.subr.bf16.mxu0 %v5062
    %5522 = vmatpush1.bf16.msra.mxu0 %v5061
    %5523 = vmatprep.subr.bf16.mxu0 %v5070
    %5524 = vmatpush1.bf16.msra.mxu0 %v5069
    %5525 = vmatprep.subr.bf16.mxu0 %v5078
    %5526 = vmatpush1.bf16.msra.mxu0 %v5077
    %5527 = vmatprep.subr.bf16.mxu0 %v5086
    %5528 = vmatpush1.bf16.msra.mxu0 %v5085
    %5529 = vmatprep.subr.bf16.mxu0 %v5094
    %5530 = vmatpush1.bf16.msra.mxu0 %v5093
    %5531 = vmatprep.subr.bf16.mxu0 %v5102
    %5532 = vmatpush1.bf16.msra.mxu0 %v5101
    %5533 = vmatprep.subr.bf16.mxu0 %v5110
    %5534 = vmatpush1.bf16.msra.mxu0 %v5109
    %5535 = vmatprep.subr.bf16.mxu0 %v5118
    %5536 = vmatpush1.bf16.msra.mxu0 %v5117
    %5537 = vmatprep.subr.bf16.mxu0 %v5126
    %5538 = vmatpush1.bf16.msra.mxu0 %v5125
    %5539 = vmatprep.subr.bf16.mxu0 %v5134
    %5540 = vmatpush1.bf16.msra.mxu0 %v5133
    %5541 = vmatprep.subr.bf16.mxu0 %v5142
    %5542 = vmatpush1.bf16.msra.mxu0 %v5141
    %5543 = vmatprep.subr.bf16.mxu0 %v5150
    %5544 = vmatpush1.bf16.msra.mxu0 %v5149
    %5545 = vmatprep.subr.bf16.mxu0 %v5158
    %5546 = vmatpush1.bf16.msra.mxu0 %v5157
    %5547 = vmatprep.mubr.bf16.mxu0 %v4464
    %5548 = vmatmul.mubr.bf16.gmra.mrb[0].mxu0 %v4463
    %v5549 = vpop.f32.mrb[0].mxu0
    %v5550 = vadd.f32 %v4628, %v5549
    %v5551 = vpop.f32.mrb[0].mxu0
    %v5552 = vadd.f32 %v4632, %v5551
    %v5553 = vpop.f32.mrb[0].mxu0
    %v5554 = vadd.f32 %v4628, %v5553
    %v5555 = vpop.f32.mrb[0].mxu0
    %v5556 = vadd.f32 %v4632, %v5555
    %5557 = vmatprep.mubr.bf16.mxu0 %v4466
    %5558 = vmatmul.mubr.bf16.gmra.mrb[0].mxu0 %v4465
    %v5559 = vpop.f32.mrb[0].mxu0
    %v5560 = vadd.f32 %v4628, %v5559
    %v5561 = vpop.f32.mrb[0].mxu0
    %v5562 = vadd.f32 %v4632, %v5561
    %v5563 = vpop.f32.mrb[0].mxu0
    %v5564 = vadd.f32 %v4628, %v5563
    %v5565 = vpop.f32.mrb[0].mxu0
    %v5566 = vadd.f32 %v4632, %v5565
    %5567 = vmatprep.mubr.bf16.mxu0 %v4468
    %5568 = vmatmul.mubr.bf16.gmra.mrb[0].mxu0 %v4467
    %v5569 = vpop.f32.mrb[0].mxu0
    %v5570 = vadd.f32 %v4628, %v5569
    %v5571 = vpop.f32.mrb[0].mxu0
    %v5572 = vadd.f32 %v4632, %v5571
    %v5573 = vpop.f32.mrb[0].mxu0
    %v5574 = vadd.f32 %v4628, %v5573
    %v5575 = vpop.f32.mrb[0].mxu0
    %v5576 = vadd.f32 %v4632, %v5575
    %5577 = vmatprep.mubr.bf16.mxu0 %v4470
    %5578 = vmatmul.mubr.bf16.gmra.mrb[0].mxu0 %v4469
    %v5579 = vpop.f32.mrb[0].mxu0
    %v5580 = vadd.f32 %v4628, %v5579
    %v5581 = vpop.f32.mrb[0].mxu0
    %v5582 = vadd.f32 %v4632, %v5581
    %v5583 = vpop.f32.mrb[0].mxu0
    %v5584 = vadd.f32 %v4628, %v5583
    %v5585 = vpop.f32.mrb[0].mxu0
    %v5586 = vadd.f32 %v4632, %v5585
    %5587 = vmatprep.mubr.bf16.mxu0 %v4472
    %5588 = vmatmul.mubr.bf16.gmra.mrb[0].mxu0 %v4471
    %v5589 = vpop.f32.mrb[0].mxu0
    %v5590 = vadd.f32 %v4628, %v5589
    %v5591 = vpop.f32.mrb[0].mxu0
    %v5592 = vadd.f32 %v4632, %v5591
    %v5593 = vpop.f32.mrb[0].mxu0
    %v5594 = vadd.f32 %v4628, %v5593
    %v5595 = vpop.f32.mrb[0].mxu0
    %v5596 = vadd.f32 %v4632, %v5595
    %5597 = vmatprep.mubr.bf16.mxu0 %v4474
    %5598 = vmatmul.mubr.bf16.gmra.mrb[0].mxu0 %v4473
    %v5599 = vpop.f32.mrb[0].mxu0
    %v5600 = vadd.f32 %v4628, %v5599
    %v5601 = vpop.f32.mrb[0].mxu0
    %v5602 = vadd.f32 %v4632, %v5601
    %v5603 = vpop.f32.mrb[0].mxu0
    %v5604 = vadd.f32 %v4628, %v5603
    %v5605 = vpop.f32.mrb[0].mxu0
    %v5606 = vadd.f32 %v4632, %v5605
    %5607 = vmatprep.mubr.bf16.mxu0 %v4476
    %5608 = vmatmul.mubr.bf16.gmra.mrb[0].mxu0 %v4475
    %v5609 = vpop.f32.mrb[0].mxu0
    %v5610 = vadd.f32 %v4628, %v5609
    %v5611 = vpop.f32.mrb[0].mxu0
    %v5612 = vadd.f32 %v4632, %v5611
    %v5613 = vpop.f32.mrb[0].mxu0
    %v5614 = vadd.f32 %v4628, %v5613
    %v5615 = vpop.f32.mrb[0].mxu0
    %v5616 = vadd.f32 %v4632, %v5615
    %5617 = vmatprep.mubr.bf16.mxu0 %v4478
    %5618 = vmatmul.mubr.bf16.gmra.mrb[0].mxu0 %v4477
    %v5619 = vpop.f32.mrb[0].mxu0
    %v5620 = vadd.f32 %v4628, %v5619
    %v5621 = vpop.f32.mrb[0].mxu0
    %v5622 = vadd.f32 %v4632, %v5621
    %v5623 = vpop.f32.mrb[0].mxu0
    %v5624 = vadd.f32 %v4628, %v5623
    %v5625 = vpop.f32.mrb[0].mxu0
    %v5626 = vadd.f32 %v4632, %v5625
    %5627 = vdwg.mxu0
    %5628 = vmatprep.subr.bf16.mxu0 %v5040
    %5629 = vmatpush1.bf16.msra.mxu0 %v5039
    %5630 = vmatprep.subr.bf16.mxu0 %v5048
    %5631 = vmatpush1.bf16.msra.mxu0 %v5047
    %5632 = vmatprep.subr.bf16.mxu0 %v5056
    %5633 = vmatpush1.bf16.msra.mxu0 %v5055
    %5634 = vmatprep.subr.bf16.mxu0 %v5064
    %5635 = vmatpush1.bf16.msra.mxu0 %v5063
    %5636 = vmatprep.subr.bf16.mxu0 %v5072
    %5637 = vmatpush1.bf16.msra.mxu0 %v5071
    %5638 = vmatprep.subr.bf16.mxu0 %v5080
    %5639 = vmatpush1.bf16.msra.mxu0 %v5079
    %5640 = vmatprep.subr.bf16.mxu0 %v5088
    %5641 = vmatpush1.bf16.msra.mxu0 %v5087
    %5642 = vmatprep.subr.bf16.mxu0 %v5096
    %5643 = vmatpush1.bf16.msra.mxu0 %v5095
    %5644 = vmatprep.subr.bf16.mxu0 %v5104
    %5645 = vmatpush1.bf16.msra.mxu0 %v5103
    %5646 = vmatprep.subr.bf16.mxu0 %v5112
    %5647 = vmatpush1.bf16.msra.mxu0 %v5111
    %5648 = vmatprep.subr.bf16.mxu0 %v5120
    %5649 = vmatpush1.bf16.msra.mxu0 %v5119
    %5650 = vmatprep.subr.bf16.mxu0 %v5128
    %5651 = vmatpush1.bf16.msra.mxu0 %v5127
    %5652 = vmatprep.subr.bf16.mxu0 %v5136
    %5653 = vmatpush1.bf16.msra.mxu0 %v5135
    %5654 = vmatprep.subr.bf16.mxu0 %v5144
    %5655 = vmatpush1.bf16.msra.mxu0 %v5143
    %5656 = vmatprep.subr.bf16.mxu0 %v5152
    %5657 = vmatpush1.bf16.msra.mxu0 %v5151
    %5658 = vmatprep.subr.bf16.mxu0 %v5160
    %5659 = vmatpush1.bf16.msra.mxu0 %v5159
    %5660 = vmatprep.mubr.bf16.mxu0 %v4464
    %5661 = vmatmul.mubr.bf16.gmra.mrb[0].mxu0 %v4463
    %v5662 = vpop.f32.mrb[0].mxu0
    %v5663 = vadd.f32 %v4636, %v5662
    %v5664 = vpop.f32.mrb[0].mxu0
    %v5665 = vadd.f32 %v4640, %v5664
    %v5666 = vpop.f32.mrb[0].mxu0
    %v5667 = vadd.f32 %v4636, %v5666
    %v5668 = vpop.f32.mrb[0].mxu0
    %v5669 = vadd.f32 %v4640, %v5668
    %5670 = vmatprep.mubr.bf16.mxu0 %v4466
    %5671 = vmatmul.mubr.bf16.gmra.mrb[0].mxu0 %v4465
    %v5672 = vpop.f32.mrb[0].mxu0
    %v5673 = vadd.f32 %v4636, %v5672
    %v5674 = vpop.f32.mrb[0].mxu0
    %v5675 = vadd.f32 %v4640, %v5674
    %v5676 = vpop.f32.mrb[0].mxu0
    %v5677 = vadd.f32 %v4636, %v5676
    %v5678 = vpop.f32.mrb[0].mxu0
    %v5679 = vadd.f32 %v4640, %v5678
    %5680 = vmatprep.mubr.bf16.mxu0 %v4468
    %5681 = vmatmul.mubr.bf16.gmra.mrb[0].mxu0 %v4467
    %v5682 = vpop.f32.mrb[0].mxu0
    %v5683 = vadd.f32 %v4636, %v5682
    %v5684 = vpop.f32.mrb[0].mxu0
    %v5685 = vadd.f32 %v4640, %v5684
    %v5686 = vpop.f32.mrb[0].mxu0
    %v5687 = vadd.f32 %v4636, %v5686
    %v5688 = vpop.f32.mrb[0].mxu0
    %v5689 = vadd.f32 %v4640, %v5688
    %5690 = vmatprep.mubr.bf16.mxu0 %v4470
    %5691 = vmatmul.mubr.bf16.gmra.mrb[0].mxu0 %v4469
    %v5692 = vpop.f32.mrb[0].mxu0
    %v5693 = vadd.f32 %v4636, %v5692
    %v5694 = vpop.f32.mrb[0].mxu0
    %v5695 = vadd.f32 %v4640, %v5694
    %v5696 = vpop.f32.mrb[0].mxu0
    %v5697 = vadd.f32 %v4636, %v5696
    %v5698 = vpop.f32.mrb[0].mxu0
    %v5699 = vadd.f32 %v4640, %v5698
    %5700 = vmatprep.mubr.bf16.mxu0 %v4472
    %5701 = vmatmul.mubr.bf16.gmra.mrb[0].mxu0 %v4471
    %v5702 = vpop.f32.mrb[0].mxu0
    %v5703 = vadd.f32 %v4636, %v5702
    %v5704 = vpop.f32.mrb[0].mxu0
    %v5705 = vadd.f32 %v4640, %v5704
    %v5706 = vpop.f32.mrb[0].mxu0
    %v5707 = vadd.f32 %v4636, %v5706
    %v5708 = vpop.f32.mrb[0].mxu0
    %v5709 = vadd.f32 %v4640, %v5708
    %5710 = vmatprep.mubr.bf16.mxu0 %v4474
    %5711 = vmatmul.mubr.bf16.gmra.mrb[0].mxu0 %v4473
    %v5712 = vpop.f32.mrb[0].mxu0
    %v5713 = vadd.f32 %v4636, %v5712
    %v5714 = vpop.f32.mrb[0].mxu0
    %v5715 = vadd.f32 %v4640, %v5714
    %v5716 = vpop.f32.mrb[0].mxu0
    %v5717 = vadd.f32 %v4636, %v5716
    %v5718 = vpop.f32.mrb[0].mxu0
    %v5719 = vadd.f32 %v4640, %v5718
    %5720 = vmatprep.mubr.bf16.mxu0 %v4476
    %5721 = vmatmul.mubr.bf16.gmra.mrb[0].mxu0 %v4475
    %v5722 = vpop.f32.mrb[0].mxu0
    %v5723 = vadd.f32 %v4636, %v5722
    %v5724 = vpop.f32.mrb[0].mxu0
    %v5725 = vadd.f32 %v4640, %v5724
    %v5726 = vpop.f32.mrb[0].mxu0
    %v5727 = vadd.f32 %v4636, %v5726
    %v5728 = vpop.f32.mrb[0].mxu0
    %v5729 = vadd.f32 %v4640, %v5728
    %5730 = vmatprep.mubr.bf16.mxu0 %v4478
    %5731 = vmatmul.mubr.bf16.gmra.mrb[0].mxu0 %v4477
    %v5732 = vpop.f32.mrb[0].mxu0
    %v5733 = vadd.f32 %v4636, %v5732
    %v5734 = vpop.f32.mrb[0].mxu0
    %v5735 = vadd.f32 %v4640, %v5734
    %v5736 = vpop.f32.mrb[0].mxu0
    %v5737 = vadd.f32 %v4636, %v5736
    %v5738 = vpop.f32.mrb[0].mxu0
    %v5739 = vadd.f32 %v4640, %v5738
    %5740 = vdwg.mxu0
    %5741 = vst [vmem:[#allocation2] sm:$0xff] %v5324
    %5742 = vst [vmem:[#allocation2 + $0x8] sm:$0xff] %v5326
    %5743 = vst [vmem:[#allocation2 + $0x10] sm:$0xff] %v5437
    %5744 = vst [vmem:[#allocation2 + $0x18] sm:$0xff] %v5439
    %5745 = vst [vmem:[#allocation2 + $0x20] sm:$0xff] %v5550
    %5746 = vst [vmem:[#allocation2 + $0x28] sm:$0xff] %v5552
    %5747 = vst [vmem:[#allocation2 + $0x30] sm:$0xff] %v5663
    %5748 = vst [vmem:[#allocation2 + $0x38] sm:$0xff] %v5665
    %5749 = vst [vmem:[#allocation2 + $0x40] sm:$0xff] %v5328
    %5750 = vst [vmem:[#allocation2 + $0x48] sm:$0xff] %v5330
    %5751 = vst [vmem:[#allocation2 + $0x50] sm:$0xff] %v5441
    %5752 = vst [vmem:[#allocation2 + $0x58] sm:$0xff] %v5443
    %5753 = vst [vmem:[#allocation2 + $0x60] sm:$0xff] %v5554
    %5754 = vst [vmem:[#allocation2 + $0x68] sm:$0xff] %v5556
    %5755 = vst [vmem:[#allocation2 + $0x70] sm:$0xff] %v5667
    %5756 = vst [vmem:[#allocation2 + $0x78] sm:$0xff] %v5669
    %5757 = vst [vmem:[#allocation2 + $0x80] sm:$0xff] %v5334
    %5758 = vst [vmem:[#allocation2 + $0x88] sm:$0xff] %v5336
    %5759 = vst [vmem:[#allocation2 + $0x90] sm:$0xff] %v5447
    %5760 = vst [vmem:[#allocation2 + $0x98] sm:$0xff] %v5449
    %5761 = vst [vmem:[#allocation2 + $0xa0] sm:$0xff] %v5560
    %5762 = vst [vmem:[#allocation2 + $0xa8] sm:$0xff] %v5562
    %5763 = vst [vmem:[#allocation2 + $0xb0] sm:$0xff] %v5673
    %5764 = vst [vmem:[#allocation2 + $0xb8] sm:$0xff] %v5675
    %5765 = vst [vmem:[#allocation2 + $0xc0] sm:$0xff] %v5338
    %5766 = vst [vmem:[#allocation2 + $0xc8] sm:$0xff] %v5340
    %5767 = vst [vmem:[#allocation2 + $0xd0] sm:$0xff] %v5451
    %5768 = vst [vmem:[#allocation2 + $0xd8] sm:$0xff] %v5453
    %5769 = vst [vmem:[#allocation2 + $0xe0] sm:$0xff] %v5564
    %5770 = vst [vmem:[#allocation2 + $0xe8] sm:$0xff] %v5566
    %5771 = vst [vmem:[#allocation2 + $0xf0] sm:$0xff] %v5677
    %5772 = vst [vmem:[#allocation2 + $0xf8] sm:$0xff] %v5679
    %5773 = vst [vmem:[#allocation2 + $0x100] sm:$0xff] %v5344
    %5774 = vst [vmem:[#allocation2 + $0x108] sm:$0xff] %v5346
    %5775 = vst [vmem:[#allocation2 + $0x110] sm:$0xff] %v5457
    %5776 = vst [vmem:[#allocation2 + $0x118] sm:$0xff] %v5459
    %5777 = vst [vmem:[#allocation2 + $0x120] sm:$0xff] %v5570
    %5778 = vst [vmem:[#allocation2 + $0x128] sm:$0xff] %v5572
    %5779 = vst [vmem:[#allocation2 + $0x130] sm:$0xff] %v5683
    %5780 = vst [vmem:[#allocation2 + $0x138] sm:$0xff] %v5685
    %5781 = vst [vmem:[#allocation2 + $0x140] sm:$0xff] %v5348
    %5782 = vst [vmem:[#allocation2 + $0x148] sm:$0xff] %v5350
    %5783 = vst [vmem:[#allocation2 + $0x150] sm:$0xff] %v5461
    %5784 = vst [vmem:[#allocation2 + $0x158] sm:$0xff] %v5463
    %5785 = vst [vmem:[#allocation2 + $0x160] sm:$0xff] %v5574
    %5786 = vst [vmem:[#allocation2 + $0x168] sm:$0xff] %v5576
    %5787 = vst [vmem:[#allocation2 + $0x170] sm:$0xff] %v5687
    %5788 = vst [vmem:[#allocation2 + $0x178] sm:$0xff] %v5689
    %5789 = vst [vmem:[#allocation2 + $0x180] sm:$0xff] %v5354
    %5790 = vst [vmem:[#allocation2 + $0x188] sm:$0xff] %v5356
    %5791 = vst [vmem:[#allocation2 + $0x190] sm:$0xff] %v5467
    %5792 = vst [vmem:[#allocation2 + $0x198] sm:$0xff] %v5469
    %5793 = vst [vmem:[#allocation2 + $0x1a0] sm:$0xff] %v5580
    %5794 = vst [vmem:[#allocation2 + $0x1a8] sm:$0xff] %v5582
    %5795 = vst [vmem:[#allocation2 + $0x1b0] sm:$0xff] %v5693
    %5796 = vst [vmem:[#allocation2 + $0x1b8] sm:$0xff] %v5695
    %5797 = vst [vmem:[#allocation2 + $0x1c0] sm:$0xff] %v5358
    %5798 = vst [vmem:[#allocation2 + $0x1c8] sm:$0xff] %v5360
    %5799 = vst [vmem:[#allocation2 + $0x1d0] sm:$0xff] %v5471
    %5800 = vst [vmem:[#allocation2 + $0x1d8] sm:$0xff] %v5473
    %5801 = vst [vmem:[#allocation2 + $0x1e0] sm:$0xff] %v5584
    %5802 = vst [vmem:[#allocation2 + $0x1e8] sm:$0xff] %v5586
    %5803 = vst [vmem:[#allocation2 + $0x1f0] sm:$0xff] %v5697
    %5804 = vst [vmem:[#allocation2 + $0x1f8] sm:$0xff] %v5699
    %5805 = vst [vmem:[#allocation2 + $0x200] sm:$0xff] %v5364
    %5806 = vst [vmem:[#allocation2 + $0x208] sm:$0xff] %v5366
    %5807 = vst [vmem:[#allocation2 + $0x210] sm:$0xff] %v5477
    %5808 = vst [vmem:[#allocation2 + $0x218] sm:$0xff] %v5479
    %5809 = vst [vmem:[#allocation2 + $0x220] sm:$0xff] %v5590
    %5810 = vst [vmem:[#allocation2 + $0x228] sm:$0xff] %v5592
    %5811 = vst [vmem:[#allocation2 + $0x230] sm:$0xff] %v5703
    %5812 = vst [vmem:[#allocation2 + $0x238] sm:$0xff] %v5705
    %5813 = vst [vmem:[#allocation2 + $0x240] sm:$0xff] %v5368
    %5814 = vst [vmem:[#allocation2 + $0x248] sm:$0xff] %v5370
    %5815 = vst [vmem:[#allocation2 + $0x250] sm:$0xff] %v5481
    %5816 = vst [vmem:[#allocation2 + $0x258] sm:$0xff] %v5483
    %5817 = vst [vmem:[#allocation2 + $0x260] sm:$0xff] %v5594
    %5818 = vst [vmem:[#allocation2 + $0x268] sm:$0xff] %v5596
    %5819 = vst [vmem:[#allocation2 + $0x270] sm:$0xff] %v5707
    %5820 = vst [vmem:[#allocation2 + $0x278] sm:$0xff] %v5709
    %5821 = vst [vmem:[#allocation2 + $0x280] sm:$0xff] %v5374
    %5822 = vst [vmem:[#allocation2 + $0x288] sm:$0xff] %v5376
    %5823 = vst [vmem:[#allocation2 + $0x290] sm:$0xff] %v5487
    %5824 = vst [vmem:[#allocation2 + $0x298] sm:$0xff] %v5489
    %5825 = vst [vmem:[#allocation2 + $0x2a0] sm:$0xff] %v5600
    %5826 = vst [vmem:[#allocation2 + $0x2a8] sm:$0xff] %v5602
    %5827 = vst [vmem:[#allocation2 + $0x2b0] sm:$0xff] %v5713
    %5828 = vst [vmem:[#allocation2 + $0x2b8] sm:$0xff] %v5715
    %5829 = vst [vmem:[#allocation2 + $0x2c0] sm:$0xff] %v5378
    %5830 = vst [vmem:[#allocation2 + $0x2c8] sm:$0xff] %v5380
    %5831 = vst [vmem:[#allocation2 + $0x2d0] sm:$0xff] %v5491
    %5832 = vst [vmem:[#allocation2 + $0x2d8] sm:$0xff] %v5493
    %5833 = vst [vmem:[#allocation2 + $0x2e0] sm:$0xff] %v5604
    %5834 = vst [vmem:[#allocation2 + $0x2e8] sm:$0xff] %v5606
    %5835 = vst [vmem:[#allocation2 + $0x2f0] sm:$0xff] %v5717
    %5836 = vst [vmem:[#allocation2 + $0x2f8] sm:$0xff] %v5719
    %5837 = vst [vmem:[#allocation2 + $0x300] sm:$0xff] %v5384
    %5838 = vst [vmem:[#allocation2 + $0x308] sm:$0xff] %v5386
    %5839 = vst [vmem:[#allocation2 + $0x310] sm:$0xff] %v5497
    %5840 = vst [vmem:[#allocation2 + $0x318] sm:$0xff] %v5499
    %5841 = vst [vmem:[#allocation2 + $0x320] sm:$0xff] %v5610
    %5842 = vst [vmem:[#allocation2 + $0x328] sm:$0xff] %v5612
    %5843 = vst [vmem:[#allocation2 + $0x330] sm:$0xff] %v5723
    %5844 = vst [vmem:[#allocation2 + $0x338] sm:$0xff] %v5725
    %5845 = vst [vmem:[#allocation2 + $0x340] sm:$0xff] %v5388
    %5846 = vst [vmem:[#allocation2 + $0x348] sm:$0xff] %v5390
    %5847 = vst [vmem:[#allocation2 + $0x350] sm:$0xff] %v5501
    %5848 = vst [vmem:[#allocation2 + $0x358] sm:$0xff] %v5503
    %5849 = vst [vmem:[#allocation2 + $0x360] sm:$0xff] %v5614
    %5850 = vst [vmem:[#allocation2 + $0x368] sm:$0xff] %v5616
    %5851 = vst [vmem:[#allocation2 + $0x370] sm:$0xff] %v5727
    %5852 = vst [vmem:[#allocation2 + $0x378] sm:$0xff] %v5729
    %5853 = vst [vmem:[#allocation2 + $0x380] sm:$0xff] %v5394
    %5854 = vst [vmem:[#allocation2 + $0x388] sm:$0xff] %v5396
    %5855 = vst [vmem:[#allocation2 + $0x390] sm:$0xff] %v5507
    %5856 = vst [vmem:[#allocation2 + $0x398] sm:$0xff] %v5509
    %5857 = vst [vmem:[#allocation2 + $0x3a0] sm:$0xff] %v5620
    %5858 = vst [vmem:[#allocation2 + $0x3a8] sm:$0xff] %v5622
    %5859 = vst [vmem:[#allocation2 + $0x3b0] sm:$0xff] %v5733
    %5860 = vst [vmem:[#allocation2 + $0x3b8] sm:$0xff] %v5735
    %5861 = vst [vmem:[#allocation2 + $0x3c0] sm:$0xff] %v5398
    %5862 = vst [vmem:[#allocation2 + $0x3c8] sm:$0xff] %v5400
    %5863 = vst [vmem:[#allocation2 + $0x3d0] sm:$0xff] %v5511
    %5864 = vst [vmem:[#allocation2 + $0x3d8] sm:$0xff] %v5513
    %5865 = vst [vmem:[#allocation2 + $0x3e0] sm:$0xff] %v5624
    %5866 = vst [vmem:[#allocation2 + $0x3e8] sm:$0xff] %v5626
    %5867 = vst [vmem:[#allocation2 + $0x3f0] sm:$0xff] %v5737
    %5868 = vst [vmem:[#allocation2 + $0x3f8] sm:$0xff] %v5739
    loop: start=0, step=1, limit=16
    $region84: #{tpu_custom_call.1} parent=1 // loop_pre_header
      _
    $region85: #{tpu_custom_call.1} parent=1 // loop_header
      %s5870 = sphi 0, %s5874
      %p5871 = scmp.ge.s32.totalorder %s5870, 16
      %v5875 = vphi 0.0, %v6879
      %v5876 = vphi 0.0, %v6880
      %v5877 = vphi 0.0, %v6875
      %v5878 = vphi 0.0, %v6876
    $region86: #{tpu_custom_call.1} parent=1 // loop_header_branch
      %5873 = sbr.rel (%p5871) target = $region90
    $region87: #{tpu_custom_call.1} parent=1 // loop_body
      %s5879 = smul.u32 %s5870, 8
      %s5880 = smul.addr %s5879, 8
      %s5881 = scalar_lea.vmem [#allocation2], %s5880
      %v5882 = vld [vmem:[%s5881] sm:$0xff]
      %v5883 = vld [vmem:[%s5881 + $0x8] sm:$0xff]
      %v5884 = vld [vmem:[%s5881 + $0x10] sm:$0xff]
      %v5885 = vld [vmem:[%s5881 + $0x18] sm:$0xff]
      %v5886 = vld [vmem:[%s5881 + $0x20] sm:$0xff]
      %v5887 = vld [vmem:[%s5881 + $0x28] sm:$0xff]
      %v5888 = vld [vmem:[%s5881 + $0x30] sm:$0xff]
      %v5889 = vld [vmem:[%s5881 + $0x38] sm:$0xff]
      %v5890 = vpack.c.bf16 %v5875, %v5875
      %v5891 = vpack.c.bf16 %v5876, %v5876
      %s5892 = scalar_lea.vmem [#allocation12], 2048
      %v5893 = vld [vmem:[%s5892] sm:$0xff]
      %v5894 = vld [vmem:[%s5892 + $0x8] sm:$0xff]
      %v5895 = vld [vmem:[%s5892 + $0x10] sm:$0xff]
      %v5896 = vld [vmem:[%s5892 + $0x18] sm:$0xff]
      %v5897 = vld [vmem:[%s5892 + $0x20] sm:$0xff]
      %v5898 = vld [vmem:[%s5892 + $0x28] sm:$0xff]
      %v5899 = vld [vmem:[%s5892 + $0x30] sm:$0xff]
      %v5900 = vld [vmem:[%s5892 + $0x38] sm:$0xff]
      %v5901 = vld [vmem:[%s5892 + $0x40] sm:$0xff]
      %v5902 = vld [vmem:[%s5892 + $0x48] sm:$0xff]
      %v5903 = vld [vmem:[%s5892 + $0x50] sm:$0xff]
      %v5904 = vld [vmem:[%s5892 + $0x58] sm:$0xff]
      %v5905 = vld [vmem:[%s5892 + $0x60] sm:$0xff]
      %v5906 = vld [vmem:[%s5892 + $0x68] sm:$0xff]
      %v5907 = vld [vmem:[%s5892 + $0x70] sm:$0xff]
      %v5908 = vld [vmem:[%s5892 + $0x78] sm:$0xff]
      %v5909 = vld [vmem:[%s5892 + $0x80] sm:$0xff]
      %v5910 = vld [vmem:[%s5892 + $0x88] sm:$0xff]
      %v5911 = vld [vmem:[%s5892 + $0x90] sm:$0xff]
      %v5912 = vld [vmem:[%s5892 + $0x98] sm:$0xff]
      %v5913 = vld [vmem:[%s5892 + $0xa0] sm:$0xff]
      %v5914 = vld [vmem:[%s5892 + $0xa8] sm:$0xff]
      %v5915 = vld [vmem:[%s5892 + $0xb0] sm:$0xff]
      %v5916 = vld [vmem:[%s5892 + $0xb8] sm:$0xff]
      %v5917 = vld [vmem:[%s5892 + $0xc0] sm:$0xff]
      %v5918 = vld [vmem:[%s5892 + $0xc8] sm:$0xff]
      %v5919 = vld [vmem:[%s5892 + $0xd0] sm:$0xff]
      %v5920 = vld [vmem:[%s5892 + $0xd8] sm:$0xff]
      %v5921 = vld [vmem:[%s5892 + $0xe0] sm:$0xff]
      %v5922 = vld [vmem:[%s5892 + $0xe8] sm:$0xff]
      %v5923 = vld [vmem:[%s5892 + $0xf0] sm:$0xff]
      %v5924 = vld [vmem:[%s5892 + $0xf8] sm:$0xff]
      %v5925 = vld [vmem:[%s5892 + $0x100] sm:$0xff]
      %v5926 = vld [vmem:[%s5892 + $0x108] sm:$0xff]
      %v5927 = vld [vmem:[%s5892 + $0x110] sm:$0xff]
      %v5928 = vld [vmem:[%s5892 + $0x118] sm:$0xff]
      %v5929 = vld [vmem:[%s5892 + $0x120] sm:$0xff]
      %v5930 = vld [vmem:[%s5892 + $0x128] sm:$0xff]
      %v5931 = vld [vmem:[%s5892 + $0x130] sm:$0xff]
      %v5932 = vld [vmem:[%s5892 + $0x138] sm:$0xff]
      %v5933 = vld [vmem:[%s5892 + $0x140] sm:$0xff]
      %v5934 = vld [vmem:[%s5892 + $0x148] sm:$0xff]
      %v5935 = vld [vmem:[%s5892 + $0x150] sm:$0xff]
      %v5936 = vld [vmem:[%s5892 + $0x158] sm:$0xff]
      %v5937 = vld [vmem:[%s5892 + $0x160] sm:$0xff]
      %v5938 = vld [vmem:[%s5892 + $0x168] sm:$0xff]
      %v5939 = vld [vmem:[%s5892 + $0x170] sm:$0xff]
      %v5940 = vld [vmem:[%s5892 + $0x178] sm:$0xff]
      %v5941 = vld [vmem:[%s5892 + $0x180] sm:$0xff]
      %v5942 = vld [vmem:[%s5892 + $0x188] sm:$0xff]
      %v5943 = vld [vmem:[%s5892 + $0x190] sm:$0xff]
      %v5944 = vld [vmem:[%s5892 + $0x198] sm:$0xff]
      %v5945 = vld [vmem:[%s5892 + $0x1a0] sm:$0xff]
      %v5946 = vld [vmem:[%s5892 + $0x1a8] sm:$0xff]
      %v5947 = vld [vmem:[%s5892 + $0x1b0] sm:$0xff]
      %v5948 = vld [vmem:[%s5892 + $0x1b8] sm:$0xff]
      %v5949 = vld [vmem:[%s5892 + $0x1c0] sm:$0xff]
      %v5950 = vld [vmem:[%s5892 + $0x1c8] sm:$0xff]
      %v5951 = vld [vmem:[%s5892 + $0x1d0] sm:$0xff]
      %v5952 = vld [vmem:[%s5892 + $0x1d8] sm:$0xff]
      %v5953 = vld [vmem:[%s5892 + $0x1e0] sm:$0xff]
      %v5954 = vld [vmem:[%s5892 + $0x1e8] sm:$0xff]
      %v5955 = vld [vmem:[%s5892 + $0x1f0] sm:$0xff]
      %v5956 = vld [vmem:[%s5892 + $0x1f8] sm:$0xff]
      %v5957 = vld [vmem:[%s5892 + $0x200] sm:$0xff]
      %v5958 = vld [vmem:[%s5892 + $0x208] sm:$0xff]
      %v5959 = vld [vmem:[%s5892 + $0x210] sm:$0xff]
      %v5960 = vld [vmem:[%s5892 + $0x218] sm:$0xff]
      %v5961 = vld [vmem:[%s5892 + $0x220] sm:$0xff]
      %v5962 = vld [vmem:[%s5892 + $0x228] sm:$0xff]
      %v5963 = vld [vmem:[%s5892 + $0x230] sm:$0xff]
      %v5964 = vld [vmem:[%s5892 + $0x238] sm:$0xff]
      %v5965 = vld [vmem:[%s5892 + $0x240] sm:$0xff]
      %v5966 = vld [vmem:[%s5892 + $0x248] sm:$0xff]
      %v5967 = vld [vmem:[%s5892 + $0x250] sm:$0xff]
      %v5968 = vld [vmem:[%s5892 + $0x258] sm:$0xff]
      %v5969 = vld [vmem:[%s5892 + $0x260] sm:$0xff]
      %v5970 = vld [vmem:[%s5892 + $0x268] sm:$0xff]
      %v5971 = vld [vmem:[%s5892 + $0x270] sm:$0xff]
      %v5972 = vld [vmem:[%s5892 + $0x278] sm:$0xff]
      %v5973 = vld [vmem:[%s5892 + $0x280] sm:$0xff]
      %v5974 = vld [vmem:[%s5892 + $0x288] sm:$0xff]
      %v5975 = vld [vmem:[%s5892 + $0x290] sm:$0xff]
      %v5976 = vld [vmem:[%s5892 + $0x298] sm:$0xff]
      %v5977 = vld [vmem:[%s5892 + $0x2a0] sm:$0xff]
      %v5978 = vld [vmem:[%s5892 + $0x2a8] sm:$0xff]
      %v5979 = vld [vmem:[%s5892 + $0x2b0] sm:$0xff]
      %v5980 = vld [vmem:[%s5892 + $0x2b8] sm:$0xff]
      %v5981 = vld [vmem:[%s5892 + $0x2c0] sm:$0xff]
      %v5982 = vld [vmem:[%s5892 + $0x2c8] sm:$0xff]
      %v5983 = vld [vmem:[%s5892 + $0x2d0] sm:$0xff]
      %v5984 = vld [vmem:[%s5892 + $0x2d8] sm:$0xff]
      %v5985 = vld [vmem:[%s5892 + $0x2e0] sm:$0xff]
      %v5986 = vld [vmem:[%s5892 + $0x2e8] sm:$0xff]
      %v5987 = vld [vmem:[%s5892 + $0x2f0] sm:$0xff]
      %v5988 = vld [vmem:[%s5892 + $0x2f8] sm:$0xff]
      %v5989 = vld [vmem:[%s5892 + $0x300] sm:$0xff]
      %v5990 = vld [vmem:[%s5892 + $0x308] sm:$0xff]
      %v5991 = vld [vmem:[%s5892 + $0x310] sm:$0xff]
      %v5992 = vld [vmem:[%s5892 + $0x318] sm:$0xff]
      %v5993 = vld [vmem:[%s5892 + $0x320] sm:$0xff]
      %v5994 = vld [vmem:[%s5892 + $0x328] sm:$0xff]
      %v5995 = vld [vmem:[%s5892 + $0x330] sm:$0xff]
      %v5996 = vld [vmem:[%s5892 + $0x338] sm:$0xff]
      %v5997 = vld [vmem:[%s5892 + $0x340] sm:$0xff]
      %v5998 = vld [vmem:[%s5892 + $0x348] sm:$0xff]
      %v5999 = vld [vmem:[%s5892 + $0x350] sm:$0xff]
      %v6000 = vld [vmem:[%s5892 + $0x358] sm:$0xff]
      %v6001 = vld [vmem:[%s5892 + $0x360] sm:$0xff]
      %v6002 = vld [vmem:[%s5892 + $0x368] sm:$0xff]
      %v6003 = vld [vmem:[%s5892 + $0x370] sm:$0xff]
      %v6004 = vld [vmem:[%s5892 + $0x378] sm:$0xff]
      %v6005 = vld [vmem:[%s5892 + $0x380] sm:$0xff]
      %v6006 = vld [vmem:[%s5892 + $0x388] sm:$0xff]
      %v6007 = vld [vmem:[%s5892 + $0x390] sm:$0xff]
      %v6008 = vld [vmem:[%s5892 + $0x398] sm:$0xff]
      %v6009 = vld [vmem:[%s5892 + $0x3a0] sm:$0xff]
      %v6010 = vld [vmem:[%s5892 + $0x3a8] sm:$0xff]
      %v6011 = vld [vmem:[%s5892 + $0x3b0] sm:$0xff]
      %v6012 = vld [vmem:[%s5892 + $0x3b8] sm:$0xff]
      %v6013 = vld [vmem:[%s5892 + $0x3c0] sm:$0xff]
      %v6014 = vld [vmem:[%s5892 + $0x3c8] sm:$0xff]
      %v6015 = vld [vmem:[%s5892 + $0x3d0] sm:$0xff]
      %v6016 = vld [vmem:[%s5892 + $0x3d8] sm:$0xff]
      %v6017 = vld [vmem:[%s5892 + $0x3e0] sm:$0xff]
      %v6018 = vld [vmem:[%s5892 + $0x3e8] sm:$0xff]
      %v6019 = vld [vmem:[%s5892 + $0x3f0] sm:$0xff]
      %v6020 = vld [vmem:[%s5892 + $0x3f8] sm:$0xff]
      %v6149 = vunpack.c.l.b16 %v5893
      %v6150 = vunpack.c.h.b16 %v5893
      %v6151 = vunpack.c.l.b16 %v5894
      %v6152 = vunpack.c.h.b16 %v5894
      %v6153 = vunpack.c.l.b16 %v5895
      %v6154 = vunpack.c.h.b16 %v5895
      %v6155 = vunpack.c.l.b16 %v5896
      %v6156 = vunpack.c.h.b16 %v5896
      %v6157 = vunpack.c.l.b16 %v5897
      %v6158 = vunpack.c.h.b16 %v5897
      %v6159 = vunpack.c.l.b16 %v5898
      %v6160 = vunpack.c.h.b16 %v5898
      %v6161 = vunpack.c.l.b16 %v5899
      %v6162 = vunpack.c.h.b16 %v5899
      %v6163 = vunpack.c.l.b16 %v5900
      %v6164 = vunpack.c.h.b16 %v5900
      %v6165 = vunpack.c.l.b16 %v5901
      %v6166 = vunpack.c.h.b16 %v5901
      %v6167 = vunpack.c.l.b16 %v5902
      %v6168 = vunpack.c.h.b16 %v5902
      %v6169 = vunpack.c.l.b16 %v5903
      %v6170 = vunpack.c.h.b16 %v5903
      %v6171 = vunpack.c.l.b16 %v5904
      %v6172 = vunpack.c.h.b16 %v5904
      %v6173 = vunpack.c.l.b16 %v5905
      %v6174 = vunpack.c.h.b16 %v5905
      %v6175 = vunpack.c.l.b16 %v5906
      %v6176 = vunpack.c.h.b16 %v5906
      %v6177 = vunpack.c.l.b16 %v5907
      %v6178 = vunpack.c.h.b16 %v5907
      %v6179 = vunpack.c.l.b16 %v5908
      %v6180 = vunpack.c.h.b16 %v5908
      %v6181 = vunpack.c.l.b16 %v5909
      %v6182 = vunpack.c.h.b16 %v5909
      %v6183 = vunpack.c.l.b16 %v5910
      %v6184 = vunpack.c.h.b16 %v5910
      %v6185 = vunpack.c.l.b16 %v5911
      %v6186 = vunpack.c.h.b16 %v5911
      %v6187 = vunpack.c.l.b16 %v5912
      %v6188 = vunpack.c.h.b16 %v5912
      %v6189 = vunpack.c.l.b16 %v5913
      %v6190 = vunpack.c.h.b16 %v5913
      %v6191 = vunpack.c.l.b16 %v5914
      %v6192 = vunpack.c.h.b16 %v5914
      %v6193 = vunpack.c.l.b16 %v5915
      %v6194 = vunpack.c.h.b16 %v5915
      %v6195 = vunpack.c.l.b16 %v5916
      %v6196 = vunpack.c.h.b16 %v5916
      %v6197 = vunpack.c.l.b16 %v5917
      %v6198 = vunpack.c.h.b16 %v5917
      %v6199 = vunpack.c.l.b16 %v5918
      %v6200 = vunpack.c.h.b16 %v5918
      %v6201 = vunpack.c.l.b16 %v5919
      %v6202 = vunpack.c.h.b16 %v5919
      %v6203 = vunpack.c.l.b16 %v5920
      %v6204 = vunpack.c.h.b16 %v5920
      %v6205 = vunpack.c.l.b16 %v5921
      %v6206 = vunpack.c.h.b16 %v5921
      %v6207 = vunpack.c.l.b16 %v5922
      %v6208 = vunpack.c.h.b16 %v5922
      %v6209 = vunpack.c.l.b16 %v5923
      %v6210 = vunpack.c.h.b16 %v5923
      %v6211 = vunpack.c.l.b16 %v5924
      %v6212 = vunpack.c.h.b16 %v5924
      %v6213 = vunpack.c.l.b16 %v5925
      %v6214 = vunpack.c.h.b16 %v5925
      %v6215 = vunpack.c.l.b16 %v5926
      %v6216 = vunpack.c.h.b16 %v5926
      %v6217 = vunpack.c.l.b16 %v5927
      %v6218 = vunpack.c.h.b16 %v5927
      %v6219 = vunpack.c.l.b16 %v5928
      %v6220 = vunpack.c.h.b16 %v5928
      %v6221 = vunpack.c.l.b16 %v5929
      %v6222 = vunpack.c.h.b16 %v5929
      %v6223 = vunpack.c.l.b16 %v5930
      %v6224 = vunpack.c.h.b16 %v5930
      %v6225 = vunpack.c.l.b16 %v5931
      %v6226 = vunpack.c.h.b16 %v5931
      %v6227 = vunpack.c.l.b16 %v5932
      %v6228 = vunpack.c.h.b16 %v5932
      %v6229 = vunpack.c.l.b16 %v5933
      %v6230 = vunpack.c.h.b16 %v5933
      %v6231 = vunpack.c.l.b16 %v5934
      %v6232 = vunpack.c.h.b16 %v5934
      %v6233 = vunpack.c.l.b16 %v5935
      %v6234 = vunpack.c.h.b16 %v5935
      %v6235 = vunpack.c.l.b16 %v5936
      %v6236 = vunpack.c.h.b16 %v5936
      %v6237 = vunpack.c.l.b16 %v5937
      %v6238 = vunpack.c.h.b16 %v5937
      %v6239 = vunpack.c.l.b16 %v5938
      %v6240 = vunpack.c.h.b16 %v5938
      %v6241 = vunpack.c.l.b16 %v5939
      %v6242 = vunpack.c.h.b16 %v5939
      %v6243 = vunpack.c.l.b16 %v5940
      %v6244 = vunpack.c.h.b16 %v5940
      %v6245 = vunpack.c.l.b16 %v5941
      %v6246 = vunpack.c.h.b16 %v5941
      %v6247 = vunpack.c.l.b16 %v5942
      %v6248 = vunpack.c.h.b16 %v5942
      %v6249 = vunpack.c.l.b16 %v5943
      %v6250 = vunpack.c.h.b16 %v5943
      %v6251 = vunpack.c.l.b16 %v5944
      %v6252 = vunpack.c.h.b16 %v5944
      %v6253 = vunpack.c.l.b16 %v5945
      %v6254 = vunpack.c.h.b16 %v5945
      %v6255 = vunpack.c.l.b16 %v5946
      %v6256 = vunpack.c.h.b16 %v5946
      %v6257 = vunpack.c.l.b16 %v5947
      %v6258 = vunpack.c.h.b16 %v5947
      %v6259 = vunpack.c.l.b16 %v5948
      %v6260 = vunpack.c.h.b16 %v5948
      %v6261 = vunpack.c.l.b16 %v5949
      %v6262 = vunpack.c.h.b16 %v5949
      %v6263 = vunpack.c.l.b16 %v5950
      %v6264 = vunpack.c.h.b16 %v5950
      %v6265 = vunpack.c.l.b16 %v5951
      %v6266 = vunpack.c.h.b16 %v5951
      %v6267 = vunpack.c.l.b16 %v5952
      %v6268 = vunpack.c.h.b16 %v5952
      %v6269 = vunpack.c.l.b16 %v5953
      %v6270 = vunpack.c.h.b16 %v5953
      %v6271 = vunpack.c.l.b16 %v5954
      %v6272 = vunpack.c.h.b16 %v5954
      %v6273 = vunpack.c.l.b16 %v5955
      %v6274 = vunpack.c.h.b16 %v5955
      %v6275 = vunpack.c.l.b16 %v5956
      %v6276 = vunpack.c.h.b16 %v5956
      %v6277 = vunpack.c.l.b16 %v5957
      %v6278 = vunpack.c.h.b16 %v5957
      %v6279 = vunpack.c.l.b16 %v5958
      %v6280 = vunpack.c.h.b16 %v5958
      %v6281 = vunpack.c.l.b16 %v5959
      %v6282 = vunpack.c.h.b16 %v5959
      %v6283 = vunpack.c.l.b16 %v5960
      %v6284 = vunpack.c.h.b16 %v5960
      %v6285 = vunpack.c.l.b16 %v5961
      %v6286 = vunpack.c.h.b16 %v5961
      %v6287 = vunpack.c.l.b16 %v5962
      %v6288 = vunpack.c.h.b16 %v5962
      %v6289 = vunpack.c.l.b16 %v5963
      %v6290 = vunpack.c.h.b16 %v5963
      %v6291 = vunpack.c.l.b16 %v5964
      %v6292 = vunpack.c.h.b16 %v5964
      %v6293 = vunpack.c.l.b16 %v5965
      %v6294 = vunpack.c.h.b16 %v5965
      %v6295 = vunpack.c.l.b16 %v5966
      %v6296 = vunpack.c.h.b16 %v5966
      %v6297 = vunpack.c.l.b16 %v5967
      %v6298 = vunpack.c.h.b16 %v5967
      %v6299 = vunpack.c.l.b16 %v5968
      %v6300 = vunpack.c.h.b16 %v5968
      %v6301 = vunpack.c.l.b16 %v5969
      %v6302 = vunpack.c.h.b16 %v5969
      %v6303 = vunpack.c.l.b16 %v5970
      %v6304 = vunpack.c.h.b16 %v5970
      %v6305 = vunpack.c.l.b16 %v5971
      %v6306 = vunpack.c.h.b16 %v5971
      %v6307 = vunpack.c.l.b16 %v5972
      %v6308 = vunpack.c.h.b16 %v5972
      %v6309 = vunpack.c.l.b16 %v5973
      %v6310 = vunpack.c.h.b16 %v5973
      %v6311 = vunpack.c.l.b16 %v5974
      %v6312 = vunpack.c.h.b16 %v5974
      %v6313 = vunpack.c.l.b16 %v5975
      %v6314 = vunpack.c.h.b16 %v5975
      %v6315 = vunpack.c.l.b16 %v5976
      %v6316 = vunpack.c.h.b16 %v5976
      %v6317 = vunpack.c.l.b16 %v5977
      %v6318 = vunpack.c.h.b16 %v5977
      %v6319 = vunpack.c.l.b16 %v5978
      %v6320 = vunpack.c.h.b16 %v5978
      %v6321 = vunpack.c.l.b16 %v5979
      %v6322 = vunpack.c.h.b16 %v5979
      %v6323 = vunpack.c.l.b16 %v5980
      %v6324 = vunpack.c.h.b16 %v5980
      %v6325 = vunpack.c.l.b16 %v5981
      %v6326 = vunpack.c.h.b16 %v5981
      %v6327 = vunpack.c.l.b16 %v5982
      %v6328 = vunpack.c.h.b16 %v5982
      %v6329 = vunpack.c.l.b16 %v5983
      %v6330 = vunpack.c.h.b16 %v5983
      %v6331 = vunpack.c.l.b16 %v5984
      %v6332 = vunpack.c.h.b16 %v5984
      %v6333 = vunpack.c.l.b16 %v5985
      %v6334 = vunpack.c.h.b16 %v5985
      %v6335 = vunpack.c.l.b16 %v5986
      %v6336 = vunpack.c.h.b16 %v5986
      %v6337 = vunpack.c.l.b16 %v5987
      %v6338 = vunpack.c.h.b16 %v5987
      %v6339 = vunpack.c.l.b16 %v5988
      %v6340 = vunpack.c.h.b16 %v5988
      %v6341 = vunpack.c.l.b16 %v5989
      %v6342 = vunpack.c.h.b16 %v5989
      %v6343 = vunpack.c.l.b16 %v5990
      %v6344 = vunpack.c.h.b16 %v5990
      %v6345 = vunpack.c.l.b16 %v5991
      %v6346 = vunpack.c.h.b16 %v5991
      %v6347 = vunpack.c.l.b16 %v5992
      %v6348 = vunpack.c.h.b16 %v5992
      %v6349 = vunpack.c.l.b16 %v5993
      %v6350 = vunpack.c.h.b16 %v5993
      %v6351 = vunpack.c.l.b16 %v5994
      %v6352 = vunpack.c.h.b16 %v5994
      %v6353 = vunpack.c.l.b16 %v5995
      %v6354 = vunpack.c.h.b16 %v5995
      %v6355 = vunpack.c.l.b16 %v5996
      %v6356 = vunpack.c.h.b16 %v5996
      %v6357 = vunpack.c.l.b16 %v5997
      %v6358 = vunpack.c.h.b16 %v5997
      %v6359 = vunpack.c.l.b16 %v5998
      %v6360 = vunpack.c.h.b16 %v5998
      %v6361 = vunpack.c.l.b16 %v5999
      %v6362 = vunpack.c.h.b16 %v5999
      %v6363 = vunpack.c.l.b16 %v6000
      %v6364 = vunpack.c.h.b16 %v6000
      %v6365 = vunpack.c.l.b16 %v6001
      %v6366 = vunpack.c.h.b16 %v6001
      %v6367 = vunpack.c.l.b16 %v6002
      %v6368 = vunpack.c.h.b16 %v6002
      %v6369 = vunpack.c.l.b16 %v6003
      %v6370 = vunpack.c.h.b16 %v6003
      %v6371 = vunpack.c.l.b16 %v6004
      %v6372 = vunpack.c.h.b16 %v6004
      %v6373 = vunpack.c.l.b16 %v6005
      %v6374 = vunpack.c.h.b16 %v6005
      %v6375 = vunpack.c.l.b16 %v6006
      %v6376 = vunpack.c.h.b16 %v6006
      %v6377 = vunpack.c.l.b16 %v6007
      %v6378 = vunpack.c.h.b16 %v6007
      %v6379 = vunpack.c.l.b16 %v6008
      %v6380 = vunpack.c.h.b16 %v6008
      %v6381 = vunpack.c.l.b16 %v6009
      %v6382 = vunpack.c.h.b16 %v6009
      %v6383 = vunpack.c.l.b16 %v6010
      %v6384 = vunpack.c.h.b16 %v6010
      %v6385 = vunpack.c.l.b16 %v6011
      %v6386 = vunpack.c.h.b16 %v6011
      %v6387 = vunpack.c.l.b16 %v6012
      %v6388 = vunpack.c.h.b16 %v6012
      %v6389 = vunpack.c.l.b16 %v6013
      %v6390 = vunpack.c.h.b16 %v6013
      %v6391 = vunpack.c.l.b16 %v6014
      %v6392 = vunpack.c.h.b16 %v6014
      %v6393 = vunpack.c.l.b16 %v6015
      %v6394 = vunpack.c.h.b16 %v6015
      %v6395 = vunpack.c.l.b16 %v6016
      %v6396 = vunpack.c.h.b16 %v6016
      %v6397 = vunpack.c.l.b16 %v6017
      %v6398 = vunpack.c.h.b16 %v6017
      %v6399 = vunpack.c.l.b16 %v6018
      %v6400 = vunpack.c.h.b16 %v6018
      %v6401 = vunpack.c.l.b16 %v6019
      %v6402 = vunpack.c.h.b16 %v6019
      %v6403 = vunpack.c.l.b16 %v6020
      %v6404 = vunpack.c.h.b16 %v6020
      %v6405 = vpack.c.b16 %v6157, %v6149
      %v6406 = vpack.c.b16 %v6158, %v6150
      %v6407 = vpack.c.b16 %v6159, %v6151
      %v6408 = vpack.c.b16 %v6160, %v6152
      %v6409 = vpack.c.b16 %v6161, %v6153
      %v6410 = vpack.c.b16 %v6162, %v6154
      %v6411 = vpack.c.b16 %v6163, %v6155
      %v6412 = vpack.c.b16 %v6164, %v6156
      %v6413 = vpack.c.b16 %v6173, %v6165
      %v6414 = vpack.c.b16 %v6174, %v6166
      %v6415 = vpack.c.b16 %v6175, %v6167
      %v6416 = vpack.c.b16 %v6176, %v6168
      %v6417 = vpack.c.b16 %v6177, %v6169
      %v6418 = vpack.c.b16 %v6178, %v6170
      %v6419 = vpack.c.b16 %v6179, %v6171
      %v6420 = vpack.c.b16 %v6180, %v6172
      %v6421 = vpack.c.b16 %v6189, %v6181
      %v6422 = vpack.c.b16 %v6190, %v6182
      %v6423 = vpack.c.b16 %v6191, %v6183
      %v6424 = vpack.c.b16 %v6192, %v6184
      %v6425 = vpack.c.b16 %v6193, %v6185
      %v6426 = vpack.c.b16 %v6194, %v6186
      %v6427 = vpack.c.b16 %v6195, %v6187
      %v6428 = vpack.c.b16 %v6196, %v6188
      %v6429 = vpack.c.b16 %v6205, %v6197
      %v6430 = vpack.c.b16 %v6206, %v6198
      %v6431 = vpack.c.b16 %v6207, %v6199
      %v6432 = vpack.c.b16 %v6208, %v6200
      %v6433 = vpack.c.b16 %v6209, %v6201
      %v6434 = vpack.c.b16 %v6210, %v6202
      %v6435 = vpack.c.b16 %v6211, %v6203
      %v6436 = vpack.c.b16 %v6212, %v6204
      %v6437 = vpack.c.b16 %v6221, %v6213
      %v6438 = vpack.c.b16 %v6222, %v6214
      %v6439 = vpack.c.b16 %v6223, %v6215
      %v6440 = vpack.c.b16 %v6224, %v6216
      %v6441 = vpack.c.b16 %v6225, %v6217
      %v6442 = vpack.c.b16 %v6226, %v6218
      %v6443 = vpack.c.b16 %v6227, %v6219
      %v6444 = vpack.c.b16 %v6228, %v6220
      %v6445 = vpack.c.b16 %v6237, %v6229
      %v6446 = vpack.c.b16 %v6238, %v6230
      %v6447 = vpack.c.b16 %v6239, %v6231
      %v6448 = vpack.c.b16 %v6240, %v6232
      %v6449 = vpack.c.b16 %v6241, %v6233
      %v6450 = vpack.c.b16 %v6242, %v6234
      %v6451 = vpack.c.b16 %v6243, %v6235
      %v6452 = vpack.c.b16 %v6244, %v6236
      %v6453 = vpack.c.b16 %v6253, %v6245
      %v6454 = vpack.c.b16 %v6254, %v6246
      %v6455 = vpack.c.b16 %v6255, %v6247
      %v6456 = vpack.c.b16 %v6256, %v6248
      %v6457 = vpack.c.b16 %v6257, %v6249
      %v6458 = vpack.c.b16 %v6258, %v6250
      %v6459 = vpack.c.b16 %v6259, %v6251
      %v6460 = vpack.c.b16 %v6260, %v6252
      %v6461 = vpack.c.b16 %v6269, %v6261
      %v6462 = vpack.c.b16 %v6270, %v6262
      %v6463 = vpack.c.b16 %v6271, %v6263
      %v6464 = vpack.c.b16 %v6272, %v6264
      %v6465 = vpack.c.b16 %v6273, %v6265
      %v6466 = vpack.c.b16 %v6274, %v6266
      %v6467 = vpack.c.b16 %v6275, %v6267
      %v6468 = vpack.c.b16 %v6276, %v6268
      %v6469 = vpack.c.b16 %v6285, %v6277
      %v6470 = vpack.c.b16 %v6286, %v6278
      %v6471 = vpack.c.b16 %v6287, %v6279
      %v6472 = vpack.c.b16 %v6288, %v6280
      %v6473 = vpack.c.b16 %v6289, %v6281
      %v6474 = vpack.c.b16 %v6290, %v6282
      %v6475 = vpack.c.b16 %v6291, %v6283
      %v6476 = vpack.c.b16 %v6292, %v6284
      %v6477 = vpack.c.b16 %v6301, %v6293
      %v6478 = vpack.c.b16 %v6302, %v6294
      %v6479 = vpack.c.b16 %v6303, %v6295
      %v6480 = vpack.c.b16 %v6304, %v6296
      %v6481 = vpack.c.b16 %v6305, %v6297
      %v6482 = vpack.c.b16 %v6306, %v6298
      %v6483 = vpack.c.b16 %v6307, %v6299
      %v6484 = vpack.c.b16 %v6308, %v6300
      %v6485 = vpack.c.b16 %v6317, %v6309
      %v6486 = vpack.c.b16 %v6318, %v6310
      %v6487 = vpack.c.b16 %v6319, %v6311
      %v6488 = vpack.c.b16 %v6320, %v6312
      %v6489 = vpack.c.b16 %v6321, %v6313
      %v6490 = vpack.c.b16 %v6322, %v6314
      %v6491 = vpack.c.b16 %v6323, %v6315
      %v6492 = vpack.c.b16 %v6324, %v6316
      %v6493 = vpack.c.b16 %v6333, %v6325
      %v6494 = vpack.c.b16 %v6334, %v6326
      %v6495 = vpack.c.b16 %v6335, %v6327
      %v6496 = vpack.c.b16 %v6336, %v6328
      %v6497 = vpack.c.b16 %v6337, %v6329
      %v6498 = vpack.c.b16 %v6338, %v6330
      %v6499 = vpack.c.b16 %v6339, %v6331
      %v6500 = vpack.c.b16 %v6340, %v6332
      %v6501 = vpack.c.b16 %v6349, %v6341
      %v6502 = vpack.c.b16 %v6350, %v6342
      %v6503 = vpack.c.b16 %v6351, %v6343
      %v6504 = vpack.c.b16 %v6352, %v6344
      %v6505 = vpack.c.b16 %v6353, %v6345
      %v6506 = vpack.c.b16 %v6354, %v6346
      %v6507 = vpack.c.b16 %v6355, %v6347
      %v6508 = vpack.c.b16 %v6356, %v6348
      %v6509 = vpack.c.b16 %v6365, %v6357
      %v6510 = vpack.c.b16 %v6366, %v6358
      %v6511 = vpack.c.b16 %v6367, %v6359
      %v6512 = vpack.c.b16 %v6368, %v6360
      %v6513 = vpack.c.b16 %v6369, %v6361
      %v6514 = vpack.c.b16 %v6370, %v6362
      %v6515 = vpack.c.b16 %v6371, %v6363
      %v6516 = vpack.c.b16 %v6372, %v6364
      %v6517 = vpack.c.b16 %v6381, %v6373
      %v6518 = vpack.c.b16 %v6382, %v6374
      %v6519 = vpack.c.b16 %v6383, %v6375
      %v6520 = vpack.c.b16 %v6384, %v6376
      %v6521 = vpack.c.b16 %v6385, %v6377
      %v6522 = vpack.c.b16 %v6386, %v6378
      %v6523 = vpack.c.b16 %v6387, %v6379
      %v6524 = vpack.c.b16 %v6388, %v6380
      %v6525 = vpack.c.b16 %v6397, %v6389
      %v6526 = vpack.c.b16 %v6398, %v6390
      %v6527 = vpack.c.b16 %v6399, %v6391
      %v6528 = vpack.c.b16 %v6400, %v6392
      %v6529 = vpack.c.b16 %v6401, %v6393
      %v6530 = vpack.c.b16 %v6402, %v6394
      %v6531 = vpack.c.b16 %v6403, %v6395
      %v6532 = vpack.c.b16 %v6404, %v6396
      %6661 = vmatprep.subr.bf16.mxu0 %v6406
      %6662 = vmatpush1.bf16.msra.mxu0 %v6405
      %6663 = vmatprep.subr.bf16.mxu0 %v6414
      %6664 = vmatpush1.bf16.msra.mxu0 %v6413
      %6665 = vmatprep.subr.bf16.mxu0 %v6422
      %6666 = vmatpush1.bf16.msra.mxu0 %v6421
      %6667 = vmatprep.subr.bf16.mxu0 %v6430
      %6668 = vmatpush1.bf16.msra.mxu0 %v6429
      %6669 = vmatprep.subr.bf16.mxu0 %v6438
      %6670 = vmatpush1.bf16.msra.mxu0 %v6437
      %6671 = vmatprep.subr.bf16.mxu0 %v6446
      %6672 = vmatpush1.bf16.msra.mxu0 %v6445
      %6673 = vmatprep.subr.bf16.mxu0 %v6454
      %6674 = vmatpush1.bf16.msra.mxu0 %v6453
      %6675 = vmatprep.subr.bf16.mxu0 %v6462
      %6676 = vmatpush1.bf16.msra.mxu0 %v6461
      %6677 = vmatprep.subr.bf16.mxu0 %v6470
      %6678 = vmatpush1.bf16.msra.mxu0 %v6469
      %6679 = vmatprep.subr.bf16.mxu0 %v6478
      %6680 = vmatpush1.bf16.msra.mxu0 %v6477
      %6681 = vmatprep.subr.bf16.mxu0 %v6486
      %6682 = vmatpush1.bf16.msra.mxu0 %v6485
      %6683 = vmatprep.subr.bf16.mxu0 %v6494
      %6684 = vmatpush1.bf16.msra.mxu0 %v6493
      %6685 = vmatprep.subr.bf16.mxu0 %v6502
      %6686 = vmatpush1.bf16.msra.mxu0 %v6501
      %6687 = vmatprep.subr.bf16.mxu0 %v6510
      %6688 = vmatpush1.bf16.msra.mxu0 %v6509
      %6689 = vmatprep.subr.bf16.mxu0 %v6518
      %6690 = vmatpush1.bf16.msra.mxu0 %v6517
      %6691 = vmatprep.subr.bf16.mxu0 %v6526
      %6692 = vmatpush1.bf16.msra.mxu0 %v6525
      %6693 = vmatprep.mubr.bf16.mxu0 %v5891
      %6694 = vmatmul.mubr.bf16.gmra.mrb[0].mxu0 %v5890
      %v6695 = vpop.f32.mrb[0].mxu0
      %v6696 = vadd.f32 0.0, %v6695
      %v6697 = vpop.f32.mrb[0].mxu0
      %v6698 = vadd.f32 0.0, %v6697
      %v6699 = vpop.f32.mrb[0].mxu0
      %v6700 = vpop.f32.mrb[0].mxu0
      %6701 = vdwg.mxu0
      %6702 = vmatprep.subr.bf16.mxu0 %v6408
      %6703 = vmatpush1.bf16.msra.mxu0 %v6407
      %6704 = vmatprep.subr.bf16.mxu0 %v6416
      %6705 = vmatpush1.bf16.msra.mxu0 %v6415
      %6706 = vmatprep.subr.bf16.mxu0 %v6424
      %6707 = vmatpush1.bf16.msra.mxu0 %v6423
      %6708 = vmatprep.subr.bf16.mxu0 %v6432
      %6709 = vmatpush1.bf16.msra.mxu0 %v6431
      %6710 = vmatprep.subr.bf16.mxu0 %v6440
      %6711 = vmatpush1.bf16.msra.mxu0 %v6439
      %6712 = vmatprep.subr.bf16.mxu0 %v6448
      %6713 = vmatpush1.bf16.msra.mxu0 %v6447
      %6714 = vmatprep.subr.bf16.mxu0 %v6456
      %6715 = vmatpush1.bf16.msra.mxu0 %v6455
      %6716 = vmatprep.subr.bf16.mxu0 %v6464
      %6717 = vmatpush1.bf16.msra.mxu0 %v6463
      %6718 = vmatprep.subr.bf16.mxu0 %v6472
      %6719 = vmatpush1.bf16.msra.mxu0 %v6471
      %6720 = vmatprep.subr.bf16.mxu0 %v6480
      %6721 = vmatpush1.bf16.msra.mxu0 %v6479
      %6722 = vmatprep.subr.bf16.mxu0 %v6488
      %6723 = vmatpush1.bf16.msra.mxu0 %v6487
      %6724 = vmatprep.subr.bf16.mxu0 %v6496
      %6725 = vmatpush1.bf16.msra.mxu0 %v6495
      %6726 = vmatprep.subr.bf16.mxu0 %v6504
      %6727 = vmatpush1.bf16.msra.mxu0 %v6503
      %6728 = vmatprep.subr.bf16.mxu0 %v6512
      %6729 = vmatpush1.bf16.msra.mxu0 %v6511
      %6730 = vmatprep.subr.bf16.mxu0 %v6520
      %6731 = vmatpush1.bf16.msra.mxu0 %v6519
      %6732 = vmatprep.subr.bf16.mxu0 %v6528
      %6733 = vmatpush1.bf16.msra.mxu0 %v6527
      %6734 = vmatprep.mubr.bf16.mxu0 %v5891
      %6735 = vmatmul.mubr.bf16.gmra.mrb[0].mxu0 %v5890
      %v6736 = vpop.f32.mrb[0].mxu0
      %v6737 = vadd.f32 0.0, %v6736
      %v6738 = vpop.f32.mrb[0].mxu0
      %v6739 = vadd.f32 0.0, %v6738
      %v6740 = vpop.f32.mrb[0].mxu0
      %v6741 = vpop.f32.mrb[0].mxu0
      %6742 = vdwg.mxu0
      %6743 = vmatprep.subr.bf16.mxu0 %v6410
      %6744 = vmatpush1.bf16.msra.mxu0 %v6409
      %6745 = vmatprep.subr.bf16.mxu0 %v6418
      %6746 = vmatpush1.bf16.msra.mxu0 %v6417
      %6747 = vmatprep.subr.bf16.mxu0 %v6426
      %6748 = vmatpush1.bf16.msra.mxu0 %v6425
      %6749 = vmatprep.subr.bf16.mxu0 %v6434
      %6750 = vmatpush1.bf16.msra.mxu0 %v6433
      %6751 = vmatprep.subr.bf16.mxu0 %v6442
      %6752 = vmatpush1.bf16.msra.mxu0 %v6441
      %6753 = vmatprep.subr.bf16.mxu0 %v6450
      %6754 = vmatpush1.bf16.msra.mxu0 %v6449
      %6755 = vmatprep.subr.bf16.mxu0 %v6458
      %6756 = vmatpush1.bf16.msra.mxu0 %v6457
      %6757 = vmatprep.subr.bf16.mxu0 %v6466
      %6758 = vmatpush1.bf16.msra.mxu0 %v6465
      %6759 = vmatprep.subr.bf16.mxu0 %v6474
      %6760 = vmatpush1.bf16.msra.mxu0 %v6473
      %6761 = vmatprep.subr.bf16.mxu0 %v6482
      %6762 = vmatpush1.bf16.msra.mxu0 %v6481
      %6763 = vmatprep.subr.bf16.mxu0 %v6490
      %6764 = vmatpush1.bf16.msra.mxu0 %v6489
      %6765 = vmatprep.subr.bf16.mxu0 %v6498
      %6766 = vmatpush1.bf16.msra.mxu0 %v6497
      %6767 = vmatprep.subr.bf16.mxu0 %v6506
      %6768 = vmatpush1.bf16.msra.mxu0 %v6505
      %6769 = vmatprep.subr.bf16.mxu0 %v6514
      %6770 = vmatpush1.bf16.msra.mxu0 %v6513
      %6771 = vmatprep.subr.bf16.mxu0 %v6522
      %6772 = vmatpush1.bf16.msra.mxu0 %v6521
      %6773 = vmatprep.subr.bf16.mxu0 %v6530
      %6774 = vmatpush1.bf16.msra.mxu0 %v6529
      %6775 = vmatprep.mubr.bf16.mxu0 %v5891
      %6776 = vmatmul.mubr.bf16.gmra.mrb[0].mxu0 %v5890
      %v6777 = vpop.f32.mrb[0].mxu0
      %v6778 = vadd.f32 0.0, %v6777
      %v6779 = vpop.f32.mrb[0].mxu0
      %v6780 = vadd.f32 0.0, %v6779
      %v6781 = vpop.f32.mrb[0].mxu0
      %v6782 = vpop.f32.mrb[0].mxu0
      %6783 = vdwg.mxu0
      %6784 = vmatprep.subr.bf16.mxu0 %v6412
      %6785 = vmatpush1.bf16.msra.mxu0 %v6411
      %6786 = vmatprep.subr.bf16.mxu0 %v6420
      %6787 = vmatpush1.bf16.msra.mxu0 %v6419
      %6788 = vmatprep.subr.bf16.mxu0 %v6428
      %6789 = vmatpush1.bf16.msra.mxu0 %v6427
      %6790 = vmatprep.subr.bf16.mxu0 %v6436
      %6791 = vmatpush1.bf16.msra.mxu0 %v6435
      %6792 = vmatprep.subr.bf16.mxu0 %v6444
      %6793 = vmatpush1.bf16.msra.mxu0 %v6443
      %6794 = vmatprep.subr.bf16.mxu0 %v6452
      %6795 = vmatpush1.bf16.msra.mxu0 %v6451
      %6796 = vmatprep.subr.bf16.mxu0 %v6460
      %6797 = vmatpush1.bf16.msra.mxu0 %v6459
      %6798 = vmatprep.subr.bf16.mxu0 %v6468
      %6799 = vmatpush1.bf16.msra.mxu0 %v6467
      %6800 = vmatprep.subr.bf16.mxu0 %v6476
      %6801 = vmatpush1.bf16.msra.mxu0 %v6475
      %6802 = vmatprep.subr.bf16.mxu0 %v6484
      %6803 = vmatpush1.bf16.msra.mxu0 %v6483
      %6804 = vmatprep.subr.bf16.mxu0 %v6492
      %6805 = vmatpush1.bf16.msra.mxu0 %v6491
      %6806 = vmatprep.subr.bf16.mxu0 %v6500
      %6807 = vmatpush1.bf16.msra.mxu0 %v6499
      %6808 = vmatprep.subr.bf16.mxu0 %v6508
      %6809 = vmatpush1.bf16.msra.mxu0 %v6507
      %6810 = vmatprep.subr.bf16.mxu0 %v6516
      %6811 = vmatpush1.bf16.msra.mxu0 %v6515
      %6812 = vmatprep.subr.bf16.mxu0 %v6524
      %6813 = vmatpush1.bf16.msra.mxu0 %v6523
      %6814 = vmatprep.subr.bf16.mxu0 %v6532
      %6815 = vmatpush1.bf16.msra.mxu0 %v6531
      %6816 = vmatprep.mubr.bf16.mxu0 %v5891
      %6817 = vmatmul.mubr.bf16.gmra.mrb[0].mxu0 %v5890
      %v6818 = vpop.f32.mrb[0].mxu0
      %v6819 = vadd.f32 0.0, %v6818
      %v6820 = vpop.f32.mrb[0].mxu0
      %v6821 = vadd.f32 0.0, %v6820
      %v6822 = vpop.f32.mrb[0].mxu0
      %v6823 = vpop.f32.mrb[0].mxu0
      %6824 = vdwg.mxu0
      %v6825 = vadd.f32 %v5882, %v6696
      %v6826 = vadd.f32 %v5883, %v6698
      %v6827 = vadd.f32 %v5884, %v6737
      %v6828 = vadd.f32 %v5885, %v6739
      %v6829 = vadd.f32 %v5886, %v6778
      %v6830 = vadd.f32 %v5887, %v6780
      %v6831 = vadd.f32 %v5888, %v6819
      %v6832 = vadd.f32 %v5889, %v6821
      %v6833 = vsub.f32 0.0, %v6825
      %v6834 = vsub.f32 0.0, %v6826
      %v6835 = vmul.f32 %v6833, 1.442695
      %v6836 = vpow.pop %v6835
      %v6837 = vmul.f32 %v6834, 1.442695
      %v6838 = vpow.pop %v6837
      %v6839 = vadd.f32 %v6836, 1.0
      %v6840 = vadd.f32 %v6838, 1.0
      %v6841 = vrcp.pop %v6839
      %v6842 = vmul.f32 1.0, %v6841
      %v6843 = vrcp.pop %v6840
      %v6844 = vmul.f32 1.0, %v6843
      %v6845 = vsub.f32 0.0, %v6827
      %v6846 = vsub.f32 0.0, %v6828
      %v6847 = vmul.f32 %v6845, 1.442695
      %v6848 = vpow.pop %v6847
      %v6849 = vmul.f32 %v6846, 1.442695
      %v6850 = vpow.pop %v6849
      %v6851 = vadd.f32 %v6848, 1.0
      %v6852 = vadd.f32 %v6850, 1.0
      %v6853 = vrcp.pop %v6851
      %v6854 = vmul.f32 1.0, %v6853
      %v6855 = vrcp.pop %v6852
      %v6856 = vmul.f32 1.0, %v6855
      %v6857 = vtanh.pop %v6829
      %v6858 = vtanh.pop %v6830
      %v6859 = vsub.f32 0.0, %v6831
      %v6860 = vsub.f32 0.0, %v6832
      %v6861 = vmul.f32 %v6859, 1.442695
      %v6862 = vpow.pop %v6861
      %v6863 = vmul.f32 %v6860, 1.442695
      %v6864 = vpow.pop %v6863
      %v6865 = vadd.f32 %v6862, 1.0
      %v6866 = vadd.f32 %v6864, 1.0
      %v6867 = vrcp.pop %v6865
      %v6868 = vmul.f32 1.0, %v6867
      %v6869 = vrcp.pop %v6866
      %v6870 = vmul.f32 1.0, %v6869
      %v6871 = vmul.f32 %v6854, %v5877
      %v6872 = vmul.f32 %v6856, %v5878
      %v6873 = vmul.f32 %v6842, %v6857
      %v6874 = vmul.f32 %v6844, %v6858
      %v6875 = vadd.f32 %v6871, %v6873
      %v6876 = vadd.f32 %v6872, %v6874
      %v6877 = vtanh.pop %v6875
      %v6878 = vtanh.pop %v6876
      %v6879 = vmul.f32 %v6868, %v6877
      %v6880 = vmul.f32 %v6870, %v6878
      %s6881 = smul.u32 %s5870, 2
      %s6882 = smul.addr %s6881, 8
      %s6883 = scalar_lea.vmem [#allocation3], %s6882
      %6884 = vst [vmem:[%s6883] sm:$0xff] %v6879
      %6885 = vst [vmem:[%s6883 + $0x8] sm:$0xff] %v6880
    $region88: #{tpu_custom_call.1} parent=1 // loop_footer
      %s5874 = sadd.s32 1, %s5870
    $region89: #{tpu_custom_call.1} parent=1 // loop_footer_branch
      %5869 = sbr.rel target = $region85
    $region90: #{tpu_custom_call.1} parent=1 // loop_exit
      _
    %v6886 = vld [vmem:[#allocation3] sm:$0xff]
    %v6887 = vld [vmem:[#allocation3 + $0x8] sm:$0xff]
    %v6888 = vld [vmem:[#allocation3 + $0x10] sm:$0xff]
    %v6889 = vld [vmem:[#allocation3 + $0x18] sm:$0xff]
    %v6890 = vld [vmem:[#allocation3 + $0x20] sm:$0xff]
    %v6891 = vld [vmem:[#allocation3 + $0x28] sm:$0xff]
    %v6892 = vld [vmem:[#allocation3 + $0x30] sm:$0xff]
    %v6893 = vld [vmem:[#allocation3 + $0x38] sm:$0xff]
    %v6894 = vld [vmem:[#allocation3 + $0x40] sm:$0xff]
    %v6895 = vld [vmem:[#allocation3 + $0x48] sm:$0xff]
    %v6896 = vld [vmem:[#allocation3 + $0x50] sm:$0xff]
    %v6897 = vld [vmem:[#allocation3 + $0x58] sm:$0xff]
    %v6898 = vld [vmem:[#allocation3 + $0x60] sm:$0xff]
    %v6899 = vld [vmem:[#allocation3 + $0x68] sm:$0xff]
    %v6900 = vld [vmem:[#allocation3 + $0x70] sm:$0xff]
    %v6901 = vld [vmem:[#allocation3 + $0x78] sm:$0xff]
    %v6902 = vld [vmem:[#allocation3 + $0x80] sm:$0xff]
    %v6903 = vld [vmem:[#allocation3 + $0x88] sm:$0xff]
    %v6904 = vld [vmem:[#allocation3 + $0x90] sm:$0xff]
    %v6905 = vld [vmem:[#allocation3 + $0x98] sm:$0xff]
    %v6906 = vld [vmem:[#allocation3 + $0xa0] sm:$0xff]
    %v6907 = vld [vmem:[#allocation3 + $0xa8] sm:$0xff]
    %v6908 = vld [vmem:[#allocation3 + $0xb0] sm:$0xff]
    %v6909 = vld [vmem:[#allocation3 + $0xb8] sm:$0xff]
    %v6910 = vld [vmem:[#allocation3 + $0xc0] sm:$0xff]
    %v6911 = vld [vmem:[#allocation3 + $0xc8] sm:$0xff]
    %v6912 = vld [vmem:[#allocation3 + $0xd0] sm:$0xff]
    %v6913 = vld [vmem:[#allocation3 + $0xd8] sm:$0xff]
    %v6914 = vld [vmem:[#allocation3 + $0xe0] sm:$0xff]
    %v6915 = vld [vmem:[#allocation3 + $0xe8] sm:$0xff]
    %v6916 = vld [vmem:[#allocation3 + $0xf0] sm:$0xff]
    %v6917 = vld [vmem:[#allocation3 + $0xf8] sm:$0xff]
    %v6918 = vpack.c.bf16 %v6888, %v6886
    %v6919 = vpack.c.bf16 %v6889, %v6887
    %v6920 = vpack.c.bf16 %v6892, %v6890
    %v6921 = vpack.c.bf16 %v6893, %v6891
    %v6922 = vpack.c.bf16 %v6896, %v6894
    %v6923 = vpack.c.bf16 %v6897, %v6895
    %v6924 = vpack.c.bf16 %v6900, %v6898
    %v6925 = vpack.c.bf16 %v6901, %v6899
    %v6926 = vpack.c.bf16 %v6904, %v6902
    %v6927 = vpack.c.bf16 %v6905, %v6903
    %v6928 = vpack.c.bf16 %v6908, %v6906
    %v6929 = vpack.c.bf16 %v6909, %v6907
    %v6930 = vpack.c.bf16 %v6912, %v6910
    %v6931 = vpack.c.bf16 %v6913, %v6911
    %v6932 = vpack.c.bf16 %v6916, %v6914
    %v6933 = vpack.c.bf16 %v6917, %v6915
    %v6934 = vld [vmem:[#allocation15] sm:$0xff]
    %v6935 = vld [vmem:[#allocation15 + $0x8] sm:$0xff]
    %v6936 = vld [vmem:[#allocation15 + $0x10] sm:$0xff]
    %v6937 = vld [vmem:[#allocation15 + $0x18] sm:$0xff]
    %v6938 = vld [vmem:[#allocation15 + $0x20] sm:$0xff]
    %v6939 = vld [vmem:[#allocation15 + $0x28] sm:$0xff]
    %v6940 = vld [vmem:[#allocation15 + $0x30] sm:$0xff]
    %v6941 = vld [vmem:[#allocation15 + $0x38] sm:$0xff]
    %v6942 = vld [vmem:[#allocation15 + $0x40] sm:$0xff]
    %v6943 = vld [vmem:[#allocation15 + $0x48] sm:$0xff]
    %v6944 = vld [vmem:[#allocation15 + $0x50] sm:$0xff]
    %v6945 = vld [vmem:[#allocation15 + $0x58] sm:$0xff]
    %v6946 = vld [vmem:[#allocation15 + $0x60] sm:$0xff]
    %v6947 = vld [vmem:[#allocation15 + $0x68] sm:$0xff]
    %v6948 = vld [vmem:[#allocation15 + $0x70] sm:$0xff]
    %v6949 = vld [vmem:[#allocation15 + $0x78] sm:$0xff]
    %v6950 = vld [vmem:[#allocation15 + $0x80] sm:$0xff]
    %v6951 = vld [vmem:[#allocation15 + $0x88] sm:$0xff]
    %v6952 = vld [vmem:[#allocation15 + $0x90] sm:$0xff]
    %v6953 = vld [vmem:[#allocation15 + $0x98] sm:$0xff]
    %v6954 = vld [vmem:[#allocation15 + $0xa0] sm:$0xff]
    %v6955 = vld [vmem:[#allocation15 + $0xa8] sm:$0xff]
    %v6956 = vld [vmem:[#allocation15 + $0xb0] sm:$0xff]
    %v6957 = vld [vmem:[#allocation15 + $0xb8] sm:$0xff]
    %v6958 = vld [vmem:[#allocation15 + $0xc0] sm:$0xff]
    %v6959 = vld [vmem:[#allocation15 + $0xc8] sm:$0xff]
    %v6960 = vld [vmem:[#allocation15 + $0xd0] sm:$0xff]
    %v6961 = vld [vmem:[#allocation15 + $0xd8] sm:$0xff]
    %v6962 = vld [vmem:[#allocation15 + $0xe0] sm:$0xff]
    %v6963 = vld [vmem:[#allocation15 + $0xe8] sm:$0xff]
    %v6964 = vld [vmem:[#allocation15 + $0xf0] sm:$0xff]
    %v6965 = vld [vmem:[#allocation15 + $0xf8] sm:$0xff]
    %v6966 = vld [vmem:[#allocation17] sm:$0x3]
    %v6968 = vlaneseq
    %v6969 = vshrl.u32 %v6968, 7
    %v6970 = vsub.s32 0, %v6969
    %v6971 = vrot.slane %v6966, %v6970
    %v6972 = vlaneseq
    %v6973 = vshrl.u32 %v6972, 7
    %v6974 = vsub.s32 1, %v6973
    %v6975 = vrot.slane %v6966, %v6974
    %v7010 = vunpack.c.l.b16 %v6934
    %v7011 = vunpack.c.h.b16 %v6934
    %v7012 = vunpack.c.l.b16 %v6935
    %v7013 = vunpack.c.h.b16 %v6935
    %v7014 = vunpack.c.l.b16 %v6936
    %v7015 = vunpack.c.h.b16 %v6936
    %v7016 = vunpack.c.l.b16 %v6937
    %v7017 = vunpack.c.h.b16 %v6937
    %v7018 = vunpack.c.l.b16 %v6938
    %v7019 = vunpack.c.h.b16 %v6938
    %v7020 = vunpack.c.l.b16 %v6939
    %v7021 = vunpack.c.h.b16 %v6939
    %v7022 = vunpack.c.l.b16 %v6940
    %v7023 = vunpack.c.h.b16 %v6940
    %v7024 = vunpack.c.l.b16 %v6941
    %v7025 = vunpack.c.h.b16 %v6941
    %v7026 = vunpack.c.l.b16 %v6942
    %v7027 = vunpack.c.h.b16 %v6942
    %v7028 = vunpack.c.l.b16 %v6943
    %v7029 = vunpack.c.h.b16 %v6943
    %v7030 = vunpack.c.l.b16 %v6944
    %v7031 = vunpack.c.h.b16 %v6944
    %v7032 = vunpack.c.l.b16 %v6945
    %v7033 = vunpack.c.h.b16 %v6945
    %v7034 = vunpack.c.l.b16 %v6946
    %v7035 = vunpack.c.h.b16 %v6946
    %v7036 = vunpack.c.l.b16 %v6947
    %v7037 = vunpack.c.h.b16 %v6947
    %v7038 = vunpack.c.l.b16 %v6948
    %v7039 = vunpack.c.h.b16 %v6948
    %v7040 = vunpack.c.l.b16 %v6949
    %v7041 = vunpack.c.h.b16 %v6949
    %v7042 = vunpack.c.l.b16 %v6950
    %v7043 = vunpack.c.h.b16 %v6950
    %v7044 = vunpack.c.l.b16 %v6951
    %v7045 = vunpack.c.h.b16 %v6951
    %v7046 = vunpack.c.l.b16 %v6952
    %v7047 = vunpack.c.h.b16 %v6952
    %v7048 = vunpack.c.l.b16 %v6953
    %v7049 = vunpack.c.h.b16 %v6953
    %v7050 = vunpack.c.l.b16 %v6954
    %v7051 = vunpack.c.h.b16 %v6954
    %v7052 = vunpack.c.l.b16 %v6955
    %v7053 = vunpack.c.h.b16 %v6955
    %v7054 = vunpack.c.l.b16 %v6956
    %v7055 = vunpack.c.h.b16 %v6956
    %v7056 = vunpack.c.l.b16 %v6957
    %v7057 = vunpack.c.h.b16 %v6957
    %v7058 = vunpack.c.l.b16 %v6958
    %v7059 = vunpack.c.h.b16 %v6958
    %v7060 = vunpack.c.l.b16 %v6959
    %v7061 = vunpack.c.h.b16 %v6959
    %v7062 = vunpack.c.l.b16 %v6960
    %v7063 = vunpack.c.h.b16 %v6960
    %v7064 = vunpack.c.l.b16 %v6961
    %v7065 = vunpack.c.h.b16 %v6961
    %v7066 = vunpack.c.l.b16 %v6962
    %v7067 = vunpack.c.h.b16 %v6962
    %v7068 = vunpack.c.l.b16 %v6963
    %v7069 = vunpack.c.h.b16 %v6963
    %v7070 = vunpack.c.l.b16 %v6964
    %v7071 = vunpack.c.h.b16 %v6964
    %v7072 = vunpack.c.l.b16 %v6965
    %v7073 = vunpack.c.h.b16 %v6965
    %v7074 = vpack.c.b16 %v7012, %v7010
    %v7075 = vpack.c.b16 %v7013, %v7011
    %v7076 = vpack.c.b16 %v7016, %v7014
    %v7077 = vpack.c.b16 %v7017, %v7015
    %v7078 = vpack.c.b16 %v7020, %v7018
    %v7079 = vpack.c.b16 %v7021, %v7019
    %v7080 = vpack.c.b16 %v7024, %v7022
    %v7081 = vpack.c.b16 %v7025, %v7023
    %v7082 = vpack.c.b16 %v7028, %v7026
    %v7083 = vpack.c.b16 %v7029, %v7027
    %v7084 = vpack.c.b16 %v7032, %v7030
    %v7085 = vpack.c.b16 %v7033, %v7031
    %v7086 = vpack.c.b16 %v7036, %v7034
    %v7087 = vpack.c.b16 %v7037, %v7035
    %v7088 = vpack.c.b16 %v7040, %v7038
    %v7089 = vpack.c.b16 %v7041, %v7039
    %v7090 = vpack.c.b16 %v7044, %v7042
    %v7091 = vpack.c.b16 %v7045, %v7043
    %v7092 = vpack.c.b16 %v7048, %v7046
    %v7093 = vpack.c.b16 %v7049, %v7047
    %v7094 = vpack.c.b16 %v7052, %v7050
    %v7095 = vpack.c.b16 %v7053, %v7051
    %v7096 = vpack.c.b16 %v7056, %v7054
    %v7097 = vpack.c.b16 %v7057, %v7055
    %v7098 = vpack.c.b16 %v7060, %v7058
    %v7099 = vpack.c.b16 %v7061, %v7059
    %v7100 = vpack.c.b16 %v7064, %v7062
    %v7101 = vpack.c.b16 %v7065, %v7063
    %v7102 = vpack.c.b16 %v7068, %v7066
    %v7103 = vpack.c.b16 %v7069, %v7067
    %v7104 = vpack.c.b16 %v7072, %v7070
    %v7105 = vpack.c.b16 %v7073, %v7071
    %7138 = vmatprep.subr.bf16.mxu0 %v7075
    %7139 = vmatpush1.bf16.msra.mxu0 %v7074
    %7140 = vmatprep.subr.bf16.mxu0 %v7077
    %7141 = vmatpush1.bf16.msra.mxu0 %v7076
    %7142 = vmatprep.subr.bf16.mxu0 %v7079
    %7143 = vmatpush1.bf16.msra.mxu0 %v7078
    %7144 = vmatprep.subr.bf16.mxu0 %v7081
    %7145 = vmatpush1.bf16.msra.mxu0 %v7080
    %7146 = vmatprep.subr.bf16.mxu0 %v7083
    %7147 = vmatpush1.bf16.msra.mxu0 %v7082
    %7148 = vmatprep.subr.bf16.mxu0 %v7085
    %7149 = vmatpush1.bf16.msra.mxu0 %v7084
    %7150 = vmatprep.subr.bf16.mxu0 %v7087
    %7151 = vmatpush1.bf16.msra.mxu0 %v7086
    %7152 = vmatprep.subr.bf16.mxu0 %v7089
    %7153 = vmatpush1.bf16.msra.mxu0 %v7088
    %7154 = vmatprep.subr.bf16.mxu0 %v7091
    %7155 = vmatpush1.bf16.msra.mxu0 %v7090
    %7156 = vmatprep.subr.bf16.mxu0 %v7093
    %7157 = vmatpush1.bf16.msra.mxu0 %v7092
    %7158 = vmatprep.subr.bf16.mxu0 %v7095
    %7159 = vmatpush1.bf16.msra.mxu0 %v7094
    %7160 = vmatprep.subr.bf16.mxu0 %v7097
    %7161 = vmatpush1.bf16.msra.mxu0 %v7096
    %7162 = vmatprep.subr.bf16.mxu0 %v7099
    %7163 = vmatpush1.bf16.msra.mxu0 %v7098
    %7164 = vmatprep.subr.bf16.mxu0 %v7101
    %7165 = vmatpush1.bf16.msra.mxu0 %v7100
    %7166 = vmatprep.subr.bf16.mxu0 %v7103
    %7167 = vmatpush1.bf16.msra.mxu0 %v7102
    %7168 = vmatprep.subr.bf16.mxu0 %v7105
    %7169 = vmatpush1.bf16.msra.mxu0 %v7104
    %7170 = vmatprep.mubr.bf16.mxu0 %v6919
    %7171 = vmatmul.mubr.bf16.gmra.mrb[0].mxu0 %v6918
    %v7172 = vpop.f32.mrb[0].mxu0
    %v7173 = vadd.f32 %v6971, %v7172
    %v7174 = vpop.f32.mrb[0].mxu0
    %v7175 = vadd.f32 %v6975, %v7174
    %v7176 = vpop.f32.mrb[0].mxu0
    %v7177 = vadd.f32 %v6971, %v7176
    %v7178 = vpop.f32.mrb[0].mxu0
    %v7179 = vadd.f32 %v6975, %v7178
    %7180 = vmatprep.mubr.bf16.mxu0 %v6921
    %7181 = vmatmul.mubr.bf16.gmra.mrb[0].mxu0 %v6920
    %v7182 = vpop.f32.mrb[0].mxu0
    %v7183 = vadd.f32 %v6971, %v7182
    %v7184 = vpop.f32.mrb[0].mxu0
    %v7185 = vadd.f32 %v6975, %v7184
    %v7186 = vpop.f32.mrb[0].mxu0
    %v7187 = vadd.f32 %v6971, %v7186
    %v7188 = vpop.f32.mrb[0].mxu0
    %v7189 = vadd.f32 %v6975, %v7188
    %7190 = vmatprep.mubr.bf16.mxu0 %v6923
    %7191 = vmatmul.mubr.bf16.gmra.mrb[0].mxu0 %v6922
    %v7192 = vpop.f32.mrb[0].mxu0
    %v7193 = vadd.f32 %v6971, %v7192
    %v7194 = vpop.f32.mrb[0].mxu0
    %v7195 = vadd.f32 %v6975, %v7194
    %v7196 = vpop.f32.mrb[0].mxu0
    %v7197 = vadd.f32 %v6971, %v7196
    %v7198 = vpop.f32.mrb[0].mxu0
    %v7199 = vadd.f32 %v6975, %v7198
    %7200 = vmatprep.mubr.bf16.mxu0 %v6925
    %7201 = vmatmul.mubr.bf16.gmra.mrb[0].mxu0 %v6924
    %v7202 = vpop.f32.mrb[0].mxu0
    %v7203 = vadd.f32 %v6971, %v7202
    %v7204 = vpop.f32.mrb[0].mxu0
    %v7205 = vadd.f32 %v6975, %v7204
    %v7206 = vpop.f32.mrb[0].mxu0
    %v7207 = vadd.f32 %v6971, %v7206
    %v7208 = vpop.f32.mrb[0].mxu0
    %v7209 = vadd.f32 %v6975, %v7208
    %7210 = vmatprep.mubr.bf16.mxu0 %v6927
    %7211 = vmatmul.mubr.bf16.gmra.mrb[0].mxu0 %v6926
    %v7212 = vpop.f32.mrb[0].mxu0
    %v7213 = vadd.f32 %v6971, %v7212
    %v7214 = vpop.f32.mrb[0].mxu0
    %v7215 = vadd.f32 %v6975, %v7214
    %v7216 = vpop.f32.mrb[0].mxu0
    %v7217 = vadd.f32 %v6971, %v7216
    %v7218 = vpop.f32.mrb[0].mxu0
    %v7219 = vadd.f32 %v6975, %v7218
    %7220 = vmatprep.mubr.bf16.mxu0 %v6929
    %7221 = vmatmul.mubr.bf16.gmra.mrb[0].mxu0 %v6928
    %v7222 = vpop.f32.mrb[0].mxu0
    %v7223 = vadd.f32 %v6971, %v7222
    %v7224 = vpop.f32.mrb[0].mxu0
    %v7225 = vadd.f32 %v6975, %v7224
    %v7226 = vpop.f32.mrb[0].mxu0
    %v7227 = vadd.f32 %v6971, %v7226
    %v7228 = vpop.f32.mrb[0].mxu0
    %v7229 = vadd.f32 %v6975, %v7228
    %7230 = vmatprep.mubr.bf16.mxu0 %v6931
    %7231 = vmatmul.mubr.bf16.gmra.mrb[0].mxu0 %v6930
    %v7232 = vpop.f32.mrb[0].mxu0
    %v7233 = vadd.f32 %v6971, %v7232
    %v7234 = vpop.f32.mrb[0].mxu0
    %v7235 = vadd.f32 %v6975, %v7234
    %v7236 = vpop.f32.mrb[0].mxu0
    %v7237 = vadd.f32 %v6971, %v7236
    %v7238 = vpop.f32.mrb[0].mxu0
    %v7239 = vadd.f32 %v6975, %v7238
    %7240 = vmatprep.mubr.bf16.mxu0 %v6933
    %7241 = vmatmul.mubr.bf16.gmra.mrb[0].mxu0 %v6932
    %v7242 = vpop.f32.mrb[0].mxu0
    %v7243 = vadd.f32 %v6971, %v7242
    %v7244 = vpop.f32.mrb[0].mxu0
    %v7245 = vadd.f32 %v6975, %v7244
    %v7246 = vpop.f32.mrb[0].mxu0
    %v7247 = vadd.f32 %v6971, %v7246
    %v7248 = vpop.f32.mrb[0].mxu0
    %v7249 = vadd.f32 %v6975, %v7248
    %7250 = vdwg.mxu0
    %v7251 = vtanh.pop %v7173
    %v7252 = vtanh.pop %v7175
    %v7253 = vtanh.pop %v7177
    %v7254 = vtanh.pop %v7179
    %v7255 = vtanh.pop %v7183
    %v7256 = vtanh.pop %v7185
    %v7257 = vtanh.pop %v7187
    %v7258 = vtanh.pop %v7189
    %v7259 = vtanh.pop %v7193
    %v7260 = vtanh.pop %v7195
    %v7261 = vtanh.pop %v7197
    %v7262 = vtanh.pop %v7199
    %v7263 = vtanh.pop %v7203
    %v7264 = vtanh.pop %v7205
    %v7265 = vtanh.pop %v7207
    %v7266 = vtanh.pop %v7209
    %v7267 = vtanh.pop %v7213
    %v7268 = vtanh.pop %v7215
    %v7269 = vtanh.pop %v7217
    %v7270 = vtanh.pop %v7219
    %v7271 = vtanh.pop %v7223
    %v7272 = vtanh.pop %v7225
    %v7273 = vtanh.pop %v7227
    %v7274 = vtanh.pop %v7229
    %v7275 = vtanh.pop %v7233
    %v7276 = vtanh.pop %v7235
    %v7277 = vtanh.pop %v7237
    %v7278 = vtanh.pop %v7239
    %v7279 = vtanh.pop %v7243
    %v7280 = vtanh.pop %v7245
    %v7281 = vtanh.pop %v7247
    %v7282 = vtanh.pop %v7249
    %7283 = vst [vmem:[#allocation4] sm:$0xff] %v7251
    %7284 = vst [vmem:[#allocation4 + $0x8] sm:$0xff] %v7252
    %7285 = vst [vmem:[#allocation4 + $0x10] sm:$0xff] %v7253
    %7286 = vst [vmem:[#allocation4 + $0x18] sm:$0xff] %v7254
    %7287 = vst [vmem:[#allocation4 + $0x20] sm:$0xff] %v7255
    %7288 = vst [vmem:[#allocation4 + $0x28] sm:$0xff] %v7256
    %7289 = vst [vmem:[#allocation4 + $0x30] sm:$0xff] %v7257
    %7290 = vst [vmem:[#allocation4 + $0x38] sm:$0xff] %v7258
    %7291 = vst [vmem:[#allocation4 + $0x40] sm:$0xff] %v7259
    %7292 = vst [vmem:[#allocation4 + $0x48] sm:$0xff] %v7260
    %7293 = vst [vmem:[#allocation4 + $0x50] sm:$0xff] %v7261
    %7294 = vst [vmem:[#allocation4 + $0x58] sm:$0xff] %v7262
    %7295 = vst [vmem:[#allocation4 + $0x60] sm:$0xff] %v7263
    %7296 = vst [vmem:[#allocation4 + $0x68] sm:$0xff] %v7264
    %7297 = vst [vmem:[#allocation4 + $0x70] sm:$0xff] %v7265
    %7298 = vst [vmem:[#allocation4 + $0x78] sm:$0xff] %v7266
    %7299 = vst [vmem:[#allocation4 + $0x80] sm:$0xff] %v7267
    %7300 = vst [vmem:[#allocation4 + $0x88] sm:$0xff] %v7268
    %7301 = vst [vmem:[#allocation4 + $0x90] sm:$0xff] %v7269
    %7302 = vst [vmem:[#allocation4 + $0x98] sm:$0xff] %v7270
    %7303 = vst [vmem:[#allocation4 + $0xa0] sm:$0xff] %v7271
    %7304 = vst [vmem:[#allocation4 + $0xa8] sm:$0xff] %v7272
    %7305 = vst [vmem:[#allocation4 + $0xb0] sm:$0xff] %v7273
    %7306 = vst [vmem:[#allocation4 + $0xb8] sm:$0xff] %v7274
    %7307 = vst [vmem:[#allocation4 + $0xc0] sm:$0xff] %v7275
    %7308 = vst [vmem:[#allocation4 + $0xc8] sm:$0xff] %v7276
    %7309 = vst [vmem:[#allocation4 + $0xd0] sm:$0xff] %v7277
    %7310 = vst [vmem:[#allocation4 + $0xd8] sm:$0xff] %v7278
    %7311 = vst [vmem:[#allocation4 + $0xe0] sm:$0xff] %v7279
    %7312 = vst [vmem:[#allocation4 + $0xe8] sm:$0xff] %v7280
    %7313 = vst [vmem:[#allocation4 + $0xf0] sm:$0xff] %v7281
    %7314 = vst [vmem:[#allocation4 + $0xf8] sm:$0xff] %v7282
    %v7315 = vld [vmem:[#allocation4] sm:$0xff]
    %v7316 = vld [vmem:[#allocation4 + $0x8] sm:$0xff]
    %v7317 = vld [vmem:[#allocation4 + $0x10] sm:$0xff]
    %v7318 = vld [vmem:[#allocation4 + $0x18] sm:$0xff]
    %v7319 = vld [vmem:[#allocation4 + $0x20] sm:$0xff]
    %v7320 = vld [vmem:[#allocation4 + $0x28] sm:$0xff]
    %v7321 = vld [vmem:[#allocation4 + $0x30] sm:$0xff]
    %v7322 = vld [vmem:[#allocation4 + $0x38] sm:$0xff]
    %v7323 = vld [vmem:[#allocation4 + $0x40] sm:$0xff]
    %v7324 = vld [vmem:[#allocation4 + $0x48] sm:$0xff]
    %v7325 = vld [vmem:[#allocation4 + $0x50] sm:$0xff]
    %v7326 = vld [vmem:[#allocation4 + $0x58] sm:$0xff]
    %v7327 = vld [vmem:[#allocation4 + $0x60] sm:$0xff]
    %v7328 = vld [vmem:[#allocation4 + $0x68] sm:$0xff]
    %v7329 = vld [vmem:[#allocation4 + $0x70] sm:$0xff]
    %v7330 = vld [vmem:[#allocation4 + $0x78] sm:$0xff]
    %v7331 = vld [vmem:[#allocation4 + $0x80] sm:$0xff]
    %v7332 = vld [vmem:[#allocation4 + $0x88] sm:$0xff]
    %v7333 = vld [vmem:[#allocation4 + $0x90] sm:$0xff]
    %v7334 = vld [vmem:[#allocation4 + $0x98] sm:$0xff]
    %v7335 = vld [vmem:[#allocation4 + $0xa0] sm:$0xff]
    %v7336 = vld [vmem:[#allocation4 + $0xa8] sm:$0xff]
    %v7337 = vld [vmem:[#allocation4 + $0xb0] sm:$0xff]
    %v7338 = vld [vmem:[#allocation4 + $0xb8] sm:$0xff]
    %v7339 = vld [vmem:[#allocation4 + $0xc0] sm:$0xff]
    %v7340 = vld [vmem:[#allocation4 + $0xc8] sm:$0xff]
    %v7341 = vld [vmem:[#allocation4 + $0xd0] sm:$0xff]
    %v7342 = vld [vmem:[#allocation4 + $0xd8] sm:$0xff]
    %v7343 = vld [vmem:[#allocation4 + $0xe0] sm:$0xff]
    %v7344 = vld [vmem:[#allocation4 + $0xe8] sm:$0xff]
    %v7345 = vld [vmem:[#allocation4 + $0xf0] sm:$0xff]
    %v7346 = vld [vmem:[#allocation4 + $0xf8] sm:$0xff]
    %v7347 = vld [vmem:[#allocation18] sm:$0x3]
    %v7349 = vlaneseq
    %v7350 = vshrl.u32 %v7349, 7
    %v7351 = vsub.s32 0, %v7350
    %v7352 = vrot.slane %v7347, %v7351
    %v7353 = vlaneseq
    %v7354 = vshrl.u32 %v7353, 7
    %v7355 = vsub.s32 1, %v7354
    %v7356 = vrot.slane %v7347, %v7355
    %v7359 = vmul.f32 %v7315, %v7352
    %v7360 = vmul.f32 %v7316, %v7356
    %v7361 = vmul.f32 %v7317, %v7352
    %v7362 = vmul.f32 %v7318, %v7356
    %v7363 = vmul.f32 %v7319, %v7352
    %v7364 = vmul.f32 %v7320, %v7356
    %v7365 = vmul.f32 %v7321, %v7352
    %v7366 = vmul.f32 %v7322, %v7356
    %v7367 = vmul.f32 %v7323, %v7352
    %v7368 = vmul.f32 %v7324, %v7356
    %v7369 = vmul.f32 %v7325, %v7352
    %v7370 = vmul.f32 %v7326, %v7356
    %v7371 = vmul.f32 %v7327, %v7352
    %v7372 = vmul.f32 %v7328, %v7356
    %v7373 = vmul.f32 %v7329, %v7352
    %v7374 = vmul.f32 %v7330, %v7356
    %v7375 = vmul.f32 %v7331, %v7352
    %v7376 = vmul.f32 %v7332, %v7356
    %v7377 = vmul.f32 %v7333, %v7352
    %v7378 = vmul.f32 %v7334, %v7356
    %v7379 = vmul.f32 %v7335, %v7352
    %v7380 = vmul.f32 %v7336, %v7356
    %v7381 = vmul.f32 %v7337, %v7352
    %v7382 = vmul.f32 %v7338, %v7356
    %v7383 = vmul.f32 %v7339, %v7352
    %v7384 = vmul.f32 %v7340, %v7356
    %v7385 = vmul.f32 %v7341, %v7352
    %v7386 = vmul.f32 %v7342, %v7356
    %v7387 = vmul.f32 %v7343, %v7352
    %v7388 = vmul.f32 %v7344, %v7356
    %v7389 = vmul.f32 %v7345, %v7352
    %v7390 = vmul.f32 %v7346, %v7356
    %v7391 = vadd.f32 %v7359, %v7360
    %7392 = vadd.xlane.f32.xlu0 %v7391
    %v7393 = vpop.xlane.xlu0 %7392
    %v7394 = vadd.f32 %v7361, %v7362
    %7395 = vadd.xlane.f32.xlu0 %v7394
    %v7396 = vpop.xlane.xlu0 %7395
    %v7397 = vadd.f32 %v7363, %v7364
    %7398 = vadd.xlane.f32.xlu0 %v7397
    %v7399 = vpop.xlane.xlu0 %7398
    %v7400 = vadd.f32 %v7365, %v7366
    %7401 = vadd.xlane.f32.xlu0 %v7400
    %v7402 = vpop.xlane.xlu0 %7401
    %v7403 = vadd.f32 %v7367, %v7368
    %7404 = vadd.xlane.f32.xlu0 %v7403
    %v7405 = vpop.xlane.xlu0 %7404
    %v7406 = vadd.f32 %v7369, %v7370
    %7407 = vadd.xlane.f32.xlu0 %v7406
    %v7408 = vpop.xlane.xlu0 %7407
    %v7409 = vadd.f32 %v7371, %v7372
    %7410 = vadd.xlane.f32.xlu0 %v7409
    %v7411 = vpop.xlane.xlu0 %7410
    %v7412 = vadd.f32 %v7373, %v7374
    %7413 = vadd.xlane.f32.xlu0 %v7412
    %v7414 = vpop.xlane.xlu0 %7413
    %v7415 = vadd.f32 %v7375, %v7376
    %7416 = vadd.xlane.f32.xlu0 %v7415
    %v7417 = vpop.xlane.xlu0 %7416
    %v7418 = vadd.f32 %v7377, %v7378
    %7419 = vadd.xlane.f32.xlu0 %v7418
    %v7420 = vpop.xlane.xlu0 %7419
    %v7421 = vadd.f32 %v7379, %v7380
    %7422 = vadd.xlane.f32.xlu0 %v7421
    %v7423 = vpop.xlane.xlu0 %7422
    %v7424 = vadd.f32 %v7381, %v7382
    %7425 = vadd.xlane.f32.xlu0 %v7424
    %v7426 = vpop.xlane.xlu0 %7425
    %v7427 = vadd.f32 %v7383, %v7384
    %7428 = vadd.xlane.f32.xlu0 %v7427
    %v7429 = vpop.xlane.xlu0 %7428
    %v7430 = vadd.f32 %v7385, %v7386
    %7431 = vadd.xlane.f32.xlu0 %v7430
    %v7432 = vpop.xlane.xlu0 %7431
    %v7433 = vadd.f32 %v7387, %v7388
    %7434 = vadd.xlane.f32.xlu0 %v7433
    %v7435 = vpop.xlane.xlu0 %7434
    %v7436 = vadd.f32 %v7389, %v7390
    %7437 = vadd.xlane.f32.xlu0 %v7436
    %v7438 = vpop.xlane.xlu0 %7437
    %v7439 = vld [vmem:[#allocation5] sm:$0x1]
    %v7441 = vlaneseq
    %v7442 = vshrl.u32 %v7441, 7
    %v7443 = vsub.s32 0, %v7442
    %v7444 = vrot.slane %v7439, %v7443
    %v7446 = vadd.f32 %v7393, %v7444
    %v7447 = vadd.f32 %v7396, %v7444
    %v7448 = vadd.f32 %v7399, %v7444
    %v7449 = vadd.f32 %v7402, %v7444
    %v7450 = vadd.f32 %v7405, %v7444
    %v7451 = vadd.f32 %v7408, %v7444
    %v7452 = vadd.f32 %v7411, %v7444
    %v7453 = vadd.f32 %v7414, %v7444
    %v7454 = vadd.f32 %v7417, %v7444
    %v7455 = vadd.f32 %v7420, %v7444
    %v7456 = vadd.f32 %v7423, %v7444
    %v7457 = vadd.f32 %v7426, %v7444
    %v7458 = vadd.f32 %v7429, %v7444
    %v7459 = vadd.f32 %v7432, %v7444
    %v7460 = vadd.f32 %v7435, %v7444
    %v7461 = vadd.f32 %v7438, %v7444
    %vm7462 = vcmask 7168
    %v7463 = vsel %vm7462, %v7446, -inf
    %v7464 = vsel %vm7462, %v7447, -inf
    %v7465 = vsel %vm7462, %v7448, -inf
    %v7466 = vsel %vm7462, %v7449, -inf
    %v7467 = vsel %vm7462, %v7450, -inf
    %v7468 = vmax.f32 %v7463, %v7467
    %v7469 = vsel %vm7462, %v7451, -inf
    %v7470 = vmax.f32 %v7464, %v7469
    %v7471 = vsel %vm7462, %v7452, -inf
    %v7472 = vmax.f32 %v7465, %v7471
    %v7473 = vsel %vm7462, %v7453, -inf
    %v7474 = vmax.f32 %v7466, %v7473
    %v7475 = vsel %vm7462, %v7454, -inf
    %v7476 = vmax.f32 %v7468, %v7475
    %v7477 = vsel %vm7462, %v7455, -inf
    %v7478 = vmax.f32 %v7470, %v7477
    %v7479 = vsel %vm7462, %v7456, -inf
    %v7480 = vmax.f32 %v7472, %v7479
    %v7481 = vsel %vm7462, %v7457, -inf
    %v7482 = vmax.f32 %v7474, %v7481
    %v7483 = vsel %vm7462, %v7458, -inf
    %v7484 = vmax.f32 %v7476, %v7483
    %v7485 = vsel %vm7462, %v7459, -inf
    %v7486 = vmax.f32 %v7478, %v7485
    %v7487 = vsel %vm7462, %v7460, -inf
    %v7488 = vmax.f32 %v7480, %v7487
    %v7489 = vsel %vm7462, %v7461, -inf
    %v7490 = vmax.f32 %v7482, %v7489
    %v7491 = vmax.f32 %v7484, %v7486
    %v7492 = vmax.f32 %v7488, %v7490
    %v7493 = vmax.f32 %v7491, %v7492
    %v7494 = vsub.f32 %v7446, %v7493
    %v7495 = vsub.f32 %v7447, %v7493
    %v7496 = vsub.f32 %v7448, %v7493
    %v7497 = vsub.f32 %v7449, %v7493
    %v7498 = vsub.f32 %v7450, %v7493
    %v7499 = vsub.f32 %v7451, %v7493
    %v7500 = vsub.f32 %v7452, %v7493
    %v7501 = vsub.f32 %v7453, %v7493
    %v7502 = vsub.f32 %v7454, %v7493
    %v7503 = vsub.f32 %v7455, %v7493
    %v7504 = vsub.f32 %v7456, %v7493
    %v7505 = vsub.f32 %v7457, %v7493
    %v7506 = vsub.f32 %v7458, %v7493
    %v7507 = vsub.f32 %v7459, %v7493
    %v7508 = vsub.f32 %v7460, %v7493
    %v7509 = vsub.f32 %v7461, %v7493
    %v7510 = vmul.f32 %v7494, 1.442695
    %v7511 = vpow.pop %v7510
    %v7512 = vmul.f32 %v7495, 1.442695
    %v7513 = vpow.pop %v7512
    %v7514 = vmul.f32 %v7496, 1.442695
    %v7515 = vpow.pop %v7514
    %v7516 = vmul.f32 %v7497, 1.442695
    %v7517 = vpow.pop %v7516
    %v7518 = vmul.f32 %v7498, 1.442695
    %v7519 = vpow.pop %v7518
    %v7520 = vmul.f32 %v7499, 1.442695
    %v7521 = vpow.pop %v7520
    %v7522 = vmul.f32 %v7500, 1.442695
    %v7523 = vpow.pop %v7522
    %v7524 = vmul.f32 %v7501, 1.442695
    %v7525 = vpow.pop %v7524
    %v7526 = vmul.f32 %v7502, 1.442695
    %v7527 = vpow.pop %v7526
    %v7528 = vmul.f32 %v7503, 1.442695
    %v7529 = vpow.pop %v7528
    %v7530 = vmul.f32 %v7504, 1.442695
    %v7531 = vpow.pop %v7530
    %v7532 = vmul.f32 %v7505, 1.442695
    %v7533 = vpow.pop %v7532
    %v7534 = vmul.f32 %v7506, 1.442695
    %v7535 = vpow.pop %v7534
    %v7536 = vmul.f32 %v7507, 1.442695
    %v7537 = vpow.pop %v7536
    %v7538 = vmul.f32 %v7508, 1.442695
    %v7539 = vpow.pop %v7538
    %v7540 = vmul.f32 %v7509, 1.442695
    %v7541 = vpow.pop %v7540
    %v7542 = vsel %vm7462, %v7511, 0.0
    %v7543 = vsel %vm7462, %v7513, 0.0
    %v7544 = vadd.f32 %v7542, %v7543
    %v7545 = vsel %vm7462, %v7515, 0.0
    %v7546 = vadd.f32 %v7544, %v7545
    %v7547 = vsel %vm7462, %v7517, 0.0
    %v7548 = vadd.f32 %v7546, %v7547
    %v7549 = vsel %vm7462, %v7519, 0.0
    %v7550 = vadd.f32 %v7548, %v7549
    %v7551 = vsel %vm7462, %v7521, 0.0
    %v7552 = vadd.f32 %v7550, %v7551
    %v7553 = vsel %vm7462, %v7523, 0.0
    %v7554 = vadd.f32 %v7552, %v7553
    %v7555 = vsel %vm7462, %v7525, 0.0
    %v7556 = vadd.f32 %v7554, %v7555
    %v7557 = vsel %vm7462, %v7527, 0.0
    %v7558 = vadd.f32 %v7556, %v7557
    %v7559 = vsel %vm7462, %v7529, 0.0
    %v7560 = vadd.f32 %v7558, %v7559
    %v7561 = vsel %vm7462, %v7531, 0.0
    %v7562 = vadd.f32 %v7560, %v7561
    %v7563 = vsel %vm7462, %v7533, 0.0
    %v7564 = vadd.f32 %v7562, %v7563
    %v7565 = vsel %vm7462, %v7535, 0.0
    %v7566 = vadd.f32 %v7564, %v7565
    %v7567 = vsel %vm7462, %v7537, 0.0
    %v7568 = vadd.f32 %v7566, %v7567
    %v7569 = vsel %vm7462, %v7539, 0.0
    %v7570 = vadd.f32 %v7568, %v7569
    %v7571 = vsel %vm7462, %v7541, 0.0
    %v7572 = vadd.f32 %v7570, %v7571
    %v7573 = vrcp.pop %v7572
    %v7574 = vmul.f32 %v7511, %v7573
    %v7575 = vmul.f32 %v7513, %v7573
    %v7576 = vmul.f32 %v7515, %v7573
    %v7577 = vmul.f32 %v7517, %v7573
    %v7578 = vmul.f32 %v7519, %v7573
    %v7579 = vmul.f32 %v7521, %v7573
    %v7580 = vmul.f32 %v7523, %v7573
    %v7581 = vmul.f32 %v7525, %v7573
    %v7582 = vmul.f32 %v7527, %v7573
    %v7583 = vmul.f32 %v7529, %v7573
    %v7584 = vmul.f32 %v7531, %v7573
    %v7585 = vmul.f32 %v7533, %v7573
    %v7586 = vmul.f32 %v7535, %v7573
    %v7587 = vmul.f32 %v7537, %v7573
    %v7588 = vmul.f32 %v7539, %v7573
    %v7589 = vmul.f32 %v7541, %v7573
    %7591 = vset.pattern.permute.xlu0 0
    %7592 = vperm.xlu0 %7591, %v7574
    %v7593 = vpop.permute.xlu0 %7592
    %7596 = vset.pattern.permute.xlu0 0
    %7597 = vperm.xlu0 %7596, %v7575
    %v7598 = vpop.permute.xlu0 %7597
    %7601 = vset.pattern.permute.xlu0 0
    %7602 = vperm.xlu0 %7601, %v7576
    %v7603 = vpop.permute.xlu0 %7602
    %7606 = vset.pattern.permute.xlu0 0
    %7607 = vperm.xlu0 %7606, %v7577
    %v7608 = vpop.permute.xlu0 %7607
    %7611 = vset.pattern.permute.xlu0 0
    %7612 = vperm.xlu0 %7611, %v7578
    %v7613 = vpop.permute.xlu0 %7612
    %7616 = vset.pattern.permute.xlu0 0
    %7617 = vperm.xlu0 %7616, %v7579
    %v7618 = vpop.permute.xlu0 %7617
    %7621 = vset.pattern.permute.xlu0 0
    %7622 = vperm.xlu0 %7621, %v7580
    %v7623 = vpop.permute.xlu0 %7622
    %7626 = vset.pattern.permute.xlu0 0
    %7627 = vperm.xlu0 %7626, %v7581
    %v7628 = vpop.permute.xlu0 %7627
    %7631 = vset.pattern.permute.xlu0 0
    %7632 = vperm.xlu0 %7631, %v7582
    %v7633 = vpop.permute.xlu0 %7632
    %7636 = vset.pattern.permute.xlu0 0
    %7637 = vperm.xlu0 %7636, %v7583
    %v7638 = vpop.permute.xlu0 %7637
    %7641 = vset.pattern.permute.xlu0 0
    %7642 = vperm.xlu0 %7641, %v7584
    %v7643 = vpop.permute.xlu0 %7642
    %7646 = vset.pattern.permute.xlu0 0
    %7647 = vperm.xlu0 %7646, %v7585
    %v7648 = vpop.permute.xlu0 %7647
    %7651 = vset.pattern.permute.xlu0 0
    %7652 = vperm.xlu0 %7651, %v7586
    %v7653 = vpop.permute.xlu0 %7652
    %7656 = vset.pattern.permute.xlu0 0
    %7657 = vperm.xlu0 %7656, %v7587
    %v7658 = vpop.permute.xlu0 %7657
    %7661 = vset.pattern.permute.xlu0 0
    %7662 = vperm.xlu0 %7661, %v7588
    %v7663 = vpop.permute.xlu0 %7662
    %7666 = vset.pattern.permute.xlu0 0
    %7667 = vperm.xlu0 %7666, %v7589
    %v7668 = vpop.permute.xlu0 %7667
    %v7670 = vmul.f32 %v7315, %v7593
    %v7671 = vmul.f32 %v7316, %v7593
    %v7672 = vmul.f32 %v7317, %v7598
    %v7673 = vmul.f32 %v7318, %v7598
    %v7674 = vmul.f32 %v7319, %v7603
    %v7675 = vmul.f32 %v7320, %v7603
    %v7676 = vmul.f32 %v7321, %v7608
    %v7677 = vmul.f32 %v7322, %v7608
    %v7678 = vmul.f32 %v7323, %v7613
    %v7679 = vmul.f32 %v7324, %v7613
    %v7680 = vmul.f32 %v7325, %v7618
    %v7681 = vmul.f32 %v7326, %v7618
    %v7682 = vmul.f32 %v7327, %v7623
    %v7683 = vmul.f32 %v7328, %v7623
    %v7684 = vmul.f32 %v7329, %v7628
    %v7685 = vmul.f32 %v7330, %v7628
    %v7686 = vmul.f32 %v7331, %v7633
    %v7687 = vmul.f32 %v7332, %v7633
    %v7688 = vmul.f32 %v7333, %v7638
    %v7689 = vmul.f32 %v7334, %v7638
    %v7690 = vmul.f32 %v7335, %v7643
    %v7691 = vmul.f32 %v7336, %v7643
    %v7692 = vmul.f32 %v7337, %v7648
    %v7693 = vmul.f32 %v7338, %v7648
    %v7694 = vmul.f32 %v7339, %v7653
    %v7695 = vmul.f32 %v7340, %v7653
    %v7696 = vmul.f32 %v7341, %v7658
    %v7697 = vmul.f32 %v7342, %v7658
    %v7698 = vmul.f32 %v7343, %v7663
    %v7699 = vmul.f32 %v7344, %v7663
    %v7700 = vmul.f32 %v7345, %v7668
    %v7701 = vmul.f32 %v7346, %v7668
    %v7702 = vadd.f32 %v7670, %v7672
    %v7703 = vadd.f32 %v7702, %v7674
    %v7704 = vadd.f32 %v7703, %v7676
    %v7705 = vadd.f32 %v7704, %v7678
    %v7706 = vadd.f32 %v7705, %v7680
    %v7707 = vadd.f32 %v7706, %v7682
    %v7708 = vadd.f32 %v7707, %v7684
    %v7709 = vadd.f32 %v7708, %v7686
    %v7710 = vadd.f32 %v7709, %v7688
    %v7711 = vadd.f32 %v7710, %v7690
    %v7712 = vadd.f32 %v7711, %v7692
    %v7713 = vadd.f32 %v7712, %v7694
    %v7714 = vadd.f32 %v7713, %v7696
    %v7715 = vadd.f32 %v7714, %v7698
    %v7716 = vadd.f32 %v7715, %v7700
    %v7717 = vadd.f32 %v7671, %v7673
    %v7718 = vadd.f32 %v7717, %v7675
    %v7719 = vadd.f32 %v7718, %v7677
    %v7720 = vadd.f32 %v7719, %v7679
    %v7721 = vadd.f32 %v7720, %v7681
    %v7722 = vadd.f32 %v7721, %v7683
    %v7723 = vadd.f32 %v7722, %v7685
    %v7724 = vadd.f32 %v7723, %v7687
    %v7725 = vadd.f32 %v7724, %v7689
    %v7726 = vadd.f32 %v7725, %v7691
    %v7727 = vadd.f32 %v7726, %v7693
    %v7728 = vadd.f32 %v7727, %v7695
    %v7729 = vadd.f32 %v7728, %v7697
    %v7730 = vadd.f32 %v7729, %v7699
    %v7731 = vadd.f32 %v7730, %v7701
    %v7732 = vmul.f32 %v7716, %v7716
    %v7733 = vmul.f32 %v7731, %v7731
    %v7734 = vadd.f32 %v7732, %v7733
    %7735 = vadd.xlane.f32.xlu0 %v7734
    %v7736 = vpop.xlane.xlu0 %7735
    %v7737 = vrsqrt.pop %v7736
    %v7738 = vmul.f32 %v7736, %v7737
    %vm7739 = vcmp.eq.f32.partialorder %v7736, inf
    %v7740 = vsel %vm7739, %v7736, %v7738
    %vm7741 = vcmp.eq.f32.partialorder %v7736, 0.0
    %v7742 = vand.u32 %v7736, 2147483648
    %v7743 = vsel %vm7741, %v7742, %v7740
    %v7744 = vrcp.pop %v7743
    %v7745 = vmul.f32 %v7716, %v7744
    %v7746 = vmul.f32 %v7731, %v7744
    %7747 = vst [vmem:[#allocation20] sm:$0xff] %v7745
    %7748 = vst [vmem:[#allocation20 + $0x8] sm:$0xff] %v7746
    // Predicated region
    $region91: #{tpu_custom_call.1} parent=1 // pred_check
      _
    $region92: #{tpu_custom_call.1} parent=1 // pred_check_branch
      %7750 = sbr.rel (0) target = $region94
    $region93: #{tpu_custom_call.1} parent=1 // pred_region
      %s7752 = ssub.s32 256, 256
      %7753 = vsyncadd [#allocation8], %s7752
      %s7755 = sshll.u32 [#allocation20], 4
      %s7756 = int_to_ptr.vmem [resolvable:$true] %s7755
      %7758 = dma.vmem_to_hbm [thread:$0]  %s7756, 256, %s9, [#allocation8]
    $region94: #{tpu_custom_call.1} parent=1 // pred_fallthru
      _
    // Predicated region
    $region95: #{tpu_custom_call.1} parent=1 // pred_check
      _
    $region96: #{tpu_custom_call.1} parent=1 // pred_check_branch
      %7760 = sbr.rel (0) target = $region98
    $region97: #{tpu_custom_call.1} parent=1 // pred_region
      %7761 = dma.done [#allocation8], 256
    $region98: #{tpu_custom_call.1} parent=1 // pred_fallthru
      _
    %7762 = vsyncpa [#allocation7], 1
    %7763 = vsyncpa [#allocation10], 1
    %7764 = vsyncpa [#allocation13], 1
    %7765 = vsyncpa [#allocation16], 1
    %7766 = vsyncpa [#allocation19], 1
    %7767 = vsyncpa [#allocation8], 1

</llo_original>
